<compile_context>
chip_gen: v5e
topology: v5e:2x2
jax: 0.10.0
libtpu: 0.0.40
codegen_flags: <defaults>
</compile_context>

<pallas_src>
import jax
import jax.numpy as jnp
from jax.experimental import pallas as pl
from jax.experimental.pallas import tpu as pltpu


def _round_up(x, m):
    return (x + m - 1) // m * m


def _vmem_capacity_bytes():
    try:
        return int(pltpu.get_tpu_info().vmem_capacity_bytes)
    except Exception:
        return 64 << 20  # conservative fallback (v7x per-TC VMEM)


def _edge_predictor_kernel(h_ref, w_src_ref, w_dst_ref, b_sum_ref,
                           w_out_ref, b_out_ref, pos_ref, neg_ref):
    # h_ref: (neg_samples + 2, TILE, d_pad)  (bf16 or f32)
    #   row 0 -> src rows, row 1 -> positive dst rows, rows 2.. -> neg dst rows.
    blk = h_ref[...]
    n_groups, tile, d = blk.shape
    n_dst = n_groups - 1                          # 1 + neg_samples

    src = blk[0]                                  # (TILE, d)
    dst = blk[1:].reshape(n_dst * tile, d)        # fused dst matmul operand

    # MXU projections, f32 accumulation.
    src_proj = jnp.dot(src, w_src_ref[...], preferred_element_type=jnp.float32)
    dst_proj = jnp.dot(dst, w_dst_ref[...], preferred_element_type=jnp.float32)
    dst_proj = dst_proj + b_sum_ref[...]          # fused (b_src + b_dst), f32

    # Broadcast-add src projection across all dst groups, ReLU (all f32 / VPU).
    edge = jnp.maximum(
        dst_proj.reshape(n_dst, tile, d) + src_proj[None, :, :], 0.0)

    # dim -> 1 head: VPU multiply + lane reduce; result (n_dst, TILE) is
    # lane-dense (edge index on the lane axis) for unmasked stores.
    scores = jnp.sum(edge * w_out_ref[...], axis=-1) + b_out_ref[...]

    pos_ref[...] = scores[0:1, :]                 # (1, TILE)
    neg_ref[...] = scores[1:, :]                  # (neg_samples, TILE)


def _pick_tile(num_edge, groups, d_pad, in_bytes, vmem_budget,
               target_block_bytes=4 << 20, max_tile=4096):
    """Byte-targeted edge tile (multiple of 128), clamped by a VMEM budget that
    includes the f32 intermediates (src_proj, dst_proj, relu'd edge)."""
    n_dst = groups - 1
    h_row = groups * d_pad * in_bytes                         # h bytes / edge
    live_row = (2 * h_row                                     # dbl-buffered h
                + (1 + 2 * n_dst) * d_pad * 4                 # f32 intermediates
                + 2 * (groups - 1) * 4)                       # dbl-buffered scores
    tile = max(128, target_block_bytes // h_row)
    cap = max(128, vmem_budget // live_row)
    tile = min(tile, cap, max_tile, _round_up(num_edge, 128))
    return int(max(128, (tile // 128) * 128))


def edge_predictor_forward(h, params, neg_samples=1, tile=None, use_bf16=True):
    """h: [num_edge*(neg_samples+2), dim_in] float32.
    Returns (pos_scores [num_edge,1], neg_scores [neg_samples*num_edge,1])."""
    n, d = h.shape
    groups = neg_samples + 2
    assert n % groups == 0
    num_edge = n // groups

    w_src, b_src, w_dst, b_dst, w_out, b_out = params

    in_dtype = jnp.bfloat16 if use_bf16 else jnp.float32
    in_bytes = 2 if use_bf16 else 4

    # Pad feature dim to a multiple of 128 (full lane density); zero padding is
    # transparent since padded weight rows/cols and w_out entries are zero.
    d_pad = _round_up(d, 128)
    pad_d = d_pad - d

    # Generation-aware VMEM budget / limit.
    vmem_cap = _vmem_capacity_bytes()
    vmem_limit = max(32 << 20, min(int(vmem_cap * 0.8), 100 << 20))
    weight_bytes = 2 * (2 * d_pad * d_pad * in_bytes + (2 * d_pad + 1) * 4)
    budget = max(4 << 20, vmem_limit - weight_bytes - (2 << 20))

    if tile is None:
        tile = _pick_tile(num_edge, groups, d_pad, in_bytes, budget)
    tile = max(128, _round_up(int(tile), 128))
    num_edge_pad = _round_up(num_edge, tile)      # pad edges instead of
    grid = (num_edge_pad // tile,)                # requiring tile | num_edge

    # Group axis first so one BlockSpec fetches src+pos+neg rows of a tile.
    h3 = h.reshape(groups, num_edge, d)
    pad_e = num_edge_pad - num_edge
    if pad_e or pad_d:
        h3 = jnp.pad(h3, ((0, 0), (0, pad_e), (0, pad_d)))
    h3 = h3.astype(in_dtype)

    if pad_d:
        w_src_p = jnp.pad(w_src, ((0, pad_d), (0, pad_d)))
        w_dst_p = jnp.pad(w_dst, ((0, pad_d), (0, pad_d)))
    else:
        w_src_p, w_dst_p = w_src, w_dst
    w_src_p = w_src_p.astype(in_dtype)
    w_dst_p = w_dst_p.astype(in_dtype)

    b_sum = (b_src + b_dst).reshape(1, d).astype(jnp.float32)   # fused bias (f32)
    w_out_row = w_out.reshape(1, d).astype(jnp.float32)
    if pad_d:
        b_sum = jnp.pad(b_sum, ((0, 0), (0, pad_d)))
        w_out_row = jnp.pad(w_out_row, ((0, 0), (0, pad_d)))
    b_out_s = b_out.reshape(1, 1).astype(jnp.float32)

    h_spec = pl.BlockSpec((groups, tile, d_pad), lambda i: (0, i, 0))
    pos_spec = pl.BlockSpec((1, tile), lambda i: (0, i))
    neg_spec = pl.BlockSpec((neg_samples, tile), lambda i: (0, i))
    out_shapes = [jax.ShapeDtypeStruct((1, num_edge_pad), jnp.float32),
                  jax.ShapeDtypeStruct((neg_samples, num_edge_pad), jnp.float32)]

    def _call(single_buffer_weights):
        def wspec(shape):
            if single_buffer_weights:
                return pl.BlockSpec(shape, lambda i: (0, 0),
                                    pipeline_mode=pl.Buffered(1))
            return pl.BlockSpec(shape, lambda i: (0, 0))
        return pl.pallas_call(
            _edge_predictor_kernel,
            grid=grid,
            in_specs=[h_spec,
                      wspec((d_pad, d_pad)),      # W_src  (resident)
                      wspec((d_pad, d_pad)),      # W_dst
                      wspec((1, d_pad)),          # b_src + b_dst (f32)
                      wspec((1, d_pad)),          # w_out row (f32)
                      wspec((1, 1))],             # b_out
            out_specs=[pos_spec, neg_spec],
            out_shape=out_shapes,
            compiler_params=pltpu.CompilerParams(
                dimension_semantics=("parallel",),
                vmem_limit_bytes=vmem_limit),
        )(h3, w_src_p, w_dst_p, b_sum, w_out_row, b_out_s)

    try:
        pos_out, neg_out = _call(True)
    except Exception:
        # Fallback if pipeline_mode=pl.Buffered(1) is unsupported by this jax:
        # weights simply get the default double buffer.
        pos_out, neg_out = _call(False)

    # Strip edge padding; restore PyTorch (N, 1) / sample-major neg ordering.
    pos = pos_out[:, :num_edge].reshape(num_edge, 1)
    neg = neg_out[:, :num_edge].reshape(neg_samples * num_edge, 1)
    return pos, neg


def init_params(key, dim_in):
    """Deterministic init. Weights stored as [in, out] (y = x @ W + b)."""
    ks = jax.random.split(key, 6)
    bound = 1.0 / jnp.sqrt(dim_in)
    w_src = jax.random.uniform(ks[0], (dim_in, dim_in), jnp.float32, -bound, bound)
    b_src = jax.random.uniform(ks[1], (1, dim_in), jnp.float32, -bound, bound)
    w_dst = jax.random.uniform(ks[2], (dim_in, dim_in), jnp.float32, -bound, bound)
    b_dst = jax.random.uniform(ks[3], (1, dim_in), jnp.float32, -bound, bound)
    w_out = jax.random.uniform(ks[4], (dim_in, 1), jnp.float32, -bound, bound)
    b_out = jax.random.uniform(ks[5], (1, 1), jnp.float32, -bound, bound)
    return (w_src, b_src, w_dst, b_dst, w_out, b_out)


def _reference_forward(h, params, neg_samples, in_dtype=jnp.float32):
    """Pure-JAX reference mirroring the PyTorch forward (optionally with
    bf16-cast matmul inputs, f32 accumulation, to match the bf16 kernel path)."""
    w_src, b_src, w_dst, b_dst, w_out, b_out = params
    num_edge = h.shape[0] // (neg_samples + 2)
    hh = h.astype(in_dtype)
    ws = w_src.astype(in_dtype)
    wd = w_dst.astype(in_dtype)
    dot = lambda a, b: jnp.dot(a, b, preferred_element_type=jnp.float32,
                               precision=jax.lax.Precision.HIGHEST)
    h_src = dot(hh[:num_edge], ws) + b_src
    h_pos_dst = dot(hh[num_edge:2 * num_edge], wd) + b_dst
    h_neg_dst = dot(hh[2 * num_edge:], wd) + b_dst
    h_pos_edge = jnp.maximum(h_src + h_pos_dst, 0.0)
    h_neg_edge = jnp.maximum(jnp.tile(h_src, (neg_samples, 1)) + h_neg_dst, 0.0)
    head = lambda e: dot(e, w_out) + b_out
    return head(h_pos_edge), head(h_neg_edge)


if __name__ == "__main__":
    dim_in = 32
    num_edge = 200
    neg_samples = 3
    groups = neg_samples + 2

    key = jax.random.PRNGKey(0)
    k_h, k_p = jax.random.split(key)
    h = jax.random.normal(k_h, (num_edge * groups, dim_in), jnp.float32)
    params = init_params(k_p, dim_in)

    # f32 path, auto tile: exercises feature padding (32->128) + edge padding.
    pos32, neg32 = edge_predictor_forward(h, params, neg_samples=neg_samples,
                                          use_bf16=False)
    # bf16 path, tile=128 -> grid=(2,): exercises the multi-tile pipelined path.
    pos16, neg16 = edge_predictor_forward(h, params, neg_samples=neg_samples,
                                          tile=128, use_bf16=True)
    jax.block_until_ready((pos32, neg32, pos16, neg16))

    ref_pos32, ref_neg32 = _reference_forward(h, params, neg_samples, jnp.float32)
    ref_pos16, ref_neg16 = _reference_forward(h, params, neg_samples, jnp.bfloat16)

    assert pos32.shape == (num_edge, 1)
    assert neg32.shape == (neg_samples * num_edge, 1)
    assert jnp.allclose(pos32, ref_pos32, atol=1e-3, rtol=1e-3)
    assert jnp.allclose(neg32, ref_neg32, atol=1e-3, rtol=1e-3)
    assert jnp.allclose(pos16, ref_pos16, atol=2e-2, rtol=2e-2)
    assert jnp.allclose(neg16, ref_neg16, atol=2e-2, rtol=2e-2)

    print("KERNEL_OK")
</pallas_src>

<mosaic_0001>
module attributes {stable_mosaic.version = 11 : i64} {
  func.func @_edge_predictor_kernel(%arg0: i32, %arg1: memref<5x256x128xf32, #tpu.memory_space<vmem>>, %arg2: memref<128x128xf32, #tpu.memory_space<vmem>>, %arg3: memref<128x128xf32, #tpu.memory_space<vmem>>, %arg4: memref<1x128xf32, #tpu.memory_space<vmem>>, %arg5: memref<1x128xf32, #tpu.memory_space<vmem>>, %arg6: memref<1x1xf32, #tpu.memory_space<vmem>>, %arg7: memref<1x256xf32, #tpu.memory_space<vmem>>, %arg8: memref<3x256xf32, #tpu.memory_space<vmem>>) attributes {dimension_semantics = [#tpu.dimension_semantics<parallel>], iteration_bounds = array<i64: 1>, scalar_prefetch = 0 : i64, scratch_operands = 0 : i64, tpu.core_type = #tpu.core_type<tc>, window_params = [{transform_indices = @transform_0, window_bounds = array<i64: 5, 256, 128>}, {pipeline_mode = #tpu.pipeline_mode<synchronous>, transform_indices = @transform_1, window_bounds = array<i64: 128, 128>}, {pipeline_mode = #tpu.pipeline_mode<synchronous>, transform_indices = @transform_2, window_bounds = array<i64: 128, 128>}, {pipeline_mode = #tpu.pipeline_mode<synchronous>, transform_indices = @transform_3, window_bounds = array<i64: 1, 128>}, {pipeline_mode = #tpu.pipeline_mode<synchronous>, transform_indices = @transform_4, window_bounds = array<i64: 1, 128>}, {pipeline_mode = #tpu.pipeline_mode<synchronous>, transform_indices = @transform_5, window_bounds = array<i64: 1, 1>}, {transform_indices = @transform_6, window_bounds = array<i64: 1, 256>}, {transform_indices = @transform_7, window_bounds = array<i64: 3, 256>}]} {
    %c0 = arith.constant 0 : index
    %c0_0 = arith.constant 0 : index
    %c0_1 = arith.constant 0 : index
    %0 = vector.load %arg1[%c0, %c0_0, %c0_1] : memref<5x256x128xf32, #tpu.memory_space<vmem>>, vector<5x256x128xf32>
    %1 = vector.extract_strided_slice %0 {offsets = [0, 0, 0], sizes = [1, 256, 128], strides = [1, 1, 1]} : vector<5x256x128xf32> to vector<1x256x128xf32>
    %2 = vector.shape_cast %1 : vector<1x256x128xf32> to vector<256x128xf32>
    %3 = vector.extract_strided_slice %0 {offsets = [1, 0, 0], sizes = [4, 256, 128], strides = [1, 1, 1]} : vector<5x256x128xf32> to vector<4x256x128xf32>
    %4 = vector.shape_cast %3 : vector<4x256x128xf32> to vector<1024x128xf32>
    %c0_2 = arith.constant 0 : index
    %c0_3 = arith.constant 0 : index
    %5 = vector.load %arg2[%c0_2, %c0_3] : memref<128x128xf32, #tpu.memory_space<vmem>>, vector<128x128xf32>
    %cst = arith.constant dense<0.000000e+00> : vector<256x128xf32>
    %6 = tpu.matmul %2, %5, %cst {dimension_numbers = #tpu.dot_dimension_numbers<[1], [0], [0], [1], [0, 0, 1, 1], [], []>} : vector<256x128xf32>, vector<128x128xf32>, vector<256x128xf32> -> vector<256x128xf32>
    %c0_4 = arith.constant 0 : index
    %c0_5 = arith.constant 0 : index
    %7 = vector.load %arg3[%c0_4, %c0_5] : memref<128x128xf32, #tpu.memory_space<vmem>>, vector<128x128xf32>
    %cst_6 = arith.constant dense<0.000000e+00> : vector<1024x128xf32>
    %8 = tpu.matmul %4, %7, %cst_6 {dimension_numbers = #tpu.dot_dimension_numbers<[1], [0], [0], [1], [0, 0, 1, 1], [], []>} : vector<1024x128xf32>, vector<128x128xf32>, vector<1024x128xf32> -> vector<1024x128xf32>
    %c0_7 = arith.constant 0 : index
    %c0_8 = arith.constant 0 : index
    %9 = vector.load %arg4[%c0_7, %c0_8] : memref<1x128xf32, #tpu.memory_space<vmem>>, vector<1x128xf32>
    %10 = vector.broadcast %9 : vector<1x128xf32> to vector<1024x128xf32>
    %11 = arith.addf %8, %10 : vector<1024x128xf32>
    %12 = vector.shape_cast %11 : vector<1024x128xf32> to vector<4x256x128xf32>
    %13 = vector.shape_cast %6 : vector<256x128xf32> to vector<1x256x128xf32>
    %14 = vector.broadcast %13 : vector<1x256x128xf32> to vector<4x256x128xf32>
    %15 = arith.addf %12, %14 : vector<4x256x128xf32>
    %cst_9 = arith.constant 0.000000e+00 : f32
    %16 = vector.broadcast %cst_9 : f32 to vector<4x256x128xf32>
    %17 = arith.maximumf %15, %16 : vector<4x256x128xf32>
    %c0_10 = arith.constant 0 : index
    %c0_11 = arith.constant 0 : index
    %18 = vector.load %arg5[%c0_10, %c0_11] : memref<1x128xf32, #tpu.memory_space<vmem>>, vector<1x128xf32>
    %19 = vector.shape_cast %18 : vector<1x128xf32> to vector<1x1x128xf32>
    %20 = vector.broadcast %19 : vector<1x1x128xf32> to vector<4x256x128xf32>
    %21 = arith.mulf %17, %20 : vector<4x256x128xf32>
    %cst_12 = arith.constant dense<0.000000e+00> : vector<4x256xf32>
    %22 = vector.multi_reduction <add>, %21, %cst_12 [2] : vector<4x256x128xf32> to vector<4x256xf32>
    %c0_13 = arith.constant 0 : index
    %c0_14 = arith.constant 0 : index
    %23 = vector.load %arg6[%c0_13, %c0_14] : memref<1x1xf32, #tpu.memory_space<vmem>>, vector<1x1xf32>
    %24 = vector.broadcast %23 : vector<1x1xf32> to vector<4x256xf32>
    %25 = arith.addf %22, %24 : vector<4x256xf32>
    %26 = vector.extract_strided_slice %25 {offsets = [0, 0], sizes = [1, 256], strides = [1, 1]} : vector<4x256xf32> to vector<1x256xf32>
    %c0_15 = arith.constant 0 : index
    %c0_16 = arith.constant 0 : index
    %27 = vector.load %arg7[%c0_15, %c0_16] : memref<1x256xf32, #tpu.memory_space<vmem>>, vector<1x256xf32>
    tpu.vector_store %arg7[%c0_15, %c0_16], %26 {strides = array<i32>} : memref<1x256xf32, #tpu.memory_space<vmem>>, vector<1x256xf32>,
    %28 = vector.extract_strided_slice %25 {offsets = [1, 0], sizes = [3, 256], strides = [1, 1]} : vector<4x256xf32> to vector<3x256xf32>
    %c0_17 = arith.constant 0 : index
    %c0_18 = arith.constant 0 : index
    %29 = vector.load %arg8[%c0_17, %c0_18] : memref<3x256xf32, #tpu.memory_space<vmem>>, vector<3x256xf32>
    tpu.vector_store %arg8[%c0_17, %c0_18], %28 {strides = array<i32>} : memref<3x256xf32, #tpu.memory_space<vmem>>, vector<3x256xf32>,
    return
  }
  func.func @transform_0(%arg0: i32) -> (i32, i32, i32) {
    %c0_i32 = arith.constant 0 : i32
    %c0_i32_0 = arith.constant 0 : i32
    %c0_i32_1 = arith.constant 0 : i32
    return %c0_i32, %arg0, %c0_i32_0 : i32, i32, i32
  }
  func.func @transform_1(%arg0: i32) -> (i32, i32) {
    %c0_i32 = arith.constant 0 : i32
    %c0_i32_0 = arith.constant 0 : i32
    %c0_i32_1 = arith.constant 0 : i32
    return %c0_i32, %c0_i32_0 : i32, i32
  }
  func.func @transform_2(%arg0: i32) -> (i32, i32) {
    %c0_i32 = arith.constant 0 : i32
    %c0_i32_0 = arith.constant 0 : i32
    %c0_i32_1 = arith.constant 0 : i32
    return %c0_i32, %c0_i32_0 : i32, i32
  }
  func.func @transform_3(%arg0: i32) -> (i32, i32) {
    %c0_i32 = arith.constant 0 : i32
    %c0_i32_0 = arith.constant 0 : i32
    %c0_i32_1 = arith.constant 0 : i32
    return %c0_i32, %c0_i32_0 : i32, i32
  }
  func.func @transform_4(%arg0: i32) -> (i32, i32) {
    %c0_i32 = arith.constant 0 : i32
    %c0_i32_0 = arith.constant 0 : i32
    %c0_i32_1 = arith.constant 0 : i32
    return %c0_i32, %c0_i32_0 : i32, i32
  }
  func.func @transform_5(%arg0: i32) -> (i32, i32) {
    %c0_i32 = arith.constant 0 : i32
    %c0_i32_0 = arith.constant 0 : i32
    %c0_i32_1 = arith.constant 0 : i32
    return %c0_i32, %c0_i32_0 : i32, i32
  }
  func.func @transform_6(%arg0: i32) -> (i32, i32) {
    %c0_i32 = arith.constant 0 : i32
    %c0_i32_0 = arith.constant 0 : i32
    return %c0_i32, %arg0 : i32, i32
  }
  func.func @transform_7(%arg0: i32) -> (i32, i32) {
    %c0_i32 = arith.constant 0 : i32
    %c0_i32_0 = arith.constant 0 : i32
    return %c0_i32, %arg0 : i32, i32
  }
}

module attributes {stable_mosaic.version = 11 : i64} {
  func.func @_edge_predictor_kernel(%arg0: i32, %arg1: memref<5x256x128xf32, #tpu.memory_space<vmem>>, %arg2: memref<128x128xf32, #tpu.memory_space<vmem>>, %arg3: memref<128x128xf32, #tpu.memory_space<vmem>>, %arg4: memref<1x128xf32, #tpu.memory_space<vmem>>, %arg5: memref<1x128xf32, #tpu.memory_space<vmem>>, %arg6: memref<1x1xf32, #tpu.memory_space<vmem>>, %arg7: memref<1x256xf32, #tpu.memory_space<vmem>>, %arg8: memref<3x256xf32, #tpu.memory_space<vmem>>) attributes {dimension_semantics = [#tpu.dimension_semantics<parallel>], iteration_bounds = array<i64: 1>, scalar_prefetch = 0 : i64, scratch_operands = 0 : i64, tpu.core_type = #tpu.core_type<tc>, window_params = [{transform_indices = @transform_0, window_bounds = array<i64: 5, 256, 128>}, {pipeline_mode = #tpu.pipeline_mode<synchronous>, transform_indices = @transform_1, window_bounds = array<i64: 128, 128>}, {pipeline_mode = #tpu.pipeline_mode<synchronous>, transform_indices = @transform_2, window_bounds = array<i64: 128, 128>}, {pipeline_mode = #tpu.pipeline_mode<synchronous>, transform_indices = @transform_3, window_bounds = array<i64: 1, 128>}, {pipeline_mode = #tpu.pipeline_mode<synchronous>, transform_indices = @transform_4, window_bounds = array<i64: 1, 128>}, {pipeline_mode = #tpu.pipeline_mode<synchronous>, transform_indices = @transform_5, window_bounds = array<i64: 1, 1>}, {transform_indices = @transform_6, window_bounds = array<i64: 1, 256>}, {transform_indices = @transform_7, window_bounds = array<i64: 3, 256>}]} {
    %c0 = arith.constant 0 : index
    %c0_0 = arith.constant 0 : index
    %c0_1 = arith.constant 0 : index
    %0 = vector.load %arg1[%c0, %c0_0, %c0_1] : memref<5x256x128xf32, #tpu.memory_space<vmem>>, vector<5x256x128xf32>
    %1 = vector.extract_strided_slice %0 {offsets = [0, 0, 0], sizes = [1, 256, 128], strides = [1, 1, 1]} : vector<5x256x128xf32> to vector<1x256x128xf32>
    %2 = vector.shape_cast %1 : vector<1x256x128xf32> to vector<256x128xf32>
    %3 = vector.extract_strided_slice %0 {offsets = [1, 0, 0], sizes = [4, 256, 128], strides = [1, 1, 1]} : vector<5x256x128xf32> to vector<4x256x128xf32>
    %4 = vector.shape_cast %3 : vector<4x256x128xf32> to vector<1024x128xf32>
    %c0_2 = arith.constant 0 : index
    %c0_3 = arith.constant 0 : index
    %5 = vector.load %arg2[%c0_2, %c0_3] : memref<128x128xf32, #tpu.memory_space<vmem>>, vector<128x128xf32>
    %cst = arith.constant dense<0.000000e+00> : vector<256x128xf32>
    %6 = tpu.matmul %2, %5, %cst {dimension_numbers = #tpu.dot_dimension_numbers<[1], [0], [0], [1], [0, 0, 1, 1], [], []>} : vector<256x128xf32>, vector<128x128xf32>, vector<256x128xf32> -> vector<256x128xf32>
    %c0_4 = arith.constant 0 : index
    %c0_5 = arith.constant 0 : index
    %7 = vector.load %arg3[%c0_4, %c0_5] : memref<128x128xf32, #tpu.memory_space<vmem>>, vector<128x128xf32>
    %cst_6 = arith.constant dense<0.000000e+00> : vector<1024x128xf32>
    %8 = tpu.matmul %4, %7, %cst_6 {dimension_numbers = #tpu.dot_dimension_numbers<[1], [0], [0], [1], [0, 0, 1, 1], [], []>} : vector<1024x128xf32>, vector<128x128xf32>, vector<1024x128xf32> -> vector<1024x128xf32>
    %c0_7 = arith.constant 0 : index
    %c0_8 = arith.constant 0 : index
    %9 = vector.load %arg4[%c0_7, %c0_8] : memref<1x128xf32, #tpu.memory_space<vmem>>, vector<1x128xf32>
    %10 = vector.broadcast %9 : vector<1x128xf32> to vector<1024x128xf32>
    %11 = arith.addf %8, %10 : vector<1024x128xf32>
    %12 = vector.shape_cast %11 : vector<1024x128xf32> to vector<4x256x128xf32>
    %13 = vector.shape_cast %6 : vector<256x128xf32> to vector<1x256x128xf32>
    %14 = vector.broadcast %13 : vector<1x256x128xf32> to vector<4x256x128xf32>
    %15 = arith.addf %12, %14 : vector<4x256x128xf32>
    %cst_9 = arith.constant 0.000000e+00 : f32
    %16 = vector.broadcast %cst_9 : f32 to vector<4x256x128xf32>
    %17 = arith.maximumf %15, %16 : vector<4x256x128xf32>
    %c0_10 = arith.constant 0 : index
    %c0_11 = arith.constant 0 : index
    %18 = vector.load %arg5[%c0_10, %c0_11] : memref<1x128xf32, #tpu.memory_space<vmem>>, vector<1x128xf32>
    %19 = vector.shape_cast %18 : vector<1x128xf32> to vector<1x1x128xf32>
    %20 = vector.broadcast %19 : vector<1x1x128xf32> to vector<4x256x128xf32>
    %21 = arith.mulf %17, %20 : vector<4x256x128xf32>
    %cst_12 = arith.constant dense<0.000000e+00> : vector<4x256xf32>
    %22 = vector.multi_reduction <add>, %21, %cst_12 [2] : vector<4x256x128xf32> to vector<4x256xf32>
    %c0_13 = arith.constant 0 : index
    %c0_14 = arith.constant 0 : index
    %23 = vector.load %arg6[%c0_13, %c0_14] : memref<1x1xf32, #tpu.memory_space<vmem>>, vector<1x1xf32>
    %24 = vector.broadcast %23 : vector<1x1xf32> to vector<4x256xf32>
    %25 = arith.addf %22, %24 : vector<4x256xf32>
    %26 = vector.extract_strided_slice %25 {offsets = [0, 0], sizes = [1, 256], strides = [1, 1]} : vector<4x256xf32> to vector<1x256xf32>
    %c0_15 = arith.constant 0 : index
    %c0_16 = arith.constant 0 : index
    %27 = vector.load %arg7[%c0_15, %c0_16] : memref<1x256xf32, #tpu.memory_space<vmem>>, vector<1x256xf32>
    tpu.vector_store %arg7[%c0_15, %c0_16], %26 {strides = array<i32>} : memref<1x256xf32, #tpu.memory_space<vmem>>, vector<1x256xf32>,
    %28 = vector.extract_strided_slice %25 {offsets = [1, 0], sizes = [3, 256], strides = [1, 1]} : vector<4x256xf32> to vector<3x256xf32>
    %c0_17 = arith.constant 0 : index
    %c0_18 = arith.constant 0 : index
    %29 = vector.load %arg8[%c0_17, %c0_18] : memref<3x256xf32, #tpu.memory_space<vmem>>, vector<3x256xf32>
    tpu.vector_store %arg8[%c0_17, %c0_18], %28 {strides = array<i32>} : memref<3x256xf32, #tpu.memory_space<vmem>>, vector<3x256xf32>,
    return
  }
  func.func @transform_0(%arg0: i32) -> (i32, i32, i32) {
    %c0_i32 = arith.constant 0 : i32
    %c0_i32_0 = arith.constant 0 : i32
    %c0_i32_1 = arith.constant 0 : i32
    return %c0_i32, %arg0, %c0_i32_0 : i32, i32, i32
  }
  func.func @transform_1(%arg0: i32) -> (i32, i32) {
    %c0_i32 = arith.constant 0 : i32
    %c0_i32_0 = arith.constant 0 : i32
    %c0_i32_1 = arith.constant 0 : i32
    return %c0_i32, %c0_i32_0 : i32, i32
  }
  func.func @transform_2(%arg0: i32) -> (i32, i32) {
    %c0_i32 = arith.constant 0 : i32
    %c0_i32_0 = arith.constant 0 : i32
    %c0_i32_1 = arith.constant 0 : i32
    return %c0_i32, %c0_i32_0 : i32, i32
  }
  func.func @transform_3(%arg0: i32) -> (i32, i32) {
    %c0_i32 = arith.constant 0 : i32
    %c0_i32_0 = arith.constant 0 : i32
    %c0_i32_1 = arith.constant 0 : i32
    return %c0_i32, %c0_i32_0 : i32, i32
  }
  func.func @transform_4(%arg0: i32) -> (i32, i32) {
    %c0_i32 = arith.constant 0 : i32
    %c0_i32_0 = arith.constant 0 : i32
    %c0_i32_1 = arith.constant 0 : i32
    return %c0_i32, %c0_i32_0 : i32, i32
  }
  func.func @transform_5(%arg0: i32) -> (i32, i32) {
    %c0_i32 = arith.constant 0 : i32
    %c0_i32_0 = arith.constant 0 : i32
    %c0_i32_1 = arith.constant 0 : i32
    return %c0_i32, %c0_i32_0 : i32, i32
  }
  func.func @transform_6(%arg0: i32) -> (i32, i32) {
    %c0_i32 = arith.constant 0 : i32
    %c0_i32_0 = arith.constant 0 : i32
    return %c0_i32, %arg0 : i32, i32
  }
  func.func @transform_7(%arg0: i32) -> (i32, i32) {
    %c0_i32 = arith.constant 0 : i32
    %c0_i32_0 = arith.constant 0 : i32
    return %c0_i32, %arg0 : i32, i32
  }
}

</mosaic_0001>

<llo_original>
// kernel: tpu_custom_call.1
$region0: #{tpu_custom_call.1}
  #allocation0 [shape = 'u32[]', space=smem, size = 0x4, offset = 0x4, fixed_abs, tag = 'smem constant byte address 0x4 - core index']
  #allocation1 [shape = 'u32[72,128]{1,0:T(1,128)}', space=vmem, size = 0x9000, scoped, tag = 'internal scratch']
  #allocation2 [shape = 'f32[1,1]{1,0:T(1,128)S(1)}', space=vmem, size = 0x200, scoped, tag = 'scoped memory for tpu_custom_call.1']
  %s0 = inlined_call_operand.hbm [shape: f32[5,256,128], index: 0, kind: input, shape index: {}]
  %s1 = inlined_call_operand.hbm [shape: f32[128,128], index: 1, kind: input, shape index: {}]
  %s2 = inlined_call_operand.hbm [shape: f32[128,128], index: 2, kind: input, shape index: {}]
  %s3 = inlined_call_operand.vmem [shape: f32[1,128], index: 3, kind: input, shape index: {}]
  %s4 = inlined_call_operand.vmem [shape: f32[1,128], index: 4, kind: input, shape index: {}]
  %s5 = inlined_call_operand.<no memory space> [shape: f32[1,1], index: 5, kind: input, shape index: {}]
  %s6 = inlined_call_operand.hbm [shape: f32[1,256], index: 6, kind: output, shape index: {0}]
  %s7 = inlined_call_operand.hbm [shape: f32[3,256], index: 7, kind: output, shape index: {1}]
  %8 = xla_tuple %s6, %s7
  %s9 = sld [smem:[#allocation0]]
  $region54: #{tpu_custom_call.1} parent=0
    _
  %s11 = ssub.s32 1, %s9
  %s12 = scalar_select 0, %s11, %s9
  %v13 = vstv %s5
  %14 = vst [vmem:[#allocation2] sm:$0x1] %v13
  $region1: #{tpu_custom_call.1} parent=0
    #allocation3 [shape = 'u8[655360]{0}', space=vmem, size = 0xa0000, scoped, tag = 'input window, operand 0, single buffered']
    #allocation4 [shape = 's32[1]{0}', space=sflag, size = 0x4, scoped, tag = 'scoped memory for tpu_custom_call.1']
    #allocation5 [shape = 's32[1]{0}', space=sflag, size = 0x4, scoped, tag = 'scoped memory for tpu_custom_call.1']
    #allocation6 [shape = 'u8[65536]{0}', space=vmem, size = 0x10000, scoped, tag = 'input window, operand 1, single buffered']
    #allocation7 [shape = 's32[1]{0}', space=sflag, size = 0x4, scoped, tag = 'scoped memory for tpu_custom_call.1']
    #allocation8 [shape = 'u8[65536]{0}', space=vmem, size = 0x10000, scoped, tag = 'input window, operand 2, single buffered']
    #allocation9 [shape = 'u8[1024]{0}', space=vmem, size = 0x400, scoped, tag = 'output window, operand 0, single buffered']
    #allocation10 [shape = 'u8[4096]{0}', space=vmem, size = 0x1000, scoped, tag = 'output window, operand 1, single buffered']
    #allocation11 [shape = 's32[1]{0}', space=sflag, size = 0x4, scoped, tag = 'scoped memory for tpu_custom_call.1']
    %15 = vsyncpa [#allocation4], 0
    %16 = vsyncpa [#allocation7], 0
    %17 = vsyncpa [#allocation5], 0
    %18 = vsyncpa [#allocation11], 0
    // Predicated region
    $region2: #{tpu_custom_call.1} parent=1 // pred_check
      _
    $region3: #{tpu_custom_call.1} parent=1 // pred_check_branch
      %20 = sbr.rel (0) target = $region5
    $region4: #{tpu_custom_call.1} parent=1 // pred_region
      %22 = vsyncadd [#allocation4], 0
      %s23 = sshll.u32 %s0, 4
      %s24 = int_to_ptr.hbm [resolvable:$true] %s23
      %s25 = sshll.u32 [#allocation3], 4
      %s26 = int_to_ptr.vmem [resolvable:$true] %s25
      %31 = dma.hbm_to_vmem [thread:$0]  %s24, 20480, %s26, [#allocation4], 128, 128, 8
    $region5: #{tpu_custom_call.1} parent=1 // pred_fallthru
      _
    // Predicated region
    $region6: #{tpu_custom_call.1} parent=1 // pred_check
      _
    $region7: #{tpu_custom_call.1} parent=1 // pred_check_branch
      %33 = sbr.rel (0) target = $region9
    $region8: #{tpu_custom_call.1} parent=1 // pred_region
      %35 = vsyncadd [#allocation7], 0
      %s36 = sshll.u32 %s1, 4
      %s37 = int_to_ptr.hbm [resolvable:$true] %s36
      %s38 = sshll.u32 [#allocation6], 4
      %s39 = int_to_ptr.vmem [resolvable:$true] %s38
      %44 = dma.hbm_to_vmem [thread:$0]  %s37, 2048, %s39, [#allocation7], 128, 128, 8
    $region9: #{tpu_custom_call.1} parent=1 // pred_fallthru
      _
    // Predicated region
    $region10: #{tpu_custom_call.1} parent=1 // pred_check
      _
    $region11: #{tpu_custom_call.1} parent=1 // pred_check_branch
      %46 = sbr.rel (0) target = $region13
    $region12: #{tpu_custom_call.1} parent=1 // pred_region
      %48 = vsyncadd [#allocation7], 0
      %s49 = sshll.u32 %s2, 4
      %s50 = int_to_ptr.hbm [resolvable:$true] %s49
      %s51 = sshll.u32 [#allocation8], 4
      %s52 = int_to_ptr.vmem [resolvable:$true] %s51
      %57 = dma.hbm_to_vmem [thread:$0]  %s50, 2048, %s52, [#allocation7], 128, 128, 8
    $region13: #{tpu_custom_call.1} parent=1 // pred_fallthru
      _
    // Predicated region
    $region14: #{tpu_custom_call.1} parent=1 // pred_check
      _
    $region15: #{tpu_custom_call.1} parent=1 // pred_check_branch
      %59 = sbr.rel (0) target = $region17
    $region16: #{tpu_custom_call.1} parent=1 // pred_region
      _
    $region17: #{tpu_custom_call.1} parent=1 // pred_fallthru
      _
    // Predicated region
    $region18: #{tpu_custom_call.1} parent=1 // pred_check
      _
    $region19: #{tpu_custom_call.1} parent=1 // pred_check_branch
      %61 = sbr.rel (0) target = $region21
    $region20: #{tpu_custom_call.1} parent=1 // pred_region
      _
    $region21: #{tpu_custom_call.1} parent=1 // pred_fallthru
      _
    // Predicated region
    $region22: #{tpu_custom_call.1} parent=1 // pred_check
      _
    $region23: #{tpu_custom_call.1} parent=1 // pred_check_branch
      %63 = sbr.rel (0) target = $region25
    $region24: #{tpu_custom_call.1} parent=1 // pred_region
      _
    $region25: #{tpu_custom_call.1} parent=1 // pred_fallthru
      _
    // Predicated region
    $region26: #{tpu_custom_call.1} parent=1 // pred_check
      _
    $region27: #{tpu_custom_call.1} parent=1 // pred_check_branch
      %65 = sbr.rel (0) target = $region29
    $region28: #{tpu_custom_call.1} parent=1 // pred_region
      %67 = dma.done [#allocation4], 20480
    $region29: #{tpu_custom_call.1} parent=1 // pred_fallthru
      _
    // Predicated region
    $region30: #{tpu_custom_call.1} parent=1 // pred_check
      _
    $region31: #{tpu_custom_call.1} parent=1 // pred_check_branch
      %69 = sbr.rel (0) target = $region33
    $region32: #{tpu_custom_call.1} parent=1 // pred_region
      %71 = dma.done [#allocation7], 2048
    $region33: #{tpu_custom_call.1} parent=1 // pred_fallthru
      _
    // Predicated region
    $region34: #{tpu_custom_call.1} parent=1 // pred_check
      _
    $region35: #{tpu_custom_call.1} parent=1 // pred_check_branch
      %73 = sbr.rel (0) target = $region37
    $region36: #{tpu_custom_call.1} parent=1 // pred_region
      %75 = dma.done [#allocation7], 2048
    $region37: #{tpu_custom_call.1} parent=1 // pred_fallthru
      _
    %v76 = vld [vmem:[#allocation3] sm:$0xff]
    %v77 = vld [vmem:[#allocation3 + $0x8] sm:$0xff]
    %v78 = vld [vmem:[#allocation3 + $0x10] sm:$0xff]
    %v79 = vld [vmem:[#allocation3 + $0x18] sm:$0xff]
    %v80 = vld [vmem:[#allocation3 + $0x20] sm:$0xff]
    %v81 = vld [vmem:[#allocation3 + $0x28] sm:$0xff]
    %v82 = vld [vmem:[#allocation3 + $0x30] sm:$0xff]
    %v83 = vld [vmem:[#allocation3 + $0x38] sm:$0xff]
    %v84 = vld [vmem:[#allocation3 + $0x40] sm:$0xff]
    %v85 = vld [vmem:[#allocation3 + $0x48] sm:$0xff]
    %v86 = vld [vmem:[#allocation3 + $0x50] sm:$0xff]
    %v87 = vld [vmem:[#allocation3 + $0x58] sm:$0xff]
    %v88 = vld [vmem:[#allocation3 + $0x60] sm:$0xff]
    %v89 = vld [vmem:[#allocation3 + $0x68] sm:$0xff]
    %v90 = vld [vmem:[#allocation3 + $0x70] sm:$0xff]
    %v91 = vld [vmem:[#allocation3 + $0x78] sm:$0xff]
    %v92 = vld [vmem:[#allocation3 + $0x80] sm:$0xff]
    %v93 = vld [vmem:[#allocation3 + $0x88] sm:$0xff]
    %v94 = vld [vmem:[#allocation3 + $0x90] sm:$0xff]
    %v95 = vld [vmem:[#allocation3 + $0x98] sm:$0xff]
    %v96 = vld [vmem:[#allocation3 + $0xa0] sm:$0xff]
    %v97 = vld [vmem:[#allocation3 + $0xa8] sm:$0xff]
    %v98 = vld [vmem:[#allocation3 + $0xb0] sm:$0xff]
    %v99 = vld [vmem:[#allocation3 + $0xb8] sm:$0xff]
    %v100 = vld [vmem:[#allocation3 + $0xc0] sm:$0xff]
    %v101 = vld [vmem:[#allocation3 + $0xc8] sm:$0xff]
    %v102 = vld [vmem:[#allocation3 + $0xd0] sm:$0xff]
    %v103 = vld [vmem:[#allocation3 + $0xd8] sm:$0xff]
    %v104 = vld [vmem:[#allocation3 + $0xe0] sm:$0xff]
    %v105 = vld [vmem:[#allocation3 + $0xe8] sm:$0xff]
    %v106 = vld [vmem:[#allocation3 + $0xf0] sm:$0xff]
    %v107 = vld [vmem:[#allocation3 + $0xf8] sm:$0xff]
    %v108 = vld [vmem:[#allocation3 + $0x100] sm:$0xff]
    %v109 = vld [vmem:[#allocation3 + $0x108] sm:$0xff]
    %v110 = vld [vmem:[#allocation3 + $0x110] sm:$0xff]
    %v111 = vld [vmem:[#allocation3 + $0x118] sm:$0xff]
    %v112 = vld [vmem:[#allocation3 + $0x120] sm:$0xff]
    %v113 = vld [vmem:[#allocation3 + $0x128] sm:$0xff]
    %v114 = vld [vmem:[#allocation3 + $0x130] sm:$0xff]
    %v115 = vld [vmem:[#allocation3 + $0x138] sm:$0xff]
    %v116 = vld [vmem:[#allocation3 + $0x140] sm:$0xff]
    %v117 = vld [vmem:[#allocation3 + $0x148] sm:$0xff]
    %v118 = vld [vmem:[#allocation3 + $0x150] sm:$0xff]
    %v119 = vld [vmem:[#allocation3 + $0x158] sm:$0xff]
    %v120 = vld [vmem:[#allocation3 + $0x160] sm:$0xff]
    %v121 = vld [vmem:[#allocation3 + $0x168] sm:$0xff]
    %v122 = vld [vmem:[#allocation3 + $0x170] sm:$0xff]
    %v123 = vld [vmem:[#allocation3 + $0x178] sm:$0xff]
    %v124 = vld [vmem:[#allocation3 + $0x180] sm:$0xff]
    %v125 = vld [vmem:[#allocation3 + $0x188] sm:$0xff]
    %v126 = vld [vmem:[#allocation3 + $0x190] sm:$0xff]
    %v127 = vld [vmem:[#allocation3 + $0x198] sm:$0xff]
    %v128 = vld [vmem:[#allocation3 + $0x1a0] sm:$0xff]
    %v129 = vld [vmem:[#allocation3 + $0x1a8] sm:$0xff]
    %v130 = vld [vmem:[#allocation3 + $0x1b0] sm:$0xff]
    %v131 = vld [vmem:[#allocation3 + $0x1b8] sm:$0xff]
    %v132 = vld [vmem:[#allocation3 + $0x1c0] sm:$0xff]
    %v133 = vld [vmem:[#allocation3 + $0x1c8] sm:$0xff]
    %v134 = vld [vmem:[#allocation3 + $0x1d0] sm:$0xff]
    %v135 = vld [vmem:[#allocation3 + $0x1d8] sm:$0xff]
    %v136 = vld [vmem:[#allocation3 + $0x1e0] sm:$0xff]
    %v137 = vld [vmem:[#allocation3 + $0x1e8] sm:$0xff]
    %v138 = vld [vmem:[#allocation3 + $0x1f0] sm:$0xff]
    %v139 = vld [vmem:[#allocation3 + $0x1f8] sm:$0xff]
    %v140 = vld [vmem:[#allocation3 + $0x200] sm:$0xff]
    %v141 = vld [vmem:[#allocation3 + $0x208] sm:$0xff]
    %v142 = vld [vmem:[#allocation3 + $0x210] sm:$0xff]
    %v143 = vld [vmem:[#allocation3 + $0x218] sm:$0xff]
    %v144 = vld [vmem:[#allocation3 + $0x220] sm:$0xff]
    %v145 = vld [vmem:[#allocation3 + $0x228] sm:$0xff]
    %v146 = vld [vmem:[#allocation3 + $0x230] sm:$0xff]
    %v147 = vld [vmem:[#allocation3 + $0x238] sm:$0xff]
    %v148 = vld [vmem:[#allocation3 + $0x240] sm:$0xff]
    %v149 = vld [vmem:[#allocation3 + $0x248] sm:$0xff]
    %v150 = vld [vmem:[#allocation3 + $0x250] sm:$0xff]
    %v151 = vld [vmem:[#allocation3 + $0x258] sm:$0xff]
    %v152 = vld [vmem:[#allocation3 + $0x260] sm:$0xff]
    %v153 = vld [vmem:[#allocation3 + $0x268] sm:$0xff]
    %v154 = vld [vmem:[#allocation3 + $0x270] sm:$0xff]
    %v155 = vld [vmem:[#allocation3 + $0x278] sm:$0xff]
    %v156 = vld [vmem:[#allocation3 + $0x280] sm:$0xff]
    %v157 = vld [vmem:[#allocation3 + $0x288] sm:$0xff]
    %v158 = vld [vmem:[#allocation3 + $0x290] sm:$0xff]
    %v159 = vld [vmem:[#allocation3 + $0x298] sm:$0xff]
    %v160 = vld [vmem:[#allocation3 + $0x2a0] sm:$0xff]
    %v161 = vld [vmem:[#allocation3 + $0x2a8] sm:$0xff]
    %v162 = vld [vmem:[#allocation3 + $0x2b0] sm:$0xff]
    %v163 = vld [vmem:[#allocation3 + $0x2b8] sm:$0xff]
    %v164 = vld [vmem:[#allocation3 + $0x2c0] sm:$0xff]
    %v165 = vld [vmem:[#allocation3 + $0x2c8] sm:$0xff]
    %v166 = vld [vmem:[#allocation3 + $0x2d0] sm:$0xff]
    %v167 = vld [vmem:[#allocation3 + $0x2d8] sm:$0xff]
    %v168 = vld [vmem:[#allocation3 + $0x2e0] sm:$0xff]
    %v169 = vld [vmem:[#allocation3 + $0x2e8] sm:$0xff]
    %v170 = vld [vmem:[#allocation3 + $0x2f0] sm:$0xff]
    %v171 = vld [vmem:[#allocation3 + $0x2f8] sm:$0xff]
    %v172 = vld [vmem:[#allocation3 + $0x300] sm:$0xff]
    %v173 = vld [vmem:[#allocation3 + $0x308] sm:$0xff]
    %v174 = vld [vmem:[#allocation3 + $0x310] sm:$0xff]
    %v175 = vld [vmem:[#allocation3 + $0x318] sm:$0xff]
    %v176 = vld [vmem:[#allocation3 + $0x320] sm:$0xff]
    %v177 = vld [vmem:[#allocation3 + $0x328] sm:$0xff]
    %v178 = vld [vmem:[#allocation3 + $0x330] sm:$0xff]
    %v179 = vld [vmem:[#allocation3 + $0x338] sm:$0xff]
    %v180 = vld [vmem:[#allocation3 + $0x340] sm:$0xff]
    %v181 = vld [vmem:[#allocation3 + $0x348] sm:$0xff]
    %v182 = vld [vmem:[#allocation3 + $0x350] sm:$0xff]
    %v183 = vld [vmem:[#allocation3 + $0x358] sm:$0xff]
    %v184 = vld [vmem:[#allocation3 + $0x360] sm:$0xff]
    %v185 = vld [vmem:[#allocation3 + $0x368] sm:$0xff]
    %v186 = vld [vmem:[#allocation3 + $0x370] sm:$0xff]
    %v187 = vld [vmem:[#allocation3 + $0x378] sm:$0xff]
    %v188 = vld [vmem:[#allocation3 + $0x380] sm:$0xff]
    %v189 = vld [vmem:[#allocation3 + $0x388] sm:$0xff]
    %v190 = vld [vmem:[#allocation3 + $0x390] sm:$0xff]
    %v191 = vld [vmem:[#allocation3 + $0x398] sm:$0xff]
    %v192 = vld [vmem:[#allocation3 + $0x3a0] sm:$0xff]
    %v193 = vld [vmem:[#allocation3 + $0x3a8] sm:$0xff]
    %v194 = vld [vmem:[#allocation3 + $0x3b0] sm:$0xff]
    %v195 = vld [vmem:[#allocation3 + $0x3b8] sm:$0xff]
    %v196 = vld [vmem:[#allocation3 + $0x3c0] sm:$0xff]
    %v197 = vld [vmem:[#allocation3 + $0x3c8] sm:$0xff]
    %v198 = vld [vmem:[#allocation3 + $0x3d0] sm:$0xff]
    %v199 = vld [vmem:[#allocation3 + $0x3d8] sm:$0xff]
    %v200 = vld [vmem:[#allocation3 + $0x3e0] sm:$0xff]
    %v201 = vld [vmem:[#allocation3 + $0x3e8] sm:$0xff]
    %v202 = vld [vmem:[#allocation3 + $0x3f0] sm:$0xff]
    %v203 = vld [vmem:[#allocation3 + $0x3f8] sm:$0xff]
    %v204 = vld [vmem:[#allocation3 + $0x400] sm:$0xff]
    %v205 = vld [vmem:[#allocation3 + $0x408] sm:$0xff]
    %v206 = vld [vmem:[#allocation3 + $0x410] sm:$0xff]
    %v207 = vld [vmem:[#allocation3 + $0x418] sm:$0xff]
    %v208 = vld [vmem:[#allocation3 + $0x420] sm:$0xff]
    %v209 = vld [vmem:[#allocation3 + $0x428] sm:$0xff]
    %v210 = vld [vmem:[#allocation3 + $0x430] sm:$0xff]
    %v211 = vld [vmem:[#allocation3 + $0x438] sm:$0xff]
    %v212 = vld [vmem:[#allocation3 + $0x440] sm:$0xff]
    %v213 = vld [vmem:[#allocation3 + $0x448] sm:$0xff]
    %v214 = vld [vmem:[#allocation3 + $0x450] sm:$0xff]
    %v215 = vld [vmem:[#allocation3 + $0x458] sm:$0xff]
    %v216 = vld [vmem:[#allocation3 + $0x460] sm:$0xff]
    %v217 = vld [vmem:[#allocation3 + $0x468] sm:$0xff]
    %v218 = vld [vmem:[#allocation3 + $0x470] sm:$0xff]
    %v219 = vld [vmem:[#allocation3 + $0x478] sm:$0xff]
    %v220 = vld [vmem:[#allocation3 + $0x480] sm:$0xff]
    %v221 = vld [vmem:[#allocation3 + $0x488] sm:$0xff]
    %v222 = vld [vmem:[#allocation3 + $0x490] sm:$0xff]
    %v223 = vld [vmem:[#allocation3 + $0x498] sm:$0xff]
    %v224 = vld [vmem:[#allocation3 + $0x4a0] sm:$0xff]
    %v225 = vld [vmem:[#allocation3 + $0x4a8] sm:$0xff]
    %v226 = vld [vmem:[#allocation3 + $0x4b0] sm:$0xff]
    %v227 = vld [vmem:[#allocation3 + $0x4b8] sm:$0xff]
    %v228 = vld [vmem:[#allocation3 + $0x4c0] sm:$0xff]
    %v229 = vld [vmem:[#allocation3 + $0x4c8] sm:$0xff]
    %v230 = vld [vmem:[#allocation3 + $0x4d0] sm:$0xff]
    %v231 = vld [vmem:[#allocation3 + $0x4d8] sm:$0xff]
    %v232 = vld [vmem:[#allocation3 + $0x4e0] sm:$0xff]
    %v233 = vld [vmem:[#allocation3 + $0x4e8] sm:$0xff]
    %v234 = vld [vmem:[#allocation3 + $0x4f0] sm:$0xff]
    %v235 = vld [vmem:[#allocation3 + $0x4f8] sm:$0xff]
    %v236 = vld [vmem:[#allocation6] sm:$0xff]
    %v237 = vld [vmem:[#allocation6 + $0x8] sm:$0xff]
    %v238 = vld [vmem:[#allocation6 + $0x10] sm:$0xff]
    %v239 = vld [vmem:[#allocation6 + $0x18] sm:$0xff]
    %v240 = vld [vmem:[#allocation6 + $0x20] sm:$0xff]
    %v241 = vld [vmem:[#allocation6 + $0x28] sm:$0xff]
    %v242 = vld [vmem:[#allocation6 + $0x30] sm:$0xff]
    %v243 = vld [vmem:[#allocation6 + $0x38] sm:$0xff]
    %v244 = vld [vmem:[#allocation6 + $0x40] sm:$0xff]
    %v245 = vld [vmem:[#allocation6 + $0x48] sm:$0xff]
    %v246 = vld [vmem:[#allocation6 + $0x50] sm:$0xff]
    %v247 = vld [vmem:[#allocation6 + $0x58] sm:$0xff]
    %v248 = vld [vmem:[#allocation6 + $0x60] sm:$0xff]
    %v249 = vld [vmem:[#allocation6 + $0x68] sm:$0xff]
    %v250 = vld [vmem:[#allocation6 + $0x70] sm:$0xff]
    %v251 = vld [vmem:[#allocation6 + $0x78] sm:$0xff]
    %252 = vmatpush.msra.mxu0 %v251
    %253 = vmatpush.msra.mxu0 %v250
    %254 = vmatpush.msra.mxu0 %v249
    %255 = vmatpush.msra.mxu0 %v248
    %256 = vmatpush.msra.mxu0 %v247
    %257 = vmatpush.msra.mxu0 %v246
    %258 = vmatpush.msra.mxu0 %v245
    %259 = vmatpush.msra.mxu0 %v244
    %260 = vmatpush.msra.mxu0 %v243
    %261 = vmatpush.msra.mxu0 %v242
    %262 = vmatpush.msra.mxu0 %v241
    %263 = vmatpush.msra.mxu0 %v240
    %264 = vmatpush.msra.mxu0 %v239
    %265 = vmatpush.msra.mxu0 %v238
    %266 = vmatpush.msra.mxu0 %v237
    %267 = vmatpush.msra.mxu0 %v236
    %268 = vmatmul.f32.gmra.mxu0 %v76
    %v269 = vpop.f32.mrf.mxu0
    %v270 = vadd.f32 0.0, %v269
    %271 = vmatmul.f32.gmra.mxu0 %v77
    %v272 = vpop.f32.mrf.mxu0
    %v273 = vadd.f32 0.0, %v272
    %274 = vmatmul.f32.gmra.mxu0 %v78
    %v275 = vpop.f32.mrf.mxu0
    %v276 = vadd.f32 0.0, %v275
    %277 = vmatmul.f32.gmra.mxu0 %v79
    %v278 = vpop.f32.mrf.mxu0
    %v279 = vadd.f32 0.0, %v278
    %280 = vmatmul.f32.gmra.mxu0 %v80
    %v281 = vpop.f32.mrf.mxu0
    %v282 = vadd.f32 0.0, %v281
    %283 = vmatmul.f32.gmra.mxu0 %v81
    %v284 = vpop.f32.mrf.mxu0
    %v285 = vadd.f32 0.0, %v284
    %286 = vmatmul.f32.gmra.mxu0 %v82
    %v287 = vpop.f32.mrf.mxu0
    %v288 = vadd.f32 0.0, %v287
    %289 = vmatmul.f32.gmra.mxu0 %v83
    %v290 = vpop.f32.mrf.mxu0
    %v291 = vadd.f32 0.0, %v290
    %292 = vmatmul.f32.gmra.mxu0 %v84
    %v293 = vpop.f32.mrf.mxu0
    %v294 = vadd.f32 0.0, %v293
    %295 = vmatmul.f32.gmra.mxu0 %v85
    %v296 = vpop.f32.mrf.mxu0
    %v297 = vadd.f32 0.0, %v296
    %298 = vmatmul.f32.gmra.mxu0 %v86
    %v299 = vpop.f32.mrf.mxu0
    %v300 = vadd.f32 0.0, %v299
    %301 = vmatmul.f32.gmra.mxu0 %v87
    %v302 = vpop.f32.mrf.mxu0
    %v303 = vadd.f32 0.0, %v302
    %304 = vmatmul.f32.gmra.mxu0 %v88
    %v305 = vpop.f32.mrf.mxu0
    %v306 = vadd.f32 0.0, %v305
    %307 = vmatmul.f32.gmra.mxu0 %v89
    %v308 = vpop.f32.mrf.mxu0
    %v309 = vadd.f32 0.0, %v308
    %310 = vmatmul.f32.gmra.mxu0 %v90
    %v311 = vpop.f32.mrf.mxu0
    %v312 = vadd.f32 0.0, %v311
    %313 = vmatmul.f32.gmra.mxu0 %v91
    %v314 = vpop.f32.mrf.mxu0
    %v315 = vadd.f32 0.0, %v314
    %316 = vmatmul.f32.gmra.mxu0 %v92
    %v317 = vpop.f32.mrf.mxu0
    %v318 = vadd.f32 0.0, %v317
    %319 = vmatmul.f32.gmra.mxu0 %v93
    %v320 = vpop.f32.mrf.mxu0
    %v321 = vadd.f32 0.0, %v320
    %322 = vmatmul.f32.gmra.mxu0 %v94
    %v323 = vpop.f32.mrf.mxu0
    %v324 = vadd.f32 0.0, %v323
    %325 = vmatmul.f32.gmra.mxu0 %v95
    %v326 = vpop.f32.mrf.mxu0
    %v327 = vadd.f32 0.0, %v326
    %328 = vmatmul.f32.gmra.mxu0 %v96
    %v329 = vpop.f32.mrf.mxu0
    %v330 = vadd.f32 0.0, %v329
    %331 = vmatmul.f32.gmra.mxu0 %v97
    %v332 = vpop.f32.mrf.mxu0
    %v333 = vadd.f32 0.0, %v332
    %334 = vmatmul.f32.gmra.mxu0 %v98
    %v335 = vpop.f32.mrf.mxu0
    %v336 = vadd.f32 0.0, %v335
    %337 = vmatmul.f32.gmra.mxu0 %v99
    %v338 = vpop.f32.mrf.mxu0
    %v339 = vadd.f32 0.0, %v338
    %340 = vmatmul.f32.gmra.mxu0 %v100
    %v341 = vpop.f32.mrf.mxu0
    %v342 = vadd.f32 0.0, %v341
    %343 = vmatmul.f32.gmra.mxu0 %v101
    %v344 = vpop.f32.mrf.mxu0
    %v345 = vadd.f32 0.0, %v344
    %346 = vmatmul.f32.gmra.mxu0 %v102
    %v347 = vpop.f32.mrf.mxu0
    %v348 = vadd.f32 0.0, %v347
    %349 = vmatmul.f32.gmra.mxu0 %v103
    %v350 = vpop.f32.mrf.mxu0
    %v351 = vadd.f32 0.0, %v350
    %352 = vmatmul.f32.gmra.mxu0 %v104
    %v353 = vpop.f32.mrf.mxu0
    %v354 = vadd.f32 0.0, %v353
    %355 = vmatmul.f32.gmra.mxu0 %v105
    %v356 = vpop.f32.mrf.mxu0
    %v357 = vadd.f32 0.0, %v356
    %358 = vmatmul.f32.gmra.mxu0 %v106
    %v359 = vpop.f32.mrf.mxu0
    %v360 = vadd.f32 0.0, %v359
    %361 = vmatmul.f32.gmra.mxu0 %v107
    %v362 = vpop.f32.mrf.mxu0
    %v363 = vadd.f32 0.0, %v362
    %364 = vdwg.mxu0
    %v365 = vld [vmem:[#allocation8] sm:$0xff]
    %v366 = vld [vmem:[#allocation8 + $0x8] sm:$0xff]
    %v367 = vld [vmem:[#allocation8 + $0x10] sm:$0xff]
    %v368 = vld [vmem:[#allocation8 + $0x18] sm:$0xff]
    %v369 = vld [vmem:[#allocation8 + $0x20] sm:$0xff]
    %v370 = vld [vmem:[#allocation8 + $0x28] sm:$0xff]
    %v371 = vld [vmem:[#allocation8 + $0x30] sm:$0xff]
    %v372 = vld [vmem:[#allocation8 + $0x38] sm:$0xff]
    %v373 = vld [vmem:[#allocation8 + $0x40] sm:$0xff]
    %v374 = vld [vmem:[#allocation8 + $0x48] sm:$0xff]
    %v375 = vld [vmem:[#allocation8 + $0x50] sm:$0xff]
    %v376 = vld [vmem:[#allocation8 + $0x58] sm:$0xff]
    %v377 = vld [vmem:[#allocation8 + $0x60] sm:$0xff]
    %v378 = vld [vmem:[#allocation8 + $0x68] sm:$0xff]
    %v379 = vld [vmem:[#allocation8 + $0x70] sm:$0xff]
    %v380 = vld [vmem:[#allocation8 + $0x78] sm:$0xff]
    %v381 = vld [vmem:[%s3] sm:$0x1]
    %v383 = vperm.slane %v381, 0
    %385 = vmatpush.msra.mxu0 %v380
    %386 = vmatpush.msra.mxu0 %v379
    %387 = vmatpush.msra.mxu0 %v378
    %388 = vmatpush.msra.mxu0 %v377
    %389 = vmatpush.msra.mxu0 %v376
    %390 = vmatpush.msra.mxu0 %v375
    %391 = vmatpush.msra.mxu0 %v374
    %392 = vmatpush.msra.mxu0 %v373
    %393 = vmatpush.msra.mxu0 %v372
    %394 = vmatpush.msra.mxu0 %v371
    %395 = vmatpush.msra.mxu0 %v370
    %396 = vmatpush.msra.mxu0 %v369
    %397 = vmatpush.msra.mxu0 %v368
    %398 = vmatpush.msra.mxu0 %v367
    %399 = vmatpush.msra.mxu0 %v366
    %400 = vmatpush.msra.mxu0 %v365
    %401 = vmatmul.f32.gmra.mxu0 %v108
    %v402 = vpop.f32.mrf.mxu0
    %v403 = vadd.f32 %v383, %v402
    %404 = vmatmul.f32.gmra.mxu0 %v109
    %v405 = vpop.f32.mrf.mxu0
    %v406 = vadd.f32 %v383, %v405
    %407 = vmatmul.f32.gmra.mxu0 %v110
    %v408 = vpop.f32.mrf.mxu0
    %v409 = vadd.f32 %v383, %v408
    %410 = vmatmul.f32.gmra.mxu0 %v111
    %v411 = vpop.f32.mrf.mxu0
    %v412 = vadd.f32 %v383, %v411
    %413 = vmatmul.f32.gmra.mxu0 %v112
    %v414 = vpop.f32.mrf.mxu0
    %v415 = vadd.f32 %v383, %v414
    %416 = vmatmul.f32.gmra.mxu0 %v113
    %v417 = vpop.f32.mrf.mxu0
    %v418 = vadd.f32 %v383, %v417
    %419 = vmatmul.f32.gmra.mxu0 %v114
    %v420 = vpop.f32.mrf.mxu0
    %v421 = vadd.f32 %v383, %v420
    %422 = vmatmul.f32.gmra.mxu0 %v115
    %v423 = vpop.f32.mrf.mxu0
    %v424 = vadd.f32 %v383, %v423
    %425 = vmatmul.f32.gmra.mxu0 %v116
    %v426 = vpop.f32.mrf.mxu0
    %v427 = vadd.f32 %v383, %v426
    %428 = vmatmul.f32.gmra.mxu0 %v117
    %v429 = vpop.f32.mrf.mxu0
    %v430 = vadd.f32 %v383, %v429
    %431 = vmatmul.f32.gmra.mxu0 %v118
    %v432 = vpop.f32.mrf.mxu0
    %v433 = vadd.f32 %v383, %v432
    %434 = vmatmul.f32.gmra.mxu0 %v119
    %v435 = vpop.f32.mrf.mxu0
    %v436 = vadd.f32 %v383, %v435
    %437 = vmatmul.f32.gmra.mxu0 %v120
    %v438 = vpop.f32.mrf.mxu0
    %v439 = vadd.f32 %v383, %v438
    %440 = vmatmul.f32.gmra.mxu0 %v121
    %v441 = vpop.f32.mrf.mxu0
    %v442 = vadd.f32 %v383, %v441
    %443 = vmatmul.f32.gmra.mxu0 %v122
    %v444 = vpop.f32.mrf.mxu0
    %v445 = vadd.f32 %v383, %v444
    %446 = vmatmul.f32.gmra.mxu0 %v123
    %v447 = vpop.f32.mrf.mxu0
    %v448 = vadd.f32 %v383, %v447
    %449 = vmatmul.f32.gmra.mxu0 %v124
    %v450 = vpop.f32.mrf.mxu0
    %v451 = vadd.f32 %v383, %v450
    %452 = vmatmul.f32.gmra.mxu0 %v125
    %v453 = vpop.f32.mrf.mxu0
    %v454 = vadd.f32 %v383, %v453
    %455 = vmatmul.f32.gmra.mxu0 %v126
    %v456 = vpop.f32.mrf.mxu0
    %v457 = vadd.f32 %v383, %v456
    %458 = vmatmul.f32.gmra.mxu0 %v127
    %v459 = vpop.f32.mrf.mxu0
    %v460 = vadd.f32 %v383, %v459
    %461 = vmatmul.f32.gmra.mxu0 %v128
    %v462 = vpop.f32.mrf.mxu0
    %v463 = vadd.f32 %v383, %v462
    %464 = vmatmul.f32.gmra.mxu0 %v129
    %v465 = vpop.f32.mrf.mxu0
    %v466 = vadd.f32 %v383, %v465
    %467 = vmatmul.f32.gmra.mxu0 %v130
    %v468 = vpop.f32.mrf.mxu0
    %v469 = vadd.f32 %v383, %v468
    %470 = vmatmul.f32.gmra.mxu0 %v131
    %v471 = vpop.f32.mrf.mxu0
    %v472 = vadd.f32 %v383, %v471
    %473 = vmatmul.f32.gmra.mxu0 %v132
    %v474 = vpop.f32.mrf.mxu0
    %v475 = vadd.f32 %v383, %v474
    %476 = vmatmul.f32.gmra.mxu0 %v133
    %v477 = vpop.f32.mrf.mxu0
    %v478 = vadd.f32 %v383, %v477
    %479 = vmatmul.f32.gmra.mxu0 %v134
    %v480 = vpop.f32.mrf.mxu0
    %v481 = vadd.f32 %v383, %v480
    %482 = vmatmul.f32.gmra.mxu0 %v135
    %v483 = vpop.f32.mrf.mxu0
    %v484 = vadd.f32 %v383, %v483
    %485 = vmatmul.f32.gmra.mxu0 %v136
    %v486 = vpop.f32.mrf.mxu0
    %v487 = vadd.f32 %v383, %v486
    %488 = vmatmul.f32.gmra.mxu0 %v137
    %v489 = vpop.f32.mrf.mxu0
    %v490 = vadd.f32 %v383, %v489
    %491 = vmatmul.f32.gmra.mxu0 %v138
    %v492 = vpop.f32.mrf.mxu0
    %v493 = vadd.f32 %v383, %v492
    %494 = vmatmul.f32.gmra.mxu0 %v139
    %v495 = vpop.f32.mrf.mxu0
    %v496 = vadd.f32 %v383, %v495
    %497 = vmatmul.f32.gmra.mxu0 %v140
    %v498 = vpop.f32.mrf.mxu0
    %v499 = vadd.f32 %v383, %v498
    %500 = vmatmul.f32.gmra.mxu0 %v141
    %v501 = vpop.f32.mrf.mxu0
    %v502 = vadd.f32 %v383, %v501
    %503 = vmatmul.f32.gmra.mxu0 %v142
    %v504 = vpop.f32.mrf.mxu0
    %v505 = vadd.f32 %v383, %v504
    %506 = vmatmul.f32.gmra.mxu0 %v143
    %v507 = vpop.f32.mrf.mxu0
    %v508 = vadd.f32 %v383, %v507
    %509 = vmatmul.f32.gmra.mxu0 %v144
    %v510 = vpop.f32.mrf.mxu0
    %v511 = vadd.f32 %v383, %v510
    %512 = vmatmul.f32.gmra.mxu0 %v145
    %v513 = vpop.f32.mrf.mxu0
    %v514 = vadd.f32 %v383, %v513
    %515 = vmatmul.f32.gmra.mxu0 %v146
    %v516 = vpop.f32.mrf.mxu0
    %v517 = vadd.f32 %v383, %v516
    %518 = vmatmul.f32.gmra.mxu0 %v147
    %v519 = vpop.f32.mrf.mxu0
    %v520 = vadd.f32 %v383, %v519
    %521 = vmatmul.f32.gmra.mxu0 %v148
    %v522 = vpop.f32.mrf.mxu0
    %v523 = vadd.f32 %v383, %v522
    %524 = vmatmul.f32.gmra.mxu0 %v149
    %v525 = vpop.f32.mrf.mxu0
    %v526 = vadd.f32 %v383, %v525
    %527 = vmatmul.f32.gmra.mxu0 %v150
    %v528 = vpop.f32.mrf.mxu0
    %v529 = vadd.f32 %v383, %v528
    %530 = vmatmul.f32.gmra.mxu0 %v151
    %v531 = vpop.f32.mrf.mxu0
    %v532 = vadd.f32 %v383, %v531
    %533 = vmatmul.f32.gmra.mxu0 %v152
    %v534 = vpop.f32.mrf.mxu0
    %v535 = vadd.f32 %v383, %v534
    %536 = vmatmul.f32.gmra.mxu0 %v153
    %v537 = vpop.f32.mrf.mxu0
    %v538 = vadd.f32 %v383, %v537
    %539 = vmatmul.f32.gmra.mxu0 %v154
    %v540 = vpop.f32.mrf.mxu0
    %v541 = vadd.f32 %v383, %v540
    %542 = vmatmul.f32.gmra.mxu0 %v155
    %v543 = vpop.f32.mrf.mxu0
    %v544 = vadd.f32 %v383, %v543
    %545 = vmatmul.f32.gmra.mxu0 %v156
    %v546 = vpop.f32.mrf.mxu0
    %v547 = vadd.f32 %v383, %v546
    %548 = vmatmul.f32.gmra.mxu0 %v157
    %v549 = vpop.f32.mrf.mxu0
    %v550 = vadd.f32 %v383, %v549
    %551 = vmatmul.f32.gmra.mxu0 %v158
    %v552 = vpop.f32.mrf.mxu0
    %v553 = vadd.f32 %v383, %v552
    %554 = vmatmul.f32.gmra.mxu0 %v159
    %v555 = vpop.f32.mrf.mxu0
    %v556 = vadd.f32 %v383, %v555
    %557 = vmatmul.f32.gmra.mxu0 %v160
    %v558 = vpop.f32.mrf.mxu0
    %v559 = vadd.f32 %v383, %v558
    %560 = vmatmul.f32.gmra.mxu0 %v161
    %v561 = vpop.f32.mrf.mxu0
    %v562 = vadd.f32 %v383, %v561
    %563 = vmatmul.f32.gmra.mxu0 %v162
    %v564 = vpop.f32.mrf.mxu0
    %v565 = vadd.f32 %v383, %v564
    %566 = vmatmul.f32.gmra.mxu0 %v163
    %v567 = vpop.f32.mrf.mxu0
    %v568 = vadd.f32 %v383, %v567
    %569 = vmatmul.f32.gmra.mxu0 %v164
    %v570 = vpop.f32.mrf.mxu0
    %v571 = vadd.f32 %v383, %v570
    %572 = vmatmul.f32.gmra.mxu0 %v165
    %v573 = vpop.f32.mrf.mxu0
    %v574 = vadd.f32 %v383, %v573
    %575 = vmatmul.f32.gmra.mxu0 %v166
    %v576 = vpop.f32.mrf.mxu0
    %v577 = vadd.f32 %v383, %v576
    %578 = vmatmul.f32.gmra.mxu0 %v167
    %v579 = vpop.f32.mrf.mxu0
    %v580 = vadd.f32 %v383, %v579
    %581 = vmatmul.f32.gmra.mxu0 %v168
    %v582 = vpop.f32.mrf.mxu0
    %v583 = vadd.f32 %v383, %v582
    %584 = vmatmul.f32.gmra.mxu0 %v169
    %v585 = vpop.f32.mrf.mxu0
    %v586 = vadd.f32 %v383, %v585
    %587 = vmatmul.f32.gmra.mxu0 %v170
    %v588 = vpop.f32.mrf.mxu0
    %v589 = vadd.f32 %v383, %v588
    %590 = vmatmul.f32.gmra.mxu0 %v171
    %v591 = vpop.f32.mrf.mxu0
    %v592 = vadd.f32 %v383, %v591
    %593 = vmatmul.f32.gmra.mxu0 %v172
    %v594 = vpop.f32.mrf.mxu0
    %v595 = vadd.f32 %v383, %v594
    %596 = vmatmul.f32.gmra.mxu0 %v173
    %v597 = vpop.f32.mrf.mxu0
    %v598 = vadd.f32 %v383, %v597
    %599 = vmatmul.f32.gmra.mxu0 %v174
    %v600 = vpop.f32.mrf.mxu0
    %v601 = vadd.f32 %v383, %v600
    %602 = vmatmul.f32.gmra.mxu0 %v175
    %v603 = vpop.f32.mrf.mxu0
    %v604 = vadd.f32 %v383, %v603
    %605 = vmatmul.f32.gmra.mxu0 %v176
    %v606 = vpop.f32.mrf.mxu0
    %v607 = vadd.f32 %v383, %v606
    %608 = vmatmul.f32.gmra.mxu0 %v177
    %v609 = vpop.f32.mrf.mxu0
    %v610 = vadd.f32 %v383, %v609
    %611 = vmatmul.f32.gmra.mxu0 %v178
    %v612 = vpop.f32.mrf.mxu0
    %v613 = vadd.f32 %v383, %v612
    %614 = vmatmul.f32.gmra.mxu0 %v179
    %v615 = vpop.f32.mrf.mxu0
    %v616 = vadd.f32 %v383, %v615
    %617 = vmatmul.f32.gmra.mxu0 %v180
    %v618 = vpop.f32.mrf.mxu0
    %v619 = vadd.f32 %v383, %v618
    %620 = vmatmul.f32.gmra.mxu0 %v181
    %v621 = vpop.f32.mrf.mxu0
    %v622 = vadd.f32 %v383, %v621
    %623 = vmatmul.f32.gmra.mxu0 %v182
    %v624 = vpop.f32.mrf.mxu0
    %v625 = vadd.f32 %v383, %v624
    %626 = vmatmul.f32.gmra.mxu0 %v183
    %v627 = vpop.f32.mrf.mxu0
    %v628 = vadd.f32 %v383, %v627
    %629 = vmatmul.f32.gmra.mxu0 %v184
    %v630 = vpop.f32.mrf.mxu0
    %v631 = vadd.f32 %v383, %v630
    %632 = vmatmul.f32.gmra.mxu0 %v185
    %v633 = vpop.f32.mrf.mxu0
    %v634 = vadd.f32 %v383, %v633
    %635 = vmatmul.f32.gmra.mxu0 %v186
    %v636 = vpop.f32.mrf.mxu0
    %v637 = vadd.f32 %v383, %v636
    %638 = vmatmul.f32.gmra.mxu0 %v187
    %v639 = vpop.f32.mrf.mxu0
    %v640 = vadd.f32 %v383, %v639
    %641 = vmatmul.f32.gmra.mxu0 %v188
    %v642 = vpop.f32.mrf.mxu0
    %v643 = vadd.f32 %v383, %v642
    %644 = vmatmul.f32.gmra.mxu0 %v189
    %v645 = vpop.f32.mrf.mxu0
    %v646 = vadd.f32 %v383, %v645
    %647 = vmatmul.f32.gmra.mxu0 %v190
    %v648 = vpop.f32.mrf.mxu0
    %v649 = vadd.f32 %v383, %v648
    %650 = vmatmul.f32.gmra.mxu0 %v191
    %v651 = vpop.f32.mrf.mxu0
    %v652 = vadd.f32 %v383, %v651
    %653 = vmatmul.f32.gmra.mxu0 %v192
    %v654 = vpop.f32.mrf.mxu0
    %v655 = vadd.f32 %v383, %v654
    %656 = vmatmul.f32.gmra.mxu0 %v193
    %v657 = vpop.f32.mrf.mxu0
    %v658 = vadd.f32 %v383, %v657
    %659 = vmatmul.f32.gmra.mxu0 %v194
    %v660 = vpop.f32.mrf.mxu0
    %v661 = vadd.f32 %v383, %v660
    %662 = vmatmul.f32.gmra.mxu0 %v195
    %v663 = vpop.f32.mrf.mxu0
    %v664 = vadd.f32 %v383, %v663
    %665 = vmatmul.f32.gmra.mxu0 %v196
    %v666 = vpop.f32.mrf.mxu0
    %v667 = vadd.f32 %v383, %v666
    %668 = vmatmul.f32.gmra.mxu0 %v197
    %v669 = vpop.f32.mrf.mxu0
    %v670 = vadd.f32 %v383, %v669
    %671 = vmatmul.f32.gmra.mxu0 %v198
    %v672 = vpop.f32.mrf.mxu0
    %v673 = vadd.f32 %v383, %v672
    %674 = vmatmul.f32.gmra.mxu0 %v199
    %v675 = vpop.f32.mrf.mxu0
    %v676 = vadd.f32 %v383, %v675
    %677 = vmatmul.f32.gmra.mxu0 %v200
    %v678 = vpop.f32.mrf.mxu0
    %v679 = vadd.f32 %v383, %v678
    %680 = vmatmul.f32.gmra.mxu0 %v201
    %v681 = vpop.f32.mrf.mxu0
    %v682 = vadd.f32 %v383, %v681
    %683 = vmatmul.f32.gmra.mxu0 %v202
    %v684 = vpop.f32.mrf.mxu0
    %v685 = vadd.f32 %v383, %v684
    %686 = vmatmul.f32.gmra.mxu0 %v203
    %v687 = vpop.f32.mrf.mxu0
    %v688 = vadd.f32 %v383, %v687
    %689 = vmatmul.f32.gmra.mxu0 %v204
    %v690 = vpop.f32.mrf.mxu0
    %v691 = vadd.f32 %v383, %v690
    %692 = vmatmul.f32.gmra.mxu0 %v205
    %v693 = vpop.f32.mrf.mxu0
    %v694 = vadd.f32 %v383, %v693
    %695 = vmatmul.f32.gmra.mxu0 %v206
    %v696 = vpop.f32.mrf.mxu0
    %v697 = vadd.f32 %v383, %v696
    %698 = vmatmul.f32.gmra.mxu0 %v207
    %v699 = vpop.f32.mrf.mxu0
    %v700 = vadd.f32 %v383, %v699
    %701 = vmatmul.f32.gmra.mxu0 %v208
    %v702 = vpop.f32.mrf.mxu0
    %v703 = vadd.f32 %v383, %v702
    %704 = vmatmul.f32.gmra.mxu0 %v209
    %v705 = vpop.f32.mrf.mxu0
    %v706 = vadd.f32 %v383, %v705
    %707 = vmatmul.f32.gmra.mxu0 %v210
    %v708 = vpop.f32.mrf.mxu0
    %v709 = vadd.f32 %v383, %v708
    %710 = vmatmul.f32.gmra.mxu0 %v211
    %v711 = vpop.f32.mrf.mxu0
    %v712 = vadd.f32 %v383, %v711
    %713 = vmatmul.f32.gmra.mxu0 %v212
    %v714 = vpop.f32.mrf.mxu0
    %v715 = vadd.f32 %v383, %v714
    %716 = vmatmul.f32.gmra.mxu0 %v213
    %v717 = vpop.f32.mrf.mxu0
    %v718 = vadd.f32 %v383, %v717
    %719 = vmatmul.f32.gmra.mxu0 %v214
    %v720 = vpop.f32.mrf.mxu0
    %v721 = vadd.f32 %v383, %v720
    %722 = vmatmul.f32.gmra.mxu0 %v215
    %v723 = vpop.f32.mrf.mxu0
    %v724 = vadd.f32 %v383, %v723
    %725 = vmatmul.f32.gmra.mxu0 %v216
    %v726 = vpop.f32.mrf.mxu0
    %v727 = vadd.f32 %v383, %v726
    %728 = vmatmul.f32.gmra.mxu0 %v217
    %v729 = vpop.f32.mrf.mxu0
    %v730 = vadd.f32 %v383, %v729
    %731 = vmatmul.f32.gmra.mxu0 %v218
    %v732 = vpop.f32.mrf.mxu0
    %v733 = vadd.f32 %v383, %v732
    %734 = vmatmul.f32.gmra.mxu0 %v219
    %v735 = vpop.f32.mrf.mxu0
    %v736 = vadd.f32 %v383, %v735
    %737 = vmatmul.f32.gmra.mxu0 %v220
    %v738 = vpop.f32.mrf.mxu0
    %v739 = vadd.f32 %v383, %v738
    %740 = vmatmul.f32.gmra.mxu0 %v221
    %v741 = vpop.f32.mrf.mxu0
    %v742 = vadd.f32 %v383, %v741
    %743 = vmatmul.f32.gmra.mxu0 %v222
    %v744 = vpop.f32.mrf.mxu0
    %v745 = vadd.f32 %v383, %v744
    %746 = vmatmul.f32.gmra.mxu0 %v223
    %v747 = vpop.f32.mrf.mxu0
    %v748 = vadd.f32 %v383, %v747
    %749 = vmatmul.f32.gmra.mxu0 %v224
    %v750 = vpop.f32.mrf.mxu0
    %v751 = vadd.f32 %v383, %v750
    %752 = vmatmul.f32.gmra.mxu0 %v225
    %v753 = vpop.f32.mrf.mxu0
    %v754 = vadd.f32 %v383, %v753
    %755 = vmatmul.f32.gmra.mxu0 %v226
    %v756 = vpop.f32.mrf.mxu0
    %v757 = vadd.f32 %v383, %v756
    %758 = vmatmul.f32.gmra.mxu0 %v227
    %v759 = vpop.f32.mrf.mxu0
    %v760 = vadd.f32 %v383, %v759
    %761 = vmatmul.f32.gmra.mxu0 %v228
    %v762 = vpop.f32.mrf.mxu0
    %v763 = vadd.f32 %v383, %v762
    %764 = vmatmul.f32.gmra.mxu0 %v229
    %v765 = vpop.f32.mrf.mxu0
    %v766 = vadd.f32 %v383, %v765
    %767 = vmatmul.f32.gmra.mxu0 %v230
    %v768 = vpop.f32.mrf.mxu0
    %v769 = vadd.f32 %v383, %v768
    %770 = vmatmul.f32.gmra.mxu0 %v231
    %v771 = vpop.f32.mrf.mxu0
    %v772 = vadd.f32 %v383, %v771
    %773 = vmatmul.f32.gmra.mxu0 %v232
    %v774 = vpop.f32.mrf.mxu0
    %v775 = vadd.f32 %v383, %v774
    %776 = vmatmul.f32.gmra.mxu0 %v233
    %v777 = vpop.f32.mrf.mxu0
    %v778 = vadd.f32 %v383, %v777
    %779 = vmatmul.f32.gmra.mxu0 %v234
    %v780 = vpop.f32.mrf.mxu0
    %v781 = vadd.f32 %v383, %v780
    %782 = vmatmul.f32.gmra.mxu0 %v235
    %v783 = vpop.f32.mrf.mxu0
    %v784 = vadd.f32 %v383, %v783
    %785 = vdwg.mxu0
    %v786 = vadd.f32 %v403, %v270
    %v787 = vadd.f32 %v406, %v273
    %v788 = vadd.f32 %v409, %v276
    %v789 = vadd.f32 %v412, %v279
    %v790 = vadd.f32 %v415, %v282
    %v791 = vadd.f32 %v418, %v285
    %v792 = vadd.f32 %v421, %v288
    %v793 = vadd.f32 %v424, %v291
    %v794 = vadd.f32 %v427, %v294
    %v795 = vadd.f32 %v430, %v297
    %v796 = vadd.f32 %v433, %v300
    %v797 = vadd.f32 %v436, %v303
    %v798 = vadd.f32 %v439, %v306
    %v799 = vadd.f32 %v442, %v309
    %v800 = vadd.f32 %v445, %v312
    %v801 = vadd.f32 %v448, %v315
    %v802 = vadd.f32 %v451, %v318
    %v803 = vadd.f32 %v454, %v321
    %v804 = vadd.f32 %v457, %v324
    %v805 = vadd.f32 %v460, %v327
    %v806 = vadd.f32 %v463, %v330
    %v807 = vadd.f32 %v466, %v333
    %v808 = vadd.f32 %v469, %v336
    %v809 = vadd.f32 %v472, %v339
    %v810 = vadd.f32 %v475, %v342
    %v811 = vadd.f32 %v478, %v345
    %v812 = vadd.f32 %v481, %v348
    %v813 = vadd.f32 %v484, %v351
    %v814 = vadd.f32 %v487, %v354
    %v815 = vadd.f32 %v490, %v357
    %v816 = vadd.f32 %v493, %v360
    %v817 = vadd.f32 %v496, %v363
    %v818 = vadd.f32 %v499, %v270
    %v819 = vadd.f32 %v502, %v273
    %v820 = vadd.f32 %v505, %v276
    %v821 = vadd.f32 %v508, %v279
    %v822 = vadd.f32 %v511, %v282
    %v823 = vadd.f32 %v514, %v285
    %v824 = vadd.f32 %v517, %v288
    %v825 = vadd.f32 %v520, %v291
    %v826 = vadd.f32 %v523, %v294
    %v827 = vadd.f32 %v526, %v297
    %v828 = vadd.f32 %v529, %v300
    %v829 = vadd.f32 %v532, %v303
    %v830 = vadd.f32 %v535, %v306
    %v831 = vadd.f32 %v538, %v309
    %v832 = vadd.f32 %v541, %v312
    %v833 = vadd.f32 %v544, %v315
    %v834 = vadd.f32 %v547, %v318
    %v835 = vadd.f32 %v550, %v321
    %v836 = vadd.f32 %v553, %v324
    %v837 = vadd.f32 %v556, %v327
    %v838 = vadd.f32 %v559, %v330
    %v839 = vadd.f32 %v562, %v333
    %v840 = vadd.f32 %v565, %v336
    %v841 = vadd.f32 %v568, %v339
    %v842 = vadd.f32 %v571, %v342
    %v843 = vadd.f32 %v574, %v345
    %v844 = vadd.f32 %v577, %v348
    %v845 = vadd.f32 %v580, %v351
    %v846 = vadd.f32 %v583, %v354
    %v847 = vadd.f32 %v586, %v357
    %v848 = vadd.f32 %v589, %v360
    %v849 = vadd.f32 %v592, %v363
    %v850 = vadd.f32 %v595, %v270
    %v851 = vadd.f32 %v598, %v273
    %v852 = vadd.f32 %v601, %v276
    %v853 = vadd.f32 %v604, %v279
    %v854 = vadd.f32 %v607, %v282
    %v855 = vadd.f32 %v610, %v285
    %v856 = vadd.f32 %v613, %v288
    %v857 = vadd.f32 %v616, %v291
    %v858 = vadd.f32 %v619, %v294
    %v859 = vadd.f32 %v622, %v297
    %v860 = vadd.f32 %v625, %v300
    %v861 = vadd.f32 %v628, %v303
    %v862 = vadd.f32 %v631, %v306
    %v863 = vadd.f32 %v634, %v309
    %v864 = vadd.f32 %v637, %v312
    %v865 = vadd.f32 %v640, %v315
    %v866 = vadd.f32 %v643, %v318
    %v867 = vadd.f32 %v646, %v321
    %v868 = vadd.f32 %v649, %v324
    %v869 = vadd.f32 %v652, %v327
    %v870 = vadd.f32 %v655, %v330
    %v871 = vadd.f32 %v658, %v333
    %v872 = vadd.f32 %v661, %v336
    %v873 = vadd.f32 %v664, %v339
    %v874 = vadd.f32 %v667, %v342
    %v875 = vadd.f32 %v670, %v345
    %v876 = vadd.f32 %v673, %v348
    %v877 = vadd.f32 %v676, %v351
    %v878 = vadd.f32 %v679, %v354
    %v879 = vadd.f32 %v682, %v357
    %v880 = vadd.f32 %v685, %v360
    %v881 = vadd.f32 %v688, %v363
    %v882 = vadd.f32 %v691, %v270
    %v883 = vadd.f32 %v694, %v273
    %v884 = vadd.f32 %v697, %v276
    %v885 = vadd.f32 %v700, %v279
    %v886 = vadd.f32 %v703, %v282
    %v887 = vadd.f32 %v706, %v285
    %v888 = vadd.f32 %v709, %v288
    %v889 = vadd.f32 %v712, %v291
    %v890 = vadd.f32 %v715, %v294
    %v891 = vadd.f32 %v718, %v297
    %v892 = vadd.f32 %v721, %v300
    %v893 = vadd.f32 %v724, %v303
    %v894 = vadd.f32 %v727, %v306
    %v895 = vadd.f32 %v730, %v309
    %v896 = vadd.f32 %v733, %v312
    %v897 = vadd.f32 %v736, %v315
    %v898 = vadd.f32 %v739, %v318
    %v899 = vadd.f32 %v742, %v321
    %v900 = vadd.f32 %v745, %v324
    %v901 = vadd.f32 %v748, %v327
    %v902 = vadd.f32 %v751, %v330
    %v903 = vadd.f32 %v754, %v333
    %v904 = vadd.f32 %v757, %v336
    %v905 = vadd.f32 %v760, %v339
    %v906 = vadd.f32 %v763, %v342
    %v907 = vadd.f32 %v766, %v345
    %v908 = vadd.f32 %v769, %v348
    %v909 = vadd.f32 %v772, %v351
    %v910 = vadd.f32 %v775, %v354
    %v911 = vadd.f32 %v778, %v357
    %v912 = vadd.f32 %v781, %v360
    %v913 = vadd.f32 %v784, %v363
    %v914 = vmax.f32 %v786, 0.0
    %v915 = vmax.f32 %v787, 0.0
    %v916 = vmax.f32 %v788, 0.0
    %v917 = vmax.f32 %v789, 0.0
    %v918 = vmax.f32 %v790, 0.0
    %v919 = vmax.f32 %v791, 0.0
    %v920 = vmax.f32 %v792, 0.0
    %v921 = vmax.f32 %v793, 0.0
    %v922 = vmax.f32 %v794, 0.0
    %v923 = vmax.f32 %v795, 0.0
    %v924 = vmax.f32 %v796, 0.0
    %v925 = vmax.f32 %v797, 0.0
    %v926 = vmax.f32 %v798, 0.0
    %v927 = vmax.f32 %v799, 0.0
    %v928 = vmax.f32 %v800, 0.0
    %v929 = vmax.f32 %v801, 0.0
    %v930 = vmax.f32 %v802, 0.0
    %v931 = vmax.f32 %v803, 0.0
    %v932 = vmax.f32 %v804, 0.0
    %v933 = vmax.f32 %v805, 0.0
    %v934 = vmax.f32 %v806, 0.0
    %v935 = vmax.f32 %v807, 0.0
    %v936 = vmax.f32 %v808, 0.0
    %v937 = vmax.f32 %v809, 0.0
    %v938 = vmax.f32 %v810, 0.0
    %v939 = vmax.f32 %v811, 0.0
    %v940 = vmax.f32 %v812, 0.0
    %v941 = vmax.f32 %v813, 0.0
    %v942 = vmax.f32 %v814, 0.0
    %v943 = vmax.f32 %v815, 0.0
    %v944 = vmax.f32 %v816, 0.0
    %v945 = vmax.f32 %v817, 0.0
    %v946 = vmax.f32 %v818, 0.0
    %v947 = vmax.f32 %v819, 0.0
    %v948 = vmax.f32 %v820, 0.0
    %v949 = vmax.f32 %v821, 0.0
    %v950 = vmax.f32 %v822, 0.0
    %v951 = vmax.f32 %v823, 0.0
    %v952 = vmax.f32 %v824, 0.0
    %v953 = vmax.f32 %v825, 0.0
    %v954 = vmax.f32 %v826, 0.0
    %v955 = vmax.f32 %v827, 0.0
    %v956 = vmax.f32 %v828, 0.0
    %v957 = vmax.f32 %v829, 0.0
    %v958 = vmax.f32 %v830, 0.0
    %v959 = vmax.f32 %v831, 0.0
    %v960 = vmax.f32 %v832, 0.0
    %v961 = vmax.f32 %v833, 0.0
    %v962 = vmax.f32 %v834, 0.0
    %v963 = vmax.f32 %v835, 0.0
    %v964 = vmax.f32 %v836, 0.0
    %v965 = vmax.f32 %v837, 0.0
    %v966 = vmax.f32 %v838, 0.0
    %v967 = vmax.f32 %v839, 0.0
    %v968 = vmax.f32 %v840, 0.0
    %v969 = vmax.f32 %v841, 0.0
    %v970 = vmax.f32 %v842, 0.0
    %v971 = vmax.f32 %v843, 0.0
    %v972 = vmax.f32 %v844, 0.0
    %v973 = vmax.f32 %v845, 0.0
    %v974 = vmax.f32 %v846, 0.0
    %v975 = vmax.f32 %v847, 0.0
    %v976 = vmax.f32 %v848, 0.0
    %v977 = vmax.f32 %v849, 0.0
    %v978 = vmax.f32 %v850, 0.0
    %v979 = vmax.f32 %v851, 0.0
    %v980 = vmax.f32 %v852, 0.0
    %v981 = vmax.f32 %v853, 0.0
    %v982 = vmax.f32 %v854, 0.0
    %v983 = vmax.f32 %v855, 0.0
    %v984 = vmax.f32 %v856, 0.0
    %v985 = vmax.f32 %v857, 0.0
    %v986 = vmax.f32 %v858, 0.0
    %v987 = vmax.f32 %v859, 0.0
    %v988 = vmax.f32 %v860, 0.0
    %v989 = vmax.f32 %v861, 0.0
    %v990 = vmax.f32 %v862, 0.0
    %v991 = vmax.f32 %v863, 0.0
    %v992 = vmax.f32 %v864, 0.0
    %v993 = vmax.f32 %v865, 0.0
    %v994 = vmax.f32 %v866, 0.0
    %v995 = vmax.f32 %v867, 0.0
    %v996 = vmax.f32 %v868, 0.0
    %v997 = vmax.f32 %v869, 0.0
    %v998 = vmax.f32 %v870, 0.0
    %v999 = vmax.f32 %v871, 0.0
    %v1000 = vmax.f32 %v872, 0.0
    %v1001 = vmax.f32 %v873, 0.0
    %v1002 = vmax.f32 %v874, 0.0
    %v1003 = vmax.f32 %v875, 0.0
    %v1004 = vmax.f32 %v876, 0.0
    %v1005 = vmax.f32 %v877, 0.0
    %v1006 = vmax.f32 %v878, 0.0
    %v1007 = vmax.f32 %v879, 0.0
    %v1008 = vmax.f32 %v880, 0.0
    %v1009 = vmax.f32 %v881, 0.0
    %v1010 = vmax.f32 %v882, 0.0
    %v1011 = vmax.f32 %v883, 0.0
    %v1012 = vmax.f32 %v884, 0.0
    %v1013 = vmax.f32 %v885, 0.0
    %v1014 = vmax.f32 %v886, 0.0
    %v1015 = vmax.f32 %v887, 0.0
    %v1016 = vmax.f32 %v888, 0.0
    %v1017 = vmax.f32 %v889, 0.0
    %v1018 = vmax.f32 %v890, 0.0
    %v1019 = vmax.f32 %v891, 0.0
    %v1020 = vmax.f32 %v892, 0.0
    %v1021 = vmax.f32 %v893, 0.0
    %v1022 = vmax.f32 %v894, 0.0
    %v1023 = vmax.f32 %v895, 0.0
    %v1024 = vmax.f32 %v896, 0.0
    %v1025 = vmax.f32 %v897, 0.0
    %v1026 = vmax.f32 %v898, 0.0
    %v1027 = vmax.f32 %v899, 0.0
    %v1028 = vmax.f32 %v900, 0.0
    %v1029 = vmax.f32 %v901, 0.0
    %v1030 = vmax.f32 %v902, 0.0
    %v1031 = vmax.f32 %v903, 0.0
    %v1032 = vmax.f32 %v904, 0.0
    %v1033 = vmax.f32 %v905, 0.0
    %v1034 = vmax.f32 %v906, 0.0
    %v1035 = vmax.f32 %v907, 0.0
    %v1036 = vmax.f32 %v908, 0.0
    %v1037 = vmax.f32 %v909, 0.0
    %v1038 = vmax.f32 %v910, 0.0
    %v1039 = vmax.f32 %v911, 0.0
    %v1040 = vmax.f32 %v912, 0.0
    %v1041 = vmax.f32 %v913, 0.0
    %v1042 = vld [vmem:[%s4] sm:$0x1]
    %v1044 = vperm.slane %v1042, 0
    %v1046 = vmul.f32 %v914, %v1044
    %v1047 = vmul.f32 %v915, %v1044
    %v1048 = vmul.f32 %v916, %v1044
    %v1049 = vmul.f32 %v917, %v1044
    %v1050 = vmul.f32 %v918, %v1044
    %v1051 = vmul.f32 %v919, %v1044
    %v1052 = vmul.f32 %v920, %v1044
    %v1053 = vmul.f32 %v921, %v1044
    %v1054 = vmul.f32 %v922, %v1044
    %v1055 = vmul.f32 %v923, %v1044
    %v1056 = vmul.f32 %v924, %v1044
    %v1057 = vmul.f32 %v925, %v1044
    %v1058 = vmul.f32 %v926, %v1044
    %v1059 = vmul.f32 %v927, %v1044
    %v1060 = vmul.f32 %v928, %v1044
    %v1061 = vmul.f32 %v929, %v1044
    %v1062 = vmul.f32 %v930, %v1044
    %v1063 = vmul.f32 %v931, %v1044
    %v1064 = vmul.f32 %v932, %v1044
    %v1065 = vmul.f32 %v933, %v1044
    %v1066 = vmul.f32 %v934, %v1044
    %v1067 = vmul.f32 %v935, %v1044
    %v1068 = vmul.f32 %v936, %v1044
    %v1069 = vmul.f32 %v937, %v1044
    %v1070 = vmul.f32 %v938, %v1044
    %v1071 = vmul.f32 %v939, %v1044
    %v1072 = vmul.f32 %v940, %v1044
    %v1073 = vmul.f32 %v941, %v1044
    %v1074 = vmul.f32 %v942, %v1044
    %v1075 = vmul.f32 %v943, %v1044
    %v1076 = vmul.f32 %v944, %v1044
    %v1077 = vmul.f32 %v945, %v1044
    %v1078 = vmul.f32 %v946, %v1044
    %v1079 = vmul.f32 %v947, %v1044
    %v1080 = vmul.f32 %v948, %v1044
    %v1081 = vmul.f32 %v949, %v1044
    %v1082 = vmul.f32 %v950, %v1044
    %v1083 = vmul.f32 %v951, %v1044
    %v1084 = vmul.f32 %v952, %v1044
    %v1085 = vmul.f32 %v953, %v1044
    %v1086 = vmul.f32 %v954, %v1044
    %v1087 = vmul.f32 %v955, %v1044
    %v1088 = vmul.f32 %v956, %v1044
    %v1089 = vmul.f32 %v957, %v1044
    %v1090 = vmul.f32 %v958, %v1044
    %v1091 = vmul.f32 %v959, %v1044
    %v1092 = vmul.f32 %v960, %v1044
    %v1093 = vmul.f32 %v961, %v1044
    %v1094 = vmul.f32 %v962, %v1044
    %v1095 = vmul.f32 %v963, %v1044
    %v1096 = vmul.f32 %v964, %v1044
    %v1097 = vmul.f32 %v965, %v1044
    %v1098 = vmul.f32 %v966, %v1044
    %v1099 = vmul.f32 %v967, %v1044
    %v1100 = vmul.f32 %v968, %v1044
    %v1101 = vmul.f32 %v969, %v1044
    %v1102 = vmul.f32 %v970, %v1044
    %v1103 = vmul.f32 %v971, %v1044
    %v1104 = vmul.f32 %v972, %v1044
    %v1105 = vmul.f32 %v973, %v1044
    %v1106 = vmul.f32 %v974, %v1044
    %v1107 = vmul.f32 %v975, %v1044
    %v1108 = vmul.f32 %v976, %v1044
    %v1109 = vmul.f32 %v977, %v1044
    %v1110 = vmul.f32 %v978, %v1044
    %v1111 = vmul.f32 %v979, %v1044
    %v1112 = vmul.f32 %v980, %v1044
    %v1113 = vmul.f32 %v981, %v1044
    %v1114 = vmul.f32 %v982, %v1044
    %v1115 = vmul.f32 %v983, %v1044
    %v1116 = vmul.f32 %v984, %v1044
    %v1117 = vmul.f32 %v985, %v1044
    %v1118 = vmul.f32 %v986, %v1044
    %v1119 = vmul.f32 %v987, %v1044
    %v1120 = vmul.f32 %v988, %v1044
    %v1121 = vmul.f32 %v989, %v1044
    %v1122 = vmul.f32 %v990, %v1044
    %v1123 = vmul.f32 %v991, %v1044
    %v1124 = vmul.f32 %v992, %v1044
    %v1125 = vmul.f32 %v993, %v1044
    %v1126 = vmul.f32 %v994, %v1044
    %v1127 = vmul.f32 %v995, %v1044
    %v1128 = vmul.f32 %v996, %v1044
    %v1129 = vmul.f32 %v997, %v1044
    %v1130 = vmul.f32 %v998, %v1044
    %v1131 = vmul.f32 %v999, %v1044
    %v1132 = vmul.f32 %v1000, %v1044
    %v1133 = vmul.f32 %v1001, %v1044
    %v1134 = vmul.f32 %v1002, %v1044
    %v1135 = vmul.f32 %v1003, %v1044
    %v1136 = vmul.f32 %v1004, %v1044
    %v1137 = vmul.f32 %v1005, %v1044
    %v1138 = vmul.f32 %v1006, %v1044
    %v1139 = vmul.f32 %v1007, %v1044
    %v1140 = vmul.f32 %v1008, %v1044
    %v1141 = vmul.f32 %v1009, %v1044
    %v1142 = vmul.f32 %v1010, %v1044
    %v1143 = vmul.f32 %v1011, %v1044
    %v1144 = vmul.f32 %v1012, %v1044
    %v1145 = vmul.f32 %v1013, %v1044
    %v1146 = vmul.f32 %v1014, %v1044
    %v1147 = vmul.f32 %v1015, %v1044
    %v1148 = vmul.f32 %v1016, %v1044
    %v1149 = vmul.f32 %v1017, %v1044
    %v1150 = vmul.f32 %v1018, %v1044
    %v1151 = vmul.f32 %v1019, %v1044
    %v1152 = vmul.f32 %v1020, %v1044
    %v1153 = vmul.f32 %v1021, %v1044
    %v1154 = vmul.f32 %v1022, %v1044
    %v1155 = vmul.f32 %v1023, %v1044
    %v1156 = vmul.f32 %v1024, %v1044
    %v1157 = vmul.f32 %v1025, %v1044
    %v1158 = vmul.f32 %v1026, %v1044
    %v1159 = vmul.f32 %v1027, %v1044
    %v1160 = vmul.f32 %v1028, %v1044
    %v1161 = vmul.f32 %v1029, %v1044
    %v1162 = vmul.f32 %v1030, %v1044
    %v1163 = vmul.f32 %v1031, %v1044
    %v1164 = vmul.f32 %v1032, %v1044
    %v1165 = vmul.f32 %v1033, %v1044
    %v1166 = vmul.f32 %v1034, %v1044
    %v1167 = vmul.f32 %v1035, %v1044
    %v1168 = vmul.f32 %v1036, %v1044
    %v1169 = vmul.f32 %v1037, %v1044
    %v1170 = vmul.f32 %v1038, %v1044
    %v1171 = vmul.f32 %v1039, %v1044
    %v1172 = vmul.f32 %v1040, %v1044
    %v1173 = vmul.f32 %v1041, %v1044
    %1174 = vadd.xlane.f32.xlu0 %v1046
    %v1175 = vpop.xlane.xlu0 %1174
    %1176 = vadd.xlane.f32.xlu0 %v1047
    %v1177 = vpop.xlane.xlu0 %1176
    %1178 = vadd.xlane.f32.xlu0 %v1048
    %v1179 = vpop.xlane.xlu0 %1178
    %1180 = vadd.xlane.f32.xlu0 %v1049
    %v1181 = vpop.xlane.xlu0 %1180
    %1182 = vadd.xlane.f32.xlu0 %v1050
    %v1183 = vpop.xlane.xlu0 %1182
    %1184 = vadd.xlane.f32.xlu0 %v1051
    %v1185 = vpop.xlane.xlu0 %1184
    %1186 = vadd.xlane.f32.xlu0 %v1052
    %v1187 = vpop.xlane.xlu0 %1186
    %1188 = vadd.xlane.f32.xlu0 %v1053
    %v1189 = vpop.xlane.xlu0 %1188
    %1190 = vadd.xlane.f32.xlu0 %v1054
    %v1191 = vpop.xlane.xlu0 %1190
    %1192 = vadd.xlane.f32.xlu0 %v1055
    %v1193 = vpop.xlane.xlu0 %1192
    %1194 = vadd.xlane.f32.xlu0 %v1056
    %v1195 = vpop.xlane.xlu0 %1194
    %1196 = vadd.xlane.f32.xlu0 %v1057
    %v1197 = vpop.xlane.xlu0 %1196
    %1198 = vadd.xlane.f32.xlu0 %v1058
    %v1199 = vpop.xlane.xlu0 %1198
    %1200 = vadd.xlane.f32.xlu0 %v1059
    %v1201 = vpop.xlane.xlu0 %1200
    %1202 = vadd.xlane.f32.xlu0 %v1060
    %v1203 = vpop.xlane.xlu0 %1202
    %1204 = vadd.xlane.f32.xlu0 %v1061
    %v1205 = vpop.xlane.xlu0 %1204
    %1206 = vadd.xlane.f32.xlu0 %v1062
    %v1207 = vpop.xlane.xlu0 %1206
    %1208 = vadd.xlane.f32.xlu0 %v1063
    %v1209 = vpop.xlane.xlu0 %1208
    %1210 = vadd.xlane.f32.xlu0 %v1064
    %v1211 = vpop.xlane.xlu0 %1210
    %1212 = vadd.xlane.f32.xlu0 %v1065
    %v1213 = vpop.xlane.xlu0 %1212
    %1214 = vadd.xlane.f32.xlu0 %v1066
    %v1215 = vpop.xlane.xlu0 %1214
    %1216 = vadd.xlane.f32.xlu0 %v1067
    %v1217 = vpop.xlane.xlu0 %1216
    %1218 = vadd.xlane.f32.xlu0 %v1068
    %v1219 = vpop.xlane.xlu0 %1218
    %1220 = vadd.xlane.f32.xlu0 %v1069
    %v1221 = vpop.xlane.xlu0 %1220
    %1222 = vadd.xlane.f32.xlu0 %v1070
    %v1223 = vpop.xlane.xlu0 %1222
    %1224 = vadd.xlane.f32.xlu0 %v1071
    %v1225 = vpop.xlane.xlu0 %1224
    %1226 = vadd.xlane.f32.xlu0 %v1072
    %v1227 = vpop.xlane.xlu0 %1226
    %1228 = vadd.xlane.f32.xlu0 %v1073
    %v1229 = vpop.xlane.xlu0 %1228
    %1230 = vadd.xlane.f32.xlu0 %v1074
    %v1231 = vpop.xlane.xlu0 %1230
    %1232 = vadd.xlane.f32.xlu0 %v1075
    %v1233 = vpop.xlane.xlu0 %1232
    %1234 = vadd.xlane.f32.xlu0 %v1076
    %v1235 = vpop.xlane.xlu0 %1234
    %1236 = vadd.xlane.f32.xlu0 %v1077
    %v1237 = vpop.xlane.xlu0 %1236
    %1238 = vadd.xlane.f32.xlu0 %v1078
    %v1239 = vpop.xlane.xlu0 %1238
    %1240 = vadd.xlane.f32.xlu0 %v1079
    %v1241 = vpop.xlane.xlu0 %1240
    %1242 = vadd.xlane.f32.xlu0 %v1080
    %v1243 = vpop.xlane.xlu0 %1242
    %1244 = vadd.xlane.f32.xlu0 %v1081
    %v1245 = vpop.xlane.xlu0 %1244
    %1246 = vadd.xlane.f32.xlu0 %v1082
    %v1247 = vpop.xlane.xlu0 %1246
    %1248 = vadd.xlane.f32.xlu0 %v1083
    %v1249 = vpop.xlane.xlu0 %1248
    %1250 = vadd.xlane.f32.xlu0 %v1084
    %v1251 = vpop.xlane.xlu0 %1250
    %1252 = vadd.xlane.f32.xlu0 %v1085
    %v1253 = vpop.xlane.xlu0 %1252
    %1254 = vadd.xlane.f32.xlu0 %v1086
    %v1255 = vpop.xlane.xlu0 %1254
    %1256 = vadd.xlane.f32.xlu0 %v1087
    %v1257 = vpop.xlane.xlu0 %1256
    %1258 = vadd.xlane.f32.xlu0 %v1088
    %v1259 = vpop.xlane.xlu0 %1258
    %1260 = vadd.xlane.f32.xlu0 %v1089
    %v1261 = vpop.xlane.xlu0 %1260
    %1262 = vadd.xlane.f32.xlu0 %v1090
    %v1263 = vpop.xlane.xlu0 %1262
    %1264 = vadd.xlane.f32.xlu0 %v1091
    %v1265 = vpop.xlane.xlu0 %1264
    %1266 = vadd.xlane.f32.xlu0 %v1092
    %v1267 = vpop.xlane.xlu0 %1266
    %1268 = vadd.xlane.f32.xlu0 %v1093
    %v1269 = vpop.xlane.xlu0 %1268
    %1270 = vadd.xlane.f32.xlu0 %v1094
    %v1271 = vpop.xlane.xlu0 %1270
    %1272 = vadd.xlane.f32.xlu0 %v1095
    %v1273 = vpop.xlane.xlu0 %1272
    %1274 = vadd.xlane.f32.xlu0 %v1096
    %v1275 = vpop.xlane.xlu0 %1274
    %1276 = vadd.xlane.f32.xlu0 %v1097
    %v1277 = vpop.xlane.xlu0 %1276
    %1278 = vadd.xlane.f32.xlu0 %v1098
    %v1279 = vpop.xlane.xlu0 %1278
    %1280 = vadd.xlane.f32.xlu0 %v1099
    %v1281 = vpop.xlane.xlu0 %1280
    %1282 = vadd.xlane.f32.xlu0 %v1100
    %v1283 = vpop.xlane.xlu0 %1282
    %1284 = vadd.xlane.f32.xlu0 %v1101
    %v1285 = vpop.xlane.xlu0 %1284
    %1286 = vadd.xlane.f32.xlu0 %v1102
    %v1287 = vpop.xlane.xlu0 %1286
    %1288 = vadd.xlane.f32.xlu0 %v1103
    %v1289 = vpop.xlane.xlu0 %1288
    %1290 = vadd.xlane.f32.xlu0 %v1104
    %v1291 = vpop.xlane.xlu0 %1290
    %1292 = vadd.xlane.f32.xlu0 %v1105
    %v1293 = vpop.xlane.xlu0 %1292
    %1294 = vadd.xlane.f32.xlu0 %v1106
    %v1295 = vpop.xlane.xlu0 %1294
    %1296 = vadd.xlane.f32.xlu0 %v1107
    %v1297 = vpop.xlane.xlu0 %1296
    %1298 = vadd.xlane.f32.xlu0 %v1108
    %v1299 = vpop.xlane.xlu0 %1298
    %1300 = vadd.xlane.f32.xlu0 %v1109
    %v1301 = vpop.xlane.xlu0 %1300
    %1302 = vadd.xlane.f32.xlu0 %v1110
    %v1303 = vpop.xlane.xlu0 %1302
    %1304 = vadd.xlane.f32.xlu0 %v1111
    %v1305 = vpop.xlane.xlu0 %1304
    %1306 = vadd.xlane.f32.xlu0 %v1112
    %v1307 = vpop.xlane.xlu0 %1306
    %1308 = vadd.xlane.f32.xlu0 %v1113
    %v1309 = vpop.xlane.xlu0 %1308
    %1310 = vadd.xlane.f32.xlu0 %v1114
    %v1311 = vpop.xlane.xlu0 %1310
    %1312 = vadd.xlane.f32.xlu0 %v1115
    %v1313 = vpop.xlane.xlu0 %1312
    %1314 = vadd.xlane.f32.xlu0 %v1116
    %v1315 = vpop.xlane.xlu0 %1314
    %1316 = vadd.xlane.f32.xlu0 %v1117
    %v1317 = vpop.xlane.xlu0 %1316
    %1318 = vadd.xlane.f32.xlu0 %v1118
    %v1319 = vpop.xlane.xlu0 %1318
    %1320 = vadd.xlane.f32.xlu0 %v1119
    %v1321 = vpop.xlane.xlu0 %1320
    %1322 = vadd.xlane.f32.xlu0 %v1120
    %v1323 = vpop.xlane.xlu0 %1322
    %1324 = vadd.xlane.f32.xlu0 %v1121
    %v1325 = vpop.xlane.xlu0 %1324
    %1326 = vadd.xlane.f32.xlu0 %v1122
    %v1327 = vpop.xlane.xlu0 %1326
    %1328 = vadd.xlane.f32.xlu0 %v1123
    %v1329 = vpop.xlane.xlu0 %1328
    %1330 = vadd.xlane.f32.xlu0 %v1124
    %v1331 = vpop.xlane.xlu0 %1330
    %1332 = vadd.xlane.f32.xlu0 %v1125
    %v1333 = vpop.xlane.xlu0 %1332
    %1334 = vadd.xlane.f32.xlu0 %v1126
    %v1335 = vpop.xlane.xlu0 %1334
    %1336 = vadd.xlane.f32.xlu0 %v1127
    %v1337 = vpop.xlane.xlu0 %1336
    %1338 = vadd.xlane.f32.xlu0 %v1128
    %v1339 = vpop.xlane.xlu0 %1338
    %1340 = vadd.xlane.f32.xlu0 %v1129
    %v1341 = vpop.xlane.xlu0 %1340
    %1342 = vadd.xlane.f32.xlu0 %v1130
    %v1343 = vpop.xlane.xlu0 %1342
    %1344 = vadd.xlane.f32.xlu0 %v1131
    %v1345 = vpop.xlane.xlu0 %1344
    %1346 = vadd.xlane.f32.xlu0 %v1132
    %v1347 = vpop.xlane.xlu0 %1346
    %1348 = vadd.xlane.f32.xlu0 %v1133
    %v1349 = vpop.xlane.xlu0 %1348
    %1350 = vadd.xlane.f32.xlu0 %v1134
    %v1351 = vpop.xlane.xlu0 %1350
    %1352 = vadd.xlane.f32.xlu0 %v1135
    %v1353 = vpop.xlane.xlu0 %1352
    %1354 = vadd.xlane.f32.xlu0 %v1136
    %v1355 = vpop.xlane.xlu0 %1354
    %1356 = vadd.xlane.f32.xlu0 %v1137
    %v1357 = vpop.xlane.xlu0 %1356
    %1358 = vadd.xlane.f32.xlu0 %v1138
    %v1359 = vpop.xlane.xlu0 %1358
    %1360 = vadd.xlane.f32.xlu0 %v1139
    %v1361 = vpop.xlane.xlu0 %1360
    %1362 = vadd.xlane.f32.xlu0 %v1140
    %v1363 = vpop.xlane.xlu0 %1362
    %1364 = vadd.xlane.f32.xlu0 %v1141
    %v1365 = vpop.xlane.xlu0 %1364
    %1366 = vadd.xlane.f32.xlu0 %v1142
    %v1367 = vpop.xlane.xlu0 %1366
    %1368 = vadd.xlane.f32.xlu0 %v1143
    %v1369 = vpop.xlane.xlu0 %1368
    %1370 = vadd.xlane.f32.xlu0 %v1144
    %v1371 = vpop.xlane.xlu0 %1370
    %1372 = vadd.xlane.f32.xlu0 %v1145
    %v1373 = vpop.xlane.xlu0 %1372
    %1374 = vadd.xlane.f32.xlu0 %v1146
    %v1375 = vpop.xlane.xlu0 %1374
    %1376 = vadd.xlane.f32.xlu0 %v1147
    %v1377 = vpop.xlane.xlu0 %1376
    %1378 = vadd.xlane.f32.xlu0 %v1148
    %v1379 = vpop.xlane.xlu0 %1378
    %1380 = vadd.xlane.f32.xlu0 %v1149
    %v1381 = vpop.xlane.xlu0 %1380
    %1382 = vadd.xlane.f32.xlu0 %v1150
    %v1383 = vpop.xlane.xlu0 %1382
    %1384 = vadd.xlane.f32.xlu0 %v1151
    %v1385 = vpop.xlane.xlu0 %1384
    %1386 = vadd.xlane.f32.xlu0 %v1152
    %v1387 = vpop.xlane.xlu0 %1386
    %1388 = vadd.xlane.f32.xlu0 %v1153
    %v1389 = vpop.xlane.xlu0 %1388
    %1390 = vadd.xlane.f32.xlu0 %v1154
    %v1391 = vpop.xlane.xlu0 %1390
    %1392 = vadd.xlane.f32.xlu0 %v1155
    %v1393 = vpop.xlane.xlu0 %1392
    %1394 = vadd.xlane.f32.xlu0 %v1156
    %v1395 = vpop.xlane.xlu0 %1394
    %1396 = vadd.xlane.f32.xlu0 %v1157
    %v1397 = vpop.xlane.xlu0 %1396
    %1398 = vadd.xlane.f32.xlu0 %v1158
    %v1399 = vpop.xlane.xlu0 %1398
    %1400 = vadd.xlane.f32.xlu0 %v1159
    %v1401 = vpop.xlane.xlu0 %1400
    %1402 = vadd.xlane.f32.xlu0 %v1160
    %v1403 = vpop.xlane.xlu0 %1402
    %1404 = vadd.xlane.f32.xlu0 %v1161
    %v1405 = vpop.xlane.xlu0 %1404
    %1406 = vadd.xlane.f32.xlu0 %v1162
    %v1407 = vpop.xlane.xlu0 %1406
    %1408 = vadd.xlane.f32.xlu0 %v1163
    %v1409 = vpop.xlane.xlu0 %1408
    %1410 = vadd.xlane.f32.xlu0 %v1164
    %v1411 = vpop.xlane.xlu0 %1410
    %1412 = vadd.xlane.f32.xlu0 %v1165
    %v1413 = vpop.xlane.xlu0 %1412
    %1414 = vadd.xlane.f32.xlu0 %v1166
    %v1415 = vpop.xlane.xlu0 %1414
    %1416 = vadd.xlane.f32.xlu0 %v1167
    %v1417 = vpop.xlane.xlu0 %1416
    %1418 = vadd.xlane.f32.xlu0 %v1168
    %v1419 = vpop.xlane.xlu0 %1418
    %1420 = vadd.xlane.f32.xlu0 %v1169
    %v1421 = vpop.xlane.xlu0 %1420
    %1422 = vadd.xlane.f32.xlu0 %v1170
    %v1423 = vpop.xlane.xlu0 %1422
    %1424 = vadd.xlane.f32.xlu0 %v1171
    %v1425 = vpop.xlane.xlu0 %1424
    %1426 = vadd.xlane.f32.xlu0 %v1172
    %v1427 = vpop.xlane.xlu0 %1426
    %1428 = vadd.xlane.f32.xlu0 %v1173
    %v1429 = vpop.xlane.xlu0 %1428
    %v1430 = vld [vmem:[#allocation2] sm:$0x1]
    %v1432 = vperm.slane %v1430, 0
    %1433 = vset.pattern.permute.xlu0 0
    %1434 = vperm.xlu0 %1433, %v1432
    %v1435 = vpop.permute.xlu0 %1434
    %v1437 = vadd.f32 %v1175, %v1435
    %v1438 = vadd.f32 %v1177, %v1435
    %v1439 = vadd.f32 %v1179, %v1435
    %v1440 = vadd.f32 %v1181, %v1435
    %v1441 = vadd.f32 %v1183, %v1435
    %v1442 = vadd.f32 %v1185, %v1435
    %v1443 = vadd.f32 %v1187, %v1435
    %v1444 = vadd.f32 %v1189, %v1435
    %v1445 = vadd.f32 %v1191, %v1435
    %v1446 = vadd.f32 %v1193, %v1435
    %v1447 = vadd.f32 %v1195, %v1435
    %v1448 = vadd.f32 %v1197, %v1435
    %v1449 = vadd.f32 %v1199, %v1435
    %v1450 = vadd.f32 %v1201, %v1435
    %v1451 = vadd.f32 %v1203, %v1435
    %v1452 = vadd.f32 %v1205, %v1435
    %v1453 = vadd.f32 %v1207, %v1435
    %v1454 = vadd.f32 %v1209, %v1435
    %v1455 = vadd.f32 %v1211, %v1435
    %v1456 = vadd.f32 %v1213, %v1435
    %v1457 = vadd.f32 %v1215, %v1435
    %v1458 = vadd.f32 %v1217, %v1435
    %v1459 = vadd.f32 %v1219, %v1435
    %v1460 = vadd.f32 %v1221, %v1435
    %v1461 = vadd.f32 %v1223, %v1435
    %v1462 = vadd.f32 %v1225, %v1435
    %v1463 = vadd.f32 %v1227, %v1435
    %v1464 = vadd.f32 %v1229, %v1435
    %v1465 = vadd.f32 %v1231, %v1435
    %v1466 = vadd.f32 %v1233, %v1435
    %v1467 = vadd.f32 %v1235, %v1435
    %v1468 = vadd.f32 %v1237, %v1435
    %v1469 = vadd.f32 %v1239, %v1435
    %v1470 = vadd.f32 %v1241, %v1435
    %v1471 = vadd.f32 %v1243, %v1435
    %v1472 = vadd.f32 %v1245, %v1435
    %v1473 = vadd.f32 %v1247, %v1435
    %v1474 = vadd.f32 %v1249, %v1435
    %v1475 = vadd.f32 %v1251, %v1435
    %v1476 = vadd.f32 %v1253, %v1435
    %v1477 = vadd.f32 %v1255, %v1435
    %v1478 = vadd.f32 %v1257, %v1435
    %v1479 = vadd.f32 %v1259, %v1435
    %v1480 = vadd.f32 %v1261, %v1435
    %v1481 = vadd.f32 %v1263, %v1435
    %v1482 = vadd.f32 %v1265, %v1435
    %v1483 = vadd.f32 %v1267, %v1435
    %v1484 = vadd.f32 %v1269, %v1435
    %v1485 = vadd.f32 %v1271, %v1435
    %v1486 = vadd.f32 %v1273, %v1435
    %v1487 = vadd.f32 %v1275, %v1435
    %v1488 = vadd.f32 %v1277, %v1435
    %v1489 = vadd.f32 %v1279, %v1435
    %v1490 = vadd.f32 %v1281, %v1435
    %v1491 = vadd.f32 %v1283, %v1435
    %v1492 = vadd.f32 %v1285, %v1435
    %v1493 = vadd.f32 %v1287, %v1435
    %v1494 = vadd.f32 %v1289, %v1435
    %v1495 = vadd.f32 %v1291, %v1435
    %v1496 = vadd.f32 %v1293, %v1435
    %v1497 = vadd.f32 %v1295, %v1435
    %v1498 = vadd.f32 %v1297, %v1435
    %v1499 = vadd.f32 %v1299, %v1435
    %v1500 = vadd.f32 %v1301, %v1435
    %v1501 = vadd.f32 %v1303, %v1435
    %v1502 = vadd.f32 %v1305, %v1435
    %v1503 = vadd.f32 %v1307, %v1435
    %v1504 = vadd.f32 %v1309, %v1435
    %v1505 = vadd.f32 %v1311, %v1435
    %v1506 = vadd.f32 %v1313, %v1435
    %v1507 = vadd.f32 %v1315, %v1435
    %v1508 = vadd.f32 %v1317, %v1435
    %v1509 = vadd.f32 %v1319, %v1435
    %v1510 = vadd.f32 %v1321, %v1435
    %v1511 = vadd.f32 %v1323, %v1435
    %v1512 = vadd.f32 %v1325, %v1435
    %v1513 = vadd.f32 %v1327, %v1435
    %v1514 = vadd.f32 %v1329, %v1435
    %v1515 = vadd.f32 %v1331, %v1435
    %v1516 = vadd.f32 %v1333, %v1435
    %v1517 = vadd.f32 %v1335, %v1435
    %v1518 = vadd.f32 %v1337, %v1435
    %v1519 = vadd.f32 %v1339, %v1435
    %v1520 = vadd.f32 %v1341, %v1435
    %v1521 = vadd.f32 %v1343, %v1435
    %v1522 = vadd.f32 %v1345, %v1435
    %v1523 = vadd.f32 %v1347, %v1435
    %v1524 = vadd.f32 %v1349, %v1435
    %v1525 = vadd.f32 %v1351, %v1435
    %v1526 = vadd.f32 %v1353, %v1435
    %v1527 = vadd.f32 %v1355, %v1435
    %v1528 = vadd.f32 %v1357, %v1435
    %v1529 = vadd.f32 %v1359, %v1435
    %v1530 = vadd.f32 %v1361, %v1435
    %v1531 = vadd.f32 %v1363, %v1435
    %v1532 = vadd.f32 %v1365, %v1435
    %v1533 = vadd.f32 %v1367, %v1435
    %v1534 = vadd.f32 %v1369, %v1435
    %v1535 = vadd.f32 %v1371, %v1435
    %v1536 = vadd.f32 %v1373, %v1435
    %v1537 = vadd.f32 %v1375, %v1435
    %v1538 = vadd.f32 %v1377, %v1435
    %v1539 = vadd.f32 %v1379, %v1435
    %v1540 = vadd.f32 %v1381, %v1435
    %v1541 = vadd.f32 %v1383, %v1435
    %v1542 = vadd.f32 %v1385, %v1435
    %v1543 = vadd.f32 %v1387, %v1435
    %v1544 = vadd.f32 %v1389, %v1435
    %v1545 = vadd.f32 %v1391, %v1435
    %v1546 = vadd.f32 %v1393, %v1435
    %v1547 = vadd.f32 %v1395, %v1435
    %v1548 = vadd.f32 %v1397, %v1435
    %v1549 = vadd.f32 %v1399, %v1435
    %v1550 = vadd.f32 %v1401, %v1435
    %v1551 = vadd.f32 %v1403, %v1435
    %v1552 = vadd.f32 %v1405, %v1435
    %v1553 = vadd.f32 %v1407, %v1435
    %v1554 = vadd.f32 %v1409, %v1435
    %v1555 = vadd.f32 %v1411, %v1435
    %v1556 = vadd.f32 %v1413, %v1435
    %v1557 = vadd.f32 %v1415, %v1435
    %v1558 = vadd.f32 %v1417, %v1435
    %v1559 = vadd.f32 %v1419, %v1435
    %v1560 = vadd.f32 %v1421, %v1435
    %v1561 = vadd.f32 %v1423, %v1435
    %v1562 = vadd.f32 %v1425, %v1435
    %v1563 = vadd.f32 %v1427, %v1435
    %v1564 = vadd.f32 %v1429, %v1435
    %v1597 = vperm.slane %v1437, 0
    %v1598 = vperm.slane %v1437, 1
    %v1599 = vperm.slane %v1437, 2
    %v1600 = vperm.slane %v1437, 3
    %v1601 = vperm.slane %v1437, 4
    %v1602 = vperm.slane %v1437, 5
    %v1603 = vperm.slane %v1437, 6
    %v1604 = vperm.slane %v1437, 7
    %v1605 = vperm.slane %v1438, 0
    %v1606 = vperm.slane %v1438, 1
    %v1607 = vperm.slane %v1438, 2
    %v1608 = vperm.slane %v1438, 3
    %v1609 = vperm.slane %v1438, 4
    %v1610 = vperm.slane %v1438, 5
    %v1611 = vperm.slane %v1438, 6
    %v1612 = vperm.slane %v1438, 7
    %v1613 = vperm.slane %v1439, 0
    %v1614 = vperm.slane %v1439, 1
    %v1615 = vperm.slane %v1439, 2
    %v1616 = vperm.slane %v1439, 3
    %v1617 = vperm.slane %v1439, 4
    %v1618 = vperm.slane %v1439, 5
    %v1619 = vperm.slane %v1439, 6
    %v1620 = vperm.slane %v1439, 7
    %v1621 = vperm.slane %v1440, 0
    %v1622 = vperm.slane %v1440, 1
    %v1623 = vperm.slane %v1440, 2
    %v1624 = vperm.slane %v1440, 3
    %v1625 = vperm.slane %v1440, 4
    %v1626 = vperm.slane %v1440, 5
    %v1627 = vperm.slane %v1440, 6
    %v1628 = vperm.slane %v1440, 7
    %v1629 = vperm.slane %v1441, 0
    %v1630 = vperm.slane %v1441, 1
    %v1631 = vperm.slane %v1441, 2
    %v1632 = vperm.slane %v1441, 3
    %v1633 = vperm.slane %v1441, 4
    %v1634 = vperm.slane %v1441, 5
    %v1635 = vperm.slane %v1441, 6
    %v1636 = vperm.slane %v1441, 7
    %v1637 = vperm.slane %v1442, 0
    %v1638 = vperm.slane %v1442, 1
    %v1639 = vperm.slane %v1442, 2
    %v1640 = vperm.slane %v1442, 3
    %v1641 = vperm.slane %v1442, 4
    %v1642 = vperm.slane %v1442, 5
    %v1643 = vperm.slane %v1442, 6
    %v1644 = vperm.slane %v1442, 7
    %v1645 = vperm.slane %v1443, 0
    %v1646 = vperm.slane %v1443, 1
    %v1647 = vperm.slane %v1443, 2
    %v1648 = vperm.slane %v1443, 3
    %v1649 = vperm.slane %v1443, 4
    %v1650 = vperm.slane %v1443, 5
    %v1651 = vperm.slane %v1443, 6
    %v1652 = vperm.slane %v1443, 7
    %v1653 = vperm.slane %v1444, 0
    %v1654 = vperm.slane %v1444, 1
    %v1655 = vperm.slane %v1444, 2
    %v1656 = vperm.slane %v1444, 3
    %v1657 = vperm.slane %v1444, 4
    %v1658 = vperm.slane %v1444, 5
    %v1659 = vperm.slane %v1444, 6
    %v1660 = vperm.slane %v1444, 7
    %v1661 = vperm.slane %v1445, 0
    %v1662 = vperm.slane %v1445, 1
    %v1663 = vperm.slane %v1445, 2
    %v1664 = vperm.slane %v1445, 3
    %v1665 = vperm.slane %v1445, 4
    %v1666 = vperm.slane %v1445, 5
    %v1667 = vperm.slane %v1445, 6
    %v1668 = vperm.slane %v1445, 7
    %v1669 = vperm.slane %v1446, 0
    %v1670 = vperm.slane %v1446, 1
    %v1671 = vperm.slane %v1446, 2
    %v1672 = vperm.slane %v1446, 3
    %v1673 = vperm.slane %v1446, 4
    %v1674 = vperm.slane %v1446, 5
    %v1675 = vperm.slane %v1446, 6
    %v1676 = vperm.slane %v1446, 7
    %v1677 = vperm.slane %v1447, 0
    %v1678 = vperm.slane %v1447, 1
    %v1679 = vperm.slane %v1447, 2
    %v1680 = vperm.slane %v1447, 3
    %v1681 = vperm.slane %v1447, 4
    %v1682 = vperm.slane %v1447, 5
    %v1683 = vperm.slane %v1447, 6
    %v1684 = vperm.slane %v1447, 7
    %v1685 = vperm.slane %v1448, 0
    %v1686 = vperm.slane %v1448, 1
    %v1687 = vperm.slane %v1448, 2
    %v1688 = vperm.slane %v1448, 3
    %v1689 = vperm.slane %v1448, 4
    %v1690 = vperm.slane %v1448, 5
    %v1691 = vperm.slane %v1448, 6
    %v1692 = vperm.slane %v1448, 7
    %v1693 = vperm.slane %v1449, 0
    %v1694 = vperm.slane %v1449, 1
    %v1695 = vperm.slane %v1449, 2
    %v1696 = vperm.slane %v1449, 3
    %v1697 = vperm.slane %v1449, 4
    %v1698 = vperm.slane %v1449, 5
    %v1699 = vperm.slane %v1449, 6
    %v1700 = vperm.slane %v1449, 7
    %v1701 = vperm.slane %v1450, 0
    %v1702 = vperm.slane %v1450, 1
    %v1703 = vperm.slane %v1450, 2
    %v1704 = vperm.slane %v1450, 3
    %v1705 = vperm.slane %v1450, 4
    %v1706 = vperm.slane %v1450, 5
    %v1707 = vperm.slane %v1450, 6
    %v1708 = vperm.slane %v1450, 7
    %v1709 = vperm.slane %v1451, 0
    %v1710 = vperm.slane %v1451, 1
    %v1711 = vperm.slane %v1451, 2
    %v1712 = vperm.slane %v1451, 3
    %v1713 = vperm.slane %v1451, 4
    %v1714 = vperm.slane %v1451, 5
    %v1715 = vperm.slane %v1451, 6
    %v1716 = vperm.slane %v1451, 7
    %v1717 = vperm.slane %v1452, 0
    %v1718 = vperm.slane %v1452, 1
    %v1719 = vperm.slane %v1452, 2
    %v1720 = vperm.slane %v1452, 3
    %v1721 = vperm.slane %v1452, 4
    %v1722 = vperm.slane %v1452, 5
    %v1723 = vperm.slane %v1452, 6
    %v1724 = vperm.slane %v1452, 7
    %v1725 = vperm.slane %v1453, 0
    %v1726 = vperm.slane %v1453, 1
    %v1727 = vperm.slane %v1453, 2
    %v1728 = vperm.slane %v1453, 3
    %v1729 = vperm.slane %v1453, 4
    %v1730 = vperm.slane %v1453, 5
    %v1731 = vperm.slane %v1453, 6
    %v1732 = vperm.slane %v1453, 7
    %v1733 = vperm.slane %v1454, 0
    %v1734 = vperm.slane %v1454, 1
    %v1735 = vperm.slane %v1454, 2
    %v1736 = vperm.slane %v1454, 3
    %v1737 = vperm.slane %v1454, 4
    %v1738 = vperm.slane %v1454, 5
    %v1739 = vperm.slane %v1454, 6
    %v1740 = vperm.slane %v1454, 7
    %v1741 = vperm.slane %v1455, 0
    %v1742 = vperm.slane %v1455, 1
    %v1743 = vperm.slane %v1455, 2
    %v1744 = vperm.slane %v1455, 3
    %v1745 = vperm.slane %v1455, 4
    %v1746 = vperm.slane %v1455, 5
    %v1747 = vperm.slane %v1455, 6
    %v1748 = vperm.slane %v1455, 7
    %v1749 = vperm.slane %v1456, 0
    %v1750 = vperm.slane %v1456, 1
    %v1751 = vperm.slane %v1456, 2
    %v1752 = vperm.slane %v1456, 3
    %v1753 = vperm.slane %v1456, 4
    %v1754 = vperm.slane %v1456, 5
    %v1755 = vperm.slane %v1456, 6
    %v1756 = vperm.slane %v1456, 7
    %v1757 = vperm.slane %v1457, 0
    %v1758 = vperm.slane %v1457, 1
    %v1759 = vperm.slane %v1457, 2
    %v1760 = vperm.slane %v1457, 3
    %v1761 = vperm.slane %v1457, 4
    %v1762 = vperm.slane %v1457, 5
    %v1763 = vperm.slane %v1457, 6
    %v1764 = vperm.slane %v1457, 7
    %v1765 = vperm.slane %v1458, 0
    %v1766 = vperm.slane %v1458, 1
    %v1767 = vperm.slane %v1458, 2
    %v1768 = vperm.slane %v1458, 3
    %v1769 = vperm.slane %v1458, 4
    %v1770 = vperm.slane %v1458, 5
    %v1771 = vperm.slane %v1458, 6
    %v1772 = vperm.slane %v1458, 7
    %v1773 = vperm.slane %v1459, 0
    %v1774 = vperm.slane %v1459, 1
    %v1775 = vperm.slane %v1459, 2
    %v1776 = vperm.slane %v1459, 3
    %v1777 = vperm.slane %v1459, 4
    %v1778 = vperm.slane %v1459, 5
    %v1779 = vperm.slane %v1459, 6
    %v1780 = vperm.slane %v1459, 7
    %v1781 = vperm.slane %v1460, 0
    %v1782 = vperm.slane %v1460, 1
    %v1783 = vperm.slane %v1460, 2
    %v1784 = vperm.slane %v1460, 3
    %v1785 = vperm.slane %v1460, 4
    %v1786 = vperm.slane %v1460, 5
    %v1787 = vperm.slane %v1460, 6
    %v1788 = vperm.slane %v1460, 7
    %v1789 = vperm.slane %v1461, 0
    %v1790 = vperm.slane %v1461, 1
    %v1791 = vperm.slane %v1461, 2
    %v1792 = vperm.slane %v1461, 3
    %v1793 = vperm.slane %v1461, 4
    %v1794 = vperm.slane %v1461, 5
    %v1795 = vperm.slane %v1461, 6
    %v1796 = vperm.slane %v1461, 7
    %v1797 = vperm.slane %v1462, 0
    %v1798 = vperm.slane %v1462, 1
    %v1799 = vperm.slane %v1462, 2
    %v1800 = vperm.slane %v1462, 3
    %v1801 = vperm.slane %v1462, 4
    %v1802 = vperm.slane %v1462, 5
    %v1803 = vperm.slane %v1462, 6
    %v1804 = vperm.slane %v1462, 7
    %v1805 = vperm.slane %v1463, 0
    %v1806 = vperm.slane %v1463, 1
    %v1807 = vperm.slane %v1463, 2
    %v1808 = vperm.slane %v1463, 3
    %v1809 = vperm.slane %v1463, 4
    %v1810 = vperm.slane %v1463, 5
    %v1811 = vperm.slane %v1463, 6
    %v1812 = vperm.slane %v1463, 7
    %v1813 = vperm.slane %v1464, 0
    %v1814 = vperm.slane %v1464, 1
    %v1815 = vperm.slane %v1464, 2
    %v1816 = vperm.slane %v1464, 3
    %v1817 = vperm.slane %v1464, 4
    %v1818 = vperm.slane %v1464, 5
    %v1819 = vperm.slane %v1464, 6
    %v1820 = vperm.slane %v1464, 7
    %v1821 = vperm.slane %v1465, 0
    %v1822 = vperm.slane %v1465, 1
    %v1823 = vperm.slane %v1465, 2
    %v1824 = vperm.slane %v1465, 3
    %v1825 = vperm.slane %v1465, 4
    %v1826 = vperm.slane %v1465, 5
    %v1827 = vperm.slane %v1465, 6
    %v1828 = vperm.slane %v1465, 7
    %v1829 = vperm.slane %v1466, 0
    %v1830 = vperm.slane %v1466, 1
    %v1831 = vperm.slane %v1466, 2
    %v1832 = vperm.slane %v1466, 3
    %v1833 = vperm.slane %v1466, 4
    %v1834 = vperm.slane %v1466, 5
    %v1835 = vperm.slane %v1466, 6
    %v1836 = vperm.slane %v1466, 7
    %v1837 = vperm.slane %v1467, 0
    %v1838 = vperm.slane %v1467, 1
    %v1839 = vperm.slane %v1467, 2
    %v1840 = vperm.slane %v1467, 3
    %v1841 = vperm.slane %v1467, 4
    %v1842 = vperm.slane %v1467, 5
    %v1843 = vperm.slane %v1467, 6
    %v1844 = vperm.slane %v1467, 7
    %v1845 = vperm.slane %v1468, 0
    %v1846 = vperm.slane %v1468, 1
    %v1847 = vperm.slane %v1468, 2
    %v1848 = vperm.slane %v1468, 3
    %v1849 = vperm.slane %v1468, 4
    %v1850 = vperm.slane %v1468, 5
    %v1851 = vperm.slane %v1468, 6
    %v1852 = vperm.slane %v1468, 7
    %1853 = vst [vmem:[#allocation1] ss:$9 sm:$0xff] %v1597
    %s1854 = scalar_lea.vmem [#allocation1], 1
    %1855 = vst [vmem:[%s1854] ss:$9 sm:$0xff] %v1598
    %s1856 = scalar_lea.vmem [#allocation1], 2
    %1857 = vst [vmem:[%s1856] ss:$9 sm:$0xff] %v1599
    %s1858 = scalar_lea.vmem [#allocation1], 3
    %1859 = vst [vmem:[%s1858] ss:$9 sm:$0xff] %v1600
    %s1860 = scalar_lea.vmem [#allocation1], 4
    %1861 = vst [vmem:[%s1860] ss:$9 sm:$0xff] %v1601
    %s1862 = scalar_lea.vmem [#allocation1], 5
    %1863 = vst [vmem:[%s1862] ss:$9 sm:$0xff] %v1602
    %s1864 = scalar_lea.vmem [#allocation1], 6
    %1865 = vst [vmem:[%s1864] ss:$9 sm:$0xff] %v1603
    %s1866 = scalar_lea.vmem [#allocation1], 7
    %1867 = vst [vmem:[%s1866] ss:$9 sm:$0xff] %v1604
    %v1868 = vld [vmem:[#allocation1] sm:$0xff]
    %1869 = vst [vmem:[#allocation1] ss:$9 sm:$0xff] %v1605
    %1870 = vst [vmem:[%s1854] ss:$9 sm:$0xff] %v1606
    %1871 = vst [vmem:[%s1856] ss:$9 sm:$0xff] %v1607
    %1872 = vst [vmem:[%s1858] ss:$9 sm:$0xff] %v1608
    %1873 = vst [vmem:[%s1860] ss:$9 sm:$0xff] %v1609
    %1874 = vst [vmem:[%s1862] ss:$9 sm:$0xff] %v1610
    %1875 = vst [vmem:[%s1864] ss:$9 sm:$0xff] %v1611
    %1876 = vst [vmem:[%s1866] ss:$9 sm:$0xff] %v1612
    %v1877 = vld [vmem:[#allocation1] sm:$0xff]
    %1878 = vst [vmem:[#allocation1] ss:$9 sm:$0xff] %v1613
    %1879 = vst [vmem:[%s1854] ss:$9 sm:$0xff] %v1614
    %1880 = vst [vmem:[%s1856] ss:$9 sm:$0xff] %v1615
    %1881 = vst [vmem:[%s1858] ss:$9 sm:$0xff] %v1616
    %1882 = vst [vmem:[%s1860] ss:$9 sm:$0xff] %v1617
    %1883 = vst [vmem:[%s1862] ss:$9 sm:$0xff] %v1618
    %1884 = vst [vmem:[%s1864] ss:$9 sm:$0xff] %v1619
    %1885 = vst [vmem:[%s1866] ss:$9 sm:$0xff] %v1620
    %v1886 = vld [vmem:[#allocation1] sm:$0xff]
    %1887 = vst [vmem:[#allocation1] ss:$9 sm:$0xff] %v1621
    %1888 = vst [vmem:[%s1854] ss:$9 sm:$0xff] %v1622
    %1889 = vst [vmem:[%s1856] ss:$9 sm:$0xff] %v1623
    %1890 = vst [vmem:[%s1858] ss:$9 sm:$0xff] %v1624
    %1891 = vst [vmem:[%s1860] ss:$9 sm:$0xff] %v1625
    %1892 = vst [vmem:[%s1862] ss:$9 sm:$0xff] %v1626
    %1893 = vst [vmem:[%s1864] ss:$9 sm:$0xff] %v1627
    %1894 = vst [vmem:[%s1866] ss:$9 sm:$0xff] %v1628
    %v1895 = vld [vmem:[#allocation1] sm:$0xff]
    %1896 = vst [vmem:[#allocation1] ss:$9 sm:$0xff] %v1629
    %1897 = vst [vmem:[%s1854] ss:$9 sm:$0xff] %v1630
    %1898 = vst [vmem:[%s1856] ss:$9 sm:$0xff] %v1631
    %1899 = vst [vmem:[%s1858] ss:$9 sm:$0xff] %v1632
    %1900 = vst [vmem:[%s1860] ss:$9 sm:$0xff] %v1633
    %1901 = vst [vmem:[%s1862] ss:$9 sm:$0xff] %v1634
    %1902 = vst [vmem:[%s1864] ss:$9 sm:$0xff] %v1635
    %1903 = vst [vmem:[%s1866] ss:$9 sm:$0xff] %v1636
    %v1904 = vld [vmem:[#allocation1] sm:$0xff]
    %1905 = vst [vmem:[#allocation1] ss:$9 sm:$0xff] %v1637
    %1906 = vst [vmem:[%s1854] ss:$9 sm:$0xff] %v1638
    %1907 = vst [vmem:[%s1856] ss:$9 sm:$0xff] %v1639
    %1908 = vst [vmem:[%s1858] ss:$9 sm:$0xff] %v1640
    %1909 = vst [vmem:[%s1860] ss:$9 sm:$0xff] %v1641
    %1910 = vst [vmem:[%s1862] ss:$9 sm:$0xff] %v1642
    %1911 = vst [vmem:[%s1864] ss:$9 sm:$0xff] %v1643
    %1912 = vst [vmem:[%s1866] ss:$9 sm:$0xff] %v1644
    %v1913 = vld [vmem:[#allocation1] sm:$0xff]
    %1914 = vst [vmem:[#allocation1] ss:$9 sm:$0xff] %v1645
    %1915 = vst [vmem:[%s1854] ss:$9 sm:$0xff] %v1646
    %1916 = vst [vmem:[%s1856] ss:$9 sm:$0xff] %v1647
    %1917 = vst [vmem:[%s1858] ss:$9 sm:$0xff] %v1648
    %1918 = vst [vmem:[%s1860] ss:$9 sm:$0xff] %v1649
    %1919 = vst [vmem:[%s1862] ss:$9 sm:$0xff] %v1650
    %1920 = vst [vmem:[%s1864] ss:$9 sm:$0xff] %v1651
    %1921 = vst [vmem:[%s1866] ss:$9 sm:$0xff] %v1652
    %v1922 = vld [vmem:[#allocation1] sm:$0xff]
    %1923 = vst [vmem:[#allocation1] ss:$9 sm:$0xff] %v1653
    %1924 = vst [vmem:[%s1854] ss:$9 sm:$0xff] %v1654
    %1925 = vst [vmem:[%s1856] ss:$9 sm:$0xff] %v1655
    %1926 = vst [vmem:[%s1858] ss:$9 sm:$0xff] %v1656
    %1927 = vst [vmem:[%s1860] ss:$9 sm:$0xff] %v1657
    %1928 = vst [vmem:[%s1862] ss:$9 sm:$0xff] %v1658
    %1929 = vst [vmem:[%s1864] ss:$9 sm:$0xff] %v1659
    %1930 = vst [vmem:[%s1866] ss:$9 sm:$0xff] %v1660
    %v1931 = vld [vmem:[#allocation1] sm:$0xff]
    %1932 = vst [vmem:[#allocation1] ss:$9 sm:$0xff] %v1661
    %1933 = vst [vmem:[%s1854] ss:$9 sm:$0xff] %v1662
    %1934 = vst [vmem:[%s1856] ss:$9 sm:$0xff] %v1663
    %1935 = vst [vmem:[%s1858] ss:$9 sm:$0xff] %v1664
    %1936 = vst [vmem:[%s1860] ss:$9 sm:$0xff] %v1665
    %1937 = vst [vmem:[%s1862] ss:$9 sm:$0xff] %v1666
    %1938 = vst [vmem:[%s1864] ss:$9 sm:$0xff] %v1667
    %1939 = vst [vmem:[%s1866] ss:$9 sm:$0xff] %v1668
    %v1940 = vld [vmem:[#allocation1] sm:$0xff]
    %1941 = vst [vmem:[#allocation1] ss:$9 sm:$0xff] %v1669
    %1942 = vst [vmem:[%s1854] ss:$9 sm:$0xff] %v1670
    %1943 = vst [vmem:[%s1856] ss:$9 sm:$0xff] %v1671
    %1944 = vst [vmem:[%s1858] ss:$9 sm:$0xff] %v1672
    %1945 = vst [vmem:[%s1860] ss:$9 sm:$0xff] %v1673
    %1946 = vst [vmem:[%s1862] ss:$9 sm:$0xff] %v1674
    %1947 = vst [vmem:[%s1864] ss:$9 sm:$0xff] %v1675
    %1948 = vst [vmem:[%s1866] ss:$9 sm:$0xff] %v1676
    %v1949 = vld [vmem:[#allocation1] sm:$0xff]
    %1950 = vst [vmem:[#allocation1] ss:$9 sm:$0xff] %v1677
    %1951 = vst [vmem:[%s1854] ss:$9 sm:$0xff] %v1678
    %1952 = vst [vmem:[%s1856] ss:$9 sm:$0xff] %v1679
    %1953 = vst [vmem:[%s1858] ss:$9 sm:$0xff] %v1680
    %1954 = vst [vmem:[%s1860] ss:$9 sm:$0xff] %v1681
    %1955 = vst [vmem:[%s1862] ss:$9 sm:$0xff] %v1682
    %1956 = vst [vmem:[%s1864] ss:$9 sm:$0xff] %v1683
    %1957 = vst [vmem:[%s1866] ss:$9 sm:$0xff] %v1684
    %v1958 = vld [vmem:[#allocation1] sm:$0xff]
    %1959 = vst [vmem:[#allocation1] ss:$9 sm:$0xff] %v1685
    %1960 = vst [vmem:[%s1854] ss:$9 sm:$0xff] %v1686
    %1961 = vst [vmem:[%s1856] ss:$9 sm:$0xff] %v1687
    %1962 = vst [vmem:[%s1858] ss:$9 sm:$0xff] %v1688
    %1963 = vst [vmem:[%s1860] ss:$9 sm:$0xff] %v1689
    %1964 = vst [vmem:[%s1862] ss:$9 sm:$0xff] %v1690
    %1965 = vst [vmem:[%s1864] ss:$9 sm:$0xff] %v1691
    %1966 = vst [vmem:[%s1866] ss:$9 sm:$0xff] %v1692
    %v1967 = vld [vmem:[#allocation1] sm:$0xff]
    %1968 = vst [vmem:[#allocation1] ss:$9 sm:$0xff] %v1693
    %1969 = vst [vmem:[%s1854] ss:$9 sm:$0xff] %v1694
    %1970 = vst [vmem:[%s1856] ss:$9 sm:$0xff] %v1695
    %1971 = vst [vmem:[%s1858] ss:$9 sm:$0xff] %v1696
    %1972 = vst [vmem:[%s1860] ss:$9 sm:$0xff] %v1697
    %1973 = vst [vmem:[%s1862] ss:$9 sm:$0xff] %v1698
    %1974 = vst [vmem:[%s1864] ss:$9 sm:$0xff] %v1699
    %1975 = vst [vmem:[%s1866] ss:$9 sm:$0xff] %v1700
    %v1976 = vld [vmem:[#allocation1] sm:$0xff]
    %1977 = vst [vmem:[#allocation1] ss:$9 sm:$0xff] %v1701
    %1978 = vst [vmem:[%s1854] ss:$9 sm:$0xff] %v1702
    %1979 = vst [vmem:[%s1856] ss:$9 sm:$0xff] %v1703
    %1980 = vst [vmem:[%s1858] ss:$9 sm:$0xff] %v1704
    %1981 = vst [vmem:[%s1860] ss:$9 sm:$0xff] %v1705
    %1982 = vst [vmem:[%s1862] ss:$9 sm:$0xff] %v1706
    %1983 = vst [vmem:[%s1864] ss:$9 sm:$0xff] %v1707
    %1984 = vst [vmem:[%s1866] ss:$9 sm:$0xff] %v1708
    %v1985 = vld [vmem:[#allocation1] sm:$0xff]
    %1986 = vst [vmem:[#allocation1] ss:$9 sm:$0xff] %v1709
    %1987 = vst [vmem:[%s1854] ss:$9 sm:$0xff] %v1710
    %1988 = vst [vmem:[%s1856] ss:$9 sm:$0xff] %v1711
    %1989 = vst [vmem:[%s1858] ss:$9 sm:$0xff] %v1712
    %1990 = vst [vmem:[%s1860] ss:$9 sm:$0xff] %v1713
    %1991 = vst [vmem:[%s1862] ss:$9 sm:$0xff] %v1714
    %1992 = vst [vmem:[%s1864] ss:$9 sm:$0xff] %v1715
    %1993 = vst [vmem:[%s1866] ss:$9 sm:$0xff] %v1716
    %v1994 = vld [vmem:[#allocation1] sm:$0xff]
    %1995 = vst [vmem:[#allocation1] ss:$9 sm:$0xff] %v1717
    %1996 = vst [vmem:[%s1854] ss:$9 sm:$0xff] %v1718
    %1997 = vst [vmem:[%s1856] ss:$9 sm:$0xff] %v1719
    %1998 = vst [vmem:[%s1858] ss:$9 sm:$0xff] %v1720
    %1999 = vst [vmem:[%s1860] ss:$9 sm:$0xff] %v1721
    %2000 = vst [vmem:[%s1862] ss:$9 sm:$0xff] %v1722
    %2001 = vst [vmem:[%s1864] ss:$9 sm:$0xff] %v1723
    %2002 = vst [vmem:[%s1866] ss:$9 sm:$0xff] %v1724
    %v2003 = vld [vmem:[#allocation1] sm:$0xff]
    %2004 = vst [vmem:[#allocation1] ss:$9 sm:$0xff] %v1725
    %2005 = vst [vmem:[%s1854] ss:$9 sm:$0xff] %v1726
    %2006 = vst [vmem:[%s1856] ss:$9 sm:$0xff] %v1727
    %2007 = vst [vmem:[%s1858] ss:$9 sm:$0xff] %v1728
    %2008 = vst [vmem:[%s1860] ss:$9 sm:$0xff] %v1729
    %2009 = vst [vmem:[%s1862] ss:$9 sm:$0xff] %v1730
    %2010 = vst [vmem:[%s1864] ss:$9 sm:$0xff] %v1731
    %2011 = vst [vmem:[%s1866] ss:$9 sm:$0xff] %v1732
    %v2012 = vld [vmem:[#allocation1] sm:$0xff]
    %2013 = vst [vmem:[#allocation1] ss:$9 sm:$0xff] %v1733
    %2014 = vst [vmem:[%s1854] ss:$9 sm:$0xff] %v1734
    %2015 = vst [vmem:[%s1856] ss:$9 sm:$0xff] %v1735
    %2016 = vst [vmem:[%s1858] ss:$9 sm:$0xff] %v1736
    %2017 = vst [vmem:[%s1860] ss:$9 sm:$0xff] %v1737
    %2018 = vst [vmem:[%s1862] ss:$9 sm:$0xff] %v1738
    %2019 = vst [vmem:[%s1864] ss:$9 sm:$0xff] %v1739
    %2020 = vst [vmem:[%s1866] ss:$9 sm:$0xff] %v1740
    %v2021 = vld [vmem:[#allocation1] sm:$0xff]
    %2022 = vst [vmem:[#allocation1] ss:$9 sm:$0xff] %v1741
    %2023 = vst [vmem:[%s1854] ss:$9 sm:$0xff] %v1742
    %2024 = vst [vmem:[%s1856] ss:$9 sm:$0xff] %v1743
    %2025 = vst [vmem:[%s1858] ss:$9 sm:$0xff] %v1744
    %2026 = vst [vmem:[%s1860] ss:$9 sm:$0xff] %v1745
    %2027 = vst [vmem:[%s1862] ss:$9 sm:$0xff] %v1746
    %2028 = vst [vmem:[%s1864] ss:$9 sm:$0xff] %v1747
    %2029 = vst [vmem:[%s1866] ss:$9 sm:$0xff] %v1748
    %v2030 = vld [vmem:[#allocation1] sm:$0xff]
    %2031 = vst [vmem:[#allocation1] ss:$9 sm:$0xff] %v1749
    %2032 = vst [vmem:[%s1854] ss:$9 sm:$0xff] %v1750
    %2033 = vst [vmem:[%s1856] ss:$9 sm:$0xff] %v1751
    %2034 = vst [vmem:[%s1858] ss:$9 sm:$0xff] %v1752
    %2035 = vst [vmem:[%s1860] ss:$9 sm:$0xff] %v1753
    %2036 = vst [vmem:[%s1862] ss:$9 sm:$0xff] %v1754
    %2037 = vst [vmem:[%s1864] ss:$9 sm:$0xff] %v1755
    %2038 = vst [vmem:[%s1866] ss:$9 sm:$0xff] %v1756
    %v2039 = vld [vmem:[#allocation1] sm:$0xff]
    %2040 = vst [vmem:[#allocation1] ss:$9 sm:$0xff] %v1757
    %2041 = vst [vmem:[%s1854] ss:$9 sm:$0xff] %v1758
    %2042 = vst [vmem:[%s1856] ss:$9 sm:$0xff] %v1759
    %2043 = vst [vmem:[%s1858] ss:$9 sm:$0xff] %v1760
    %2044 = vst [vmem:[%s1860] ss:$9 sm:$0xff] %v1761
    %2045 = vst [vmem:[%s1862] ss:$9 sm:$0xff] %v1762
    %2046 = vst [vmem:[%s1864] ss:$9 sm:$0xff] %v1763
    %2047 = vst [vmem:[%s1866] ss:$9 sm:$0xff] %v1764
    %v2048 = vld [vmem:[#allocation1] sm:$0xff]
    %2049 = vst [vmem:[#allocation1] ss:$9 sm:$0xff] %v1765
    %2050 = vst [vmem:[%s1854] ss:$9 sm:$0xff] %v1766
    %2051 = vst [vmem:[%s1856] ss:$9 sm:$0xff] %v1767
    %2052 = vst [vmem:[%s1858] ss:$9 sm:$0xff] %v1768
    %2053 = vst [vmem:[%s1860] ss:$9 sm:$0xff] %v1769
    %2054 = vst [vmem:[%s1862] ss:$9 sm:$0xff] %v1770
    %2055 = vst [vmem:[%s1864] ss:$9 sm:$0xff] %v1771
    %2056 = vst [vmem:[%s1866] ss:$9 sm:$0xff] %v1772
    %v2057 = vld [vmem:[#allocation1] sm:$0xff]
    %2058 = vst [vmem:[#allocation1] ss:$9 sm:$0xff] %v1773
    %2059 = vst [vmem:[%s1854] ss:$9 sm:$0xff] %v1774
    %2060 = vst [vmem:[%s1856] ss:$9 sm:$0xff] %v1775
    %2061 = vst [vmem:[%s1858] ss:$9 sm:$0xff] %v1776
    %2062 = vst [vmem:[%s1860] ss:$9 sm:$0xff] %v1777
    %2063 = vst [vmem:[%s1862] ss:$9 sm:$0xff] %v1778
    %2064 = vst [vmem:[%s1864] ss:$9 sm:$0xff] %v1779
    %2065 = vst [vmem:[%s1866] ss:$9 sm:$0xff] %v1780
    %v2066 = vld [vmem:[#allocation1] sm:$0xff]
    %2067 = vst [vmem:[#allocation1] ss:$9 sm:$0xff] %v1781
    %2068 = vst [vmem:[%s1854] ss:$9 sm:$0xff] %v1782
    %2069 = vst [vmem:[%s1856] ss:$9 sm:$0xff] %v1783
    %2070 = vst [vmem:[%s1858] ss:$9 sm:$0xff] %v1784
    %2071 = vst [vmem:[%s1860] ss:$9 sm:$0xff] %v1785
    %2072 = vst [vmem:[%s1862] ss:$9 sm:$0xff] %v1786
    %2073 = vst [vmem:[%s1864] ss:$9 sm:$0xff] %v1787
    %2074 = vst [vmem:[%s1866] ss:$9 sm:$0xff] %v1788
    %v2075 = vld [vmem:[#allocation1] sm:$0xff]
    %2076 = vst [vmem:[#allocation1] ss:$9 sm:$0xff] %v1789
    %2077 = vst [vmem:[%s1854] ss:$9 sm:$0xff] %v1790
    %2078 = vst [vmem:[%s1856] ss:$9 sm:$0xff] %v1791
    %2079 = vst [vmem:[%s1858] ss:$9 sm:$0xff] %v1792
    %2080 = vst [vmem:[%s1860] ss:$9 sm:$0xff] %v1793
    %2081 = vst [vmem:[%s1862] ss:$9 sm:$0xff] %v1794
    %2082 = vst [vmem:[%s1864] ss:$9 sm:$0xff] %v1795
    %2083 = vst [vmem:[%s1866] ss:$9 sm:$0xff] %v1796
    %v2084 = vld [vmem:[#allocation1] sm:$0xff]
    %2085 = vst [vmem:[#allocation1] ss:$9 sm:$0xff] %v1797
    %2086 = vst [vmem:[%s1854] ss:$9 sm:$0xff] %v1798
    %2087 = vst [vmem:[%s1856] ss:$9 sm:$0xff] %v1799
    %2088 = vst [vmem:[%s1858] ss:$9 sm:$0xff] %v1800
    %2089 = vst [vmem:[%s1860] ss:$9 sm:$0xff] %v1801
    %2090 = vst [vmem:[%s1862] ss:$9 sm:$0xff] %v1802
    %2091 = vst [vmem:[%s1864] ss:$9 sm:$0xff] %v1803
    %2092 = vst [vmem:[%s1866] ss:$9 sm:$0xff] %v1804
    %v2093 = vld [vmem:[#allocation1] sm:$0xff]
    %2094 = vst [vmem:[#allocation1] ss:$9 sm:$0xff] %v1805
    %2095 = vst [vmem:[%s1854] ss:$9 sm:$0xff] %v1806
    %2096 = vst [vmem:[%s1856] ss:$9 sm:$0xff] %v1807
    %2097 = vst [vmem:[%s1858] ss:$9 sm:$0xff] %v1808
    %2098 = vst [vmem:[%s1860] ss:$9 sm:$0xff] %v1809
    %2099 = vst [vmem:[%s1862] ss:$9 sm:$0xff] %v1810
    %2100 = vst [vmem:[%s1864] ss:$9 sm:$0xff] %v1811
    %2101 = vst [vmem:[%s1866] ss:$9 sm:$0xff] %v1812
    %v2102 = vld [vmem:[#allocation1] sm:$0xff]
    %2103 = vst [vmem:[#allocation1] ss:$9 sm:$0xff] %v1813
    %2104 = vst [vmem:[%s1854] ss:$9 sm:$0xff] %v1814
    %2105 = vst [vmem:[%s1856] ss:$9 sm:$0xff] %v1815
    %2106 = vst [vmem:[%s1858] ss:$9 sm:$0xff] %v1816
    %2107 = vst [vmem:[%s1860] ss:$9 sm:$0xff] %v1817
    %2108 = vst [vmem:[%s1862] ss:$9 sm:$0xff] %v1818
    %2109 = vst [vmem:[%s1864] ss:$9 sm:$0xff] %v1819
    %2110 = vst [vmem:[%s1866] ss:$9 sm:$0xff] %v1820
    %v2111 = vld [vmem:[#allocation1] sm:$0xff]
    %2112 = vst [vmem:[#allocation1] ss:$9 sm:$0xff] %v1821
    %2113 = vst [vmem:[%s1854] ss:$9 sm:$0xff] %v1822
    %2114 = vst [vmem:[%s1856] ss:$9 sm:$0xff] %v1823
    %2115 = vst [vmem:[%s1858] ss:$9 sm:$0xff] %v1824
    %2116 = vst [vmem:[%s1860] ss:$9 sm:$0xff] %v1825
    %2117 = vst [vmem:[%s1862] ss:$9 sm:$0xff] %v1826
    %2118 = vst [vmem:[%s1864] ss:$9 sm:$0xff] %v1827
    %2119 = vst [vmem:[%s1866] ss:$9 sm:$0xff] %v1828
    %v2120 = vld [vmem:[#allocation1] sm:$0xff]
    %2121 = vst [vmem:[#allocation1] ss:$9 sm:$0xff] %v1829
    %2122 = vst [vmem:[%s1854] ss:$9 sm:$0xff] %v1830
    %2123 = vst [vmem:[%s1856] ss:$9 sm:$0xff] %v1831
    %2124 = vst [vmem:[%s1858] ss:$9 sm:$0xff] %v1832
    %2125 = vst [vmem:[%s1860] ss:$9 sm:$0xff] %v1833
    %2126 = vst [vmem:[%s1862] ss:$9 sm:$0xff] %v1834
    %2127 = vst [vmem:[%s1864] ss:$9 sm:$0xff] %v1835
    %2128 = vst [vmem:[%s1866] ss:$9 sm:$0xff] %v1836
    %v2129 = vld [vmem:[#allocation1] sm:$0xff]
    %2130 = vst [vmem:[#allocation1] ss:$9 sm:$0xff] %v1837
    %2131 = vst [vmem:[%s1854] ss:$9 sm:$0xff] %v1838
    %2132 = vst [vmem:[%s1856] ss:$9 sm:$0xff] %v1839
    %2133 = vst [vmem:[%s1858] ss:$9 sm:$0xff] %v1840
    %2134 = vst [vmem:[%s1860] ss:$9 sm:$0xff] %v1841
    %2135 = vst [vmem:[%s1862] ss:$9 sm:$0xff] %v1842
    %2136 = vst [vmem:[%s1864] ss:$9 sm:$0xff] %v1843
    %2137 = vst [vmem:[%s1866] ss:$9 sm:$0xff] %v1844
    %v2138 = vld [vmem:[#allocation1] sm:$0xff]
    %2139 = vst [vmem:[#allocation1] ss:$9 sm:$0xff] %v1845
    %2140 = vst [vmem:[%s1854] ss:$9 sm:$0xff] %v1846
    %2141 = vst [vmem:[%s1856] ss:$9 sm:$0xff] %v1847
    %2142 = vst [vmem:[%s1858] ss:$9 sm:$0xff] %v1848
    %2143 = vst [vmem:[%s1860] ss:$9 sm:$0xff] %v1849
    %2144 = vst [vmem:[%s1862] ss:$9 sm:$0xff] %v1850
    %2145 = vst [vmem:[%s1864] ss:$9 sm:$0xff] %v1851
    %2146 = vst [vmem:[%s1866] ss:$9 sm:$0xff] %v1852
    %v2147 = vld [vmem:[#allocation1] sm:$0xff]
    %2148 = vset.pattern.permute.xlu0 0
    %2149 = vperm.xlu0 %2148, %v1868
    %v2150 = vpop.permute.xlu0 %2149
    %2151 = vset.pattern.permute.xlu0 0
    %2152 = vperm.xlu0 %2151, %v1877
    %v2153 = vpop.permute.xlu0 %2152
    %2154 = vset.pattern.permute.xlu0 0
    %2155 = vperm.xlu0 %2154, %v1886
    %v2156 = vpop.permute.xlu0 %2155
    %2157 = vset.pattern.permute.xlu0 0
    %2158 = vperm.xlu0 %2157, %v1895
    %v2159 = vpop.permute.xlu0 %2158
    %2160 = vset.pattern.permute.xlu0 0
    %2161 = vperm.xlu0 %2160, %v1904
    %v2162 = vpop.permute.xlu0 %2161
    %2163 = vset.pattern.permute.xlu0 0
    %2164 = vperm.xlu0 %2163, %v1913
    %v2165 = vpop.permute.xlu0 %2164
    %2166 = vset.pattern.permute.xlu0 0
    %2167 = vperm.xlu0 %2166, %v1922
    %v2168 = vpop.permute.xlu0 %2167
    %2169 = vset.pattern.permute.xlu0 0
    %2170 = vperm.xlu0 %2169, %v1931
    %v2171 = vpop.permute.xlu0 %2170
    %2172 = vset.pattern.permute.xlu0 0
    %2173 = vperm.xlu0 %2172, %v1940
    %v2174 = vpop.permute.xlu0 %2173
    %2175 = vset.pattern.permute.xlu0 0
    %2176 = vperm.xlu0 %2175, %v1949
    %v2177 = vpop.permute.xlu0 %2176
    %2178 = vset.pattern.permute.xlu0 0
    %2179 = vperm.xlu0 %2178, %v1958
    %v2180 = vpop.permute.xlu0 %2179
    %2181 = vset.pattern.permute.xlu0 0
    %2182 = vperm.xlu0 %2181, %v1967
    %v2183 = vpop.permute.xlu0 %2182
    %2184 = vset.pattern.permute.xlu0 0
    %2185 = vperm.xlu0 %2184, %v1976
    %v2186 = vpop.permute.xlu0 %2185
    %2187 = vset.pattern.permute.xlu0 0
    %2188 = vperm.xlu0 %2187, %v1985
    %v2189 = vpop.permute.xlu0 %2188
    %2190 = vset.pattern.permute.xlu0 0
    %2191 = vperm.xlu0 %2190, %v1994
    %v2192 = vpop.permute.xlu0 %2191
    %2193 = vset.pattern.permute.xlu0 0
    %2194 = vperm.xlu0 %2193, %v2003
    %v2195 = vpop.permute.xlu0 %2194
    %2196 = vset.pattern.permute.xlu0 0
    %2197 = vperm.xlu0 %2196, %v2012
    %v2198 = vpop.permute.xlu0 %2197
    %2199 = vset.pattern.permute.xlu0 0
    %2200 = vperm.xlu0 %2199, %v2021
    %v2201 = vpop.permute.xlu0 %2200
    %2202 = vset.pattern.permute.xlu0 0
    %2203 = vperm.xlu0 %2202, %v2030
    %v2204 = vpop.permute.xlu0 %2203
    %2205 = vset.pattern.permute.xlu0 0
    %2206 = vperm.xlu0 %2205, %v2039
    %v2207 = vpop.permute.xlu0 %2206
    %2208 = vset.pattern.permute.xlu0 0
    %2209 = vperm.xlu0 %2208, %v2048
    %v2210 = vpop.permute.xlu0 %2209
    %2211 = vset.pattern.permute.xlu0 0
    %2212 = vperm.xlu0 %2211, %v2057
    %v2213 = vpop.permute.xlu0 %2212
    %2214 = vset.pattern.permute.xlu0 0
    %2215 = vperm.xlu0 %2214, %v2066
    %v2216 = vpop.permute.xlu0 %2215
    %2217 = vset.pattern.permute.xlu0 0
    %2218 = vperm.xlu0 %2217, %v2075
    %v2219 = vpop.permute.xlu0 %2218
    %2220 = vset.pattern.permute.xlu0 0
    %2221 = vperm.xlu0 %2220, %v2084
    %v2222 = vpop.permute.xlu0 %2221
    %2223 = vset.pattern.permute.xlu0 0
    %2224 = vperm.xlu0 %2223, %v2093
    %v2225 = vpop.permute.xlu0 %2224
    %2226 = vset.pattern.permute.xlu0 0
    %2227 = vperm.xlu0 %2226, %v2102
    %v2228 = vpop.permute.xlu0 %2227
    %2229 = vset.pattern.permute.xlu0 0
    %2230 = vperm.xlu0 %2229, %v2111
    %v2231 = vpop.permute.xlu0 %2230
    %2232 = vset.pattern.permute.xlu0 0
    %2233 = vperm.xlu0 %2232, %v2120
    %v2234 = vpop.permute.xlu0 %2233
    %2235 = vset.pattern.permute.xlu0 0
    %2236 = vperm.xlu0 %2235, %v2129
    %v2237 = vpop.permute.xlu0 %2236
    %2238 = vset.pattern.permute.xlu0 0
    %2239 = vperm.xlu0 %2238, %v2138
    %v2240 = vpop.permute.xlu0 %2239
    %2241 = vset.pattern.permute.xlu0 0
    %2242 = vperm.xlu0 %2241, %v2147
    %v2243 = vpop.permute.xlu0 %2242
    %v2244 = vlaneseq
    %v2245 = vand.u32 %v2244, 127
    %v2246 = vperm.slane %v2150, %v2245
    %v2247 = vadd.s32 %v2245, 4294967288
    %v2248 = vperm.slane %v2153, %v2247
    %vm2249 = vcmask 130112
    %v2250 = vsel %vm2249, %v2248, %v2246
    %v2251 = vadd.s32 %v2245, 4294967280
    %v2252 = vperm.slane %v2156, %v2251
    %vm2253 = vcmask 195712
    %v2254 = vsel %vm2253, %v2252, %v2250
    %v2255 = vadd.s32 %v2245, 4294967272
    %v2256 = vperm.slane %v2159, %v2255
    %vm2257 = vcmask 261312
    %v2258 = vsel %vm2257, %v2256, %v2254
    %v2259 = vadd.s32 %v2245, 4294967264
    %v2260 = vperm.slane %v2162, %v2259
    %vm2261 = vcmask 326912
    %v2262 = vsel %vm2261, %v2260, %v2258
    %v2263 = vadd.s32 %v2245, 4294967256
    %v2264 = vperm.slane %v2165, %v2263
    %vm2265 = vcmask 392512
    %v2266 = vsel %vm2265, %v2264, %v2262
    %v2267 = vadd.s32 %v2245, 4294967248
    %v2268 = vperm.slane %v2168, %v2267
    %vm2269 = vcmask 458112
    %v2270 = vsel %vm2269, %v2268, %v2266
    %v2271 = vadd.s32 %v2245, 4294967240
    %v2272 = vperm.slane %v2171, %v2271
    %vm2273 = vcmask 523712
    %v2274 = vsel %vm2273, %v2272, %v2270
    %v2275 = vadd.s32 %v2245, 4294967232
    %v2276 = vperm.slane %v2174, %v2275
    %vm2277 = vcmask 589312
    %v2278 = vsel %vm2277, %v2276, %v2274
    %v2279 = vadd.s32 %v2245, 4294967224
    %v2280 = vperm.slane %v2177, %v2279
    %vm2281 = vcmask 654912
    %v2282 = vsel %vm2281, %v2280, %v2278
    %v2283 = vadd.s32 %v2245, 4294967216
    %v2284 = vperm.slane %v2180, %v2283
    %vm2285 = vcmask 720512
    %v2286 = vsel %vm2285, %v2284, %v2282
    %v2287 = vadd.s32 %v2245, 4294967208
    %v2288 = vperm.slane %v2183, %v2287
    %vm2289 = vcmask 786112
    %v2290 = vsel %vm2289, %v2288, %v2286
    %v2291 = vadd.s32 %v2245, 4294967200
    %v2292 = vperm.slane %v2186, %v2291
    %vm2293 = vcmask 851712
    %v2294 = vsel %vm2293, %v2292, %v2290
    %v2295 = vadd.s32 %v2245, 4294967192
    %v2296 = vperm.slane %v2189, %v2295
    %vm2297 = vcmask 917312
    %v2298 = vsel %vm2297, %v2296, %v2294
    %v2299 = vadd.s32 %v2245, 4294967184
    %v2300 = vperm.slane %v2192, %v2299
    %vm2301 = vcmask 982912
    %v2302 = vsel %vm2301, %v2300, %v2298
    %v2303 = vadd.s32 %v2245, 4294967176
    %v2304 = vperm.slane %v2195, %v2303
    %vm2305 = vcmask 1048512
    %v2306 = vsel %vm2305, %v2304, %v2302
    %v2307 = vperm.slane %v2198, %v2245
    %v2308 = vperm.slane %v2201, %v2247
    %v2309 = vsel %vm2249, %v2308, %v2307
    %v2310 = vperm.slane %v2204, %v2251
    %v2311 = vsel %vm2253, %v2310, %v2309
    %v2312 = vperm.slane %v2207, %v2255
    %v2313 = vsel %vm2257, %v2312, %v2311
    %v2314 = vperm.slane %v2210, %v2259
    %v2315 = vsel %vm2261, %v2314, %v2313
    %v2316 = vperm.slane %v2213, %v2263
    %v2317 = vsel %vm2265, %v2316, %v2315
    %v2318 = vperm.slane %v2216, %v2267
    %v2319 = vsel %vm2269, %v2318, %v2317
    %v2320 = vperm.slane %v2219, %v2271
    %v2321 = vsel %vm2273, %v2320, %v2319
    %v2322 = vperm.slane %v2222, %v2275
    %v2323 = vsel %vm2277, %v2322, %v2321
    %v2324 = vperm.slane %v2225, %v2279
    %v2325 = vsel %vm2281, %v2324, %v2323
    %v2326 = vperm.slane %v2228, %v2283
    %v2327 = vsel %vm2285, %v2326, %v2325
    %v2328 = vperm.slane %v2231, %v2287
    %v2329 = vsel %vm2289, %v2328, %v2327
    %v2330 = vperm.slane %v2234, %v2291
    %v2331 = vsel %vm2293, %v2330, %v2329
    %v2332 = vperm.slane %v2237, %v2295
    %v2333 = vsel %vm2297, %v2332, %v2331
    %v2334 = vperm.slane %v2240, %v2299
    %v2335 = vsel %vm2301, %v2334, %v2333
    %v2336 = vperm.slane %v2243, %v2303
    %v2337 = vsel %vm2305, %v2336, %v2335
    %v2338 = vrot.slane %v2337, 7
    %vm2339 = vcmask 1040384
    %v2340 = vsel %vm2339, %v2306, %v2338
    %v2342 = vlaneseq
    %vm2343 = vcmp.ge.s32.totalorder %v2342, 0
    %vm2344 = vcmp.lt.s32.totalorder %v2342, 256
    %vm2345 = vmand %vm2343, %vm2344
    %2346 = vst.msk [vmem:[#allocation9] sm:$0x3] %vm2345, %v2340
    %v2444 = vunpack.c.l.s4 839922192
    %v2445 = vunpack.c.0.s8 %v2444
    %v2446 = vperm.slane %v1469, %v2445
    %v2448 = vunpack.c.l.s4 1985246804
    %v2449 = vunpack.c.0.s8 %v2448
    %v2450 = vperm.slane %v1469, %v2449
    %v2452 = vunpack.c.l.s4 839922192
    %v2453 = vunpack.c.0.s8 %v2452
    %v2454 = vperm.slane %v1470, %v2453
    %v2456 = vunpack.c.l.s4 1985246804
    %v2457 = vunpack.c.0.s8 %v2456
    %v2458 = vperm.slane %v1470, %v2457
    %v2460 = vunpack.c.l.s4 839922192
    %v2461 = vunpack.c.0.s8 %v2460
    %v2462 = vperm.slane %v1471, %v2461
    %v2464 = vunpack.c.l.s4 1985246804
    %v2465 = vunpack.c.0.s8 %v2464
    %v2466 = vperm.slane %v1471, %v2465
    %v2468 = vunpack.c.l.s4 839922192
    %v2469 = vunpack.c.0.s8 %v2468
    %v2470 = vperm.slane %v1472, %v2469
    %v2472 = vunpack.c.l.s4 1985246804
    %v2473 = vunpack.c.0.s8 %v2472
    %v2474 = vperm.slane %v1472, %v2473
    %v2476 = vunpack.c.l.s4 839922192
    %v2477 = vunpack.c.0.s8 %v2476
    %v2478 = vperm.slane %v1473, %v2477
    %v2480 = vunpack.c.l.s4 1985246804
    %v2481 = vunpack.c.0.s8 %v2480
    %v2482 = vperm.slane %v1473, %v2481
    %v2484 = vunpack.c.l.s4 839922192
    %v2485 = vunpack.c.0.s8 %v2484
    %v2486 = vperm.slane %v1474, %v2485
    %v2488 = vunpack.c.l.s4 1985246804
    %v2489 = vunpack.c.0.s8 %v2488
    %v2490 = vperm.slane %v1474, %v2489
    %v2492 = vunpack.c.l.s4 839922192
    %v2493 = vunpack.c.0.s8 %v2492
    %v2494 = vperm.slane %v1475, %v2493
    %v2496 = vunpack.c.l.s4 1985246804
    %v2497 = vunpack.c.0.s8 %v2496
    %v2498 = vperm.slane %v1475, %v2497
    %v2500 = vunpack.c.l.s4 839922192
    %v2501 = vunpack.c.0.s8 %v2500
    %v2502 = vperm.slane %v1476, %v2501
    %v2504 = vunpack.c.l.s4 1985246804
    %v2505 = vunpack.c.0.s8 %v2504
    %v2506 = vperm.slane %v1476, %v2505
    %v2508 = vunpack.c.l.s4 839922192
    %v2509 = vunpack.c.0.s8 %v2508
    %v2510 = vperm.slane %v1477, %v2509
    %v2512 = vunpack.c.l.s4 1985246804
    %v2513 = vunpack.c.0.s8 %v2512
    %v2514 = vperm.slane %v1477, %v2513
    %v2516 = vunpack.c.l.s4 839922192
    %v2517 = vunpack.c.0.s8 %v2516
    %v2518 = vperm.slane %v1478, %v2517
    %v2520 = vunpack.c.l.s4 1985246804
    %v2521 = vunpack.c.0.s8 %v2520
    %v2522 = vperm.slane %v1478, %v2521
    %v2524 = vunpack.c.l.s4 839922192
    %v2525 = vunpack.c.0.s8 %v2524
    %v2526 = vperm.slane %v1479, %v2525
    %v2528 = vunpack.c.l.s4 1985246804
    %v2529 = vunpack.c.0.s8 %v2528
    %v2530 = vperm.slane %v1479, %v2529
    %v2532 = vunpack.c.l.s4 839922192
    %v2533 = vunpack.c.0.s8 %v2532
    %v2534 = vperm.slane %v1480, %v2533
    %v2536 = vunpack.c.l.s4 1985246804
    %v2537 = vunpack.c.0.s8 %v2536
    %v2538 = vperm.slane %v1480, %v2537
    %v2540 = vunpack.c.l.s4 839922192
    %v2541 = vunpack.c.0.s8 %v2540
    %v2542 = vperm.slane %v1481, %v2541
    %v2544 = vunpack.c.l.s4 1985246804
    %v2545 = vunpack.c.0.s8 %v2544
    %v2546 = vperm.slane %v1481, %v2545
    %v2548 = vunpack.c.l.s4 839922192
    %v2549 = vunpack.c.0.s8 %v2548
    %v2550 = vperm.slane %v1482, %v2549
    %v2552 = vunpack.c.l.s4 1985246804
    %v2553 = vunpack.c.0.s8 %v2552
    %v2554 = vperm.slane %v1482, %v2553
    %v2556 = vunpack.c.l.s4 839922192
    %v2557 = vunpack.c.0.s8 %v2556
    %v2558 = vperm.slane %v1483, %v2557
    %v2560 = vunpack.c.l.s4 1985246804
    %v2561 = vunpack.c.0.s8 %v2560
    %v2562 = vperm.slane %v1483, %v2561
    %v2564 = vunpack.c.l.s4 839922192
    %v2565 = vunpack.c.0.s8 %v2564
    %v2566 = vperm.slane %v1484, %v2565
    %v2568 = vunpack.c.l.s4 1985246804
    %v2569 = vunpack.c.0.s8 %v2568
    %v2570 = vperm.slane %v1484, %v2569
    %v2572 = vunpack.c.l.s4 839922192
    %v2573 = vunpack.c.0.s8 %v2572
    %v2574 = vperm.slane %v1485, %v2573
    %v2576 = vunpack.c.l.s4 1985246804
    %v2577 = vunpack.c.0.s8 %v2576
    %v2578 = vperm.slane %v1485, %v2577
    %v2580 = vunpack.c.l.s4 839922192
    %v2581 = vunpack.c.0.s8 %v2580
    %v2582 = vperm.slane %v1486, %v2581
    %v2584 = vunpack.c.l.s4 1985246804
    %v2585 = vunpack.c.0.s8 %v2584
    %v2586 = vperm.slane %v1486, %v2585
    %v2588 = vunpack.c.l.s4 839922192
    %v2589 = vunpack.c.0.s8 %v2588
    %v2590 = vperm.slane %v1487, %v2589
    %v2592 = vunpack.c.l.s4 1985246804
    %v2593 = vunpack.c.0.s8 %v2592
    %v2594 = vperm.slane %v1487, %v2593
    %v2596 = vunpack.c.l.s4 839922192
    %v2597 = vunpack.c.0.s8 %v2596
    %v2598 = vperm.slane %v1488, %v2597
    %v2600 = vunpack.c.l.s4 1985246804
    %v2601 = vunpack.c.0.s8 %v2600
    %v2602 = vperm.slane %v1488, %v2601
    %v2604 = vunpack.c.l.s4 839922192
    %v2605 = vunpack.c.0.s8 %v2604
    %v2606 = vperm.slane %v1489, %v2605
    %v2608 = vunpack.c.l.s4 1985246804
    %v2609 = vunpack.c.0.s8 %v2608
    %v2610 = vperm.slane %v1489, %v2609
    %v2612 = vunpack.c.l.s4 839922192
    %v2613 = vunpack.c.0.s8 %v2612
    %v2614 = vperm.slane %v1490, %v2613
    %v2616 = vunpack.c.l.s4 1985246804
    %v2617 = vunpack.c.0.s8 %v2616
    %v2618 = vperm.slane %v1490, %v2617
    %v2620 = vunpack.c.l.s4 839922192
    %v2621 = vunpack.c.0.s8 %v2620
    %v2622 = vperm.slane %v1491, %v2621
    %v2624 = vunpack.c.l.s4 1985246804
    %v2625 = vunpack.c.0.s8 %v2624
    %v2626 = vperm.slane %v1491, %v2625
    %v2628 = vunpack.c.l.s4 839922192
    %v2629 = vunpack.c.0.s8 %v2628
    %v2630 = vperm.slane %v1492, %v2629
    %v2632 = vunpack.c.l.s4 1985246804
    %v2633 = vunpack.c.0.s8 %v2632
    %v2634 = vperm.slane %v1492, %v2633
    %v2636 = vunpack.c.l.s4 839922192
    %v2637 = vunpack.c.0.s8 %v2636
    %v2638 = vperm.slane %v1493, %v2637
    %v2640 = vunpack.c.l.s4 1985246804
    %v2641 = vunpack.c.0.s8 %v2640
    %v2642 = vperm.slane %v1493, %v2641
    %v2644 = vunpack.c.l.s4 839922192
    %v2645 = vunpack.c.0.s8 %v2644
    %v2646 = vperm.slane %v1494, %v2645
    %v2648 = vunpack.c.l.s4 1985246804
    %v2649 = vunpack.c.0.s8 %v2648
    %v2650 = vperm.slane %v1494, %v2649
    %v2652 = vunpack.c.l.s4 839922192
    %v2653 = vunpack.c.0.s8 %v2652
    %v2654 = vperm.slane %v1495, %v2653
    %v2656 = vunpack.c.l.s4 1985246804
    %v2657 = vunpack.c.0.s8 %v2656
    %v2658 = vperm.slane %v1495, %v2657
    %v2660 = vunpack.c.l.s4 839922192
    %v2661 = vunpack.c.0.s8 %v2660
    %v2662 = vperm.slane %v1496, %v2661
    %v2664 = vunpack.c.l.s4 1985246804
    %v2665 = vunpack.c.0.s8 %v2664
    %v2666 = vperm.slane %v1496, %v2665
    %v2668 = vunpack.c.l.s4 839922192
    %v2669 = vunpack.c.0.s8 %v2668
    %v2670 = vperm.slane %v1497, %v2669
    %v2672 = vunpack.c.l.s4 1985246804
    %v2673 = vunpack.c.0.s8 %v2672
    %v2674 = vperm.slane %v1497, %v2673
    %v2676 = vunpack.c.l.s4 839922192
    %v2677 = vunpack.c.0.s8 %v2676
    %v2678 = vperm.slane %v1498, %v2677
    %v2680 = vunpack.c.l.s4 1985246804
    %v2681 = vunpack.c.0.s8 %v2680
    %v2682 = vperm.slane %v1498, %v2681
    %v2684 = vunpack.c.l.s4 839922192
    %v2685 = vunpack.c.0.s8 %v2684
    %v2686 = vperm.slane %v1499, %v2685
    %v2688 = vunpack.c.l.s4 1985246804
    %v2689 = vunpack.c.0.s8 %v2688
    %v2690 = vperm.slane %v1499, %v2689
    %v2692 = vunpack.c.l.s4 839922192
    %v2693 = vunpack.c.0.s8 %v2692
    %v2694 = vperm.slane %v1500, %v2693
    %v2696 = vunpack.c.l.s4 1985246804
    %v2697 = vunpack.c.0.s8 %v2696
    %v2698 = vperm.slane %v1500, %v2697
    %v2700 = vunpack.c.l.s4 839922192
    %v2701 = vunpack.c.0.s8 %v2700
    %v2702 = vperm.slane %v1501, %v2701
    %v2704 = vunpack.c.l.s4 1985246804
    %v2705 = vunpack.c.0.s8 %v2704
    %v2706 = vperm.slane %v1501, %v2705
    %v2708 = vunpack.c.l.s4 839922192
    %v2709 = vunpack.c.0.s8 %v2708
    %v2710 = vperm.slane %v1502, %v2709
    %v2712 = vunpack.c.l.s4 1985246804
    %v2713 = vunpack.c.0.s8 %v2712
    %v2714 = vperm.slane %v1502, %v2713
    %v2716 = vunpack.c.l.s4 839922192
    %v2717 = vunpack.c.0.s8 %v2716
    %v2718 = vperm.slane %v1503, %v2717
    %v2720 = vunpack.c.l.s4 1985246804
    %v2721 = vunpack.c.0.s8 %v2720
    %v2722 = vperm.slane %v1503, %v2721
    %v2724 = vunpack.c.l.s4 839922192
    %v2725 = vunpack.c.0.s8 %v2724
    %v2726 = vperm.slane %v1504, %v2725
    %v2728 = vunpack.c.l.s4 1985246804
    %v2729 = vunpack.c.0.s8 %v2728
    %v2730 = vperm.slane %v1504, %v2729
    %v2732 = vunpack.c.l.s4 839922192
    %v2733 = vunpack.c.0.s8 %v2732
    %v2734 = vperm.slane %v1505, %v2733
    %v2736 = vunpack.c.l.s4 1985246804
    %v2737 = vunpack.c.0.s8 %v2736
    %v2738 = vperm.slane %v1505, %v2737
    %v2740 = vunpack.c.l.s4 839922192
    %v2741 = vunpack.c.0.s8 %v2740
    %v2742 = vperm.slane %v1506, %v2741
    %v2744 = vunpack.c.l.s4 1985246804
    %v2745 = vunpack.c.0.s8 %v2744
    %v2746 = vperm.slane %v1506, %v2745
    %v2748 = vunpack.c.l.s4 839922192
    %v2749 = vunpack.c.0.s8 %v2748
    %v2750 = vperm.slane %v1507, %v2749
    %v2752 = vunpack.c.l.s4 1985246804
    %v2753 = vunpack.c.0.s8 %v2752
    %v2754 = vperm.slane %v1507, %v2753
    %v2756 = vunpack.c.l.s4 839922192
    %v2757 = vunpack.c.0.s8 %v2756
    %v2758 = vperm.slane %v1508, %v2757
    %v2760 = vunpack.c.l.s4 1985246804
    %v2761 = vunpack.c.0.s8 %v2760
    %v2762 = vperm.slane %v1508, %v2761
    %v2764 = vunpack.c.l.s4 839922192
    %v2765 = vunpack.c.0.s8 %v2764
    %v2766 = vperm.slane %v1509, %v2765
    %v2768 = vunpack.c.l.s4 1985246804
    %v2769 = vunpack.c.0.s8 %v2768
    %v2770 = vperm.slane %v1509, %v2769
    %v2772 = vunpack.c.l.s4 839922192
    %v2773 = vunpack.c.0.s8 %v2772
    %v2774 = vperm.slane %v1510, %v2773
    %v2776 = vunpack.c.l.s4 1985246804
    %v2777 = vunpack.c.0.s8 %v2776
    %v2778 = vperm.slane %v1510, %v2777
    %v2780 = vunpack.c.l.s4 839922192
    %v2781 = vunpack.c.0.s8 %v2780
    %v2782 = vperm.slane %v1511, %v2781
    %v2784 = vunpack.c.l.s4 1985246804
    %v2785 = vunpack.c.0.s8 %v2784
    %v2786 = vperm.slane %v1511, %v2785
    %v2788 = vunpack.c.l.s4 839922192
    %v2789 = vunpack.c.0.s8 %v2788
    %v2790 = vperm.slane %v1512, %v2789
    %v2792 = vunpack.c.l.s4 1985246804
    %v2793 = vunpack.c.0.s8 %v2792
    %v2794 = vperm.slane %v1512, %v2793
    %v2796 = vunpack.c.l.s4 839922192
    %v2797 = vunpack.c.0.s8 %v2796
    %v2798 = vperm.slane %v1513, %v2797
    %v2800 = vunpack.c.l.s4 1985246804
    %v2801 = vunpack.c.0.s8 %v2800
    %v2802 = vperm.slane %v1513, %v2801
    %v2804 = vunpack.c.l.s4 839922192
    %v2805 = vunpack.c.0.s8 %v2804
    %v2806 = vperm.slane %v1514, %v2805
    %v2808 = vunpack.c.l.s4 1985246804
    %v2809 = vunpack.c.0.s8 %v2808
    %v2810 = vperm.slane %v1514, %v2809
    %v2812 = vunpack.c.l.s4 839922192
    %v2813 = vunpack.c.0.s8 %v2812
    %v2814 = vperm.slane %v1515, %v2813
    %v2816 = vunpack.c.l.s4 1985246804
    %v2817 = vunpack.c.0.s8 %v2816
    %v2818 = vperm.slane %v1515, %v2817
    %v2820 = vunpack.c.l.s4 839922192
    %v2821 = vunpack.c.0.s8 %v2820
    %v2822 = vperm.slane %v1516, %v2821
    %v2824 = vunpack.c.l.s4 1985246804
    %v2825 = vunpack.c.0.s8 %v2824
    %v2826 = vperm.slane %v1516, %v2825
    %v2828 = vunpack.c.l.s4 839922192
    %v2829 = vunpack.c.0.s8 %v2828
    %v2830 = vperm.slane %v1517, %v2829
    %v2832 = vunpack.c.l.s4 1985246804
    %v2833 = vunpack.c.0.s8 %v2832
    %v2834 = vperm.slane %v1517, %v2833
    %v2836 = vunpack.c.l.s4 839922192
    %v2837 = vunpack.c.0.s8 %v2836
    %v2838 = vperm.slane %v1518, %v2837
    %v2840 = vunpack.c.l.s4 1985246804
    %v2841 = vunpack.c.0.s8 %v2840
    %v2842 = vperm.slane %v1518, %v2841
    %v2844 = vunpack.c.l.s4 839922192
    %v2845 = vunpack.c.0.s8 %v2844
    %v2846 = vperm.slane %v1519, %v2845
    %v2848 = vunpack.c.l.s4 1985246804
    %v2849 = vunpack.c.0.s8 %v2848
    %v2850 = vperm.slane %v1519, %v2849
    %v2852 = vunpack.c.l.s4 839922192
    %v2853 = vunpack.c.0.s8 %v2852
    %v2854 = vperm.slane %v1520, %v2853
    %v2856 = vunpack.c.l.s4 1985246804
    %v2857 = vunpack.c.0.s8 %v2856
    %v2858 = vperm.slane %v1520, %v2857
    %v2860 = vunpack.c.l.s4 839922192
    %v2861 = vunpack.c.0.s8 %v2860
    %v2862 = vperm.slane %v1521, %v2861
    %v2864 = vunpack.c.l.s4 1985246804
    %v2865 = vunpack.c.0.s8 %v2864
    %v2866 = vperm.slane %v1521, %v2865
    %v2868 = vunpack.c.l.s4 839922192
    %v2869 = vunpack.c.0.s8 %v2868
    %v2870 = vperm.slane %v1522, %v2869
    %v2872 = vunpack.c.l.s4 1985246804
    %v2873 = vunpack.c.0.s8 %v2872
    %v2874 = vperm.slane %v1522, %v2873
    %v2876 = vunpack.c.l.s4 839922192
    %v2877 = vunpack.c.0.s8 %v2876
    %v2878 = vperm.slane %v1523, %v2877
    %v2880 = vunpack.c.l.s4 1985246804
    %v2881 = vunpack.c.0.s8 %v2880
    %v2882 = vperm.slane %v1523, %v2881
    %v2884 = vunpack.c.l.s4 839922192
    %v2885 = vunpack.c.0.s8 %v2884
    %v2886 = vperm.slane %v1524, %v2885
    %v2888 = vunpack.c.l.s4 1985246804
    %v2889 = vunpack.c.0.s8 %v2888
    %v2890 = vperm.slane %v1524, %v2889
    %v2892 = vunpack.c.l.s4 839922192
    %v2893 = vunpack.c.0.s8 %v2892
    %v2894 = vperm.slane %v1525, %v2893
    %v2896 = vunpack.c.l.s4 1985246804
    %v2897 = vunpack.c.0.s8 %v2896
    %v2898 = vperm.slane %v1525, %v2897
    %v2900 = vunpack.c.l.s4 839922192
    %v2901 = vunpack.c.0.s8 %v2900
    %v2902 = vperm.slane %v1526, %v2901
    %v2904 = vunpack.c.l.s4 1985246804
    %v2905 = vunpack.c.0.s8 %v2904
    %v2906 = vperm.slane %v1526, %v2905
    %v2908 = vunpack.c.l.s4 839922192
    %v2909 = vunpack.c.0.s8 %v2908
    %v2910 = vperm.slane %v1527, %v2909
    %v2912 = vunpack.c.l.s4 1985246804
    %v2913 = vunpack.c.0.s8 %v2912
    %v2914 = vperm.slane %v1527, %v2913
    %v2916 = vunpack.c.l.s4 839922192
    %v2917 = vunpack.c.0.s8 %v2916
    %v2918 = vperm.slane %v1528, %v2917
    %v2920 = vunpack.c.l.s4 1985246804
    %v2921 = vunpack.c.0.s8 %v2920
    %v2922 = vperm.slane %v1528, %v2921
    %v2924 = vunpack.c.l.s4 839922192
    %v2925 = vunpack.c.0.s8 %v2924
    %v2926 = vperm.slane %v1529, %v2925
    %v2928 = vunpack.c.l.s4 1985246804
    %v2929 = vunpack.c.0.s8 %v2928
    %v2930 = vperm.slane %v1529, %v2929
    %v2932 = vunpack.c.l.s4 839922192
    %v2933 = vunpack.c.0.s8 %v2932
    %v2934 = vperm.slane %v1530, %v2933
    %v2936 = vunpack.c.l.s4 1985246804
    %v2937 = vunpack.c.0.s8 %v2936
    %v2938 = vperm.slane %v1530, %v2937
    %v2940 = vunpack.c.l.s4 839922192
    %v2941 = vunpack.c.0.s8 %v2940
    %v2942 = vperm.slane %v1531, %v2941
    %v2944 = vunpack.c.l.s4 1985246804
    %v2945 = vunpack.c.0.s8 %v2944
    %v2946 = vperm.slane %v1531, %v2945
    %v2948 = vunpack.c.l.s4 839922192
    %v2949 = vunpack.c.0.s8 %v2948
    %v2950 = vperm.slane %v1532, %v2949
    %v2952 = vunpack.c.l.s4 1985246804
    %v2953 = vunpack.c.0.s8 %v2952
    %v2954 = vperm.slane %v1532, %v2953
    %v2956 = vunpack.c.l.s4 839922192
    %v2957 = vunpack.c.0.s8 %v2956
    %v2958 = vperm.slane %v1533, %v2957
    %v2960 = vunpack.c.l.s4 1985246804
    %v2961 = vunpack.c.0.s8 %v2960
    %v2962 = vperm.slane %v1533, %v2961
    %v2964 = vunpack.c.l.s4 839922192
    %v2965 = vunpack.c.0.s8 %v2964
    %v2966 = vperm.slane %v1534, %v2965
    %v2968 = vunpack.c.l.s4 1985246804
    %v2969 = vunpack.c.0.s8 %v2968
    %v2970 = vperm.slane %v1534, %v2969
    %v2972 = vunpack.c.l.s4 839922192
    %v2973 = vunpack.c.0.s8 %v2972
    %v2974 = vperm.slane %v1535, %v2973
    %v2976 = vunpack.c.l.s4 1985246804
    %v2977 = vunpack.c.0.s8 %v2976
    %v2978 = vperm.slane %v1535, %v2977
    %v2980 = vunpack.c.l.s4 839922192
    %v2981 = vunpack.c.0.s8 %v2980
    %v2982 = vperm.slane %v1536, %v2981
    %v2984 = vunpack.c.l.s4 1985246804
    %v2985 = vunpack.c.0.s8 %v2984
    %v2986 = vperm.slane %v1536, %v2985
    %v2988 = vunpack.c.l.s4 839922192
    %v2989 = vunpack.c.0.s8 %v2988
    %v2990 = vperm.slane %v1537, %v2989
    %v2992 = vunpack.c.l.s4 1985246804
    %v2993 = vunpack.c.0.s8 %v2992
    %v2994 = vperm.slane %v1537, %v2993
    %v2996 = vunpack.c.l.s4 839922192
    %v2997 = vunpack.c.0.s8 %v2996
    %v2998 = vperm.slane %v1538, %v2997
    %v3000 = vunpack.c.l.s4 1985246804
    %v3001 = vunpack.c.0.s8 %v3000
    %v3002 = vperm.slane %v1538, %v3001
    %v3004 = vunpack.c.l.s4 839922192
    %v3005 = vunpack.c.0.s8 %v3004
    %v3006 = vperm.slane %v1539, %v3005
    %v3008 = vunpack.c.l.s4 1985246804
    %v3009 = vunpack.c.0.s8 %v3008
    %v3010 = vperm.slane %v1539, %v3009
    %v3012 = vunpack.c.l.s4 839922192
    %v3013 = vunpack.c.0.s8 %v3012
    %v3014 = vperm.slane %v1540, %v3013
    %v3016 = vunpack.c.l.s4 1985246804
    %v3017 = vunpack.c.0.s8 %v3016
    %v3018 = vperm.slane %v1540, %v3017
    %v3020 = vunpack.c.l.s4 839922192
    %v3021 = vunpack.c.0.s8 %v3020
    %v3022 = vperm.slane %v1541, %v3021
    %v3024 = vunpack.c.l.s4 1985246804
    %v3025 = vunpack.c.0.s8 %v3024
    %v3026 = vperm.slane %v1541, %v3025
    %v3028 = vunpack.c.l.s4 839922192
    %v3029 = vunpack.c.0.s8 %v3028
    %v3030 = vperm.slane %v1542, %v3029
    %v3032 = vunpack.c.l.s4 1985246804
    %v3033 = vunpack.c.0.s8 %v3032
    %v3034 = vperm.slane %v1542, %v3033
    %v3036 = vunpack.c.l.s4 839922192
    %v3037 = vunpack.c.0.s8 %v3036
    %v3038 = vperm.slane %v1543, %v3037
    %v3040 = vunpack.c.l.s4 1985246804
    %v3041 = vunpack.c.0.s8 %v3040
    %v3042 = vperm.slane %v1543, %v3041
    %v3044 = vunpack.c.l.s4 839922192
    %v3045 = vunpack.c.0.s8 %v3044
    %v3046 = vperm.slane %v1544, %v3045
    %v3048 = vunpack.c.l.s4 1985246804
    %v3049 = vunpack.c.0.s8 %v3048
    %v3050 = vperm.slane %v1544, %v3049
    %v3052 = vunpack.c.l.s4 839922192
    %v3053 = vunpack.c.0.s8 %v3052
    %v3054 = vperm.slane %v1545, %v3053
    %v3056 = vunpack.c.l.s4 1985246804
    %v3057 = vunpack.c.0.s8 %v3056
    %v3058 = vperm.slane %v1545, %v3057
    %v3060 = vunpack.c.l.s4 839922192
    %v3061 = vunpack.c.0.s8 %v3060
    %v3062 = vperm.slane %v1546, %v3061
    %v3064 = vunpack.c.l.s4 1985246804
    %v3065 = vunpack.c.0.s8 %v3064
    %v3066 = vperm.slane %v1546, %v3065
    %v3068 = vunpack.c.l.s4 839922192
    %v3069 = vunpack.c.0.s8 %v3068
    %v3070 = vperm.slane %v1547, %v3069
    %v3072 = vunpack.c.l.s4 1985246804
    %v3073 = vunpack.c.0.s8 %v3072
    %v3074 = vperm.slane %v1547, %v3073
    %v3076 = vunpack.c.l.s4 839922192
    %v3077 = vunpack.c.0.s8 %v3076
    %v3078 = vperm.slane %v1548, %v3077
    %v3080 = vunpack.c.l.s4 1985246804
    %v3081 = vunpack.c.0.s8 %v3080
    %v3082 = vperm.slane %v1548, %v3081
    %v3084 = vunpack.c.l.s4 839922192
    %v3085 = vunpack.c.0.s8 %v3084
    %v3086 = vperm.slane %v1549, %v3085
    %v3088 = vunpack.c.l.s4 1985246804
    %v3089 = vunpack.c.0.s8 %v3088
    %v3090 = vperm.slane %v1549, %v3089
    %v3092 = vunpack.c.l.s4 839922192
    %v3093 = vunpack.c.0.s8 %v3092
    %v3094 = vperm.slane %v1550, %v3093
    %v3096 = vunpack.c.l.s4 1985246804
    %v3097 = vunpack.c.0.s8 %v3096
    %v3098 = vperm.slane %v1550, %v3097
    %v3100 = vunpack.c.l.s4 839922192
    %v3101 = vunpack.c.0.s8 %v3100
    %v3102 = vperm.slane %v1551, %v3101
    %v3104 = vunpack.c.l.s4 1985246804
    %v3105 = vunpack.c.0.s8 %v3104
    %v3106 = vperm.slane %v1551, %v3105
    %v3108 = vunpack.c.l.s4 839922192
    %v3109 = vunpack.c.0.s8 %v3108
    %v3110 = vperm.slane %v1552, %v3109
    %v3112 = vunpack.c.l.s4 1985246804
    %v3113 = vunpack.c.0.s8 %v3112
    %v3114 = vperm.slane %v1552, %v3113
    %v3116 = vunpack.c.l.s4 839922192
    %v3117 = vunpack.c.0.s8 %v3116
    %v3118 = vperm.slane %v1553, %v3117
    %v3120 = vunpack.c.l.s4 1985246804
    %v3121 = vunpack.c.0.s8 %v3120
    %v3122 = vperm.slane %v1553, %v3121
    %v3124 = vunpack.c.l.s4 839922192
    %v3125 = vunpack.c.0.s8 %v3124
    %v3126 = vperm.slane %v1554, %v3125
    %v3128 = vunpack.c.l.s4 1985246804
    %v3129 = vunpack.c.0.s8 %v3128
    %v3130 = vperm.slane %v1554, %v3129
    %v3132 = vunpack.c.l.s4 839922192
    %v3133 = vunpack.c.0.s8 %v3132
    %v3134 = vperm.slane %v1555, %v3133
    %v3136 = vunpack.c.l.s4 1985246804
    %v3137 = vunpack.c.0.s8 %v3136
    %v3138 = vperm.slane %v1555, %v3137
    %v3140 = vunpack.c.l.s4 839922192
    %v3141 = vunpack.c.0.s8 %v3140
    %v3142 = vperm.slane %v1556, %v3141
    %v3144 = vunpack.c.l.s4 1985246804
    %v3145 = vunpack.c.0.s8 %v3144
    %v3146 = vperm.slane %v1556, %v3145
    %v3148 = vunpack.c.l.s4 839922192
    %v3149 = vunpack.c.0.s8 %v3148
    %v3150 = vperm.slane %v1557, %v3149
    %v3152 = vunpack.c.l.s4 1985246804
    %v3153 = vunpack.c.0.s8 %v3152
    %v3154 = vperm.slane %v1557, %v3153
    %v3156 = vunpack.c.l.s4 839922192
    %v3157 = vunpack.c.0.s8 %v3156
    %v3158 = vperm.slane %v1558, %v3157
    %v3160 = vunpack.c.l.s4 1985246804
    %v3161 = vunpack.c.0.s8 %v3160
    %v3162 = vperm.slane %v1558, %v3161
    %v3164 = vunpack.c.l.s4 839922192
    %v3165 = vunpack.c.0.s8 %v3164
    %v3166 = vperm.slane %v1559, %v3165
    %v3168 = vunpack.c.l.s4 1985246804
    %v3169 = vunpack.c.0.s8 %v3168
    %v3170 = vperm.slane %v1559, %v3169
    %v3172 = vunpack.c.l.s4 839922192
    %v3173 = vunpack.c.0.s8 %v3172
    %v3174 = vperm.slane %v1560, %v3173
    %v3176 = vunpack.c.l.s4 1985246804
    %v3177 = vunpack.c.0.s8 %v3176
    %v3178 = vperm.slane %v1560, %v3177
    %v3180 = vunpack.c.l.s4 839922192
    %v3181 = vunpack.c.0.s8 %v3180
    %v3182 = vperm.slane %v1561, %v3181
    %v3184 = vunpack.c.l.s4 1985246804
    %v3185 = vunpack.c.0.s8 %v3184
    %v3186 = vperm.slane %v1561, %v3185
    %v3188 = vunpack.c.l.s4 839922192
    %v3189 = vunpack.c.0.s8 %v3188
    %v3190 = vperm.slane %v1562, %v3189
    %v3192 = vunpack.c.l.s4 1985246804
    %v3193 = vunpack.c.0.s8 %v3192
    %v3194 = vperm.slane %v1562, %v3193
    %v3196 = vunpack.c.l.s4 839922192
    %v3197 = vunpack.c.0.s8 %v3196
    %v3198 = vperm.slane %v1563, %v3197
    %v3200 = vunpack.c.l.s4 1985246804
    %v3201 = vunpack.c.0.s8 %v3200
    %v3202 = vperm.slane %v1563, %v3201
    %v3204 = vunpack.c.l.s4 839922192
    %v3205 = vunpack.c.0.s8 %v3204
    %v3206 = vperm.slane %v1564, %v3205
    %v3208 = vunpack.c.l.s4 1985246804
    %v3209 = vunpack.c.0.s8 %v3208
    %v3210 = vperm.slane %v1564, %v3209
    %3211 = vst [vmem:[#allocation1] ss:$2 sm:$0xff] %v2446
    %s3212 = scalar_lea.vmem [#allocation1], 1
    %3213 = vst [vmem:[%s3212] ss:$2 sm:$0xff] %v2450
    %s3214 = scalar_lea.vmem [#allocation1], 16
    %3215 = vst [vmem:[%s3214] ss:$2 sm:$0xff] %v2454
    %s3216 = scalar_lea.vmem [#allocation1], 17
    %3217 = vst [vmem:[%s3216] ss:$2 sm:$0xff] %v2458
    %s3218 = scalar_lea.vmem [#allocation1], 32
    %3219 = vst [vmem:[%s3218] ss:$2 sm:$0xff] %v2462
    %s3220 = scalar_lea.vmem [#allocation1], 33
    %3221 = vst [vmem:[%s3220] ss:$2 sm:$0xff] %v2466
    %s3222 = scalar_lea.vmem [#allocation1], 48
    %3223 = vst [vmem:[%s3222] ss:$2 sm:$0xff] %v2470
    %s3224 = scalar_lea.vmem [#allocation1], 49
    %3225 = vst [vmem:[%s3224] ss:$2 sm:$0xff] %v2474
    %v3226 = vld.sshfl [vmem:[#allocation1] sm:$0xff pattern:$0x75316420]
    %v3227 = vld.sshfl [vmem:[#allocation1 + $0x10] sm:$0xff pattern:$0x75316420]
    %v3228 = vld.sshfl [vmem:[#allocation1 + $0x20] sm:$0xff pattern:$0x75316420]
    %v3229 = vld.sshfl [vmem:[#allocation1 + $0x30] sm:$0xff pattern:$0x75316420]
    %3230 = vst [vmem:[#allocation1] ss:$2 sm:$0xff] %v2478
    %3231 = vst [vmem:[%s3212] ss:$2 sm:$0xff] %v2482
    %3232 = vst [vmem:[%s3214] ss:$2 sm:$0xff] %v2486
    %3233 = vst [vmem:[%s3216] ss:$2 sm:$0xff] %v2490
    %3234 = vst [vmem:[%s3218] ss:$2 sm:$0xff] %v2494
    %3235 = vst [vmem:[%s3220] ss:$2 sm:$0xff] %v2498
    %3236 = vst [vmem:[%s3222] ss:$2 sm:$0xff] %v2502
    %3237 = vst [vmem:[%s3224] ss:$2 sm:$0xff] %v2506
    %v3238 = vld.sshfl [vmem:[#allocation1] sm:$0xff pattern:$0x75316420]
    %v3239 = vld.sshfl [vmem:[#allocation1 + $0x10] sm:$0xff pattern:$0x75316420]
    %v3240 = vld.sshfl [vmem:[#allocation1 + $0x20] sm:$0xff pattern:$0x75316420]
    %v3241 = vld.sshfl [vmem:[#allocation1 + $0x30] sm:$0xff pattern:$0x75316420]
    %3242 = vst [vmem:[#allocation1] ss:$2 sm:$0xff] %v2510
    %3243 = vst [vmem:[%s3212] ss:$2 sm:$0xff] %v2514
    %3244 = vst [vmem:[%s3214] ss:$2 sm:$0xff] %v2518
    %3245 = vst [vmem:[%s3216] ss:$2 sm:$0xff] %v2522
    %3246 = vst [vmem:[%s3218] ss:$2 sm:$0xff] %v2526
    %3247 = vst [vmem:[%s3220] ss:$2 sm:$0xff] %v2530
    %3248 = vst [vmem:[%s3222] ss:$2 sm:$0xff] %v2534
    %3249 = vst [vmem:[%s3224] ss:$2 sm:$0xff] %v2538
    %v3250 = vld.sshfl [vmem:[#allocation1] sm:$0xff pattern:$0x75316420]
    %v3251 = vld.sshfl [vmem:[#allocation1 + $0x10] sm:$0xff pattern:$0x75316420]
    %v3252 = vld.sshfl [vmem:[#allocation1 + $0x20] sm:$0xff pattern:$0x75316420]
    %v3253 = vld.sshfl [vmem:[#allocation1 + $0x30] sm:$0xff pattern:$0x75316420]
    %3254 = vst [vmem:[#allocation1] ss:$2 sm:$0xff] %v2542
    %3255 = vst [vmem:[%s3212] ss:$2 sm:$0xff] %v2546
    %3256 = vst [vmem:[%s3214] ss:$2 sm:$0xff] %v2550
    %3257 = vst [vmem:[%s3216] ss:$2 sm:$0xff] %v2554
    %3258 = vst [vmem:[%s3218] ss:$2 sm:$0xff] %v2558
    %3259 = vst [vmem:[%s3220] ss:$2 sm:$0xff] %v2562
    %3260 = vst [vmem:[%s3222] ss:$2 sm:$0xff] %v2566
    %3261 = vst [vmem:[%s3224] ss:$2 sm:$0xff] %v2570
    %v3262 = vld.sshfl [vmem:[#allocation1] sm:$0xff pattern:$0x75316420]
    %v3263 = vld.sshfl [vmem:[#allocation1 + $0x10] sm:$0xff pattern:$0x75316420]
    %v3264 = vld.sshfl [vmem:[#allocation1 + $0x20] sm:$0xff pattern:$0x75316420]
    %v3265 = vld.sshfl [vmem:[#allocation1 + $0x30] sm:$0xff pattern:$0x75316420]
    %3266 = vst [vmem:[#allocation1] ss:$2 sm:$0xff] %v2574
    %3267 = vst [vmem:[%s3212] ss:$2 sm:$0xff] %v2578
    %3268 = vst [vmem:[%s3214] ss:$2 sm:$0xff] %v2582
    %3269 = vst [vmem:[%s3216] ss:$2 sm:$0xff] %v2586
    %3270 = vst [vmem:[%s3218] ss:$2 sm:$0xff] %v2590
    %3271 = vst [vmem:[%s3220] ss:$2 sm:$0xff] %v2594
    %3272 = vst [vmem:[%s3222] ss:$2 sm:$0xff] %v2598
    %3273 = vst [vmem:[%s3224] ss:$2 sm:$0xff] %v2602
    %v3274 = vld.sshfl [vmem:[#allocation1] sm:$0xff pattern:$0x75316420]
    %v3275 = vld.sshfl [vmem:[#allocation1 + $0x10] sm:$0xff pattern:$0x75316420]
    %v3276 = vld.sshfl [vmem:[#allocation1 + $0x20] sm:$0xff pattern:$0x75316420]
    %v3277 = vld.sshfl [vmem:[#allocation1 + $0x30] sm:$0xff pattern:$0x75316420]
    %3278 = vst [vmem:[#allocation1] ss:$2 sm:$0xff] %v2606
    %3279 = vst [vmem:[%s3212] ss:$2 sm:$0xff] %v2610
    %3280 = vst [vmem:[%s3214] ss:$2 sm:$0xff] %v2614
    %3281 = vst [vmem:[%s3216] ss:$2 sm:$0xff] %v2618
    %3282 = vst [vmem:[%s3218] ss:$2 sm:$0xff] %v2622
    %3283 = vst [vmem:[%s3220] ss:$2 sm:$0xff] %v2626
    %3284 = vst [vmem:[%s3222] ss:$2 sm:$0xff] %v2630
    %3285 = vst [vmem:[%s3224] ss:$2 sm:$0xff] %v2634
    %v3286 = vld.sshfl [vmem:[#allocation1] sm:$0xff pattern:$0x75316420]
    %v3287 = vld.sshfl [vmem:[#allocation1 + $0x10] sm:$0xff pattern:$0x75316420]
    %v3288 = vld.sshfl [vmem:[#allocation1 + $0x20] sm:$0xff pattern:$0x75316420]
    %v3289 = vld.sshfl [vmem:[#allocation1 + $0x30] sm:$0xff pattern:$0x75316420]
    %3290 = vst [vmem:[#allocation1] ss:$2 sm:$0xff] %v2638
    %3291 = vst [vmem:[%s3212] ss:$2 sm:$0xff] %v2642
    %3292 = vst [vmem:[%s3214] ss:$2 sm:$0xff] %v2646
    %3293 = vst [vmem:[%s3216] ss:$2 sm:$0xff] %v2650
    %3294 = vst [vmem:[%s3218] ss:$2 sm:$0xff] %v2654
    %3295 = vst [vmem:[%s3220] ss:$2 sm:$0xff] %v2658
    %3296 = vst [vmem:[%s3222] ss:$2 sm:$0xff] %v2662
    %3297 = vst [vmem:[%s3224] ss:$2 sm:$0xff] %v2666
    %v3298 = vld.sshfl [vmem:[#allocation1] sm:$0xff pattern:$0x75316420]
    %v3299 = vld.sshfl [vmem:[#allocation1 + $0x10] sm:$0xff pattern:$0x75316420]
    %v3300 = vld.sshfl [vmem:[#allocation1 + $0x20] sm:$0xff pattern:$0x75316420]
    %v3301 = vld.sshfl [vmem:[#allocation1 + $0x30] sm:$0xff pattern:$0x75316420]
    %3302 = vst [vmem:[#allocation1] ss:$2 sm:$0xff] %v2670
    %3303 = vst [vmem:[%s3212] ss:$2 sm:$0xff] %v2674
    %3304 = vst [vmem:[%s3214] ss:$2 sm:$0xff] %v2678
    %3305 = vst [vmem:[%s3216] ss:$2 sm:$0xff] %v2682
    %3306 = vst [vmem:[%s3218] ss:$2 sm:$0xff] %v2686
    %3307 = vst [vmem:[%s3220] ss:$2 sm:$0xff] %v2690
    %3308 = vst [vmem:[%s3222] ss:$2 sm:$0xff] %v2694
    %3309 = vst [vmem:[%s3224] ss:$2 sm:$0xff] %v2698
    %v3310 = vld.sshfl [vmem:[#allocation1] sm:$0xff pattern:$0x75316420]
    %v3311 = vld.sshfl [vmem:[#allocation1 + $0x10] sm:$0xff pattern:$0x75316420]
    %v3312 = vld.sshfl [vmem:[#allocation1 + $0x20] sm:$0xff pattern:$0x75316420]
    %v3313 = vld.sshfl [vmem:[#allocation1 + $0x30] sm:$0xff pattern:$0x75316420]
    %3314 = vst [vmem:[#allocation1] ss:$2 sm:$0xff] %v2702
    %3315 = vst [vmem:[%s3212] ss:$2 sm:$0xff] %v2706
    %3316 = vst [vmem:[%s3214] ss:$2 sm:$0xff] %v2710
    %3317 = vst [vmem:[%s3216] ss:$2 sm:$0xff] %v2714
    %3318 = vst [vmem:[%s3218] ss:$2 sm:$0xff] %v2718
    %3319 = vst [vmem:[%s3220] ss:$2 sm:$0xff] %v2722
    %3320 = vst [vmem:[%s3222] ss:$2 sm:$0xff] %v2726
    %3321 = vst [vmem:[%s3224] ss:$2 sm:$0xff] %v2730
    %v3322 = vld.sshfl [vmem:[#allocation1] sm:$0xff pattern:$0x75316420]
    %v3323 = vld.sshfl [vmem:[#allocation1 + $0x10] sm:$0xff pattern:$0x75316420]
    %v3324 = vld.sshfl [vmem:[#allocation1 + $0x20] sm:$0xff pattern:$0x75316420]
    %v3325 = vld.sshfl [vmem:[#allocation1 + $0x30] sm:$0xff pattern:$0x75316420]
    %3326 = vst [vmem:[#allocation1] ss:$2 sm:$0xff] %v2734
    %3327 = vst [vmem:[%s3212] ss:$2 sm:$0xff] %v2738
    %3328 = vst [vmem:[%s3214] ss:$2 sm:$0xff] %v2742
    %3329 = vst [vmem:[%s3216] ss:$2 sm:$0xff] %v2746
    %3330 = vst [vmem:[%s3218] ss:$2 sm:$0xff] %v2750
    %3331 = vst [vmem:[%s3220] ss:$2 sm:$0xff] %v2754
    %3332 = vst [vmem:[%s3222] ss:$2 sm:$0xff] %v2758
    %3333 = vst [vmem:[%s3224] ss:$2 sm:$0xff] %v2762
    %v3334 = vld.sshfl [vmem:[#allocation1] sm:$0xff pattern:$0x75316420]
    %v3335 = vld.sshfl [vmem:[#allocation1 + $0x10] sm:$0xff pattern:$0x75316420]
    %v3336 = vld.sshfl [vmem:[#allocation1 + $0x20] sm:$0xff pattern:$0x75316420]
    %v3337 = vld.sshfl [vmem:[#allocation1 + $0x30] sm:$0xff pattern:$0x75316420]
    %3338 = vst [vmem:[#allocation1] ss:$2 sm:$0xff] %v2766
    %3339 = vst [vmem:[%s3212] ss:$2 sm:$0xff] %v2770
    %3340 = vst [vmem:[%s3214] ss:$2 sm:$0xff] %v2774
    %3341 = vst [vmem:[%s3216] ss:$2 sm:$0xff] %v2778
    %3342 = vst [vmem:[%s3218] ss:$2 sm:$0xff] %v2782
    %3343 = vst [vmem:[%s3220] ss:$2 sm:$0xff] %v2786
    %3344 = vst [vmem:[%s3222] ss:$2 sm:$0xff] %v2790
    %3345 = vst [vmem:[%s3224] ss:$2 sm:$0xff] %v2794
    %v3346 = vld.sshfl [vmem:[#allocation1] sm:$0xff pattern:$0x75316420]
    %v3347 = vld.sshfl [vmem:[#allocation1 + $0x10] sm:$0xff pattern:$0x75316420]
    %v3348 = vld.sshfl [vmem:[#allocation1 + $0x20] sm:$0xff pattern:$0x75316420]
    %v3349 = vld.sshfl [vmem:[#allocation1 + $0x30] sm:$0xff pattern:$0x75316420]
    %3350 = vst [vmem:[#allocation1] ss:$2 sm:$0xff] %v2798
    %3351 = vst [vmem:[%s3212] ss:$2 sm:$0xff] %v2802
    %3352 = vst [vmem:[%s3214] ss:$2 sm:$0xff] %v2806
    %3353 = vst [vmem:[%s3216] ss:$2 sm:$0xff] %v2810
    %3354 = vst [vmem:[%s3218] ss:$2 sm:$0xff] %v2814
    %3355 = vst [vmem:[%s3220] ss:$2 sm:$0xff] %v2818
    %3356 = vst [vmem:[%s3222] ss:$2 sm:$0xff] %v2822
    %3357 = vst [vmem:[%s3224] ss:$2 sm:$0xff] %v2826
    %v3358 = vld.sshfl [vmem:[#allocation1] sm:$0xff pattern:$0x75316420]
    %v3359 = vld.sshfl [vmem:[#allocation1 + $0x10] sm:$0xff pattern:$0x75316420]
    %v3360 = vld.sshfl [vmem:[#allocation1 + $0x20] sm:$0xff pattern:$0x75316420]
    %v3361 = vld.sshfl [vmem:[#allocation1 + $0x30] sm:$0xff pattern:$0x75316420]
    %3362 = vst [vmem:[#allocation1] ss:$2 sm:$0xff] %v2830
    %3363 = vst [vmem:[%s3212] ss:$2 sm:$0xff] %v2834
    %3364 = vst [vmem:[%s3214] ss:$2 sm:$0xff] %v2838
    %3365 = vst [vmem:[%s3216] ss:$2 sm:$0xff] %v2842
    %3366 = vst [vmem:[%s3218] ss:$2 sm:$0xff] %v2846
    %3367 = vst [vmem:[%s3220] ss:$2 sm:$0xff] %v2850
    %3368 = vst [vmem:[%s3222] ss:$2 sm:$0xff] %v2854
    %3369 = vst [vmem:[%s3224] ss:$2 sm:$0xff] %v2858
    %v3370 = vld.sshfl [vmem:[#allocation1] sm:$0xff pattern:$0x75316420]
    %v3371 = vld.sshfl [vmem:[#allocation1 + $0x10] sm:$0xff pattern:$0x75316420]
    %v3372 = vld.sshfl [vmem:[#allocation1 + $0x20] sm:$0xff pattern:$0x75316420]
    %v3373 = vld.sshfl [vmem:[#allocation1 + $0x30] sm:$0xff pattern:$0x75316420]
    %3374 = vst [vmem:[#allocation1] ss:$2 sm:$0xff] %v2862
    %3375 = vst [vmem:[%s3212] ss:$2 sm:$0xff] %v2866
    %3376 = vst [vmem:[%s3214] ss:$2 sm:$0xff] %v2870
    %3377 = vst [vmem:[%s3216] ss:$2 sm:$0xff] %v2874
    %3378 = vst [vmem:[%s3218] ss:$2 sm:$0xff] %v2878
    %3379 = vst [vmem:[%s3220] ss:$2 sm:$0xff] %v2882
    %3380 = vst [vmem:[%s3222] ss:$2 sm:$0xff] %v2886
    %3381 = vst [vmem:[%s3224] ss:$2 sm:$0xff] %v2890
    %v3382 = vld.sshfl [vmem:[#allocation1] sm:$0xff pattern:$0x75316420]
    %v3383 = vld.sshfl [vmem:[#allocation1 + $0x10] sm:$0xff pattern:$0x75316420]
    %v3384 = vld.sshfl [vmem:[#allocation1 + $0x20] sm:$0xff pattern:$0x75316420]
    %v3385 = vld.sshfl [vmem:[#allocation1 + $0x30] sm:$0xff pattern:$0x75316420]
    %3386 = vst [vmem:[#allocation1] ss:$2 sm:$0xff] %v2894
    %3387 = vst [vmem:[%s3212] ss:$2 sm:$0xff] %v2898
    %3388 = vst [vmem:[%s3214] ss:$2 sm:$0xff] %v2902
    %3389 = vst [vmem:[%s3216] ss:$2 sm:$0xff] %v2906
    %3390 = vst [vmem:[%s3218] ss:$2 sm:$0xff] %v2910
    %3391 = vst [vmem:[%s3220] ss:$2 sm:$0xff] %v2914
    %3392 = vst [vmem:[%s3222] ss:$2 sm:$0xff] %v2918
    %3393 = vst [vmem:[%s3224] ss:$2 sm:$0xff] %v2922
    %v3394 = vld.sshfl [vmem:[#allocation1] sm:$0xff pattern:$0x75316420]
    %v3395 = vld.sshfl [vmem:[#allocation1 + $0x10] sm:$0xff pattern:$0x75316420]
    %v3396 = vld.sshfl [vmem:[#allocation1 + $0x20] sm:$0xff pattern:$0x75316420]
    %v3397 = vld.sshfl [vmem:[#allocation1 + $0x30] sm:$0xff pattern:$0x75316420]
    %3398 = vst [vmem:[#allocation1] ss:$2 sm:$0xff] %v2926
    %3399 = vst [vmem:[%s3212] ss:$2 sm:$0xff] %v2930
    %3400 = vst [vmem:[%s3214] ss:$2 sm:$0xff] %v2934
    %3401 = vst [vmem:[%s3216] ss:$2 sm:$0xff] %v2938
    %3402 = vst [vmem:[%s3218] ss:$2 sm:$0xff] %v2942
    %3403 = vst [vmem:[%s3220] ss:$2 sm:$0xff] %v2946
    %3404 = vst [vmem:[%s3222] ss:$2 sm:$0xff] %v2950
    %3405 = vst [vmem:[%s3224] ss:$2 sm:$0xff] %v2954
    %v3406 = vld.sshfl [vmem:[#allocation1] sm:$0xff pattern:$0x75316420]
    %v3407 = vld.sshfl [vmem:[#allocation1 + $0x10] sm:$0xff pattern:$0x75316420]
    %v3408 = vld.sshfl [vmem:[#allocation1 + $0x20] sm:$0xff pattern:$0x75316420]
    %v3409 = vld.sshfl [vmem:[#allocation1 + $0x30] sm:$0xff pattern:$0x75316420]
    %3410 = vst [vmem:[#allocation1] ss:$2 sm:$0xff] %v2958
    %3411 = vst [vmem:[%s3212] ss:$2 sm:$0xff] %v2962
    %3412 = vst [vmem:[%s3214] ss:$2 sm:$0xff] %v2966
    %3413 = vst [vmem:[%s3216] ss:$2 sm:$0xff] %v2970
    %3414 = vst [vmem:[%s3218] ss:$2 sm:$0xff] %v2974
    %3415 = vst [vmem:[%s3220] ss:$2 sm:$0xff] %v2978
    %3416 = vst [vmem:[%s3222] ss:$2 sm:$0xff] %v2982
    %3417 = vst [vmem:[%s3224] ss:$2 sm:$0xff] %v2986
    %v3418 = vld.sshfl [vmem:[#allocation1] sm:$0xff pattern:$0x75316420]
    %v3419 = vld.sshfl [vmem:[#allocation1 + $0x10] sm:$0xff pattern:$0x75316420]
    %v3420 = vld.sshfl [vmem:[#allocation1 + $0x20] sm:$0xff pattern:$0x75316420]
    %v3421 = vld.sshfl [vmem:[#allocation1 + $0x30] sm:$0xff pattern:$0x75316420]
    %3422 = vst [vmem:[#allocation1] ss:$2 sm:$0xff] %v2990
    %3423 = vst [vmem:[%s3212] ss:$2 sm:$0xff] %v2994
    %3424 = vst [vmem:[%s3214] ss:$2 sm:$0xff] %v2998
    %3425 = vst [vmem:[%s3216] ss:$2 sm:$0xff] %v3002
    %3426 = vst [vmem:[%s3218] ss:$2 sm:$0xff] %v3006
    %3427 = vst [vmem:[%s3220] ss:$2 sm:$0xff] %v3010
    %3428 = vst [vmem:[%s3222] ss:$2 sm:$0xff] %v3014
    %3429 = vst [vmem:[%s3224] ss:$2 sm:$0xff] %v3018
    %v3430 = vld.sshfl [vmem:[#allocation1] sm:$0xff pattern:$0x75316420]
    %v3431 = vld.sshfl [vmem:[#allocation1 + $0x10] sm:$0xff pattern:$0x75316420]
    %v3432 = vld.sshfl [vmem:[#allocation1 + $0x20] sm:$0xff pattern:$0x75316420]
    %v3433 = vld.sshfl [vmem:[#allocation1 + $0x30] sm:$0xff pattern:$0x75316420]
    %3434 = vst [vmem:[#allocation1] ss:$2 sm:$0xff] %v3022
    %3435 = vst [vmem:[%s3212] ss:$2 sm:$0xff] %v3026
    %3436 = vst [vmem:[%s3214] ss:$2 sm:$0xff] %v3030
    %3437 = vst [vmem:[%s3216] ss:$2 sm:$0xff] %v3034
    %3438 = vst [vmem:[%s3218] ss:$2 sm:$0xff] %v3038
    %3439 = vst [vmem:[%s3220] ss:$2 sm:$0xff] %v3042
    %3440 = vst [vmem:[%s3222] ss:$2 sm:$0xff] %v3046
    %3441 = vst [vmem:[%s3224] ss:$2 sm:$0xff] %v3050
    %v3442 = vld.sshfl [vmem:[#allocation1] sm:$0xff pattern:$0x75316420]
    %v3443 = vld.sshfl [vmem:[#allocation1 + $0x10] sm:$0xff pattern:$0x75316420]
    %v3444 = vld.sshfl [vmem:[#allocation1 + $0x20] sm:$0xff pattern:$0x75316420]
    %v3445 = vld.sshfl [vmem:[#allocation1 + $0x30] sm:$0xff pattern:$0x75316420]
    %3446 = vst [vmem:[#allocation1] ss:$2 sm:$0xff] %v3054
    %3447 = vst [vmem:[%s3212] ss:$2 sm:$0xff] %v3058
    %3448 = vst [vmem:[%s3214] ss:$2 sm:$0xff] %v3062
    %3449 = vst [vmem:[%s3216] ss:$2 sm:$0xff] %v3066
    %3450 = vst [vmem:[%s3218] ss:$2 sm:$0xff] %v3070
    %3451 = vst [vmem:[%s3220] ss:$2 sm:$0xff] %v3074
    %3452 = vst [vmem:[%s3222] ss:$2 sm:$0xff] %v3078
    %3453 = vst [vmem:[%s3224] ss:$2 sm:$0xff] %v3082
    %v3454 = vld.sshfl [vmem:[#allocation1] sm:$0xff pattern:$0x75316420]
    %v3455 = vld.sshfl [vmem:[#allocation1 + $0x10] sm:$0xff pattern:$0x75316420]
    %v3456 = vld.sshfl [vmem:[#allocation1 + $0x20] sm:$0xff pattern:$0x75316420]
    %v3457 = vld.sshfl [vmem:[#allocation1 + $0x30] sm:$0xff pattern:$0x75316420]
    %3458 = vst [vmem:[#allocation1] ss:$2 sm:$0xff] %v3086
    %3459 = vst [vmem:[%s3212] ss:$2 sm:$0xff] %v3090
    %3460 = vst [vmem:[%s3214] ss:$2 sm:$0xff] %v3094
    %3461 = vst [vmem:[%s3216] ss:$2 sm:$0xff] %v3098
    %3462 = vst [vmem:[%s3218] ss:$2 sm:$0xff] %v3102
    %3463 = vst [vmem:[%s3220] ss:$2 sm:$0xff] %v3106
    %3464 = vst [vmem:[%s3222] ss:$2 sm:$0xff] %v3110
    %3465 = vst [vmem:[%s3224] ss:$2 sm:$0xff] %v3114
    %v3466 = vld.sshfl [vmem:[#allocation1] sm:$0xff pattern:$0x75316420]
    %v3467 = vld.sshfl [vmem:[#allocation1 + $0x10] sm:$0xff pattern:$0x75316420]
    %v3468 = vld.sshfl [vmem:[#allocation1 + $0x20] sm:$0xff pattern:$0x75316420]
    %v3469 = vld.sshfl [vmem:[#allocation1 + $0x30] sm:$0xff pattern:$0x75316420]
    %3470 = vst [vmem:[#allocation1] ss:$2 sm:$0xff] %v3118
    %3471 = vst [vmem:[%s3212] ss:$2 sm:$0xff] %v3122
    %3472 = vst [vmem:[%s3214] ss:$2 sm:$0xff] %v3126
    %3473 = vst [vmem:[%s3216] ss:$2 sm:$0xff] %v3130
    %3474 = vst [vmem:[%s3218] ss:$2 sm:$0xff] %v3134
    %3475 = vst [vmem:[%s3220] ss:$2 sm:$0xff] %v3138
    %3476 = vst [vmem:[%s3222] ss:$2 sm:$0xff] %v3142
    %3477 = vst [vmem:[%s3224] ss:$2 sm:$0xff] %v3146
    %v3478 = vld.sshfl [vmem:[#allocation1] sm:$0xff pattern:$0x75316420]
    %v3479 = vld.sshfl [vmem:[#allocation1 + $0x10] sm:$0xff pattern:$0x75316420]
    %v3480 = vld.sshfl [vmem:[#allocation1 + $0x20] sm:$0xff pattern:$0x75316420]
    %v3481 = vld.sshfl [vmem:[#allocation1 + $0x30] sm:$0xff pattern:$0x75316420]
    %3482 = vst [vmem:[#allocation1] ss:$2 sm:$0xff] %v3150
    %3483 = vst [vmem:[%s3212] ss:$2 sm:$0xff] %v3154
    %3484 = vst [vmem:[%s3214] ss:$2 sm:$0xff] %v3158
    %3485 = vst [vmem:[%s3216] ss:$2 sm:$0xff] %v3162
    %3486 = vst [vmem:[%s3218] ss:$2 sm:$0xff] %v3166
    %3487 = vst [vmem:[%s3220] ss:$2 sm:$0xff] %v3170
    %3488 = vst [vmem:[%s3222] ss:$2 sm:$0xff] %v3174
    %3489 = vst [vmem:[%s3224] ss:$2 sm:$0xff] %v3178
    %v3490 = vld.sshfl [vmem:[#allocation1] sm:$0xff pattern:$0x75316420]
    %v3491 = vld.sshfl [vmem:[#allocation1 + $0x10] sm:$0xff pattern:$0x75316420]
    %v3492 = vld.sshfl [vmem:[#allocation1 + $0x20] sm:$0xff pattern:$0x75316420]
    %v3493 = vld.sshfl [vmem:[#allocation1 + $0x30] sm:$0xff pattern:$0x75316420]
    %3494 = vst [vmem:[#allocation1] ss:$2 sm:$0xff] %v3182
    %3495 = vst [vmem:[%s3212] ss:$2 sm:$0xff] %v3186
    %3496 = vst [vmem:[%s3214] ss:$2 sm:$0xff] %v3190
    %3497 = vst [vmem:[%s3216] ss:$2 sm:$0xff] %v3194
    %3498 = vst [vmem:[%s3218] ss:$2 sm:$0xff] %v3198
    %3499 = vst [vmem:[%s3220] ss:$2 sm:$0xff] %v3202
    %3500 = vst [vmem:[%s3222] ss:$2 sm:$0xff] %v3206
    %3501 = vst [vmem:[%s3224] ss:$2 sm:$0xff] %v3210
    %v3502 = vld.sshfl [vmem:[#allocation1] sm:$0xff pattern:$0x75316420]
    %v3503 = vld.sshfl [vmem:[#allocation1 + $0x10] sm:$0xff pattern:$0x75316420]
    %v3504 = vld.sshfl [vmem:[#allocation1 + $0x20] sm:$0xff pattern:$0x75316420]
    %v3505 = vld.sshfl [vmem:[#allocation1 + $0x30] sm:$0xff pattern:$0x75316420]
    %3506 = vset.pattern.permute.xlu0 0
    %3507 = vperm.xlu0 %3506, %v3226
    %v3508 = vpop.permute.xlu0 %3507
    %3509 = vset.pattern.permute.xlu0 0
    %3510 = vperm.xlu0 %3509, %v3227
    %v3511 = vpop.permute.xlu0 %3510
    %3512 = vset.pattern.permute.xlu0 0
    %3513 = vperm.xlu0 %3512, %v3228
    %v3514 = vpop.permute.xlu0 %3513
    %3515 = vset.pattern.permute.xlu0 0
    %3516 = vperm.xlu0 %3515, %v3229
    %v3517 = vpop.permute.xlu0 %3516
    %3518 = vset.pattern.permute.xlu0 0
    %3519 = vperm.xlu0 %3518, %v3238
    %v3520 = vpop.permute.xlu0 %3519
    %3521 = vset.pattern.permute.xlu0 0
    %3522 = vperm.xlu0 %3521, %v3239
    %v3523 = vpop.permute.xlu0 %3522
    %3524 = vset.pattern.permute.xlu0 0
    %3525 = vperm.xlu0 %3524, %v3240
    %v3526 = vpop.permute.xlu0 %3525
    %3527 = vset.pattern.permute.xlu0 0
    %3528 = vperm.xlu0 %3527, %v3241
    %v3529 = vpop.permute.xlu0 %3528
    %3530 = vset.pattern.permute.xlu0 0
    %3531 = vperm.xlu0 %3530, %v3250
    %v3532 = vpop.permute.xlu0 %3531
    %3533 = vset.pattern.permute.xlu0 0
    %3534 = vperm.xlu0 %3533, %v3251
    %v3535 = vpop.permute.xlu0 %3534
    %3536 = vset.pattern.permute.xlu0 0
    %3537 = vperm.xlu0 %3536, %v3252
    %v3538 = vpop.permute.xlu0 %3537
    %3539 = vset.pattern.permute.xlu0 0
    %3540 = vperm.xlu0 %3539, %v3253
    %v3541 = vpop.permute.xlu0 %3540
    %3542 = vset.pattern.permute.xlu0 0
    %3543 = vperm.xlu0 %3542, %v3262
    %v3544 = vpop.permute.xlu0 %3543
    %3545 = vset.pattern.permute.xlu0 0
    %3546 = vperm.xlu0 %3545, %v3263
    %v3547 = vpop.permute.xlu0 %3546
    %3548 = vset.pattern.permute.xlu0 0
    %3549 = vperm.xlu0 %3548, %v3264
    %v3550 = vpop.permute.xlu0 %3549
    %3551 = vset.pattern.permute.xlu0 0
    %3552 = vperm.xlu0 %3551, %v3265
    %v3553 = vpop.permute.xlu0 %3552
    %3554 = vset.pattern.permute.xlu0 0
    %3555 = vperm.xlu0 %3554, %v3274
    %v3556 = vpop.permute.xlu0 %3555
    %3557 = vset.pattern.permute.xlu0 0
    %3558 = vperm.xlu0 %3557, %v3275
    %v3559 = vpop.permute.xlu0 %3558
    %3560 = vset.pattern.permute.xlu0 0
    %3561 = vperm.xlu0 %3560, %v3276
    %v3562 = vpop.permute.xlu0 %3561
    %3563 = vset.pattern.permute.xlu0 0
    %3564 = vperm.xlu0 %3563, %v3277
    %v3565 = vpop.permute.xlu0 %3564
    %3566 = vset.pattern.permute.xlu0 0
    %3567 = vperm.xlu0 %3566, %v3286
    %v3568 = vpop.permute.xlu0 %3567
    %3569 = vset.pattern.permute.xlu0 0
    %3570 = vperm.xlu0 %3569, %v3287
    %v3571 = vpop.permute.xlu0 %3570
    %3572 = vset.pattern.permute.xlu0 0
    %3573 = vperm.xlu0 %3572, %v3288
    %v3574 = vpop.permute.xlu0 %3573
    %3575 = vset.pattern.permute.xlu0 0
    %3576 = vperm.xlu0 %3575, %v3289
    %v3577 = vpop.permute.xlu0 %3576
    %3578 = vset.pattern.permute.xlu0 0
    %3579 = vperm.xlu0 %3578, %v3298
    %v3580 = vpop.permute.xlu0 %3579
    %3581 = vset.pattern.permute.xlu0 0
    %3582 = vperm.xlu0 %3581, %v3299
    %v3583 = vpop.permute.xlu0 %3582
    %3584 = vset.pattern.permute.xlu0 0
    %3585 = vperm.xlu0 %3584, %v3300
    %v3586 = vpop.permute.xlu0 %3585
    %3587 = vset.pattern.permute.xlu0 0
    %3588 = vperm.xlu0 %3587, %v3301
    %v3589 = vpop.permute.xlu0 %3588
    %3590 = vset.pattern.permute.xlu0 0
    %3591 = vperm.xlu0 %3590, %v3310
    %v3592 = vpop.permute.xlu0 %3591
    %3593 = vset.pattern.permute.xlu0 0
    %3594 = vperm.xlu0 %3593, %v3311
    %v3595 = vpop.permute.xlu0 %3594
    %3596 = vset.pattern.permute.xlu0 0
    %3597 = vperm.xlu0 %3596, %v3312
    %v3598 = vpop.permute.xlu0 %3597
    %3599 = vset.pattern.permute.xlu0 0
    %3600 = vperm.xlu0 %3599, %v3313
    %v3601 = vpop.permute.xlu0 %3600
    %3602 = vset.pattern.permute.xlu0 0
    %3603 = vperm.xlu0 %3602, %v3322
    %v3604 = vpop.permute.xlu0 %3603
    %3605 = vset.pattern.permute.xlu0 0
    %3606 = vperm.xlu0 %3605, %v3323
    %v3607 = vpop.permute.xlu0 %3606
    %3608 = vset.pattern.permute.xlu0 0
    %3609 = vperm.xlu0 %3608, %v3324
    %v3610 = vpop.permute.xlu0 %3609
    %3611 = vset.pattern.permute.xlu0 0
    %3612 = vperm.xlu0 %3611, %v3325
    %v3613 = vpop.permute.xlu0 %3612
    %3614 = vset.pattern.permute.xlu0 0
    %3615 = vperm.xlu0 %3614, %v3334
    %v3616 = vpop.permute.xlu0 %3615
    %3617 = vset.pattern.permute.xlu0 0
    %3618 = vperm.xlu0 %3617, %v3335
    %v3619 = vpop.permute.xlu0 %3618
    %3620 = vset.pattern.permute.xlu0 0
    %3621 = vperm.xlu0 %3620, %v3336
    %v3622 = vpop.permute.xlu0 %3621
    %3623 = vset.pattern.permute.xlu0 0
    %3624 = vperm.xlu0 %3623, %v3337
    %v3625 = vpop.permute.xlu0 %3624
    %3626 = vset.pattern.permute.xlu0 0
    %3627 = vperm.xlu0 %3626, %v3346
    %v3628 = vpop.permute.xlu0 %3627
    %3629 = vset.pattern.permute.xlu0 0
    %3630 = vperm.xlu0 %3629, %v3347
    %v3631 = vpop.permute.xlu0 %3630
    %3632 = vset.pattern.permute.xlu0 0
    %3633 = vperm.xlu0 %3632, %v3348
    %v3634 = vpop.permute.xlu0 %3633
    %3635 = vset.pattern.permute.xlu0 0
    %3636 = vperm.xlu0 %3635, %v3349
    %v3637 = vpop.permute.xlu0 %3636
    %3638 = vset.pattern.permute.xlu0 0
    %3639 = vperm.xlu0 %3638, %v3358
    %v3640 = vpop.permute.xlu0 %3639
    %3641 = vset.pattern.permute.xlu0 0
    %3642 = vperm.xlu0 %3641, %v3359
    %v3643 = vpop.permute.xlu0 %3642
    %3644 = vset.pattern.permute.xlu0 0
    %3645 = vperm.xlu0 %3644, %v3360
    %v3646 = vpop.permute.xlu0 %3645
    %3647 = vset.pattern.permute.xlu0 0
    %3648 = vperm.xlu0 %3647, %v3361
    %v3649 = vpop.permute.xlu0 %3648
    %3650 = vset.pattern.permute.xlu0 0
    %3651 = vperm.xlu0 %3650, %v3370
    %v3652 = vpop.permute.xlu0 %3651
    %3653 = vset.pattern.permute.xlu0 0
    %3654 = vperm.xlu0 %3653, %v3371
    %v3655 = vpop.permute.xlu0 %3654
    %3656 = vset.pattern.permute.xlu0 0
    %3657 = vperm.xlu0 %3656, %v3372
    %v3658 = vpop.permute.xlu0 %3657
    %3659 = vset.pattern.permute.xlu0 0
    %3660 = vperm.xlu0 %3659, %v3373
    %v3661 = vpop.permute.xlu0 %3660
    %3662 = vset.pattern.permute.xlu0 0
    %3663 = vperm.xlu0 %3662, %v3382
    %v3664 = vpop.permute.xlu0 %3663
    %3665 = vset.pattern.permute.xlu0 0
    %3666 = vperm.xlu0 %3665, %v3383
    %v3667 = vpop.permute.xlu0 %3666
    %3668 = vset.pattern.permute.xlu0 0
    %3669 = vperm.xlu0 %3668, %v3384
    %v3670 = vpop.permute.xlu0 %3669
    %3671 = vset.pattern.permute.xlu0 0
    %3672 = vperm.xlu0 %3671, %v3385
    %v3673 = vpop.permute.xlu0 %3672
    %3674 = vset.pattern.permute.xlu0 0
    %3675 = vperm.xlu0 %3674, %v3394
    %v3676 = vpop.permute.xlu0 %3675
    %3677 = vset.pattern.permute.xlu0 0
    %3678 = vperm.xlu0 %3677, %v3395
    %v3679 = vpop.permute.xlu0 %3678
    %3680 = vset.pattern.permute.xlu0 0
    %3681 = vperm.xlu0 %3680, %v3396
    %v3682 = vpop.permute.xlu0 %3681
    %3683 = vset.pattern.permute.xlu0 0
    %3684 = vperm.xlu0 %3683, %v3397
    %v3685 = vpop.permute.xlu0 %3684
    %3686 = vset.pattern.permute.xlu0 0
    %3687 = vperm.xlu0 %3686, %v3406
    %v3688 = vpop.permute.xlu0 %3687
    %3689 = vset.pattern.permute.xlu0 0
    %3690 = vperm.xlu0 %3689, %v3407
    %v3691 = vpop.permute.xlu0 %3690
    %3692 = vset.pattern.permute.xlu0 0
    %3693 = vperm.xlu0 %3692, %v3408
    %v3694 = vpop.permute.xlu0 %3693
    %3695 = vset.pattern.permute.xlu0 0
    %3696 = vperm.xlu0 %3695, %v3409
    %v3697 = vpop.permute.xlu0 %3696
    %3698 = vset.pattern.permute.xlu0 0
    %3699 = vperm.xlu0 %3698, %v3418
    %v3700 = vpop.permute.xlu0 %3699
    %3701 = vset.pattern.permute.xlu0 0
    %3702 = vperm.xlu0 %3701, %v3419
    %v3703 = vpop.permute.xlu0 %3702
    %3704 = vset.pattern.permute.xlu0 0
    %3705 = vperm.xlu0 %3704, %v3420
    %v3706 = vpop.permute.xlu0 %3705
    %3707 = vset.pattern.permute.xlu0 0
    %3708 = vperm.xlu0 %3707, %v3421
    %v3709 = vpop.permute.xlu0 %3708
    %3710 = vset.pattern.permute.xlu0 0
    %3711 = vperm.xlu0 %3710, %v3430
    %v3712 = vpop.permute.xlu0 %3711
    %3713 = vset.pattern.permute.xlu0 0
    %3714 = vperm.xlu0 %3713, %v3431
    %v3715 = vpop.permute.xlu0 %3714
    %3716 = vset.pattern.permute.xlu0 0
    %3717 = vperm.xlu0 %3716, %v3432
    %v3718 = vpop.permute.xlu0 %3717
    %3719 = vset.pattern.permute.xlu0 0
    %3720 = vperm.xlu0 %3719, %v3433
    %v3721 = vpop.permute.xlu0 %3720
    %3722 = vset.pattern.permute.xlu0 0
    %3723 = vperm.xlu0 %3722, %v3442
    %v3724 = vpop.permute.xlu0 %3723
    %3725 = vset.pattern.permute.xlu0 0
    %3726 = vperm.xlu0 %3725, %v3443
    %v3727 = vpop.permute.xlu0 %3726
    %3728 = vset.pattern.permute.xlu0 0
    %3729 = vperm.xlu0 %3728, %v3444
    %v3730 = vpop.permute.xlu0 %3729
    %3731 = vset.pattern.permute.xlu0 0
    %3732 = vperm.xlu0 %3731, %v3445
    %v3733 = vpop.permute.xlu0 %3732
    %3734 = vset.pattern.permute.xlu0 0
    %3735 = vperm.xlu0 %3734, %v3454
    %v3736 = vpop.permute.xlu0 %3735
    %3737 = vset.pattern.permute.xlu0 0
    %3738 = vperm.xlu0 %3737, %v3455
    %v3739 = vpop.permute.xlu0 %3738
    %3740 = vset.pattern.permute.xlu0 0
    %3741 = vperm.xlu0 %3740, %v3456
    %v3742 = vpop.permute.xlu0 %3741
    %3743 = vset.pattern.permute.xlu0 0
    %3744 = vperm.xlu0 %3743, %v3457
    %v3745 = vpop.permute.xlu0 %3744
    %3746 = vset.pattern.permute.xlu0 0
    %3747 = vperm.xlu0 %3746, %v3466
    %v3748 = vpop.permute.xlu0 %3747
    %3749 = vset.pattern.permute.xlu0 0
    %3750 = vperm.xlu0 %3749, %v3467
    %v3751 = vpop.permute.xlu0 %3750
    %3752 = vset.pattern.permute.xlu0 0
    %3753 = vperm.xlu0 %3752, %v3468
    %v3754 = vpop.permute.xlu0 %3753
    %3755 = vset.pattern.permute.xlu0 0
    %3756 = vperm.xlu0 %3755, %v3469
    %v3757 = vpop.permute.xlu0 %3756
    %3758 = vset.pattern.permute.xlu0 0
    %3759 = vperm.xlu0 %3758, %v3478
    %v3760 = vpop.permute.xlu0 %3759
    %3761 = vset.pattern.permute.xlu0 0
    %3762 = vperm.xlu0 %3761, %v3479
    %v3763 = vpop.permute.xlu0 %3762
    %3764 = vset.pattern.permute.xlu0 0
    %3765 = vperm.xlu0 %3764, %v3480
    %v3766 = vpop.permute.xlu0 %3765
    %3767 = vset.pattern.permute.xlu0 0
    %3768 = vperm.xlu0 %3767, %v3481
    %v3769 = vpop.permute.xlu0 %3768
    %3770 = vset.pattern.permute.xlu0 0
    %3771 = vperm.xlu0 %3770, %v3490
    %v3772 = vpop.permute.xlu0 %3771
    %3773 = vset.pattern.permute.xlu0 0
    %3774 = vperm.xlu0 %3773, %v3491
    %v3775 = vpop.permute.xlu0 %3774
    %3776 = vset.pattern.permute.xlu0 0
    %3777 = vperm.xlu0 %3776, %v3492
    %v3778 = vpop.permute.xlu0 %3777
    %3779 = vset.pattern.permute.xlu0 0
    %3780 = vperm.xlu0 %3779, %v3493
    %v3781 = vpop.permute.xlu0 %3780
    %3782 = vset.pattern.permute.xlu0 0
    %3783 = vperm.xlu0 %3782, %v3502
    %v3784 = vpop.permute.xlu0 %3783
    %3785 = vset.pattern.permute.xlu0 0
    %3786 = vperm.xlu0 %3785, %v3503
    %v3787 = vpop.permute.xlu0 %3786
    %3788 = vset.pattern.permute.xlu0 0
    %3789 = vperm.xlu0 %3788, %v3504
    %v3790 = vpop.permute.xlu0 %3789
    %3791 = vset.pattern.permute.xlu0 0
    %3792 = vperm.xlu0 %3791, %v3505
    %v3793 = vpop.permute.xlu0 %3792
    %v3794 = vperm.slane %v3508, %v2245
    %v3795 = vperm.slane %v3511, %v2247
    %v3796 = vsel %vm2249, %v3795, %v3794
    %v3797 = vperm.slane %v3514, %v2251
    %v3798 = vsel %vm2253, %v3797, %v3796
    %v3799 = vperm.slane %v3517, %v2255
    %v3800 = vsel %vm2257, %v3799, %v3798
    %v3801 = vperm.slane %v3520, %v2259
    %v3802 = vsel %vm2261, %v3801, %v3800
    %v3803 = vperm.slane %v3523, %v2263
    %v3804 = vsel %vm2265, %v3803, %v3802
    %v3805 = vperm.slane %v3526, %v2267
    %v3806 = vsel %vm2269, %v3805, %v3804
    %v3807 = vperm.slane %v3529, %v2271
    %v3808 = vsel %vm2273, %v3807, %v3806
    %v3809 = vperm.slane %v3532, %v2275
    %v3810 = vsel %vm2277, %v3809, %v3808
    %v3811 = vperm.slane %v3535, %v2279
    %v3812 = vsel %vm2281, %v3811, %v3810
    %v3813 = vperm.slane %v3538, %v2283
    %v3814 = vsel %vm2285, %v3813, %v3812
    %v3815 = vperm.slane %v3541, %v2287
    %v3816 = vsel %vm2289, %v3815, %v3814
    %v3817 = vperm.slane %v3544, %v2291
    %v3818 = vsel %vm2293, %v3817, %v3816
    %v3819 = vperm.slane %v3547, %v2295
    %v3820 = vsel %vm2297, %v3819, %v3818
    %v3821 = vperm.slane %v3550, %v2299
    %v3822 = vsel %vm2301, %v3821, %v3820
    %v3823 = vperm.slane %v3553, %v2303
    %v3824 = vsel %vm2305, %v3823, %v3822
    %v3825 = vperm.slane %v3556, %v2245
    %v3826 = vperm.slane %v3559, %v2247
    %v3827 = vsel %vm2249, %v3826, %v3825
    %v3828 = vperm.slane %v3562, %v2251
    %v3829 = vsel %vm2253, %v3828, %v3827
    %v3830 = vperm.slane %v3565, %v2255
    %v3831 = vsel %vm2257, %v3830, %v3829
    %v3832 = vperm.slane %v3568, %v2259
    %v3833 = vsel %vm2261, %v3832, %v3831
    %v3834 = vperm.slane %v3571, %v2263
    %v3835 = vsel %vm2265, %v3834, %v3833
    %v3836 = vperm.slane %v3574, %v2267
    %v3837 = vsel %vm2269, %v3836, %v3835
    %v3838 = vperm.slane %v3577, %v2271
    %v3839 = vsel %vm2273, %v3838, %v3837
    %v3840 = vperm.slane %v3580, %v2275
    %v3841 = vsel %vm2277, %v3840, %v3839
    %v3842 = vperm.slane %v3583, %v2279
    %v3843 = vsel %vm2281, %v3842, %v3841
    %v3844 = vperm.slane %v3586, %v2283
    %v3845 = vsel %vm2285, %v3844, %v3843
    %v3846 = vperm.slane %v3589, %v2287
    %v3847 = vsel %vm2289, %v3846, %v3845
    %v3848 = vperm.slane %v3592, %v2291
    %v3849 = vsel %vm2293, %v3848, %v3847
    %v3850 = vperm.slane %v3595, %v2295
    %v3851 = vsel %vm2297, %v3850, %v3849
    %v3852 = vperm.slane %v3598, %v2299
    %v3853 = vsel %vm2301, %v3852, %v3851
    %v3854 = vperm.slane %v3601, %v2303
    %v3855 = vsel %vm2305, %v3854, %v3853
    %v3856 = vperm.slane %v3604, %v2245
    %v3857 = vperm.slane %v3607, %v2247
    %v3858 = vsel %vm2249, %v3857, %v3856
    %v3859 = vperm.slane %v3610, %v2251
    %v3860 = vsel %vm2253, %v3859, %v3858
    %v3861 = vperm.slane %v3613, %v2255
    %v3862 = vsel %vm2257, %v3861, %v3860
    %v3863 = vperm.slane %v3616, %v2259
    %v3864 = vsel %vm2261, %v3863, %v3862
    %v3865 = vperm.slane %v3619, %v2263
    %v3866 = vsel %vm2265, %v3865, %v3864
    %v3867 = vperm.slane %v3622, %v2267
    %v3868 = vsel %vm2269, %v3867, %v3866
    %v3869 = vperm.slane %v3625, %v2271
    %v3870 = vsel %vm2273, %v3869, %v3868
    %v3871 = vperm.slane %v3628, %v2275
    %v3872 = vsel %vm2277, %v3871, %v3870
    %v3873 = vperm.slane %v3631, %v2279
    %v3874 = vsel %vm2281, %v3873, %v3872
    %v3875 = vperm.slane %v3634, %v2283
    %v3876 = vsel %vm2285, %v3875, %v3874
    %v3877 = vperm.slane %v3637, %v2287
    %v3878 = vsel %vm2289, %v3877, %v3876
    %v3879 = vperm.slane %v3640, %v2291
    %v3880 = vsel %vm2293, %v3879, %v3878
    %v3881 = vperm.slane %v3643, %v2295
    %v3882 = vsel %vm2297, %v3881, %v3880
    %v3883 = vperm.slane %v3646, %v2299
    %v3884 = vsel %vm2301, %v3883, %v3882
    %v3885 = vperm.slane %v3649, %v2303
    %v3886 = vsel %vm2305, %v3885, %v3884
    %v3887 = vperm.slane %v3652, %v2245
    %v3888 = vperm.slane %v3655, %v2247
    %v3889 = vsel %vm2249, %v3888, %v3887
    %v3890 = vperm.slane %v3658, %v2251
    %v3891 = vsel %vm2253, %v3890, %v3889
    %v3892 = vperm.slane %v3661, %v2255
    %v3893 = vsel %vm2257, %v3892, %v3891
    %v3894 = vperm.slane %v3664, %v2259
    %v3895 = vsel %vm2261, %v3894, %v3893
    %v3896 = vperm.slane %v3667, %v2263
    %v3897 = vsel %vm2265, %v3896, %v3895
    %v3898 = vperm.slane %v3670, %v2267
    %v3899 = vsel %vm2269, %v3898, %v3897
    %v3900 = vperm.slane %v3673, %v2271
    %v3901 = vsel %vm2273, %v3900, %v3899
    %v3902 = vperm.slane %v3676, %v2275
    %v3903 = vsel %vm2277, %v3902, %v3901
    %v3904 = vperm.slane %v3679, %v2279
    %v3905 = vsel %vm2281, %v3904, %v3903
    %v3906 = vperm.slane %v3682, %v2283
    %v3907 = vsel %vm2285, %v3906, %v3905
    %v3908 = vperm.slane %v3685, %v2287
    %v3909 = vsel %vm2289, %v3908, %v3907
    %v3910 = vperm.slane %v3688, %v2291
    %v3911 = vsel %vm2293, %v3910, %v3909
    %v3912 = vperm.slane %v3691, %v2295
    %v3913 = vsel %vm2297, %v3912, %v3911
    %v3914 = vperm.slane %v3694, %v2299
    %v3915 = vsel %vm2301, %v3914, %v3913
    %v3916 = vperm.slane %v3697, %v2303
    %v3917 = vsel %vm2305, %v3916, %v3915
    %v3918 = vperm.slane %v3700, %v2245
    %v3919 = vperm.slane %v3703, %v2247
    %v3920 = vsel %vm2249, %v3919, %v3918
    %v3921 = vperm.slane %v3706, %v2251
    %v3922 = vsel %vm2253, %v3921, %v3920
    %v3923 = vperm.slane %v3709, %v2255
    %v3924 = vsel %vm2257, %v3923, %v3922
    %v3925 = vperm.slane %v3712, %v2259
    %v3926 = vsel %vm2261, %v3925, %v3924
    %v3927 = vperm.slane %v3715, %v2263
    %v3928 = vsel %vm2265, %v3927, %v3926
    %v3929 = vperm.slane %v3718, %v2267
    %v3930 = vsel %vm2269, %v3929, %v3928
    %v3931 = vperm.slane %v3721, %v2271
    %v3932 = vsel %vm2273, %v3931, %v3930
    %v3933 = vperm.slane %v3724, %v2275
    %v3934 = vsel %vm2277, %v3933, %v3932
    %v3935 = vperm.slane %v3727, %v2279
    %v3936 = vsel %vm2281, %v3935, %v3934
    %v3937 = vperm.slane %v3730, %v2283
    %v3938 = vsel %vm2285, %v3937, %v3936
    %v3939 = vperm.slane %v3733, %v2287
    %v3940 = vsel %vm2289, %v3939, %v3938
    %v3941 = vperm.slane %v3736, %v2291
    %v3942 = vsel %vm2293, %v3941, %v3940
    %v3943 = vperm.slane %v3739, %v2295
    %v3944 = vsel %vm2297, %v3943, %v3942
    %v3945 = vperm.slane %v3742, %v2299
    %v3946 = vsel %vm2301, %v3945, %v3944
    %v3947 = vperm.slane %v3745, %v2303
    %v3948 = vsel %vm2305, %v3947, %v3946
    %v3949 = vperm.slane %v3748, %v2245
    %v3950 = vperm.slane %v3751, %v2247
    %v3951 = vsel %vm2249, %v3950, %v3949
    %v3952 = vperm.slane %v3754, %v2251
    %v3953 = vsel %vm2253, %v3952, %v3951
    %v3954 = vperm.slane %v3757, %v2255
    %v3955 = vsel %vm2257, %v3954, %v3953
    %v3956 = vperm.slane %v3760, %v2259
    %v3957 = vsel %vm2261, %v3956, %v3955
    %v3958 = vperm.slane %v3763, %v2263
    %v3959 = vsel %vm2265, %v3958, %v3957
    %v3960 = vperm.slane %v3766, %v2267
    %v3961 = vsel %vm2269, %v3960, %v3959
    %v3962 = vperm.slane %v3769, %v2271
    %v3963 = vsel %vm2273, %v3962, %v3961
    %v3964 = vperm.slane %v3772, %v2275
    %v3965 = vsel %vm2277, %v3964, %v3963
    %v3966 = vperm.slane %v3775, %v2279
    %v3967 = vsel %vm2281, %v3966, %v3965
    %v3968 = vperm.slane %v3778, %v2283
    %v3969 = vsel %vm2285, %v3968, %v3967
    %v3970 = vperm.slane %v3781, %v2287
    %v3971 = vsel %vm2289, %v3970, %v3969
    %v3972 = vperm.slane %v3784, %v2291
    %v3973 = vsel %vm2293, %v3972, %v3971
    %v3974 = vperm.slane %v3787, %v2295
    %v3975 = vsel %vm2297, %v3974, %v3973
    %v3976 = vperm.slane %v3790, %v2299
    %v3977 = vsel %vm2301, %v3976, %v3975
    %v3978 = vperm.slane %v3793, %v2303
    %v3979 = vsel %vm2305, %v3978, %v3977
    %vm3980 = vcmask 1041409
    %v3981 = vsel %vm3980, %v3886, %v3824
    %vm3982 = vcmask 1042434
    %v3983 = vsel %vm3982, %v3948, %v3981
    %v3984 = vsel %vm3980, %v3917, %v3855
    %v3985 = vsel %vm3982, %v3979, %v3984
    %v3986 = vrot.slane %v3985, 4
    %vm3987 = vcmask 1043456
    %v3988 = vsel %vm3987, %v3983, %v3986
    %3990 = vst [vmem:[#allocation10] sm:$0x77] %v3988
    // Predicated region
    $region38: #{tpu_custom_call.1} parent=1 // pred_check
      _
    $region39: #{tpu_custom_call.1} parent=1 // pred_check_branch
      %3992 = sbr.rel (0) target = $region41
    $region40: #{tpu_custom_call.1} parent=1 // pred_region
      %3994 = vsyncadd [#allocation5], 0
      %s3996 = sshll.u32 [#allocation9], 4
      %s3997 = int_to_ptr.vmem [resolvable:$true] %s3996
      %s3998 = sshll.u32 %s6, 4
      %s3999 = int_to_ptr.hbm [resolvable:$true] %s3998
      %4001 = dma.vmem_to_hbm [thread:$0]  %s3997, 32, %s3999, [#allocation5]
    $region41: #{tpu_custom_call.1} parent=1 // pred_fallthru
      _
    // Predicated region
    $region42: #{tpu_custom_call.1} parent=1 // pred_check
      _
    $region43: #{tpu_custom_call.1} parent=1 // pred_check_branch
      %4003 = sbr.rel (0) target = $region45
    $region44: #{tpu_custom_call.1} parent=1 // pred_region
      %4005 = vsyncadd [#allocation11], 0
      %s4007 = sshll.u32 [#allocation10], 4
      %s4008 = int_to_ptr.vmem [resolvable:$true] %s4007
      %s4009 = sshll.u32 %s7, 4
      %s4010 = int_to_ptr.hbm [resolvable:$true] %s4009
      %4012 = dma.vmem_to_hbm [thread:$0]  %s4008, 128, %s4010, [#allocation11]
    $region45: #{tpu_custom_call.1} parent=1 // pred_fallthru
      _
    // Predicated region
    $region46: #{tpu_custom_call.1} parent=1 // pred_check
      _
    $region47: #{tpu_custom_call.1} parent=1 // pred_check_branch
      %4014 = sbr.rel (0) target = $region49
    $region48: #{tpu_custom_call.1} parent=1 // pred_region
      %4016 = dma.done [#allocation5], 32
    $region49: #{tpu_custom_call.1} parent=1 // pred_fallthru
      _
    // Predicated region
    $region50: #{tpu_custom_call.1} parent=1 // pred_check
      _
    $region51: #{tpu_custom_call.1} parent=1 // pred_check_branch
      %4018 = sbr.rel (0) target = $region53
    $region52: #{tpu_custom_call.1} parent=1 // pred_region
      %4020 = dma.done [#allocation11], 128
    $region53: #{tpu_custom_call.1} parent=1 // pred_fallthru
      _
    %4021 = vsyncpa [#allocation4], 1
    %4022 = vsyncpa [#allocation7], 1
    %4023 = vsyncpa [#allocation5], 1
    %4024 = vsyncpa [#allocation11], 1

// kernel: tpu_custom_call.1
$region0: #{tpu_custom_call.1}
  #allocation0 [shape = 'u32[]', space=smem, size = 0x4, offset = 0x4, fixed_abs, tag = 'smem constant byte address 0x4 - core index']
  #allocation1 [shape = 'u32[72,128]{1,0:T(1,128)}', space=vmem, size = 0x9000, scoped, tag = 'internal scratch']
  #allocation2 [shape = 'f32[1,1]{1,0:T(1,128)S(1)}', space=vmem, size = 0x200, scoped, tag = 'scoped memory for tpu_custom_call.1']
  %s0 = inlined_call_operand.hbm [shape: f32[5,256,128], index: 0, kind: input, shape index: {}]
  %s1 = inlined_call_operand.hbm [shape: f32[128,128], index: 1, kind: input, shape index: {}]
  %s2 = inlined_call_operand.hbm [shape: f32[128,128], index: 2, kind: input, shape index: {}]
  %s3 = inlined_call_operand.vmem [shape: f32[1,128], index: 3, kind: input, shape index: {}]
  %s4 = inlined_call_operand.vmem [shape: f32[1,128], index: 4, kind: input, shape index: {}]
  %s5 = inlined_call_operand.<no memory space> [shape: f32[1,1], index: 5, kind: input, shape index: {}]
  %s6 = inlined_call_operand.hbm [shape: f32[1,256], index: 6, kind: output, shape index: {0}]
  %s7 = inlined_call_operand.hbm [shape: f32[3,256], index: 7, kind: output, shape index: {1}]
  %8 = xla_tuple %s6, %s7
  %s9 = sld [smem:[#allocation0]]
  $region54: #{tpu_custom_call.1} parent=0
    _
  %s11 = ssub.s32 1, %s9
  %s12 = scalar_select 0, %s11, %s9
  %v13 = vstv %s5
  %14 = vst [vmem:[#allocation2] sm:$0x1] %v13
  $region1: #{tpu_custom_call.1} parent=0
    #allocation3 [shape = 'u8[655360]{0}', space=vmem, size = 0xa0000, scoped, tag = 'input window, operand 0, single buffered']
    #allocation4 [shape = 's32[1]{0}', space=sflag, size = 0x4, scoped, tag = 'scoped memory for tpu_custom_call.1']
    #allocation5 [shape = 's32[1]{0}', space=sflag, size = 0x4, scoped, tag = 'scoped memory for tpu_custom_call.1']
    #allocation6 [shape = 'u8[65536]{0}', space=vmem, size = 0x10000, scoped, tag = 'input window, operand 1, single buffered']
    #allocation7 [shape = 's32[1]{0}', space=sflag, size = 0x4, scoped, tag = 'scoped memory for tpu_custom_call.1']
    #allocation8 [shape = 'u8[65536]{0}', space=vmem, size = 0x10000, scoped, tag = 'input window, operand 2, single buffered']
    #allocation9 [shape = 'u8[1024]{0}', space=vmem, size = 0x400, scoped, tag = 'output window, operand 0, single buffered']
    #allocation10 [shape = 'u8[4096]{0}', space=vmem, size = 0x1000, scoped, tag = 'output window, operand 1, single buffered']
    #allocation11 [shape = 's32[1]{0}', space=sflag, size = 0x4, scoped, tag = 'scoped memory for tpu_custom_call.1']
    %15 = vsyncpa [#allocation4], 0
    %16 = vsyncpa [#allocation7], 0
    %17 = vsyncpa [#allocation5], 0
    %18 = vsyncpa [#allocation11], 0
    // Predicated region
    $region2: #{tpu_custom_call.1} parent=1 // pred_check
      _
    $region3: #{tpu_custom_call.1} parent=1 // pred_check_branch
      %20 = sbr.rel (0) target = $region5
    $region4: #{tpu_custom_call.1} parent=1 // pred_region
      %22 = vsyncadd [#allocation4], 0
      %s23 = sshll.u32 %s0, 4
      %s24 = int_to_ptr.hbm [resolvable:$true] %s23
      %s25 = sshll.u32 [#allocation3], 4
      %s26 = int_to_ptr.vmem [resolvable:$true] %s25
      %31 = dma.hbm_to_vmem [thread:$0]  %s24, 20480, %s26, [#allocation4], 128, 128, 8
    $region5: #{tpu_custom_call.1} parent=1 // pred_fallthru
      _
    // Predicated region
    $region6: #{tpu_custom_call.1} parent=1 // pred_check
      _
    $region7: #{tpu_custom_call.1} parent=1 // pred_check_branch
      %33 = sbr.rel (0) target = $region9
    $region8: #{tpu_custom_call.1} parent=1 // pred_region
      %35 = vsyncadd [#allocation7], 0
      %s36 = sshll.u32 %s1, 4
      %s37 = int_to_ptr.hbm [resolvable:$true] %s36
      %s38 = sshll.u32 [#allocation6], 4
      %s39 = int_to_ptr.vmem [resolvable:$true] %s38
      %44 = dma.hbm_to_vmem [thread:$0]  %s37, 2048, %s39, [#allocation7], 128, 128, 8
    $region9: #{tpu_custom_call.1} parent=1 // pred_fallthru
      _
    // Predicated region
    $region10: #{tpu_custom_call.1} parent=1 // pred_check
      _
    $region11: #{tpu_custom_call.1} parent=1 // pred_check_branch
      %46 = sbr.rel (0) target = $region13
    $region12: #{tpu_custom_call.1} parent=1 // pred_region
      %48 = vsyncadd [#allocation7], 0
      %s49 = sshll.u32 %s2, 4
      %s50 = int_to_ptr.hbm [resolvable:$true] %s49
      %s51 = sshll.u32 [#allocation8], 4
      %s52 = int_to_ptr.vmem [resolvable:$true] %s51
      %57 = dma.hbm_to_vmem [thread:$0]  %s50, 2048, %s52, [#allocation7], 128, 128, 8
    $region13: #{tpu_custom_call.1} parent=1 // pred_fallthru
      _
    // Predicated region
    $region14: #{tpu_custom_call.1} parent=1 // pred_check
      _
    $region15: #{tpu_custom_call.1} parent=1 // pred_check_branch
      %59 = sbr.rel (0) target = $region17
    $region16: #{tpu_custom_call.1} parent=1 // pred_region
      _
    $region17: #{tpu_custom_call.1} parent=1 // pred_fallthru
      _
    // Predicated region
    $region18: #{tpu_custom_call.1} parent=1 // pred_check
      _
    $region19: #{tpu_custom_call.1} parent=1 // pred_check_branch
      %61 = sbr.rel (0) target = $region21
    $region20: #{tpu_custom_call.1} parent=1 // pred_region
      _
    $region21: #{tpu_custom_call.1} parent=1 // pred_fallthru
      _
    // Predicated region
    $region22: #{tpu_custom_call.1} parent=1 // pred_check
      _
    $region23: #{tpu_custom_call.1} parent=1 // pred_check_branch
      %63 = sbr.rel (0) target = $region25
    $region24: #{tpu_custom_call.1} parent=1 // pred_region
      _
    $region25: #{tpu_custom_call.1} parent=1 // pred_fallthru
      _
    // Predicated region
    $region26: #{tpu_custom_call.1} parent=1 // pred_check
      _
    $region27: #{tpu_custom_call.1} parent=1 // pred_check_branch
      %65 = sbr.rel (0) target = $region29
    $region28: #{tpu_custom_call.1} parent=1 // pred_region
      %67 = dma.done [#allocation4], 20480
    $region29: #{tpu_custom_call.1} parent=1 // pred_fallthru
      _
    // Predicated region
    $region30: #{tpu_custom_call.1} parent=1 // pred_check
      _
    $region31: #{tpu_custom_call.1} parent=1 // pred_check_branch
      %69 = sbr.rel (0) target = $region33
    $region32: #{tpu_custom_call.1} parent=1 // pred_region
      %71 = dma.done [#allocation7], 2048
    $region33: #{tpu_custom_call.1} parent=1 // pred_fallthru
      _
    // Predicated region
    $region34: #{tpu_custom_call.1} parent=1 // pred_check
      _
    $region35: #{tpu_custom_call.1} parent=1 // pred_check_branch
      %73 = sbr.rel (0) target = $region37
    $region36: #{tpu_custom_call.1} parent=1 // pred_region
      %75 = dma.done [#allocation7], 2048
    $region37: #{tpu_custom_call.1} parent=1 // pred_fallthru
      _
    %v76 = vld [vmem:[#allocation3] sm:$0xff]
    %v77 = vld [vmem:[#allocation3 + $0x8] sm:$0xff]
    %v78 = vld [vmem:[#allocation3 + $0x10] sm:$0xff]
    %v79 = vld [vmem:[#allocation3 + $0x18] sm:$0xff]
    %v80 = vld [vmem:[#allocation3 + $0x20] sm:$0xff]
    %v81 = vld [vmem:[#allocation3 + $0x28] sm:$0xff]
    %v82 = vld [vmem:[#allocation3 + $0x30] sm:$0xff]
    %v83 = vld [vmem:[#allocation3 + $0x38] sm:$0xff]
    %v84 = vld [vmem:[#allocation3 + $0x40] sm:$0xff]
    %v85 = vld [vmem:[#allocation3 + $0x48] sm:$0xff]
    %v86 = vld [vmem:[#allocation3 + $0x50] sm:$0xff]
    %v87 = vld [vmem:[#allocation3 + $0x58] sm:$0xff]
    %v88 = vld [vmem:[#allocation3 + $0x60] sm:$0xff]
    %v89 = vld [vmem:[#allocation3 + $0x68] sm:$0xff]
    %v90 = vld [vmem:[#allocation3 + $0x70] sm:$0xff]
    %v91 = vld [vmem:[#allocation3 + $0x78] sm:$0xff]
    %v92 = vld [vmem:[#allocation3 + $0x80] sm:$0xff]
    %v93 = vld [vmem:[#allocation3 + $0x88] sm:$0xff]
    %v94 = vld [vmem:[#allocation3 + $0x90] sm:$0xff]
    %v95 = vld [vmem:[#allocation3 + $0x98] sm:$0xff]
    %v96 = vld [vmem:[#allocation3 + $0xa0] sm:$0xff]
    %v97 = vld [vmem:[#allocation3 + $0xa8] sm:$0xff]
    %v98 = vld [vmem:[#allocation3 + $0xb0] sm:$0xff]
    %v99 = vld [vmem:[#allocation3 + $0xb8] sm:$0xff]
    %v100 = vld [vmem:[#allocation3 + $0xc0] sm:$0xff]
    %v101 = vld [vmem:[#allocation3 + $0xc8] sm:$0xff]
    %v102 = vld [vmem:[#allocation3 + $0xd0] sm:$0xff]
    %v103 = vld [vmem:[#allocation3 + $0xd8] sm:$0xff]
    %v104 = vld [vmem:[#allocation3 + $0xe0] sm:$0xff]
    %v105 = vld [vmem:[#allocation3 + $0xe8] sm:$0xff]
    %v106 = vld [vmem:[#allocation3 + $0xf0] sm:$0xff]
    %v107 = vld [vmem:[#allocation3 + $0xf8] sm:$0xff]
    %v108 = vld [vmem:[#allocation3 + $0x100] sm:$0xff]
    %v109 = vld [vmem:[#allocation3 + $0x108] sm:$0xff]
    %v110 = vld [vmem:[#allocation3 + $0x110] sm:$0xff]
    %v111 = vld [vmem:[#allocation3 + $0x118] sm:$0xff]
    %v112 = vld [vmem:[#allocation3 + $0x120] sm:$0xff]
    %v113 = vld [vmem:[#allocation3 + $0x128] sm:$0xff]
    %v114 = vld [vmem:[#allocation3 + $0x130] sm:$0xff]
    %v115 = vld [vmem:[#allocation3 + $0x138] sm:$0xff]
    %v116 = vld [vmem:[#allocation3 + $0x140] sm:$0xff]
    %v117 = vld [vmem:[#allocation3 + $0x148] sm:$0xff]
    %v118 = vld [vmem:[#allocation3 + $0x150] sm:$0xff]
    %v119 = vld [vmem:[#allocation3 + $0x158] sm:$0xff]
    %v120 = vld [vmem:[#allocation3 + $0x160] sm:$0xff]
    %v121 = vld [vmem:[#allocation3 + $0x168] sm:$0xff]
    %v122 = vld [vmem:[#allocation3 + $0x170] sm:$0xff]
    %v123 = vld [vmem:[#allocation3 + $0x178] sm:$0xff]
    %v124 = vld [vmem:[#allocation3 + $0x180] sm:$0xff]
    %v125 = vld [vmem:[#allocation3 + $0x188] sm:$0xff]
    %v126 = vld [vmem:[#allocation3 + $0x190] sm:$0xff]
    %v127 = vld [vmem:[#allocation3 + $0x198] sm:$0xff]
    %v128 = vld [vmem:[#allocation3 + $0x1a0] sm:$0xff]
    %v129 = vld [vmem:[#allocation3 + $0x1a8] sm:$0xff]
    %v130 = vld [vmem:[#allocation3 + $0x1b0] sm:$0xff]
    %v131 = vld [vmem:[#allocation3 + $0x1b8] sm:$0xff]
    %v132 = vld [vmem:[#allocation3 + $0x1c0] sm:$0xff]
    %v133 = vld [vmem:[#allocation3 + $0x1c8] sm:$0xff]
    %v134 = vld [vmem:[#allocation3 + $0x1d0] sm:$0xff]
    %v135 = vld [vmem:[#allocation3 + $0x1d8] sm:$0xff]
    %v136 = vld [vmem:[#allocation3 + $0x1e0] sm:$0xff]
    %v137 = vld [vmem:[#allocation3 + $0x1e8] sm:$0xff]
    %v138 = vld [vmem:[#allocation3 + $0x1f0] sm:$0xff]
    %v139 = vld [vmem:[#allocation3 + $0x1f8] sm:$0xff]
    %v140 = vld [vmem:[#allocation3 + $0x200] sm:$0xff]
    %v141 = vld [vmem:[#allocation3 + $0x208] sm:$0xff]
    %v142 = vld [vmem:[#allocation3 + $0x210] sm:$0xff]
    %v143 = vld [vmem:[#allocation3 + $0x218] sm:$0xff]
    %v144 = vld [vmem:[#allocation3 + $0x220] sm:$0xff]
    %v145 = vld [vmem:[#allocation3 + $0x228] sm:$0xff]
    %v146 = vld [vmem:[#allocation3 + $0x230] sm:$0xff]
    %v147 = vld [vmem:[#allocation3 + $0x238] sm:$0xff]
    %v148 = vld [vmem:[#allocation3 + $0x240] sm:$0xff]
    %v149 = vld [vmem:[#allocation3 + $0x248] sm:$0xff]
    %v150 = vld [vmem:[#allocation3 + $0x250] sm:$0xff]
    %v151 = vld [vmem:[#allocation3 + $0x258] sm:$0xff]
    %v152 = vld [vmem:[#allocation3 + $0x260] sm:$0xff]
    %v153 = vld [vmem:[#allocation3 + $0x268] sm:$0xff]
    %v154 = vld [vmem:[#allocation3 + $0x270] sm:$0xff]
    %v155 = vld [vmem:[#allocation3 + $0x278] sm:$0xff]
    %v156 = vld [vmem:[#allocation3 + $0x280] sm:$0xff]
    %v157 = vld [vmem:[#allocation3 + $0x288] sm:$0xff]
    %v158 = vld [vmem:[#allocation3 + $0x290] sm:$0xff]
    %v159 = vld [vmem:[#allocation3 + $0x298] sm:$0xff]
    %v160 = vld [vmem:[#allocation3 + $0x2a0] sm:$0xff]
    %v161 = vld [vmem:[#allocation3 + $0x2a8] sm:$0xff]
    %v162 = vld [vmem:[#allocation3 + $0x2b0] sm:$0xff]
    %v163 = vld [vmem:[#allocation3 + $0x2b8] sm:$0xff]
    %v164 = vld [vmem:[#allocation3 + $0x2c0] sm:$0xff]
    %v165 = vld [vmem:[#allocation3 + $0x2c8] sm:$0xff]
    %v166 = vld [vmem:[#allocation3 + $0x2d0] sm:$0xff]
    %v167 = vld [vmem:[#allocation3 + $0x2d8] sm:$0xff]
    %v168 = vld [vmem:[#allocation3 + $0x2e0] sm:$0xff]
    %v169 = vld [vmem:[#allocation3 + $0x2e8] sm:$0xff]
    %v170 = vld [vmem:[#allocation3 + $0x2f0] sm:$0xff]
    %v171 = vld [vmem:[#allocation3 + $0x2f8] sm:$0xff]
    %v172 = vld [vmem:[#allocation3 + $0x300] sm:$0xff]
    %v173 = vld [vmem:[#allocation3 + $0x308] sm:$0xff]
    %v174 = vld [vmem:[#allocation3 + $0x310] sm:$0xff]
    %v175 = vld [vmem:[#allocation3 + $0x318] sm:$0xff]
    %v176 = vld [vmem:[#allocation3 + $0x320] sm:$0xff]
    %v177 = vld [vmem:[#allocation3 + $0x328] sm:$0xff]
    %v178 = vld [vmem:[#allocation3 + $0x330] sm:$0xff]
    %v179 = vld [vmem:[#allocation3 + $0x338] sm:$0xff]
    %v180 = vld [vmem:[#allocation3 + $0x340] sm:$0xff]
    %v181 = vld [vmem:[#allocation3 + $0x348] sm:$0xff]
    %v182 = vld [vmem:[#allocation3 + $0x350] sm:$0xff]
    %v183 = vld [vmem:[#allocation3 + $0x358] sm:$0xff]
    %v184 = vld [vmem:[#allocation3 + $0x360] sm:$0xff]
    %v185 = vld [vmem:[#allocation3 + $0x368] sm:$0xff]
    %v186 = vld [vmem:[#allocation3 + $0x370] sm:$0xff]
    %v187 = vld [vmem:[#allocation3 + $0x378] sm:$0xff]
    %v188 = vld [vmem:[#allocation3 + $0x380] sm:$0xff]
    %v189 = vld [vmem:[#allocation3 + $0x388] sm:$0xff]
    %v190 = vld [vmem:[#allocation3 + $0x390] sm:$0xff]
    %v191 = vld [vmem:[#allocation3 + $0x398] sm:$0xff]
    %v192 = vld [vmem:[#allocation3 + $0x3a0] sm:$0xff]
    %v193 = vld [vmem:[#allocation3 + $0x3a8] sm:$0xff]
    %v194 = vld [vmem:[#allocation3 + $0x3b0] sm:$0xff]
    %v195 = vld [vmem:[#allocation3 + $0x3b8] sm:$0xff]
    %v196 = vld [vmem:[#allocation3 + $0x3c0] sm:$0xff]
    %v197 = vld [vmem:[#allocation3 + $0x3c8] sm:$0xff]
    %v198 = vld [vmem:[#allocation3 + $0x3d0] sm:$0xff]
    %v199 = vld [vmem:[#allocation3 + $0x3d8] sm:$0xff]
    %v200 = vld [vmem:[#allocation3 + $0x3e0] sm:$0xff]
    %v201 = vld [vmem:[#allocation3 + $0x3e8] sm:$0xff]
    %v202 = vld [vmem:[#allocation3 + $0x3f0] sm:$0xff]
    %v203 = vld [vmem:[#allocation3 + $0x3f8] sm:$0xff]
    %v204 = vld [vmem:[#allocation3 + $0x400] sm:$0xff]
    %v205 = vld [vmem:[#allocation3 + $0x408] sm:$0xff]
    %v206 = vld [vmem:[#allocation3 + $0x410] sm:$0xff]
    %v207 = vld [vmem:[#allocation3 + $0x418] sm:$0xff]
    %v208 = vld [vmem:[#allocation3 + $0x420] sm:$0xff]
    %v209 = vld [vmem:[#allocation3 + $0x428] sm:$0xff]
    %v210 = vld [vmem:[#allocation3 + $0x430] sm:$0xff]
    %v211 = vld [vmem:[#allocation3 + $0x438] sm:$0xff]
    %v212 = vld [vmem:[#allocation3 + $0x440] sm:$0xff]
    %v213 = vld [vmem:[#allocation3 + $0x448] sm:$0xff]
    %v214 = vld [vmem:[#allocation3 + $0x450] sm:$0xff]
    %v215 = vld [vmem:[#allocation3 + $0x458] sm:$0xff]
    %v216 = vld [vmem:[#allocation3 + $0x460] sm:$0xff]
    %v217 = vld [vmem:[#allocation3 + $0x468] sm:$0xff]
    %v218 = vld [vmem:[#allocation3 + $0x470] sm:$0xff]
    %v219 = vld [vmem:[#allocation3 + $0x478] sm:$0xff]
    %v220 = vld [vmem:[#allocation3 + $0x480] sm:$0xff]
    %v221 = vld [vmem:[#allocation3 + $0x488] sm:$0xff]
    %v222 = vld [vmem:[#allocation3 + $0x490] sm:$0xff]
    %v223 = vld [vmem:[#allocation3 + $0x498] sm:$0xff]
    %v224 = vld [vmem:[#allocation3 + $0x4a0] sm:$0xff]
    %v225 = vld [vmem:[#allocation3 + $0x4a8] sm:$0xff]
    %v226 = vld [vmem:[#allocation3 + $0x4b0] sm:$0xff]
    %v227 = vld [vmem:[#allocation3 + $0x4b8] sm:$0xff]
    %v228 = vld [vmem:[#allocation3 + $0x4c0] sm:$0xff]
    %v229 = vld [vmem:[#allocation3 + $0x4c8] sm:$0xff]
    %v230 = vld [vmem:[#allocation3 + $0x4d0] sm:$0xff]
    %v231 = vld [vmem:[#allocation3 + $0x4d8] sm:$0xff]
    %v232 = vld [vmem:[#allocation3 + $0x4e0] sm:$0xff]
    %v233 = vld [vmem:[#allocation3 + $0x4e8] sm:$0xff]
    %v234 = vld [vmem:[#allocation3 + $0x4f0] sm:$0xff]
    %v235 = vld [vmem:[#allocation3 + $0x4f8] sm:$0xff]
    %v236 = vld [vmem:[#allocation6] sm:$0xff]
    %v237 = vld [vmem:[#allocation6 + $0x8] sm:$0xff]
    %v238 = vld [vmem:[#allocation6 + $0x10] sm:$0xff]
    %v239 = vld [vmem:[#allocation6 + $0x18] sm:$0xff]
    %v240 = vld [vmem:[#allocation6 + $0x20] sm:$0xff]
    %v241 = vld [vmem:[#allocation6 + $0x28] sm:$0xff]
    %v242 = vld [vmem:[#allocation6 + $0x30] sm:$0xff]
    %v243 = vld [vmem:[#allocation6 + $0x38] sm:$0xff]
    %v244 = vld [vmem:[#allocation6 + $0x40] sm:$0xff]
    %v245 = vld [vmem:[#allocation6 + $0x48] sm:$0xff]
    %v246 = vld [vmem:[#allocation6 + $0x50] sm:$0xff]
    %v247 = vld [vmem:[#allocation6 + $0x58] sm:$0xff]
    %v248 = vld [vmem:[#allocation6 + $0x60] sm:$0xff]
    %v249 = vld [vmem:[#allocation6 + $0x68] sm:$0xff]
    %v250 = vld [vmem:[#allocation6 + $0x70] sm:$0xff]
    %v251 = vld [vmem:[#allocation6 + $0x78] sm:$0xff]
    %252 = vmatpush.msra.mxu0 %v251
    %253 = vmatpush.msra.mxu0 %v250
    %254 = vmatpush.msra.mxu0 %v249
    %255 = vmatpush.msra.mxu0 %v248
    %256 = vmatpush.msra.mxu0 %v247
    %257 = vmatpush.msra.mxu0 %v246
    %258 = vmatpush.msra.mxu0 %v245
    %259 = vmatpush.msra.mxu0 %v244
    %260 = vmatpush.msra.mxu0 %v243
    %261 = vmatpush.msra.mxu0 %v242
    %262 = vmatpush.msra.mxu0 %v241
    %263 = vmatpush.msra.mxu0 %v240
    %264 = vmatpush.msra.mxu0 %v239
    %265 = vmatpush.msra.mxu0 %v238
    %266 = vmatpush.msra.mxu0 %v237
    %267 = vmatpush.msra.mxu0 %v236
    %268 = vmatmul.f32.gmra.mxu0 %v76
    %v269 = vpop.f32.mrf.mxu0
    %v270 = vadd.f32 0.0, %v269
    %271 = vmatmul.f32.gmra.mxu0 %v77
    %v272 = vpop.f32.mrf.mxu0
    %v273 = vadd.f32 0.0, %v272
    %274 = vmatmul.f32.gmra.mxu0 %v78
    %v275 = vpop.f32.mrf.mxu0
    %v276 = vadd.f32 0.0, %v275
    %277 = vmatmul.f32.gmra.mxu0 %v79
    %v278 = vpop.f32.mrf.mxu0
    %v279 = vadd.f32 0.0, %v278
    %280 = vmatmul.f32.gmra.mxu0 %v80
    %v281 = vpop.f32.mrf.mxu0
    %v282 = vadd.f32 0.0, %v281
    %283 = vmatmul.f32.gmra.mxu0 %v81
    %v284 = vpop.f32.mrf.mxu0
    %v285 = vadd.f32 0.0, %v284
    %286 = vmatmul.f32.gmra.mxu0 %v82
    %v287 = vpop.f32.mrf.mxu0
    %v288 = vadd.f32 0.0, %v287
    %289 = vmatmul.f32.gmra.mxu0 %v83
    %v290 = vpop.f32.mrf.mxu0
    %v291 = vadd.f32 0.0, %v290
    %292 = vmatmul.f32.gmra.mxu0 %v84
    %v293 = vpop.f32.mrf.mxu0
    %v294 = vadd.f32 0.0, %v293
    %295 = vmatmul.f32.gmra.mxu0 %v85
    %v296 = vpop.f32.mrf.mxu0
    %v297 = vadd.f32 0.0, %v296
    %298 = vmatmul.f32.gmra.mxu0 %v86
    %v299 = vpop.f32.mrf.mxu0
    %v300 = vadd.f32 0.0, %v299
    %301 = vmatmul.f32.gmra.mxu0 %v87
    %v302 = vpop.f32.mrf.mxu0
    %v303 = vadd.f32 0.0, %v302
    %304 = vmatmul.f32.gmra.mxu0 %v88
    %v305 = vpop.f32.mrf.mxu0
    %v306 = vadd.f32 0.0, %v305
    %307 = vmatmul.f32.gmra.mxu0 %v89
    %v308 = vpop.f32.mrf.mxu0
    %v309 = vadd.f32 0.0, %v308
    %310 = vmatmul.f32.gmra.mxu0 %v90
    %v311 = vpop.f32.mrf.mxu0
    %v312 = vadd.f32 0.0, %v311
    %313 = vmatmul.f32.gmra.mxu0 %v91
    %v314 = vpop.f32.mrf.mxu0
    %v315 = vadd.f32 0.0, %v314
    %316 = vmatmul.f32.gmra.mxu0 %v92
    %v317 = vpop.f32.mrf.mxu0
    %v318 = vadd.f32 0.0, %v317
    %319 = vmatmul.f32.gmra.mxu0 %v93
    %v320 = vpop.f32.mrf.mxu0
    %v321 = vadd.f32 0.0, %v320
    %322 = vmatmul.f32.gmra.mxu0 %v94
    %v323 = vpop.f32.mrf.mxu0
    %v324 = vadd.f32 0.0, %v323
    %325 = vmatmul.f32.gmra.mxu0 %v95
    %v326 = vpop.f32.mrf.mxu0
    %v327 = vadd.f32 0.0, %v326
    %328 = vmatmul.f32.gmra.mxu0 %v96
    %v329 = vpop.f32.mrf.mxu0
    %v330 = vadd.f32 0.0, %v329
    %331 = vmatmul.f32.gmra.mxu0 %v97
    %v332 = vpop.f32.mrf.mxu0
    %v333 = vadd.f32 0.0, %v332
    %334 = vmatmul.f32.gmra.mxu0 %v98
    %v335 = vpop.f32.mrf.mxu0
    %v336 = vadd.f32 0.0, %v335
    %337 = vmatmul.f32.gmra.mxu0 %v99
    %v338 = vpop.f32.mrf.mxu0
    %v339 = vadd.f32 0.0, %v338
    %340 = vmatmul.f32.gmra.mxu0 %v100
    %v341 = vpop.f32.mrf.mxu0
    %v342 = vadd.f32 0.0, %v341
    %343 = vmatmul.f32.gmra.mxu0 %v101
    %v344 = vpop.f32.mrf.mxu0
    %v345 = vadd.f32 0.0, %v344
    %346 = vmatmul.f32.gmra.mxu0 %v102
    %v347 = vpop.f32.mrf.mxu0
    %v348 = vadd.f32 0.0, %v347
    %349 = vmatmul.f32.gmra.mxu0 %v103
    %v350 = vpop.f32.mrf.mxu0
    %v351 = vadd.f32 0.0, %v350
    %352 = vmatmul.f32.gmra.mxu0 %v104
    %v353 = vpop.f32.mrf.mxu0
    %v354 = vadd.f32 0.0, %v353
    %355 = vmatmul.f32.gmra.mxu0 %v105
    %v356 = vpop.f32.mrf.mxu0
    %v357 = vadd.f32 0.0, %v356
    %358 = vmatmul.f32.gmra.mxu0 %v106
    %v359 = vpop.f32.mrf.mxu0
    %v360 = vadd.f32 0.0, %v359
    %361 = vmatmul.f32.gmra.mxu0 %v107
    %v362 = vpop.f32.mrf.mxu0
    %v363 = vadd.f32 0.0, %v362
    %364 = vdwg.mxu0
    %v365 = vld [vmem:[#allocation8] sm:$0xff]
    %v366 = vld [vmem:[#allocation8 + $0x8] sm:$0xff]
    %v367 = vld [vmem:[#allocation8 + $0x10] sm:$0xff]
    %v368 = vld [vmem:[#allocation8 + $0x18] sm:$0xff]
    %v369 = vld [vmem:[#allocation8 + $0x20] sm:$0xff]
    %v370 = vld [vmem:[#allocation8 + $0x28] sm:$0xff]
    %v371 = vld [vmem:[#allocation8 + $0x30] sm:$0xff]
    %v372 = vld [vmem:[#allocation8 + $0x38] sm:$0xff]
    %v373 = vld [vmem:[#allocation8 + $0x40] sm:$0xff]
    %v374 = vld [vmem:[#allocation8 + $0x48] sm:$0xff]
    %v375 = vld [vmem:[#allocation8 + $0x50] sm:$0xff]
    %v376 = vld [vmem:[#allocation8 + $0x58] sm:$0xff]
    %v377 = vld [vmem:[#allocation8 + $0x60] sm:$0xff]
    %v378 = vld [vmem:[#allocation8 + $0x68] sm:$0xff]
    %v379 = vld [vmem:[#allocation8 + $0x70] sm:$0xff]
    %v380 = vld [vmem:[#allocation8 + $0x78] sm:$0xff]
    %v381 = vld [vmem:[%s3] sm:$0x1]
    %v383 = vperm.slane %v381, 0
    %385 = vmatpush.msra.mxu0 %v380
    %386 = vmatpush.msra.mxu0 %v379
    %387 = vmatpush.msra.mxu0 %v378
    %388 = vmatpush.msra.mxu0 %v377
    %389 = vmatpush.msra.mxu0 %v376
    %390 = vmatpush.msra.mxu0 %v375
    %391 = vmatpush.msra.mxu0 %v374
    %392 = vmatpush.msra.mxu0 %v373
    %393 = vmatpush.msra.mxu0 %v372
    %394 = vmatpush.msra.mxu0 %v371
    %395 = vmatpush.msra.mxu0 %v370
    %396 = vmatpush.msra.mxu0 %v369
    %397 = vmatpush.msra.mxu0 %v368
    %398 = vmatpush.msra.mxu0 %v367
    %399 = vmatpush.msra.mxu0 %v366
    %400 = vmatpush.msra.mxu0 %v365
    %401 = vmatmul.f32.gmra.mxu0 %v108
    %v402 = vpop.f32.mrf.mxu0
    %v403 = vadd.f32 %v383, %v402
    %404 = vmatmul.f32.gmra.mxu0 %v109
    %v405 = vpop.f32.mrf.mxu0
    %v406 = vadd.f32 %v383, %v405
    %407 = vmatmul.f32.gmra.mxu0 %v110
    %v408 = vpop.f32.mrf.mxu0
    %v409 = vadd.f32 %v383, %v408
    %410 = vmatmul.f32.gmra.mxu0 %v111
    %v411 = vpop.f32.mrf.mxu0
    %v412 = vadd.f32 %v383, %v411
    %413 = vmatmul.f32.gmra.mxu0 %v112
    %v414 = vpop.f32.mrf.mxu0
    %v415 = vadd.f32 %v383, %v414
    %416 = vmatmul.f32.gmra.mxu0 %v113
    %v417 = vpop.f32.mrf.mxu0
    %v418 = vadd.f32 %v383, %v417
    %419 = vmatmul.f32.gmra.mxu0 %v114
    %v420 = vpop.f32.mrf.mxu0
    %v421 = vadd.f32 %v383, %v420
    %422 = vmatmul.f32.gmra.mxu0 %v115
    %v423 = vpop.f32.mrf.mxu0
    %v424 = vadd.f32 %v383, %v423
    %425 = vmatmul.f32.gmra.mxu0 %v116
    %v426 = vpop.f32.mrf.mxu0
    %v427 = vadd.f32 %v383, %v426
    %428 = vmatmul.f32.gmra.mxu0 %v117
    %v429 = vpop.f32.mrf.mxu0
    %v430 = vadd.f32 %v383, %v429
    %431 = vmatmul.f32.gmra.mxu0 %v118
    %v432 = vpop.f32.mrf.mxu0
    %v433 = vadd.f32 %v383, %v432
    %434 = vmatmul.f32.gmra.mxu0 %v119
    %v435 = vpop.f32.mrf.mxu0
    %v436 = vadd.f32 %v383, %v435
    %437 = vmatmul.f32.gmra.mxu0 %v120
    %v438 = vpop.f32.mrf.mxu0
    %v439 = vadd.f32 %v383, %v438
    %440 = vmatmul.f32.gmra.mxu0 %v121
    %v441 = vpop.f32.mrf.mxu0
    %v442 = vadd.f32 %v383, %v441
    %443 = vmatmul.f32.gmra.mxu0 %v122
    %v444 = vpop.f32.mrf.mxu0
    %v445 = vadd.f32 %v383, %v444
    %446 = vmatmul.f32.gmra.mxu0 %v123
    %v447 = vpop.f32.mrf.mxu0
    %v448 = vadd.f32 %v383, %v447
    %449 = vmatmul.f32.gmra.mxu0 %v124
    %v450 = vpop.f32.mrf.mxu0
    %v451 = vadd.f32 %v383, %v450
    %452 = vmatmul.f32.gmra.mxu0 %v125
    %v453 = vpop.f32.mrf.mxu0
    %v454 = vadd.f32 %v383, %v453
    %455 = vmatmul.f32.gmra.mxu0 %v126
    %v456 = vpop.f32.mrf.mxu0
    %v457 = vadd.f32 %v383, %v456
    %458 = vmatmul.f32.gmra.mxu0 %v127
    %v459 = vpop.f32.mrf.mxu0
    %v460 = vadd.f32 %v383, %v459
    %461 = vmatmul.f32.gmra.mxu0 %v128
    %v462 = vpop.f32.mrf.mxu0
    %v463 = vadd.f32 %v383, %v462
    %464 = vmatmul.f32.gmra.mxu0 %v129
    %v465 = vpop.f32.mrf.mxu0
    %v466 = vadd.f32 %v383, %v465
    %467 = vmatmul.f32.gmra.mxu0 %v130
    %v468 = vpop.f32.mrf.mxu0
    %v469 = vadd.f32 %v383, %v468
    %470 = vmatmul.f32.gmra.mxu0 %v131
    %v471 = vpop.f32.mrf.mxu0
    %v472 = vadd.f32 %v383, %v471
    %473 = vmatmul.f32.gmra.mxu0 %v132
    %v474 = vpop.f32.mrf.mxu0
    %v475 = vadd.f32 %v383, %v474
    %476 = vmatmul.f32.gmra.mxu0 %v133
    %v477 = vpop.f32.mrf.mxu0
    %v478 = vadd.f32 %v383, %v477
    %479 = vmatmul.f32.gmra.mxu0 %v134
    %v480 = vpop.f32.mrf.mxu0
    %v481 = vadd.f32 %v383, %v480
    %482 = vmatmul.f32.gmra.mxu0 %v135
    %v483 = vpop.f32.mrf.mxu0
    %v484 = vadd.f32 %v383, %v483
    %485 = vmatmul.f32.gmra.mxu0 %v136
    %v486 = vpop.f32.mrf.mxu0
    %v487 = vadd.f32 %v383, %v486
    %488 = vmatmul.f32.gmra.mxu0 %v137
    %v489 = vpop.f32.mrf.mxu0
    %v490 = vadd.f32 %v383, %v489
    %491 = vmatmul.f32.gmra.mxu0 %v138
    %v492 = vpop.f32.mrf.mxu0
    %v493 = vadd.f32 %v383, %v492
    %494 = vmatmul.f32.gmra.mxu0 %v139
    %v495 = vpop.f32.mrf.mxu0
    %v496 = vadd.f32 %v383, %v495
    %497 = vmatmul.f32.gmra.mxu0 %v140
    %v498 = vpop.f32.mrf.mxu0
    %v499 = vadd.f32 %v383, %v498
    %500 = vmatmul.f32.gmra.mxu0 %v141
    %v501 = vpop.f32.mrf.mxu0
    %v502 = vadd.f32 %v383, %v501
    %503 = vmatmul.f32.gmra.mxu0 %v142
    %v504 = vpop.f32.mrf.mxu0
    %v505 = vadd.f32 %v383, %v504
    %506 = vmatmul.f32.gmra.mxu0 %v143
    %v507 = vpop.f32.mrf.mxu0
    %v508 = vadd.f32 %v383, %v507
    %509 = vmatmul.f32.gmra.mxu0 %v144
    %v510 = vpop.f32.mrf.mxu0
    %v511 = vadd.f32 %v383, %v510
    %512 = vmatmul.f32.gmra.mxu0 %v145
    %v513 = vpop.f32.mrf.mxu0
    %v514 = vadd.f32 %v383, %v513
    %515 = vmatmul.f32.gmra.mxu0 %v146
    %v516 = vpop.f32.mrf.mxu0
    %v517 = vadd.f32 %v383, %v516
    %518 = vmatmul.f32.gmra.mxu0 %v147
    %v519 = vpop.f32.mrf.mxu0
    %v520 = vadd.f32 %v383, %v519
    %521 = vmatmul.f32.gmra.mxu0 %v148
    %v522 = vpop.f32.mrf.mxu0
    %v523 = vadd.f32 %v383, %v522
    %524 = vmatmul.f32.gmra.mxu0 %v149
    %v525 = vpop.f32.mrf.mxu0
    %v526 = vadd.f32 %v383, %v525
    %527 = vmatmul.f32.gmra.mxu0 %v150
    %v528 = vpop.f32.mrf.mxu0
    %v529 = vadd.f32 %v383, %v528
    %530 = vmatmul.f32.gmra.mxu0 %v151
    %v531 = vpop.f32.mrf.mxu0
    %v532 = vadd.f32 %v383, %v531
    %533 = vmatmul.f32.gmra.mxu0 %v152
    %v534 = vpop.f32.mrf.mxu0
    %v535 = vadd.f32 %v383, %v534
    %536 = vmatmul.f32.gmra.mxu0 %v153
    %v537 = vpop.f32.mrf.mxu0
    %v538 = vadd.f32 %v383, %v537
    %539 = vmatmul.f32.gmra.mxu0 %v154
    %v540 = vpop.f32.mrf.mxu0
    %v541 = vadd.f32 %v383, %v540
    %542 = vmatmul.f32.gmra.mxu0 %v155
    %v543 = vpop.f32.mrf.mxu0
    %v544 = vadd.f32 %v383, %v543
    %545 = vmatmul.f32.gmra.mxu0 %v156
    %v546 = vpop.f32.mrf.mxu0
    %v547 = vadd.f32 %v383, %v546
    %548 = vmatmul.f32.gmra.mxu0 %v157
    %v549 = vpop.f32.mrf.mxu0
    %v550 = vadd.f32 %v383, %v549
    %551 = vmatmul.f32.gmra.mxu0 %v158
    %v552 = vpop.f32.mrf.mxu0
    %v553 = vadd.f32 %v383, %v552
    %554 = vmatmul.f32.gmra.mxu0 %v159
    %v555 = vpop.f32.mrf.mxu0
    %v556 = vadd.f32 %v383, %v555
    %557 = vmatmul.f32.gmra.mxu0 %v160
    %v558 = vpop.f32.mrf.mxu0
    %v559 = vadd.f32 %v383, %v558
    %560 = vmatmul.f32.gmra.mxu0 %v161
    %v561 = vpop.f32.mrf.mxu0
    %v562 = vadd.f32 %v383, %v561
    %563 = vmatmul.f32.gmra.mxu0 %v162
    %v564 = vpop.f32.mrf.mxu0
    %v565 = vadd.f32 %v383, %v564
    %566 = vmatmul.f32.gmra.mxu0 %v163
    %v567 = vpop.f32.mrf.mxu0
    %v568 = vadd.f32 %v383, %v567
    %569 = vmatmul.f32.gmra.mxu0 %v164
    %v570 = vpop.f32.mrf.mxu0
    %v571 = vadd.f32 %v383, %v570
    %572 = vmatmul.f32.gmra.mxu0 %v165
    %v573 = vpop.f32.mrf.mxu0
    %v574 = vadd.f32 %v383, %v573
    %575 = vmatmul.f32.gmra.mxu0 %v166
    %v576 = vpop.f32.mrf.mxu0
    %v577 = vadd.f32 %v383, %v576
    %578 = vmatmul.f32.gmra.mxu0 %v167
    %v579 = vpop.f32.mrf.mxu0
    %v580 = vadd.f32 %v383, %v579
    %581 = vmatmul.f32.gmra.mxu0 %v168
    %v582 = vpop.f32.mrf.mxu0
    %v583 = vadd.f32 %v383, %v582
    %584 = vmatmul.f32.gmra.mxu0 %v169
    %v585 = vpop.f32.mrf.mxu0
    %v586 = vadd.f32 %v383, %v585
    %587 = vmatmul.f32.gmra.mxu0 %v170
    %v588 = vpop.f32.mrf.mxu0
    %v589 = vadd.f32 %v383, %v588
    %590 = vmatmul.f32.gmra.mxu0 %v171
    %v591 = vpop.f32.mrf.mxu0
    %v592 = vadd.f32 %v383, %v591
    %593 = vmatmul.f32.gmra.mxu0 %v172
    %v594 = vpop.f32.mrf.mxu0
    %v595 = vadd.f32 %v383, %v594
    %596 = vmatmul.f32.gmra.mxu0 %v173
    %v597 = vpop.f32.mrf.mxu0
    %v598 = vadd.f32 %v383, %v597
    %599 = vmatmul.f32.gmra.mxu0 %v174
    %v600 = vpop.f32.mrf.mxu0
    %v601 = vadd.f32 %v383, %v600
    %602 = vmatmul.f32.gmra.mxu0 %v175
    %v603 = vpop.f32.mrf.mxu0
    %v604 = vadd.f32 %v383, %v603
    %605 = vmatmul.f32.gmra.mxu0 %v176
    %v606 = vpop.f32.mrf.mxu0
    %v607 = vadd.f32 %v383, %v606
    %608 = vmatmul.f32.gmra.mxu0 %v177
    %v609 = vpop.f32.mrf.mxu0
    %v610 = vadd.f32 %v383, %v609
    %611 = vmatmul.f32.gmra.mxu0 %v178
    %v612 = vpop.f32.mrf.mxu0
    %v613 = vadd.f32 %v383, %v612
    %614 = vmatmul.f32.gmra.mxu0 %v179
    %v615 = vpop.f32.mrf.mxu0
    %v616 = vadd.f32 %v383, %v615
    %617 = vmatmul.f32.gmra.mxu0 %v180
    %v618 = vpop.f32.mrf.mxu0
    %v619 = vadd.f32 %v383, %v618
    %620 = vmatmul.f32.gmra.mxu0 %v181
    %v621 = vpop.f32.mrf.mxu0
    %v622 = vadd.f32 %v383, %v621
    %623 = vmatmul.f32.gmra.mxu0 %v182
    %v624 = vpop.f32.mrf.mxu0
    %v625 = vadd.f32 %v383, %v624
    %626 = vmatmul.f32.gmra.mxu0 %v183
    %v627 = vpop.f32.mrf.mxu0
    %v628 = vadd.f32 %v383, %v627
    %629 = vmatmul.f32.gmra.mxu0 %v184
    %v630 = vpop.f32.mrf.mxu0
    %v631 = vadd.f32 %v383, %v630
    %632 = vmatmul.f32.gmra.mxu0 %v185
    %v633 = vpop.f32.mrf.mxu0
    %v634 = vadd.f32 %v383, %v633
    %635 = vmatmul.f32.gmra.mxu0 %v186
    %v636 = vpop.f32.mrf.mxu0
    %v637 = vadd.f32 %v383, %v636
    %638 = vmatmul.f32.gmra.mxu0 %v187
    %v639 = vpop.f32.mrf.mxu0
    %v640 = vadd.f32 %v383, %v639
    %641 = vmatmul.f32.gmra.mxu0 %v188
    %v642 = vpop.f32.mrf.mxu0
    %v643 = vadd.f32 %v383, %v642
    %644 = vmatmul.f32.gmra.mxu0 %v189
    %v645 = vpop.f32.mrf.mxu0
    %v646 = vadd.f32 %v383, %v645
    %647 = vmatmul.f32.gmra.mxu0 %v190
    %v648 = vpop.f32.mrf.mxu0
    %v649 = vadd.f32 %v383, %v648
    %650 = vmatmul.f32.gmra.mxu0 %v191
    %v651 = vpop.f32.mrf.mxu0
    %v652 = vadd.f32 %v383, %v651
    %653 = vmatmul.f32.gmra.mxu0 %v192
    %v654 = vpop.f32.mrf.mxu0
    %v655 = vadd.f32 %v383, %v654
    %656 = vmatmul.f32.gmra.mxu0 %v193
    %v657 = vpop.f32.mrf.mxu0
    %v658 = vadd.f32 %v383, %v657
    %659 = vmatmul.f32.gmra.mxu0 %v194
    %v660 = vpop.f32.mrf.mxu0
    %v661 = vadd.f32 %v383, %v660
    %662 = vmatmul.f32.gmra.mxu0 %v195
    %v663 = vpop.f32.mrf.mxu0
    %v664 = vadd.f32 %v383, %v663
    %665 = vmatmul.f32.gmra.mxu0 %v196
    %v666 = vpop.f32.mrf.mxu0
    %v667 = vadd.f32 %v383, %v666
    %668 = vmatmul.f32.gmra.mxu0 %v197
    %v669 = vpop.f32.mrf.mxu0
    %v670 = vadd.f32 %v383, %v669
    %671 = vmatmul.f32.gmra.mxu0 %v198
    %v672 = vpop.f32.mrf.mxu0
    %v673 = vadd.f32 %v383, %v672
    %674 = vmatmul.f32.gmra.mxu0 %v199
    %v675 = vpop.f32.mrf.mxu0
    %v676 = vadd.f32 %v383, %v675
    %677 = vmatmul.f32.gmra.mxu0 %v200
    %v678 = vpop.f32.mrf.mxu0
    %v679 = vadd.f32 %v383, %v678
    %680 = vmatmul.f32.gmra.mxu0 %v201
    %v681 = vpop.f32.mrf.mxu0
    %v682 = vadd.f32 %v383, %v681
    %683 = vmatmul.f32.gmra.mxu0 %v202
    %v684 = vpop.f32.mrf.mxu0
    %v685 = vadd.f32 %v383, %v684
    %686 = vmatmul.f32.gmra.mxu0 %v203
    %v687 = vpop.f32.mrf.mxu0
    %v688 = vadd.f32 %v383, %v687
    %689 = vmatmul.f32.gmra.mxu0 %v204
    %v690 = vpop.f32.mrf.mxu0
    %v691 = vadd.f32 %v383, %v690
    %692 = vmatmul.f32.gmra.mxu0 %v205
    %v693 = vpop.f32.mrf.mxu0
    %v694 = vadd.f32 %v383, %v693
    %695 = vmatmul.f32.gmra.mxu0 %v206
    %v696 = vpop.f32.mrf.mxu0
    %v697 = vadd.f32 %v383, %v696
    %698 = vmatmul.f32.gmra.mxu0 %v207
    %v699 = vpop.f32.mrf.mxu0
    %v700 = vadd.f32 %v383, %v699
    %701 = vmatmul.f32.gmra.mxu0 %v208
    %v702 = vpop.f32.mrf.mxu0
    %v703 = vadd.f32 %v383, %v702
    %704 = vmatmul.f32.gmra.mxu0 %v209
    %v705 = vpop.f32.mrf.mxu0
    %v706 = vadd.f32 %v383, %v705
    %707 = vmatmul.f32.gmra.mxu0 %v210
    %v708 = vpop.f32.mrf.mxu0
    %v709 = vadd.f32 %v383, %v708
    %710 = vmatmul.f32.gmra.mxu0 %v211
    %v711 = vpop.f32.mrf.mxu0
    %v712 = vadd.f32 %v383, %v711
    %713 = vmatmul.f32.gmra.mxu0 %v212
    %v714 = vpop.f32.mrf.mxu0
    %v715 = vadd.f32 %v383, %v714
    %716 = vmatmul.f32.gmra.mxu0 %v213
    %v717 = vpop.f32.mrf.mxu0
    %v718 = vadd.f32 %v383, %v717
    %719 = vmatmul.f32.gmra.mxu0 %v214
    %v720 = vpop.f32.mrf.mxu0
    %v721 = vadd.f32 %v383, %v720
    %722 = vmatmul.f32.gmra.mxu0 %v215
    %v723 = vpop.f32.mrf.mxu0
    %v724 = vadd.f32 %v383, %v723
    %725 = vmatmul.f32.gmra.mxu0 %v216
    %v726 = vpop.f32.mrf.mxu0
    %v727 = vadd.f32 %v383, %v726
    %728 = vmatmul.f32.gmra.mxu0 %v217
    %v729 = vpop.f32.mrf.mxu0
    %v730 = vadd.f32 %v383, %v729
    %731 = vmatmul.f32.gmra.mxu0 %v218
    %v732 = vpop.f32.mrf.mxu0
    %v733 = vadd.f32 %v383, %v732
    %734 = vmatmul.f32.gmra.mxu0 %v219
    %v735 = vpop.f32.mrf.mxu0
    %v736 = vadd.f32 %v383, %v735
    %737 = vmatmul.f32.gmra.mxu0 %v220
    %v738 = vpop.f32.mrf.mxu0
    %v739 = vadd.f32 %v383, %v738
    %740 = vmatmul.f32.gmra.mxu0 %v221
    %v741 = vpop.f32.mrf.mxu0
    %v742 = vadd.f32 %v383, %v741
    %743 = vmatmul.f32.gmra.mxu0 %v222
    %v744 = vpop.f32.mrf.mxu0
    %v745 = vadd.f32 %v383, %v744
    %746 = vmatmul.f32.gmra.mxu0 %v223
    %v747 = vpop.f32.mrf.mxu0
    %v748 = vadd.f32 %v383, %v747
    %749 = vmatmul.f32.gmra.mxu0 %v224
    %v750 = vpop.f32.mrf.mxu0
    %v751 = vadd.f32 %v383, %v750
    %752 = vmatmul.f32.gmra.mxu0 %v225
    %v753 = vpop.f32.mrf.mxu0
    %v754 = vadd.f32 %v383, %v753
    %755 = vmatmul.f32.gmra.mxu0 %v226
    %v756 = vpop.f32.mrf.mxu0
    %v757 = vadd.f32 %v383, %v756
    %758 = vmatmul.f32.gmra.mxu0 %v227
    %v759 = vpop.f32.mrf.mxu0
    %v760 = vadd.f32 %v383, %v759
    %761 = vmatmul.f32.gmra.mxu0 %v228
    %v762 = vpop.f32.mrf.mxu0
    %v763 = vadd.f32 %v383, %v762
    %764 = vmatmul.f32.gmra.mxu0 %v229
    %v765 = vpop.f32.mrf.mxu0
    %v766 = vadd.f32 %v383, %v765
    %767 = vmatmul.f32.gmra.mxu0 %v230
    %v768 = vpop.f32.mrf.mxu0
    %v769 = vadd.f32 %v383, %v768
    %770 = vmatmul.f32.gmra.mxu0 %v231
    %v771 = vpop.f32.mrf.mxu0
    %v772 = vadd.f32 %v383, %v771
    %773 = vmatmul.f32.gmra.mxu0 %v232
    %v774 = vpop.f32.mrf.mxu0
    %v775 = vadd.f32 %v383, %v774
    %776 = vmatmul.f32.gmra.mxu0 %v233
    %v777 = vpop.f32.mrf.mxu0
    %v778 = vadd.f32 %v383, %v777
    %779 = vmatmul.f32.gmra.mxu0 %v234
    %v780 = vpop.f32.mrf.mxu0
    %v781 = vadd.f32 %v383, %v780
    %782 = vmatmul.f32.gmra.mxu0 %v235
    %v783 = vpop.f32.mrf.mxu0
    %v784 = vadd.f32 %v383, %v783
    %785 = vdwg.mxu0
    %v786 = vadd.f32 %v403, %v270
    %v787 = vadd.f32 %v406, %v273
    %v788 = vadd.f32 %v409, %v276
    %v789 = vadd.f32 %v412, %v279
    %v790 = vadd.f32 %v415, %v282
    %v791 = vadd.f32 %v418, %v285
    %v792 = vadd.f32 %v421, %v288
    %v793 = vadd.f32 %v424, %v291
    %v794 = vadd.f32 %v427, %v294
    %v795 = vadd.f32 %v430, %v297
    %v796 = vadd.f32 %v433, %v300
    %v797 = vadd.f32 %v436, %v303
    %v798 = vadd.f32 %v439, %v306
    %v799 = vadd.f32 %v442, %v309
    %v800 = vadd.f32 %v445, %v312
    %v801 = vadd.f32 %v448, %v315
    %v802 = vadd.f32 %v451, %v318
    %v803 = vadd.f32 %v454, %v321
    %v804 = vadd.f32 %v457, %v324
    %v805 = vadd.f32 %v460, %v327
    %v806 = vadd.f32 %v463, %v330
    %v807 = vadd.f32 %v466, %v333
    %v808 = vadd.f32 %v469, %v336
    %v809 = vadd.f32 %v472, %v339
    %v810 = vadd.f32 %v475, %v342
    %v811 = vadd.f32 %v478, %v345
    %v812 = vadd.f32 %v481, %v348
    %v813 = vadd.f32 %v484, %v351
    %v814 = vadd.f32 %v487, %v354
    %v815 = vadd.f32 %v490, %v357
    %v816 = vadd.f32 %v493, %v360
    %v817 = vadd.f32 %v496, %v363
    %v818 = vadd.f32 %v499, %v270
    %v819 = vadd.f32 %v502, %v273
    %v820 = vadd.f32 %v505, %v276
    %v821 = vadd.f32 %v508, %v279
    %v822 = vadd.f32 %v511, %v282
    %v823 = vadd.f32 %v514, %v285
    %v824 = vadd.f32 %v517, %v288
    %v825 = vadd.f32 %v520, %v291
    %v826 = vadd.f32 %v523, %v294
    %v827 = vadd.f32 %v526, %v297
    %v828 = vadd.f32 %v529, %v300
    %v829 = vadd.f32 %v532, %v303
    %v830 = vadd.f32 %v535, %v306
    %v831 = vadd.f32 %v538, %v309
    %v832 = vadd.f32 %v541, %v312
    %v833 = vadd.f32 %v544, %v315
    %v834 = vadd.f32 %v547, %v318
    %v835 = vadd.f32 %v550, %v321
    %v836 = vadd.f32 %v553, %v324
    %v837 = vadd.f32 %v556, %v327
    %v838 = vadd.f32 %v559, %v330
    %v839 = vadd.f32 %v562, %v333
    %v840 = vadd.f32 %v565, %v336
    %v841 = vadd.f32 %v568, %v339
    %v842 = vadd.f32 %v571, %v342
    %v843 = vadd.f32 %v574, %v345
    %v844 = vadd.f32 %v577, %v348
    %v845 = vadd.f32 %v580, %v351
    %v846 = vadd.f32 %v583, %v354
    %v847 = vadd.f32 %v586, %v357
    %v848 = vadd.f32 %v589, %v360
    %v849 = vadd.f32 %v592, %v363
    %v850 = vadd.f32 %v595, %v270
    %v851 = vadd.f32 %v598, %v273
    %v852 = vadd.f32 %v601, %v276
    %v853 = vadd.f32 %v604, %v279
    %v854 = vadd.f32 %v607, %v282
    %v855 = vadd.f32 %v610, %v285
    %v856 = vadd.f32 %v613, %v288
    %v857 = vadd.f32 %v616, %v291
    %v858 = vadd.f32 %v619, %v294
    %v859 = vadd.f32 %v622, %v297
    %v860 = vadd.f32 %v625, %v300
    %v861 = vadd.f32 %v628, %v303
    %v862 = vadd.f32 %v631, %v306
    %v863 = vadd.f32 %v634, %v309
    %v864 = vadd.f32 %v637, %v312
    %v865 = vadd.f32 %v640, %v315
    %v866 = vadd.f32 %v643, %v318
    %v867 = vadd.f32 %v646, %v321
    %v868 = vadd.f32 %v649, %v324
    %v869 = vadd.f32 %v652, %v327
    %v870 = vadd.f32 %v655, %v330
    %v871 = vadd.f32 %v658, %v333
    %v872 = vadd.f32 %v661, %v336
    %v873 = vadd.f32 %v664, %v339
    %v874 = vadd.f32 %v667, %v342
    %v875 = vadd.f32 %v670, %v345
    %v876 = vadd.f32 %v673, %v348
    %v877 = vadd.f32 %v676, %v351
    %v878 = vadd.f32 %v679, %v354
    %v879 = vadd.f32 %v682, %v357
    %v880 = vadd.f32 %v685, %v360
    %v881 = vadd.f32 %v688, %v363
    %v882 = vadd.f32 %v691, %v270
    %v883 = vadd.f32 %v694, %v273
    %v884 = vadd.f32 %v697, %v276
    %v885 = vadd.f32 %v700, %v279
    %v886 = vadd.f32 %v703, %v282
    %v887 = vadd.f32 %v706, %v285
    %v888 = vadd.f32 %v709, %v288
    %v889 = vadd.f32 %v712, %v291
    %v890 = vadd.f32 %v715, %v294
    %v891 = vadd.f32 %v718, %v297
    %v892 = vadd.f32 %v721, %v300
    %v893 = vadd.f32 %v724, %v303
    %v894 = vadd.f32 %v727, %v306
    %v895 = vadd.f32 %v730, %v309
    %v896 = vadd.f32 %v733, %v312
    %v897 = vadd.f32 %v736, %v315
    %v898 = vadd.f32 %v739, %v318
    %v899 = vadd.f32 %v742, %v321
    %v900 = vadd.f32 %v745, %v324
    %v901 = vadd.f32 %v748, %v327
    %v902 = vadd.f32 %v751, %v330
    %v903 = vadd.f32 %v754, %v333
    %v904 = vadd.f32 %v757, %v336
    %v905 = vadd.f32 %v760, %v339
    %v906 = vadd.f32 %v763, %v342
    %v907 = vadd.f32 %v766, %v345
    %v908 = vadd.f32 %v769, %v348
    %v909 = vadd.f32 %v772, %v351
    %v910 = vadd.f32 %v775, %v354
    %v911 = vadd.f32 %v778, %v357
    %v912 = vadd.f32 %v781, %v360
    %v913 = vadd.f32 %v784, %v363
    %v914 = vmax.f32 %v786, 0.0
    %v915 = vmax.f32 %v787, 0.0
    %v916 = vmax.f32 %v788, 0.0
    %v917 = vmax.f32 %v789, 0.0
    %v918 = vmax.f32 %v790, 0.0
    %v919 = vmax.f32 %v791, 0.0
    %v920 = vmax.f32 %v792, 0.0
    %v921 = vmax.f32 %v793, 0.0
    %v922 = vmax.f32 %v794, 0.0
    %v923 = vmax.f32 %v795, 0.0
    %v924 = vmax.f32 %v796, 0.0
    %v925 = vmax.f32 %v797, 0.0
    %v926 = vmax.f32 %v798, 0.0
    %v927 = vmax.f32 %v799, 0.0
    %v928 = vmax.f32 %v800, 0.0
    %v929 = vmax.f32 %v801, 0.0
    %v930 = vmax.f32 %v802, 0.0
    %v931 = vmax.f32 %v803, 0.0
    %v932 = vmax.f32 %v804, 0.0
    %v933 = vmax.f32 %v805, 0.0
    %v934 = vmax.f32 %v806, 0.0
    %v935 = vmax.f32 %v807, 0.0
    %v936 = vmax.f32 %v808, 0.0
    %v937 = vmax.f32 %v809, 0.0
    %v938 = vmax.f32 %v810, 0.0
    %v939 = vmax.f32 %v811, 0.0
    %v940 = vmax.f32 %v812, 0.0
    %v941 = vmax.f32 %v813, 0.0
    %v942 = vmax.f32 %v814, 0.0
    %v943 = vmax.f32 %v815, 0.0
    %v944 = vmax.f32 %v816, 0.0
    %v945 = vmax.f32 %v817, 0.0
    %v946 = vmax.f32 %v818, 0.0
    %v947 = vmax.f32 %v819, 0.0
    %v948 = vmax.f32 %v820, 0.0
    %v949 = vmax.f32 %v821, 0.0
    %v950 = vmax.f32 %v822, 0.0
    %v951 = vmax.f32 %v823, 0.0
    %v952 = vmax.f32 %v824, 0.0
    %v953 = vmax.f32 %v825, 0.0
    %v954 = vmax.f32 %v826, 0.0
    %v955 = vmax.f32 %v827, 0.0
    %v956 = vmax.f32 %v828, 0.0
    %v957 = vmax.f32 %v829, 0.0
    %v958 = vmax.f32 %v830, 0.0
    %v959 = vmax.f32 %v831, 0.0
    %v960 = vmax.f32 %v832, 0.0
    %v961 = vmax.f32 %v833, 0.0
    %v962 = vmax.f32 %v834, 0.0
    %v963 = vmax.f32 %v835, 0.0
    %v964 = vmax.f32 %v836, 0.0
    %v965 = vmax.f32 %v837, 0.0
    %v966 = vmax.f32 %v838, 0.0
    %v967 = vmax.f32 %v839, 0.0
    %v968 = vmax.f32 %v840, 0.0
    %v969 = vmax.f32 %v841, 0.0
    %v970 = vmax.f32 %v842, 0.0
    %v971 = vmax.f32 %v843, 0.0
    %v972 = vmax.f32 %v844, 0.0
    %v973 = vmax.f32 %v845, 0.0
    %v974 = vmax.f32 %v846, 0.0
    %v975 = vmax.f32 %v847, 0.0
    %v976 = vmax.f32 %v848, 0.0
    %v977 = vmax.f32 %v849, 0.0
    %v978 = vmax.f32 %v850, 0.0
    %v979 = vmax.f32 %v851, 0.0
    %v980 = vmax.f32 %v852, 0.0
    %v981 = vmax.f32 %v853, 0.0
    %v982 = vmax.f32 %v854, 0.0
    %v983 = vmax.f32 %v855, 0.0
    %v984 = vmax.f32 %v856, 0.0
    %v985 = vmax.f32 %v857, 0.0
    %v986 = vmax.f32 %v858, 0.0
    %v987 = vmax.f32 %v859, 0.0
    %v988 = vmax.f32 %v860, 0.0
    %v989 = vmax.f32 %v861, 0.0
    %v990 = vmax.f32 %v862, 0.0
    %v991 = vmax.f32 %v863, 0.0
    %v992 = vmax.f32 %v864, 0.0
    %v993 = vmax.f32 %v865, 0.0
    %v994 = vmax.f32 %v866, 0.0
    %v995 = vmax.f32 %v867, 0.0
    %v996 = vmax.f32 %v868, 0.0
    %v997 = vmax.f32 %v869, 0.0
    %v998 = vmax.f32 %v870, 0.0
    %v999 = vmax.f32 %v871, 0.0
    %v1000 = vmax.f32 %v872, 0.0
    %v1001 = vmax.f32 %v873, 0.0
    %v1002 = vmax.f32 %v874, 0.0
    %v1003 = vmax.f32 %v875, 0.0
    %v1004 = vmax.f32 %v876, 0.0
    %v1005 = vmax.f32 %v877, 0.0
    %v1006 = vmax.f32 %v878, 0.0
    %v1007 = vmax.f32 %v879, 0.0
    %v1008 = vmax.f32 %v880, 0.0
    %v1009 = vmax.f32 %v881, 0.0
    %v1010 = vmax.f32 %v882, 0.0
    %v1011 = vmax.f32 %v883, 0.0
    %v1012 = vmax.f32 %v884, 0.0
    %v1013 = vmax.f32 %v885, 0.0
    %v1014 = vmax.f32 %v886, 0.0
    %v1015 = vmax.f32 %v887, 0.0
    %v1016 = vmax.f32 %v888, 0.0
    %v1017 = vmax.f32 %v889, 0.0
    %v1018 = vmax.f32 %v890, 0.0
    %v1019 = vmax.f32 %v891, 0.0
    %v1020 = vmax.f32 %v892, 0.0
    %v1021 = vmax.f32 %v893, 0.0
    %v1022 = vmax.f32 %v894, 0.0
    %v1023 = vmax.f32 %v895, 0.0
    %v1024 = vmax.f32 %v896, 0.0
    %v1025 = vmax.f32 %v897, 0.0
    %v1026 = vmax.f32 %v898, 0.0
    %v1027 = vmax.f32 %v899, 0.0
    %v1028 = vmax.f32 %v900, 0.0
    %v1029 = vmax.f32 %v901, 0.0
    %v1030 = vmax.f32 %v902, 0.0
    %v1031 = vmax.f32 %v903, 0.0
    %v1032 = vmax.f32 %v904, 0.0
    %v1033 = vmax.f32 %v905, 0.0
    %v1034 = vmax.f32 %v906, 0.0
    %v1035 = vmax.f32 %v907, 0.0
    %v1036 = vmax.f32 %v908, 0.0
    %v1037 = vmax.f32 %v909, 0.0
    %v1038 = vmax.f32 %v910, 0.0
    %v1039 = vmax.f32 %v911, 0.0
    %v1040 = vmax.f32 %v912, 0.0
    %v1041 = vmax.f32 %v913, 0.0
    %v1042 = vld [vmem:[%s4] sm:$0x1]
    %v1044 = vperm.slane %v1042, 0
    %v1046 = vmul.f32 %v914, %v1044
    %v1047 = vmul.f32 %v915, %v1044
    %v1048 = vmul.f32 %v916, %v1044
    %v1049 = vmul.f32 %v917, %v1044
    %v1050 = vmul.f32 %v918, %v1044
    %v1051 = vmul.f32 %v919, %v1044
    %v1052 = vmul.f32 %v920, %v1044
    %v1053 = vmul.f32 %v921, %v1044
    %v1054 = vmul.f32 %v922, %v1044
    %v1055 = vmul.f32 %v923, %v1044
    %v1056 = vmul.f32 %v924, %v1044
    %v1057 = vmul.f32 %v925, %v1044
    %v1058 = vmul.f32 %v926, %v1044
    %v1059 = vmul.f32 %v927, %v1044
    %v1060 = vmul.f32 %v928, %v1044
    %v1061 = vmul.f32 %v929, %v1044
    %v1062 = vmul.f32 %v930, %v1044
    %v1063 = vmul.f32 %v931, %v1044
    %v1064 = vmul.f32 %v932, %v1044
    %v1065 = vmul.f32 %v933, %v1044
    %v1066 = vmul.f32 %v934, %v1044
    %v1067 = vmul.f32 %v935, %v1044
    %v1068 = vmul.f32 %v936, %v1044
    %v1069 = vmul.f32 %v937, %v1044
    %v1070 = vmul.f32 %v938, %v1044
    %v1071 = vmul.f32 %v939, %v1044
    %v1072 = vmul.f32 %v940, %v1044
    %v1073 = vmul.f32 %v941, %v1044
    %v1074 = vmul.f32 %v942, %v1044
    %v1075 = vmul.f32 %v943, %v1044
    %v1076 = vmul.f32 %v944, %v1044
    %v1077 = vmul.f32 %v945, %v1044
    %v1078 = vmul.f32 %v946, %v1044
    %v1079 = vmul.f32 %v947, %v1044
    %v1080 = vmul.f32 %v948, %v1044
    %v1081 = vmul.f32 %v949, %v1044
    %v1082 = vmul.f32 %v950, %v1044
    %v1083 = vmul.f32 %v951, %v1044
    %v1084 = vmul.f32 %v952, %v1044
    %v1085 = vmul.f32 %v953, %v1044
    %v1086 = vmul.f32 %v954, %v1044
    %v1087 = vmul.f32 %v955, %v1044
    %v1088 = vmul.f32 %v956, %v1044
    %v1089 = vmul.f32 %v957, %v1044
    %v1090 = vmul.f32 %v958, %v1044
    %v1091 = vmul.f32 %v959, %v1044
    %v1092 = vmul.f32 %v960, %v1044
    %v1093 = vmul.f32 %v961, %v1044
    %v1094 = vmul.f32 %v962, %v1044
    %v1095 = vmul.f32 %v963, %v1044
    %v1096 = vmul.f32 %v964, %v1044
    %v1097 = vmul.f32 %v965, %v1044
    %v1098 = vmul.f32 %v966, %v1044
    %v1099 = vmul.f32 %v967, %v1044
    %v1100 = vmul.f32 %v968, %v1044
    %v1101 = vmul.f32 %v969, %v1044
    %v1102 = vmul.f32 %v970, %v1044
    %v1103 = vmul.f32 %v971, %v1044
    %v1104 = vmul.f32 %v972, %v1044
    %v1105 = vmul.f32 %v973, %v1044
    %v1106 = vmul.f32 %v974, %v1044
    %v1107 = vmul.f32 %v975, %v1044
    %v1108 = vmul.f32 %v976, %v1044
    %v1109 = vmul.f32 %v977, %v1044
    %v1110 = vmul.f32 %v978, %v1044
    %v1111 = vmul.f32 %v979, %v1044
    %v1112 = vmul.f32 %v980, %v1044
    %v1113 = vmul.f32 %v981, %v1044
    %v1114 = vmul.f32 %v982, %v1044
    %v1115 = vmul.f32 %v983, %v1044
    %v1116 = vmul.f32 %v984, %v1044
    %v1117 = vmul.f32 %v985, %v1044
    %v1118 = vmul.f32 %v986, %v1044
    %v1119 = vmul.f32 %v987, %v1044
    %v1120 = vmul.f32 %v988, %v1044
    %v1121 = vmul.f32 %v989, %v1044
    %v1122 = vmul.f32 %v990, %v1044
    %v1123 = vmul.f32 %v991, %v1044
    %v1124 = vmul.f32 %v992, %v1044
    %v1125 = vmul.f32 %v993, %v1044
    %v1126 = vmul.f32 %v994, %v1044
    %v1127 = vmul.f32 %v995, %v1044
    %v1128 = vmul.f32 %v996, %v1044
    %v1129 = vmul.f32 %v997, %v1044
    %v1130 = vmul.f32 %v998, %v1044
    %v1131 = vmul.f32 %v999, %v1044
    %v1132 = vmul.f32 %v1000, %v1044
    %v1133 = vmul.f32 %v1001, %v1044
    %v1134 = vmul.f32 %v1002, %v1044
    %v1135 = vmul.f32 %v1003, %v1044
    %v1136 = vmul.f32 %v1004, %v1044
    %v1137 = vmul.f32 %v1005, %v1044
    %v1138 = vmul.f32 %v1006, %v1044
    %v1139 = vmul.f32 %v1007, %v1044
    %v1140 = vmul.f32 %v1008, %v1044
    %v1141 = vmul.f32 %v1009, %v1044
    %v1142 = vmul.f32 %v1010, %v1044
    %v1143 = vmul.f32 %v1011, %v1044
    %v1144 = vmul.f32 %v1012, %v1044
    %v1145 = vmul.f32 %v1013, %v1044
    %v1146 = vmul.f32 %v1014, %v1044
    %v1147 = vmul.f32 %v1015, %v1044
    %v1148 = vmul.f32 %v1016, %v1044
    %v1149 = vmul.f32 %v1017, %v1044
    %v1150 = vmul.f32 %v1018, %v1044
    %v1151 = vmul.f32 %v1019, %v1044
    %v1152 = vmul.f32 %v1020, %v1044
    %v1153 = vmul.f32 %v1021, %v1044
    %v1154 = vmul.f32 %v1022, %v1044
    %v1155 = vmul.f32 %v1023, %v1044
    %v1156 = vmul.f32 %v1024, %v1044
    %v1157 = vmul.f32 %v1025, %v1044
    %v1158 = vmul.f32 %v1026, %v1044
    %v1159 = vmul.f32 %v1027, %v1044
    %v1160 = vmul.f32 %v1028, %v1044
    %v1161 = vmul.f32 %v1029, %v1044
    %v1162 = vmul.f32 %v1030, %v1044
    %v1163 = vmul.f32 %v1031, %v1044
    %v1164 = vmul.f32 %v1032, %v1044
    %v1165 = vmul.f32 %v1033, %v1044
    %v1166 = vmul.f32 %v1034, %v1044
    %v1167 = vmul.f32 %v1035, %v1044
    %v1168 = vmul.f32 %v1036, %v1044
    %v1169 = vmul.f32 %v1037, %v1044
    %v1170 = vmul.f32 %v1038, %v1044
    %v1171 = vmul.f32 %v1039, %v1044
    %v1172 = vmul.f32 %v1040, %v1044
    %v1173 = vmul.f32 %v1041, %v1044
    %1174 = vadd.xlane.f32.xlu0 %v1046
    %v1175 = vpop.xlane.xlu0 %1174
    %1176 = vadd.xlane.f32.xlu0 %v1047
    %v1177 = vpop.xlane.xlu0 %1176
    %1178 = vadd.xlane.f32.xlu0 %v1048
    %v1179 = vpop.xlane.xlu0 %1178
    %1180 = vadd.xlane.f32.xlu0 %v1049
    %v1181 = vpop.xlane.xlu0 %1180
    %1182 = vadd.xlane.f32.xlu0 %v1050
    %v1183 = vpop.xlane.xlu0 %1182
    %1184 = vadd.xlane.f32.xlu0 %v1051
    %v1185 = vpop.xlane.xlu0 %1184
    %1186 = vadd.xlane.f32.xlu0 %v1052
    %v1187 = vpop.xlane.xlu0 %1186
    %1188 = vadd.xlane.f32.xlu0 %v1053
    %v1189 = vpop.xlane.xlu0 %1188
    %1190 = vadd.xlane.f32.xlu0 %v1054
    %v1191 = vpop.xlane.xlu0 %1190
    %1192 = vadd.xlane.f32.xlu0 %v1055
    %v1193 = vpop.xlane.xlu0 %1192
    %1194 = vadd.xlane.f32.xlu0 %v1056
    %v1195 = vpop.xlane.xlu0 %1194
    %1196 = vadd.xlane.f32.xlu0 %v1057
    %v1197 = vpop.xlane.xlu0 %1196
    %1198 = vadd.xlane.f32.xlu0 %v1058
    %v1199 = vpop.xlane.xlu0 %1198
    %1200 = vadd.xlane.f32.xlu0 %v1059
    %v1201 = vpop.xlane.xlu0 %1200
    %1202 = vadd.xlane.f32.xlu0 %v1060
    %v1203 = vpop.xlane.xlu0 %1202
    %1204 = vadd.xlane.f32.xlu0 %v1061
    %v1205 = vpop.xlane.xlu0 %1204
    %1206 = vadd.xlane.f32.xlu0 %v1062
    %v1207 = vpop.xlane.xlu0 %1206
    %1208 = vadd.xlane.f32.xlu0 %v1063
    %v1209 = vpop.xlane.xlu0 %1208
    %1210 = vadd.xlane.f32.xlu0 %v1064
    %v1211 = vpop.xlane.xlu0 %1210
    %1212 = vadd.xlane.f32.xlu0 %v1065
    %v1213 = vpop.xlane.xlu0 %1212
    %1214 = vadd.xlane.f32.xlu0 %v1066
    %v1215 = vpop.xlane.xlu0 %1214
    %1216 = vadd.xlane.f32.xlu0 %v1067
    %v1217 = vpop.xlane.xlu0 %1216
    %1218 = vadd.xlane.f32.xlu0 %v1068
    %v1219 = vpop.xlane.xlu0 %1218
    %1220 = vadd.xlane.f32.xlu0 %v1069
    %v1221 = vpop.xlane.xlu0 %1220
    %1222 = vadd.xlane.f32.xlu0 %v1070
    %v1223 = vpop.xlane.xlu0 %1222
    %1224 = vadd.xlane.f32.xlu0 %v1071
    %v1225 = vpop.xlane.xlu0 %1224
    %1226 = vadd.xlane.f32.xlu0 %v1072
    %v1227 = vpop.xlane.xlu0 %1226
    %1228 = vadd.xlane.f32.xlu0 %v1073
    %v1229 = vpop.xlane.xlu0 %1228
    %1230 = vadd.xlane.f32.xlu0 %v1074
    %v1231 = vpop.xlane.xlu0 %1230
    %1232 = vadd.xlane.f32.xlu0 %v1075
    %v1233 = vpop.xlane.xlu0 %1232
    %1234 = vadd.xlane.f32.xlu0 %v1076
    %v1235 = vpop.xlane.xlu0 %1234
    %1236 = vadd.xlane.f32.xlu0 %v1077
    %v1237 = vpop.xlane.xlu0 %1236
    %1238 = vadd.xlane.f32.xlu0 %v1078
    %v1239 = vpop.xlane.xlu0 %1238
    %1240 = vadd.xlane.f32.xlu0 %v1079
    %v1241 = vpop.xlane.xlu0 %1240
    %1242 = vadd.xlane.f32.xlu0 %v1080
    %v1243 = vpop.xlane.xlu0 %1242
    %1244 = vadd.xlane.f32.xlu0 %v1081
    %v1245 = vpop.xlane.xlu0 %1244
    %1246 = vadd.xlane.f32.xlu0 %v1082
    %v1247 = vpop.xlane.xlu0 %1246
    %1248 = vadd.xlane.f32.xlu0 %v1083
    %v1249 = vpop.xlane.xlu0 %1248
    %1250 = vadd.xlane.f32.xlu0 %v1084
    %v1251 = vpop.xlane.xlu0 %1250
    %1252 = vadd.xlane.f32.xlu0 %v1085
    %v1253 = vpop.xlane.xlu0 %1252
    %1254 = vadd.xlane.f32.xlu0 %v1086
    %v1255 = vpop.xlane.xlu0 %1254
    %1256 = vadd.xlane.f32.xlu0 %v1087
    %v1257 = vpop.xlane.xlu0 %1256
    %1258 = vadd.xlane.f32.xlu0 %v1088
    %v1259 = vpop.xlane.xlu0 %1258
    %1260 = vadd.xlane.f32.xlu0 %v1089
    %v1261 = vpop.xlane.xlu0 %1260
    %1262 = vadd.xlane.f32.xlu0 %v1090
    %v1263 = vpop.xlane.xlu0 %1262
    %1264 = vadd.xlane.f32.xlu0 %v1091
    %v1265 = vpop.xlane.xlu0 %1264
    %1266 = vadd.xlane.f32.xlu0 %v1092
    %v1267 = vpop.xlane.xlu0 %1266
    %1268 = vadd.xlane.f32.xlu0 %v1093
    %v1269 = vpop.xlane.xlu0 %1268
    %1270 = vadd.xlane.f32.xlu0 %v1094
    %v1271 = vpop.xlane.xlu0 %1270
    %1272 = vadd.xlane.f32.xlu0 %v1095
    %v1273 = vpop.xlane.xlu0 %1272
    %1274 = vadd.xlane.f32.xlu0 %v1096
    %v1275 = vpop.xlane.xlu0 %1274
    %1276 = vadd.xlane.f32.xlu0 %v1097
    %v1277 = vpop.xlane.xlu0 %1276
    %1278 = vadd.xlane.f32.xlu0 %v1098
    %v1279 = vpop.xlane.xlu0 %1278
    %1280 = vadd.xlane.f32.xlu0 %v1099
    %v1281 = vpop.xlane.xlu0 %1280
    %1282 = vadd.xlane.f32.xlu0 %v1100
    %v1283 = vpop.xlane.xlu0 %1282
    %1284 = vadd.xlane.f32.xlu0 %v1101
    %v1285 = vpop.xlane.xlu0 %1284
    %1286 = vadd.xlane.f32.xlu0 %v1102
    %v1287 = vpop.xlane.xlu0 %1286
    %1288 = vadd.xlane.f32.xlu0 %v1103
    %v1289 = vpop.xlane.xlu0 %1288
    %1290 = vadd.xlane.f32.xlu0 %v1104
    %v1291 = vpop.xlane.xlu0 %1290
    %1292 = vadd.xlane.f32.xlu0 %v1105
    %v1293 = vpop.xlane.xlu0 %1292
    %1294 = vadd.xlane.f32.xlu0 %v1106
    %v1295 = vpop.xlane.xlu0 %1294
    %1296 = vadd.xlane.f32.xlu0 %v1107
    %v1297 = vpop.xlane.xlu0 %1296
    %1298 = vadd.xlane.f32.xlu0 %v1108
    %v1299 = vpop.xlane.xlu0 %1298
    %1300 = vadd.xlane.f32.xlu0 %v1109
    %v1301 = vpop.xlane.xlu0 %1300
    %1302 = vadd.xlane.f32.xlu0 %v1110
    %v1303 = vpop.xlane.xlu0 %1302
    %1304 = vadd.xlane.f32.xlu0 %v1111
    %v1305 = vpop.xlane.xlu0 %1304
    %1306 = vadd.xlane.f32.xlu0 %v1112
    %v1307 = vpop.xlane.xlu0 %1306
    %1308 = vadd.xlane.f32.xlu0 %v1113
    %v1309 = vpop.xlane.xlu0 %1308
    %1310 = vadd.xlane.f32.xlu0 %v1114
    %v1311 = vpop.xlane.xlu0 %1310
    %1312 = vadd.xlane.f32.xlu0 %v1115
    %v1313 = vpop.xlane.xlu0 %1312
    %1314 = vadd.xlane.f32.xlu0 %v1116
    %v1315 = vpop.xlane.xlu0 %1314
    %1316 = vadd.xlane.f32.xlu0 %v1117
    %v1317 = vpop.xlane.xlu0 %1316
    %1318 = vadd.xlane.f32.xlu0 %v1118
    %v1319 = vpop.xlane.xlu0 %1318
    %1320 = vadd.xlane.f32.xlu0 %v1119
    %v1321 = vpop.xlane.xlu0 %1320
    %1322 = vadd.xlane.f32.xlu0 %v1120
    %v1323 = vpop.xlane.xlu0 %1322
    %1324 = vadd.xlane.f32.xlu0 %v1121
    %v1325 = vpop.xlane.xlu0 %1324
    %1326 = vadd.xlane.f32.xlu0 %v1122
    %v1327 = vpop.xlane.xlu0 %1326
    %1328 = vadd.xlane.f32.xlu0 %v1123
    %v1329 = vpop.xlane.xlu0 %1328
    %1330 = vadd.xlane.f32.xlu0 %v1124
    %v1331 = vpop.xlane.xlu0 %1330
    %1332 = vadd.xlane.f32.xlu0 %v1125
    %v1333 = vpop.xlane.xlu0 %1332
    %1334 = vadd.xlane.f32.xlu0 %v1126
    %v1335 = vpop.xlane.xlu0 %1334
    %1336 = vadd.xlane.f32.xlu0 %v1127
    %v1337 = vpop.xlane.xlu0 %1336
    %1338 = vadd.xlane.f32.xlu0 %v1128
    %v1339 = vpop.xlane.xlu0 %1338
    %1340 = vadd.xlane.f32.xlu0 %v1129
    %v1341 = vpop.xlane.xlu0 %1340
    %1342 = vadd.xlane.f32.xlu0 %v1130
    %v1343 = vpop.xlane.xlu0 %1342
    %1344 = vadd.xlane.f32.xlu0 %v1131
    %v1345 = vpop.xlane.xlu0 %1344
    %1346 = vadd.xlane.f32.xlu0 %v1132
    %v1347 = vpop.xlane.xlu0 %1346
    %1348 = vadd.xlane.f32.xlu0 %v1133
    %v1349 = vpop.xlane.xlu0 %1348
    %1350 = vadd.xlane.f32.xlu0 %v1134
    %v1351 = vpop.xlane.xlu0 %1350
    %1352 = vadd.xlane.f32.xlu0 %v1135
    %v1353 = vpop.xlane.xlu0 %1352
    %1354 = vadd.xlane.f32.xlu0 %v1136
    %v1355 = vpop.xlane.xlu0 %1354
    %1356 = vadd.xlane.f32.xlu0 %v1137
    %v1357 = vpop.xlane.xlu0 %1356
    %1358 = vadd.xlane.f32.xlu0 %v1138
    %v1359 = vpop.xlane.xlu0 %1358
    %1360 = vadd.xlane.f32.xlu0 %v1139
    %v1361 = vpop.xlane.xlu0 %1360
    %1362 = vadd.xlane.f32.xlu0 %v1140
    %v1363 = vpop.xlane.xlu0 %1362
    %1364 = vadd.xlane.f32.xlu0 %v1141
    %v1365 = vpop.xlane.xlu0 %1364
    %1366 = vadd.xlane.f32.xlu0 %v1142
    %v1367 = vpop.xlane.xlu0 %1366
    %1368 = vadd.xlane.f32.xlu0 %v1143
    %v1369 = vpop.xlane.xlu0 %1368
    %1370 = vadd.xlane.f32.xlu0 %v1144
    %v1371 = vpop.xlane.xlu0 %1370
    %1372 = vadd.xlane.f32.xlu0 %v1145
    %v1373 = vpop.xlane.xlu0 %1372
    %1374 = vadd.xlane.f32.xlu0 %v1146
    %v1375 = vpop.xlane.xlu0 %1374
    %1376 = vadd.xlane.f32.xlu0 %v1147
    %v1377 = vpop.xlane.xlu0 %1376
    %1378 = vadd.xlane.f32.xlu0 %v1148
    %v1379 = vpop.xlane.xlu0 %1378
    %1380 = vadd.xlane.f32.xlu0 %v1149
    %v1381 = vpop.xlane.xlu0 %1380
    %1382 = vadd.xlane.f32.xlu0 %v1150
    %v1383 = vpop.xlane.xlu0 %1382
    %1384 = vadd.xlane.f32.xlu0 %v1151
    %v1385 = vpop.xlane.xlu0 %1384
    %1386 = vadd.xlane.f32.xlu0 %v1152
    %v1387 = vpop.xlane.xlu0 %1386
    %1388 = vadd.xlane.f32.xlu0 %v1153
    %v1389 = vpop.xlane.xlu0 %1388
    %1390 = vadd.xlane.f32.xlu0 %v1154
    %v1391 = vpop.xlane.xlu0 %1390
    %1392 = vadd.xlane.f32.xlu0 %v1155
    %v1393 = vpop.xlane.xlu0 %1392
    %1394 = vadd.xlane.f32.xlu0 %v1156
    %v1395 = vpop.xlane.xlu0 %1394
    %1396 = vadd.xlane.f32.xlu0 %v1157
    %v1397 = vpop.xlane.xlu0 %1396
    %1398 = vadd.xlane.f32.xlu0 %v1158
    %v1399 = vpop.xlane.xlu0 %1398
    %1400 = vadd.xlane.f32.xlu0 %v1159
    %v1401 = vpop.xlane.xlu0 %1400
    %1402 = vadd.xlane.f32.xlu0 %v1160
    %v1403 = vpop.xlane.xlu0 %1402
    %1404 = vadd.xlane.f32.xlu0 %v1161
    %v1405 = vpop.xlane.xlu0 %1404
    %1406 = vadd.xlane.f32.xlu0 %v1162
    %v1407 = vpop.xlane.xlu0 %1406
    %1408 = vadd.xlane.f32.xlu0 %v1163
    %v1409 = vpop.xlane.xlu0 %1408
    %1410 = vadd.xlane.f32.xlu0 %v1164
    %v1411 = vpop.xlane.xlu0 %1410
    %1412 = vadd.xlane.f32.xlu0 %v1165
    %v1413 = vpop.xlane.xlu0 %1412
    %1414 = vadd.xlane.f32.xlu0 %v1166
    %v1415 = vpop.xlane.xlu0 %1414
    %1416 = vadd.xlane.f32.xlu0 %v1167
    %v1417 = vpop.xlane.xlu0 %1416
    %1418 = vadd.xlane.f32.xlu0 %v1168
    %v1419 = vpop.xlane.xlu0 %1418
    %1420 = vadd.xlane.f32.xlu0 %v1169
    %v1421 = vpop.xlane.xlu0 %1420
    %1422 = vadd.xlane.f32.xlu0 %v1170
    %v1423 = vpop.xlane.xlu0 %1422
    %1424 = vadd.xlane.f32.xlu0 %v1171
    %v1425 = vpop.xlane.xlu0 %1424
    %1426 = vadd.xlane.f32.xlu0 %v1172
    %v1427 = vpop.xlane.xlu0 %1426
    %1428 = vadd.xlane.f32.xlu0 %v1173
    %v1429 = vpop.xlane.xlu0 %1428
    %v1430 = vld [vmem:[#allocation2] sm:$0x1]
    %v1432 = vperm.slane %v1430, 0
    %1433 = vset.pattern.permute.xlu0 0
    %1434 = vperm.xlu0 %1433, %v1432
    %v1435 = vpop.permute.xlu0 %1434
    %v1437 = vadd.f32 %v1175, %v1435
    %v1438 = vadd.f32 %v1177, %v1435
    %v1439 = vadd.f32 %v1179, %v1435
    %v1440 = vadd.f32 %v1181, %v1435
    %v1441 = vadd.f32 %v1183, %v1435
    %v1442 = vadd.f32 %v1185, %v1435
    %v1443 = vadd.f32 %v1187, %v1435
    %v1444 = vadd.f32 %v1189, %v1435
    %v1445 = vadd.f32 %v1191, %v1435
    %v1446 = vadd.f32 %v1193, %v1435
    %v1447 = vadd.f32 %v1195, %v1435
    %v1448 = vadd.f32 %v1197, %v1435
    %v1449 = vadd.f32 %v1199, %v1435
    %v1450 = vadd.f32 %v1201, %v1435
    %v1451 = vadd.f32 %v1203, %v1435
    %v1452 = vadd.f32 %v1205, %v1435
    %v1453 = vadd.f32 %v1207, %v1435
    %v1454 = vadd.f32 %v1209, %v1435
    %v1455 = vadd.f32 %v1211, %v1435
    %v1456 = vadd.f32 %v1213, %v1435
    %v1457 = vadd.f32 %v1215, %v1435
    %v1458 = vadd.f32 %v1217, %v1435
    %v1459 = vadd.f32 %v1219, %v1435
    %v1460 = vadd.f32 %v1221, %v1435
    %v1461 = vadd.f32 %v1223, %v1435
    %v1462 = vadd.f32 %v1225, %v1435
    %v1463 = vadd.f32 %v1227, %v1435
    %v1464 = vadd.f32 %v1229, %v1435
    %v1465 = vadd.f32 %v1231, %v1435
    %v1466 = vadd.f32 %v1233, %v1435
    %v1467 = vadd.f32 %v1235, %v1435
    %v1468 = vadd.f32 %v1237, %v1435
    %v1469 = vadd.f32 %v1239, %v1435
    %v1470 = vadd.f32 %v1241, %v1435
    %v1471 = vadd.f32 %v1243, %v1435
    %v1472 = vadd.f32 %v1245, %v1435
    %v1473 = vadd.f32 %v1247, %v1435
    %v1474 = vadd.f32 %v1249, %v1435
    %v1475 = vadd.f32 %v1251, %v1435
    %v1476 = vadd.f32 %v1253, %v1435
    %v1477 = vadd.f32 %v1255, %v1435
    %v1478 = vadd.f32 %v1257, %v1435
    %v1479 = vadd.f32 %v1259, %v1435
    %v1480 = vadd.f32 %v1261, %v1435
    %v1481 = vadd.f32 %v1263, %v1435
    %v1482 = vadd.f32 %v1265, %v1435
    %v1483 = vadd.f32 %v1267, %v1435
    %v1484 = vadd.f32 %v1269, %v1435
    %v1485 = vadd.f32 %v1271, %v1435
    %v1486 = vadd.f32 %v1273, %v1435
    %v1487 = vadd.f32 %v1275, %v1435
    %v1488 = vadd.f32 %v1277, %v1435
    %v1489 = vadd.f32 %v1279, %v1435
    %v1490 = vadd.f32 %v1281, %v1435
    %v1491 = vadd.f32 %v1283, %v1435
    %v1492 = vadd.f32 %v1285, %v1435
    %v1493 = vadd.f32 %v1287, %v1435
    %v1494 = vadd.f32 %v1289, %v1435
    %v1495 = vadd.f32 %v1291, %v1435
    %v1496 = vadd.f32 %v1293, %v1435
    %v1497 = vadd.f32 %v1295, %v1435
    %v1498 = vadd.f32 %v1297, %v1435
    %v1499 = vadd.f32 %v1299, %v1435
    %v1500 = vadd.f32 %v1301, %v1435
    %v1501 = vadd.f32 %v1303, %v1435
    %v1502 = vadd.f32 %v1305, %v1435
    %v1503 = vadd.f32 %v1307, %v1435
    %v1504 = vadd.f32 %v1309, %v1435
    %v1505 = vadd.f32 %v1311, %v1435
    %v1506 = vadd.f32 %v1313, %v1435
    %v1507 = vadd.f32 %v1315, %v1435
    %v1508 = vadd.f32 %v1317, %v1435
    %v1509 = vadd.f32 %v1319, %v1435
    %v1510 = vadd.f32 %v1321, %v1435
    %v1511 = vadd.f32 %v1323, %v1435
    %v1512 = vadd.f32 %v1325, %v1435
    %v1513 = vadd.f32 %v1327, %v1435
    %v1514 = vadd.f32 %v1329, %v1435
    %v1515 = vadd.f32 %v1331, %v1435
    %v1516 = vadd.f32 %v1333, %v1435
    %v1517 = vadd.f32 %v1335, %v1435
    %v1518 = vadd.f32 %v1337, %v1435
    %v1519 = vadd.f32 %v1339, %v1435
    %v1520 = vadd.f32 %v1341, %v1435
    %v1521 = vadd.f32 %v1343, %v1435
    %v1522 = vadd.f32 %v1345, %v1435
    %v1523 = vadd.f32 %v1347, %v1435
    %v1524 = vadd.f32 %v1349, %v1435
    %v1525 = vadd.f32 %v1351, %v1435
    %v1526 = vadd.f32 %v1353, %v1435
    %v1527 = vadd.f32 %v1355, %v1435
    %v1528 = vadd.f32 %v1357, %v1435
    %v1529 = vadd.f32 %v1359, %v1435
    %v1530 = vadd.f32 %v1361, %v1435
    %v1531 = vadd.f32 %v1363, %v1435
    %v1532 = vadd.f32 %v1365, %v1435
    %v1533 = vadd.f32 %v1367, %v1435
    %v1534 = vadd.f32 %v1369, %v1435
    %v1535 = vadd.f32 %v1371, %v1435
    %v1536 = vadd.f32 %v1373, %v1435
    %v1537 = vadd.f32 %v1375, %v1435
    %v1538 = vadd.f32 %v1377, %v1435
    %v1539 = vadd.f32 %v1379, %v1435
    %v1540 = vadd.f32 %v1381, %v1435
    %v1541 = vadd.f32 %v1383, %v1435
    %v1542 = vadd.f32 %v1385, %v1435
    %v1543 = vadd.f32 %v1387, %v1435
    %v1544 = vadd.f32 %v1389, %v1435
    %v1545 = vadd.f32 %v1391, %v1435
    %v1546 = vadd.f32 %v1393, %v1435
    %v1547 = vadd.f32 %v1395, %v1435
    %v1548 = vadd.f32 %v1397, %v1435
    %v1549 = vadd.f32 %v1399, %v1435
    %v1550 = vadd.f32 %v1401, %v1435
    %v1551 = vadd.f32 %v1403, %v1435
    %v1552 = vadd.f32 %v1405, %v1435
    %v1553 = vadd.f32 %v1407, %v1435
    %v1554 = vadd.f32 %v1409, %v1435
    %v1555 = vadd.f32 %v1411, %v1435
    %v1556 = vadd.f32 %v1413, %v1435
    %v1557 = vadd.f32 %v1415, %v1435
    %v1558 = vadd.f32 %v1417, %v1435
    %v1559 = vadd.f32 %v1419, %v1435
    %v1560 = vadd.f32 %v1421, %v1435
    %v1561 = vadd.f32 %v1423, %v1435
    %v1562 = vadd.f32 %v1425, %v1435
    %v1563 = vadd.f32 %v1427, %v1435
    %v1564 = vadd.f32 %v1429, %v1435
    %v1597 = vperm.slane %v1437, 0
    %v1598 = vperm.slane %v1437, 1
    %v1599 = vperm.slane %v1437, 2
    %v1600 = vperm.slane %v1437, 3
    %v1601 = vperm.slane %v1437, 4
    %v1602 = vperm.slane %v1437, 5
    %v1603 = vperm.slane %v1437, 6
    %v1604 = vperm.slane %v1437, 7
    %v1605 = vperm.slane %v1438, 0
    %v1606 = vperm.slane %v1438, 1
    %v1607 = vperm.slane %v1438, 2
    %v1608 = vperm.slane %v1438, 3
    %v1609 = vperm.slane %v1438, 4
    %v1610 = vperm.slane %v1438, 5
    %v1611 = vperm.slane %v1438, 6
    %v1612 = vperm.slane %v1438, 7
    %v1613 = vperm.slane %v1439, 0
    %v1614 = vperm.slane %v1439, 1
    %v1615 = vperm.slane %v1439, 2
    %v1616 = vperm.slane %v1439, 3
    %v1617 = vperm.slane %v1439, 4
    %v1618 = vperm.slane %v1439, 5
    %v1619 = vperm.slane %v1439, 6
    %v1620 = vperm.slane %v1439, 7
    %v1621 = vperm.slane %v1440, 0
    %v1622 = vperm.slane %v1440, 1
    %v1623 = vperm.slane %v1440, 2
    %v1624 = vperm.slane %v1440, 3
    %v1625 = vperm.slane %v1440, 4
    %v1626 = vperm.slane %v1440, 5
    %v1627 = vperm.slane %v1440, 6
    %v1628 = vperm.slane %v1440, 7
    %v1629 = vperm.slane %v1441, 0
    %v1630 = vperm.slane %v1441, 1
    %v1631 = vperm.slane %v1441, 2
    %v1632 = vperm.slane %v1441, 3
    %v1633 = vperm.slane %v1441, 4
    %v1634 = vperm.slane %v1441, 5
    %v1635 = vperm.slane %v1441, 6
    %v1636 = vperm.slane %v1441, 7
    %v1637 = vperm.slane %v1442, 0
    %v1638 = vperm.slane %v1442, 1
    %v1639 = vperm.slane %v1442, 2
    %v1640 = vperm.slane %v1442, 3
    %v1641 = vperm.slane %v1442, 4
    %v1642 = vperm.slane %v1442, 5
    %v1643 = vperm.slane %v1442, 6
    %v1644 = vperm.slane %v1442, 7
    %v1645 = vperm.slane %v1443, 0
    %v1646 = vperm.slane %v1443, 1
    %v1647 = vperm.slane %v1443, 2
    %v1648 = vperm.slane %v1443, 3
    %v1649 = vperm.slane %v1443, 4
    %v1650 = vperm.slane %v1443, 5
    %v1651 = vperm.slane %v1443, 6
    %v1652 = vperm.slane %v1443, 7
    %v1653 = vperm.slane %v1444, 0
    %v1654 = vperm.slane %v1444, 1
    %v1655 = vperm.slane %v1444, 2
    %v1656 = vperm.slane %v1444, 3
    %v1657 = vperm.slane %v1444, 4
    %v1658 = vperm.slane %v1444, 5
    %v1659 = vperm.slane %v1444, 6
    %v1660 = vperm.slane %v1444, 7
    %v1661 = vperm.slane %v1445, 0
    %v1662 = vperm.slane %v1445, 1
    %v1663 = vperm.slane %v1445, 2
    %v1664 = vperm.slane %v1445, 3
    %v1665 = vperm.slane %v1445, 4
    %v1666 = vperm.slane %v1445, 5
    %v1667 = vperm.slane %v1445, 6
    %v1668 = vperm.slane %v1445, 7
    %v1669 = vperm.slane %v1446, 0
    %v1670 = vperm.slane %v1446, 1
    %v1671 = vperm.slane %v1446, 2
    %v1672 = vperm.slane %v1446, 3
    %v1673 = vperm.slane %v1446, 4
    %v1674 = vperm.slane %v1446, 5
    %v1675 = vperm.slane %v1446, 6
    %v1676 = vperm.slane %v1446, 7
    %v1677 = vperm.slane %v1447, 0
    %v1678 = vperm.slane %v1447, 1
    %v1679 = vperm.slane %v1447, 2
    %v1680 = vperm.slane %v1447, 3
    %v1681 = vperm.slane %v1447, 4
    %v1682 = vperm.slane %v1447, 5
    %v1683 = vperm.slane %v1447, 6
    %v1684 = vperm.slane %v1447, 7
    %v1685 = vperm.slane %v1448, 0
    %v1686 = vperm.slane %v1448, 1
    %v1687 = vperm.slane %v1448, 2
    %v1688 = vperm.slane %v1448, 3
    %v1689 = vperm.slane %v1448, 4
    %v1690 = vperm.slane %v1448, 5
    %v1691 = vperm.slane %v1448, 6
    %v1692 = vperm.slane %v1448, 7
    %v1693 = vperm.slane %v1449, 0
    %v1694 = vperm.slane %v1449, 1
    %v1695 = vperm.slane %v1449, 2
    %v1696 = vperm.slane %v1449, 3
    %v1697 = vperm.slane %v1449, 4
    %v1698 = vperm.slane %v1449, 5
    %v1699 = vperm.slane %v1449, 6
    %v1700 = vperm.slane %v1449, 7
    %v1701 = vperm.slane %v1450, 0
    %v1702 = vperm.slane %v1450, 1
    %v1703 = vperm.slane %v1450, 2
    %v1704 = vperm.slane %v1450, 3
    %v1705 = vperm.slane %v1450, 4
    %v1706 = vperm.slane %v1450, 5
    %v1707 = vperm.slane %v1450, 6
    %v1708 = vperm.slane %v1450, 7
    %v1709 = vperm.slane %v1451, 0
    %v1710 = vperm.slane %v1451, 1
    %v1711 = vperm.slane %v1451, 2
    %v1712 = vperm.slane %v1451, 3
    %v1713 = vperm.slane %v1451, 4
    %v1714 = vperm.slane %v1451, 5
    %v1715 = vperm.slane %v1451, 6
    %v1716 = vperm.slane %v1451, 7
    %v1717 = vperm.slane %v1452, 0
    %v1718 = vperm.slane %v1452, 1
    %v1719 = vperm.slane %v1452, 2
    %v1720 = vperm.slane %v1452, 3
    %v1721 = vperm.slane %v1452, 4
    %v1722 = vperm.slane %v1452, 5
    %v1723 = vperm.slane %v1452, 6
    %v1724 = vperm.slane %v1452, 7
    %v1725 = vperm.slane %v1453, 0
    %v1726 = vperm.slane %v1453, 1
    %v1727 = vperm.slane %v1453, 2
    %v1728 = vperm.slane %v1453, 3
    %v1729 = vperm.slane %v1453, 4
    %v1730 = vperm.slane %v1453, 5
    %v1731 = vperm.slane %v1453, 6
    %v1732 = vperm.slane %v1453, 7
    %v1733 = vperm.slane %v1454, 0
    %v1734 = vperm.slane %v1454, 1
    %v1735 = vperm.slane %v1454, 2
    %v1736 = vperm.slane %v1454, 3
    %v1737 = vperm.slane %v1454, 4
    %v1738 = vperm.slane %v1454, 5
    %v1739 = vperm.slane %v1454, 6
    %v1740 = vperm.slane %v1454, 7
    %v1741 = vperm.slane %v1455, 0
    %v1742 = vperm.slane %v1455, 1
    %v1743 = vperm.slane %v1455, 2
    %v1744 = vperm.slane %v1455, 3
    %v1745 = vperm.slane %v1455, 4
    %v1746 = vperm.slane %v1455, 5
    %v1747 = vperm.slane %v1455, 6
    %v1748 = vperm.slane %v1455, 7
    %v1749 = vperm.slane %v1456, 0
    %v1750 = vperm.slane %v1456, 1
    %v1751 = vperm.slane %v1456, 2
    %v1752 = vperm.slane %v1456, 3
    %v1753 = vperm.slane %v1456, 4
    %v1754 = vperm.slane %v1456, 5
    %v1755 = vperm.slane %v1456, 6
    %v1756 = vperm.slane %v1456, 7
    %v1757 = vperm.slane %v1457, 0
    %v1758 = vperm.slane %v1457, 1
    %v1759 = vperm.slane %v1457, 2
    %v1760 = vperm.slane %v1457, 3
    %v1761 = vperm.slane %v1457, 4
    %v1762 = vperm.slane %v1457, 5
    %v1763 = vperm.slane %v1457, 6
    %v1764 = vperm.slane %v1457, 7
    %v1765 = vperm.slane %v1458, 0
    %v1766 = vperm.slane %v1458, 1
    %v1767 = vperm.slane %v1458, 2
    %v1768 = vperm.slane %v1458, 3
    %v1769 = vperm.slane %v1458, 4
    %v1770 = vperm.slane %v1458, 5
    %v1771 = vperm.slane %v1458, 6
    %v1772 = vperm.slane %v1458, 7
    %v1773 = vperm.slane %v1459, 0
    %v1774 = vperm.slane %v1459, 1
    %v1775 = vperm.slane %v1459, 2
    %v1776 = vperm.slane %v1459, 3
    %v1777 = vperm.slane %v1459, 4
    %v1778 = vperm.slane %v1459, 5
    %v1779 = vperm.slane %v1459, 6
    %v1780 = vperm.slane %v1459, 7
    %v1781 = vperm.slane %v1460, 0
    %v1782 = vperm.slane %v1460, 1
    %v1783 = vperm.slane %v1460, 2
    %v1784 = vperm.slane %v1460, 3
    %v1785 = vperm.slane %v1460, 4
    %v1786 = vperm.slane %v1460, 5
    %v1787 = vperm.slane %v1460, 6
    %v1788 = vperm.slane %v1460, 7
    %v1789 = vperm.slane %v1461, 0
    %v1790 = vperm.slane %v1461, 1
    %v1791 = vperm.slane %v1461, 2
    %v1792 = vperm.slane %v1461, 3
    %v1793 = vperm.slane %v1461, 4
    %v1794 = vperm.slane %v1461, 5
    %v1795 = vperm.slane %v1461, 6
    %v1796 = vperm.slane %v1461, 7
    %v1797 = vperm.slane %v1462, 0
    %v1798 = vperm.slane %v1462, 1
    %v1799 = vperm.slane %v1462, 2
    %v1800 = vperm.slane %v1462, 3
    %v1801 = vperm.slane %v1462, 4
    %v1802 = vperm.slane %v1462, 5
    %v1803 = vperm.slane %v1462, 6
    %v1804 = vperm.slane %v1462, 7
    %v1805 = vperm.slane %v1463, 0
    %v1806 = vperm.slane %v1463, 1
    %v1807 = vperm.slane %v1463, 2
    %v1808 = vperm.slane %v1463, 3
    %v1809 = vperm.slane %v1463, 4
    %v1810 = vperm.slane %v1463, 5
    %v1811 = vperm.slane %v1463, 6
    %v1812 = vperm.slane %v1463, 7
    %v1813 = vperm.slane %v1464, 0
    %v1814 = vperm.slane %v1464, 1
    %v1815 = vperm.slane %v1464, 2
    %v1816 = vperm.slane %v1464, 3
    %v1817 = vperm.slane %v1464, 4
    %v1818 = vperm.slane %v1464, 5
    %v1819 = vperm.slane %v1464, 6
    %v1820 = vperm.slane %v1464, 7
    %v1821 = vperm.slane %v1465, 0
    %v1822 = vperm.slane %v1465, 1
    %v1823 = vperm.slane %v1465, 2
    %v1824 = vperm.slane %v1465, 3
    %v1825 = vperm.slane %v1465, 4
    %v1826 = vperm.slane %v1465, 5
    %v1827 = vperm.slane %v1465, 6
    %v1828 = vperm.slane %v1465, 7
    %v1829 = vperm.slane %v1466, 0
    %v1830 = vperm.slane %v1466, 1
    %v1831 = vperm.slane %v1466, 2
    %v1832 = vperm.slane %v1466, 3
    %v1833 = vperm.slane %v1466, 4
    %v1834 = vperm.slane %v1466, 5
    %v1835 = vperm.slane %v1466, 6
    %v1836 = vperm.slane %v1466, 7
    %v1837 = vperm.slane %v1467, 0
    %v1838 = vperm.slane %v1467, 1
    %v1839 = vperm.slane %v1467, 2
    %v1840 = vperm.slane %v1467, 3
    %v1841 = vperm.slane %v1467, 4
    %v1842 = vperm.slane %v1467, 5
    %v1843 = vperm.slane %v1467, 6
    %v1844 = vperm.slane %v1467, 7
    %v1845 = vperm.slane %v1468, 0
    %v1846 = vperm.slane %v1468, 1
    %v1847 = vperm.slane %v1468, 2
    %v1848 = vperm.slane %v1468, 3
    %v1849 = vperm.slane %v1468, 4
    %v1850 = vperm.slane %v1468, 5
    %v1851 = vperm.slane %v1468, 6
    %v1852 = vperm.slane %v1468, 7
    %1853 = vst [vmem:[#allocation1] ss:$9 sm:$0xff] %v1597
    %s1854 = scalar_lea.vmem [#allocation1], 1
    %1855 = vst [vmem:[%s1854] ss:$9 sm:$0xff] %v1598
    %s1856 = scalar_lea.vmem [#allocation1], 2
    %1857 = vst [vmem:[%s1856] ss:$9 sm:$0xff] %v1599
    %s1858 = scalar_lea.vmem [#allocation1], 3
    %1859 = vst [vmem:[%s1858] ss:$9 sm:$0xff] %v1600
    %s1860 = scalar_lea.vmem [#allocation1], 4
    %1861 = vst [vmem:[%s1860] ss:$9 sm:$0xff] %v1601
    %s1862 = scalar_lea.vmem [#allocation1], 5
    %1863 = vst [vmem:[%s1862] ss:$9 sm:$0xff] %v1602
    %s1864 = scalar_lea.vmem [#allocation1], 6
    %1865 = vst [vmem:[%s1864] ss:$9 sm:$0xff] %v1603
    %s1866 = scalar_lea.vmem [#allocation1], 7
    %1867 = vst [vmem:[%s1866] ss:$9 sm:$0xff] %v1604
    %v1868 = vld [vmem:[#allocation1] sm:$0xff]
    %1869 = vst [vmem:[#allocation1] ss:$9 sm:$0xff] %v1605
    %1870 = vst [vmem:[%s1854] ss:$9 sm:$0xff] %v1606
    %1871 = vst [vmem:[%s1856] ss:$9 sm:$0xff] %v1607
    %1872 = vst [vmem:[%s1858] ss:$9 sm:$0xff] %v1608
    %1873 = vst [vmem:[%s1860] ss:$9 sm:$0xff] %v1609
    %1874 = vst [vmem:[%s1862] ss:$9 sm:$0xff] %v1610
    %1875 = vst [vmem:[%s1864] ss:$9 sm:$0xff] %v1611
    %1876 = vst [vmem:[%s1866] ss:$9 sm:$0xff] %v1612
    %v1877 = vld [vmem:[#allocation1] sm:$0xff]
    %1878 = vst [vmem:[#allocation1] ss:$9 sm:$0xff] %v1613
    %1879 = vst [vmem:[%s1854] ss:$9 sm:$0xff] %v1614
    %1880 = vst [vmem:[%s1856] ss:$9 sm:$0xff] %v1615
    %1881 = vst [vmem:[%s1858] ss:$9 sm:$0xff] %v1616
    %1882 = vst [vmem:[%s1860] ss:$9 sm:$0xff] %v1617
    %1883 = vst [vmem:[%s1862] ss:$9 sm:$0xff] %v1618
    %1884 = vst [vmem:[%s1864] ss:$9 sm:$0xff] %v1619
    %1885 = vst [vmem:[%s1866] ss:$9 sm:$0xff] %v1620
    %v1886 = vld [vmem:[#allocation1] sm:$0xff]
    %1887 = vst [vmem:[#allocation1] ss:$9 sm:$0xff] %v1621
    %1888 = vst [vmem:[%s1854] ss:$9 sm:$0xff] %v1622
    %1889 = vst [vmem:[%s1856] ss:$9 sm:$0xff] %v1623
    %1890 = vst [vmem:[%s1858] ss:$9 sm:$0xff] %v1624
    %1891 = vst [vmem:[%s1860] ss:$9 sm:$0xff] %v1625
    %1892 = vst [vmem:[%s1862] ss:$9 sm:$0xff] %v1626
    %1893 = vst [vmem:[%s1864] ss:$9 sm:$0xff] %v1627
    %1894 = vst [vmem:[%s1866] ss:$9 sm:$0xff] %v1628
    %v1895 = vld [vmem:[#allocation1] sm:$0xff]
    %1896 = vst [vmem:[#allocation1] ss:$9 sm:$0xff] %v1629
    %1897 = vst [vmem:[%s1854] ss:$9 sm:$0xff] %v1630
    %1898 = vst [vmem:[%s1856] ss:$9 sm:$0xff] %v1631
    %1899 = vst [vmem:[%s1858] ss:$9 sm:$0xff] %v1632
    %1900 = vst [vmem:[%s1860] ss:$9 sm:$0xff] %v1633
    %1901 = vst [vmem:[%s1862] ss:$9 sm:$0xff] %v1634
    %1902 = vst [vmem:[%s1864] ss:$9 sm:$0xff] %v1635
    %1903 = vst [vmem:[%s1866] ss:$9 sm:$0xff] %v1636
    %v1904 = vld [vmem:[#allocation1] sm:$0xff]
    %1905 = vst [vmem:[#allocation1] ss:$9 sm:$0xff] %v1637
    %1906 = vst [vmem:[%s1854] ss:$9 sm:$0xff] %v1638
    %1907 = vst [vmem:[%s1856] ss:$9 sm:$0xff] %v1639
    %1908 = vst [vmem:[%s1858] ss:$9 sm:$0xff] %v1640
    %1909 = vst [vmem:[%s1860] ss:$9 sm:$0xff] %v1641
    %1910 = vst [vmem:[%s1862] ss:$9 sm:$0xff] %v1642
    %1911 = vst [vmem:[%s1864] ss:$9 sm:$0xff] %v1643
    %1912 = vst [vmem:[%s1866] ss:$9 sm:$0xff] %v1644
    %v1913 = vld [vmem:[#allocation1] sm:$0xff]
    %1914 = vst [vmem:[#allocation1] ss:$9 sm:$0xff] %v1645
    %1915 = vst [vmem:[%s1854] ss:$9 sm:$0xff] %v1646
    %1916 = vst [vmem:[%s1856] ss:$9 sm:$0xff] %v1647
    %1917 = vst [vmem:[%s1858] ss:$9 sm:$0xff] %v1648
    %1918 = vst [vmem:[%s1860] ss:$9 sm:$0xff] %v1649
    %1919 = vst [vmem:[%s1862] ss:$9 sm:$0xff] %v1650
    %1920 = vst [vmem:[%s1864] ss:$9 sm:$0xff] %v1651
    %1921 = vst [vmem:[%s1866] ss:$9 sm:$0xff] %v1652
    %v1922 = vld [vmem:[#allocation1] sm:$0xff]
    %1923 = vst [vmem:[#allocation1] ss:$9 sm:$0xff] %v1653
    %1924 = vst [vmem:[%s1854] ss:$9 sm:$0xff] %v1654
    %1925 = vst [vmem:[%s1856] ss:$9 sm:$0xff] %v1655
    %1926 = vst [vmem:[%s1858] ss:$9 sm:$0xff] %v1656
    %1927 = vst [vmem:[%s1860] ss:$9 sm:$0xff] %v1657
    %1928 = vst [vmem:[%s1862] ss:$9 sm:$0xff] %v1658
    %1929 = vst [vmem:[%s1864] ss:$9 sm:$0xff] %v1659
    %1930 = vst [vmem:[%s1866] ss:$9 sm:$0xff] %v1660
    %v1931 = vld [vmem:[#allocation1] sm:$0xff]
    %1932 = vst [vmem:[#allocation1] ss:$9 sm:$0xff] %v1661
    %1933 = vst [vmem:[%s1854] ss:$9 sm:$0xff] %v1662
    %1934 = vst [vmem:[%s1856] ss:$9 sm:$0xff] %v1663
    %1935 = vst [vmem:[%s1858] ss:$9 sm:$0xff] %v1664
    %1936 = vst [vmem:[%s1860] ss:$9 sm:$0xff] %v1665
    %1937 = vst [vmem:[%s1862] ss:$9 sm:$0xff] %v1666
    %1938 = vst [vmem:[%s1864] ss:$9 sm:$0xff] %v1667
    %1939 = vst [vmem:[%s1866] ss:$9 sm:$0xff] %v1668
    %v1940 = vld [vmem:[#allocation1] sm:$0xff]
    %1941 = vst [vmem:[#allocation1] ss:$9 sm:$0xff] %v1669
    %1942 = vst [vmem:[%s1854] ss:$9 sm:$0xff] %v1670
    %1943 = vst [vmem:[%s1856] ss:$9 sm:$0xff] %v1671
    %1944 = vst [vmem:[%s1858] ss:$9 sm:$0xff] %v1672
    %1945 = vst [vmem:[%s1860] ss:$9 sm:$0xff] %v1673
    %1946 = vst [vmem:[%s1862] ss:$9 sm:$0xff] %v1674
    %1947 = vst [vmem:[%s1864] ss:$9 sm:$0xff] %v1675
    %1948 = vst [vmem:[%s1866] ss:$9 sm:$0xff] %v1676
    %v1949 = vld [vmem:[#allocation1] sm:$0xff]
    %1950 = vst [vmem:[#allocation1] ss:$9 sm:$0xff] %v1677
    %1951 = vst [vmem:[%s1854] ss:$9 sm:$0xff] %v1678
    %1952 = vst [vmem:[%s1856] ss:$9 sm:$0xff] %v1679
    %1953 = vst [vmem:[%s1858] ss:$9 sm:$0xff] %v1680
    %1954 = vst [vmem:[%s1860] ss:$9 sm:$0xff] %v1681
    %1955 = vst [vmem:[%s1862] ss:$9 sm:$0xff] %v1682
    %1956 = vst [vmem:[%s1864] ss:$9 sm:$0xff] %v1683
    %1957 = vst [vmem:[%s1866] ss:$9 sm:$0xff] %v1684
    %v1958 = vld [vmem:[#allocation1] sm:$0xff]
    %1959 = vst [vmem:[#allocation1] ss:$9 sm:$0xff] %v1685
    %1960 = vst [vmem:[%s1854] ss:$9 sm:$0xff] %v1686
    %1961 = vst [vmem:[%s1856] ss:$9 sm:$0xff] %v1687
    %1962 = vst [vmem:[%s1858] ss:$9 sm:$0xff] %v1688
    %1963 = vst [vmem:[%s1860] ss:$9 sm:$0xff] %v1689
    %1964 = vst [vmem:[%s1862] ss:$9 sm:$0xff] %v1690
    %1965 = vst [vmem:[%s1864] ss:$9 sm:$0xff] %v1691
    %1966 = vst [vmem:[%s1866] ss:$9 sm:$0xff] %v1692
    %v1967 = vld [vmem:[#allocation1] sm:$0xff]
    %1968 = vst [vmem:[#allocation1] ss:$9 sm:$0xff] %v1693
    %1969 = vst [vmem:[%s1854] ss:$9 sm:$0xff] %v1694
    %1970 = vst [vmem:[%s1856] ss:$9 sm:$0xff] %v1695
    %1971 = vst [vmem:[%s1858] ss:$9 sm:$0xff] %v1696
    %1972 = vst [vmem:[%s1860] ss:$9 sm:$0xff] %v1697
    %1973 = vst [vmem:[%s1862] ss:$9 sm:$0xff] %v1698
    %1974 = vst [vmem:[%s1864] ss:$9 sm:$0xff] %v1699
    %1975 = vst [vmem:[%s1866] ss:$9 sm:$0xff] %v1700
    %v1976 = vld [vmem:[#allocation1] sm:$0xff]
    %1977 = vst [vmem:[#allocation1] ss:$9 sm:$0xff] %v1701
    %1978 = vst [vmem:[%s1854] ss:$9 sm:$0xff] %v1702
    %1979 = vst [vmem:[%s1856] ss:$9 sm:$0xff] %v1703
    %1980 = vst [vmem:[%s1858] ss:$9 sm:$0xff] %v1704
    %1981 = vst [vmem:[%s1860] ss:$9 sm:$0xff] %v1705
    %1982 = vst [vmem:[%s1862] ss:$9 sm:$0xff] %v1706
    %1983 = vst [vmem:[%s1864] ss:$9 sm:$0xff] %v1707
    %1984 = vst [vmem:[%s1866] ss:$9 sm:$0xff] %v1708
    %v1985 = vld [vmem:[#allocation1] sm:$0xff]
    %1986 = vst [vmem:[#allocation1] ss:$9 sm:$0xff] %v1709
    %1987 = vst [vmem:[%s1854] ss:$9 sm:$0xff] %v1710
    %1988 = vst [vmem:[%s1856] ss:$9 sm:$0xff] %v1711
    %1989 = vst [vmem:[%s1858] ss:$9 sm:$0xff] %v1712
    %1990 = vst [vmem:[%s1860] ss:$9 sm:$0xff] %v1713
    %1991 = vst [vmem:[%s1862] ss:$9 sm:$0xff] %v1714
    %1992 = vst [vmem:[%s1864] ss:$9 sm:$0xff] %v1715
    %1993 = vst [vmem:[%s1866] ss:$9 sm:$0xff] %v1716
    %v1994 = vld [vmem:[#allocation1] sm:$0xff]
    %1995 = vst [vmem:[#allocation1] ss:$9 sm:$0xff] %v1717
    %1996 = vst [vmem:[%s1854] ss:$9 sm:$0xff] %v1718
    %1997 = vst [vmem:[%s1856] ss:$9 sm:$0xff] %v1719
    %1998 = vst [vmem:[%s1858] ss:$9 sm:$0xff] %v1720
    %1999 = vst [vmem:[%s1860] ss:$9 sm:$0xff] %v1721
    %2000 = vst [vmem:[%s1862] ss:$9 sm:$0xff] %v1722
    %2001 = vst [vmem:[%s1864] ss:$9 sm:$0xff] %v1723
    %2002 = vst [vmem:[%s1866] ss:$9 sm:$0xff] %v1724
    %v2003 = vld [vmem:[#allocation1] sm:$0xff]
    %2004 = vst [vmem:[#allocation1] ss:$9 sm:$0xff] %v1725
    %2005 = vst [vmem:[%s1854] ss:$9 sm:$0xff] %v1726
    %2006 = vst [vmem:[%s1856] ss:$9 sm:$0xff] %v1727
    %2007 = vst [vmem:[%s1858] ss:$9 sm:$0xff] %v1728
    %2008 = vst [vmem:[%s1860] ss:$9 sm:$0xff] %v1729
    %2009 = vst [vmem:[%s1862] ss:$9 sm:$0xff] %v1730
    %2010 = vst [vmem:[%s1864] ss:$9 sm:$0xff] %v1731
    %2011 = vst [vmem:[%s1866] ss:$9 sm:$0xff] %v1732
    %v2012 = vld [vmem:[#allocation1] sm:$0xff]
    %2013 = vst [vmem:[#allocation1] ss:$9 sm:$0xff] %v1733
    %2014 = vst [vmem:[%s1854] ss:$9 sm:$0xff] %v1734
    %2015 = vst [vmem:[%s1856] ss:$9 sm:$0xff] %v1735
    %2016 = vst [vmem:[%s1858] ss:$9 sm:$0xff] %v1736
    %2017 = vst [vmem:[%s1860] ss:$9 sm:$0xff] %v1737
    %2018 = vst [vmem:[%s1862] ss:$9 sm:$0xff] %v1738
    %2019 = vst [vmem:[%s1864] ss:$9 sm:$0xff] %v1739
    %2020 = vst [vmem:[%s1866] ss:$9 sm:$0xff] %v1740
    %v2021 = vld [vmem:[#allocation1] sm:$0xff]
    %2022 = vst [vmem:[#allocation1] ss:$9 sm:$0xff] %v1741
    %2023 = vst [vmem:[%s1854] ss:$9 sm:$0xff] %v1742
    %2024 = vst [vmem:[%s1856] ss:$9 sm:$0xff] %v1743
    %2025 = vst [vmem:[%s1858] ss:$9 sm:$0xff] %v1744
    %2026 = vst [vmem:[%s1860] ss:$9 sm:$0xff] %v1745
    %2027 = vst [vmem:[%s1862] ss:$9 sm:$0xff] %v1746
    %2028 = vst [vmem:[%s1864] ss:$9 sm:$0xff] %v1747
    %2029 = vst [vmem:[%s1866] ss:$9 sm:$0xff] %v1748
    %v2030 = vld [vmem:[#allocation1] sm:$0xff]
    %2031 = vst [vmem:[#allocation1] ss:$9 sm:$0xff] %v1749
    %2032 = vst [vmem:[%s1854] ss:$9 sm:$0xff] %v1750
    %2033 = vst [vmem:[%s1856] ss:$9 sm:$0xff] %v1751
    %2034 = vst [vmem:[%s1858] ss:$9 sm:$0xff] %v1752
    %2035 = vst [vmem:[%s1860] ss:$9 sm:$0xff] %v1753
    %2036 = vst [vmem:[%s1862] ss:$9 sm:$0xff] %v1754
    %2037 = vst [vmem:[%s1864] ss:$9 sm:$0xff] %v1755
    %2038 = vst [vmem:[%s1866] ss:$9 sm:$0xff] %v1756
    %v2039 = vld [vmem:[#allocation1] sm:$0xff]
    %2040 = vst [vmem:[#allocation1] ss:$9 sm:$0xff] %v1757
    %2041 = vst [vmem:[%s1854] ss:$9 sm:$0xff] %v1758
    %2042 = vst [vmem:[%s1856] ss:$9 sm:$0xff] %v1759
    %2043 = vst [vmem:[%s1858] ss:$9 sm:$0xff] %v1760
    %2044 = vst [vmem:[%s1860] ss:$9 sm:$0xff] %v1761
    %2045 = vst [vmem:[%s1862] ss:$9 sm:$0xff] %v1762
    %2046 = vst [vmem:[%s1864] ss:$9 sm:$0xff] %v1763
    %2047 = vst [vmem:[%s1866] ss:$9 sm:$0xff] %v1764
    %v2048 = vld [vmem:[#allocation1] sm:$0xff]
    %2049 = vst [vmem:[#allocation1] ss:$9 sm:$0xff] %v1765
    %2050 = vst [vmem:[%s1854] ss:$9 sm:$0xff] %v1766
    %2051 = vst [vmem:[%s1856] ss:$9 sm:$0xff] %v1767
    %2052 = vst [vmem:[%s1858] ss:$9 sm:$0xff] %v1768
    %2053 = vst [vmem:[%s1860] ss:$9 sm:$0xff] %v1769
    %2054 = vst [vmem:[%s1862] ss:$9 sm:$0xff] %v1770
    %2055 = vst [vmem:[%s1864] ss:$9 sm:$0xff] %v1771
    %2056 = vst [vmem:[%s1866] ss:$9 sm:$0xff] %v1772
    %v2057 = vld [vmem:[#allocation1] sm:$0xff]
    %2058 = vst [vmem:[#allocation1] ss:$9 sm:$0xff] %v1773
    %2059 = vst [vmem:[%s1854] ss:$9 sm:$0xff] %v1774
    %2060 = vst [vmem:[%s1856] ss:$9 sm:$0xff] %v1775
    %2061 = vst [vmem:[%s1858] ss:$9 sm:$0xff] %v1776
    %2062 = vst [vmem:[%s1860] ss:$9 sm:$0xff] %v1777
    %2063 = vst [vmem:[%s1862] ss:$9 sm:$0xff] %v1778
    %2064 = vst [vmem:[%s1864] ss:$9 sm:$0xff] %v1779
    %2065 = vst [vmem:[%s1866] ss:$9 sm:$0xff] %v1780
    %v2066 = vld [vmem:[#allocation1] sm:$0xff]
    %2067 = vst [vmem:[#allocation1] ss:$9 sm:$0xff] %v1781
    %2068 = vst [vmem:[%s1854] ss:$9 sm:$0xff] %v1782
    %2069 = vst [vmem:[%s1856] ss:$9 sm:$0xff] %v1783
    %2070 = vst [vmem:[%s1858] ss:$9 sm:$0xff] %v1784
    %2071 = vst [vmem:[%s1860] ss:$9 sm:$0xff] %v1785
    %2072 = vst [vmem:[%s1862] ss:$9 sm:$0xff] %v1786
    %2073 = vst [vmem:[%s1864] ss:$9 sm:$0xff] %v1787
    %2074 = vst [vmem:[%s1866] ss:$9 sm:$0xff] %v1788
    %v2075 = vld [vmem:[#allocation1] sm:$0xff]
    %2076 = vst [vmem:[#allocation1] ss:$9 sm:$0xff] %v1789
    %2077 = vst [vmem:[%s1854] ss:$9 sm:$0xff] %v1790
    %2078 = vst [vmem:[%s1856] ss:$9 sm:$0xff] %v1791
    %2079 = vst [vmem:[%s1858] ss:$9 sm:$0xff] %v1792
    %2080 = vst [vmem:[%s1860] ss:$9 sm:$0xff] %v1793
    %2081 = vst [vmem:[%s1862] ss:$9 sm:$0xff] %v1794
    %2082 = vst [vmem:[%s1864] ss:$9 sm:$0xff] %v1795
    %2083 = vst [vmem:[%s1866] ss:$9 sm:$0xff] %v1796
    %v2084 = vld [vmem:[#allocation1] sm:$0xff]
    %2085 = vst [vmem:[#allocation1] ss:$9 sm:$0xff] %v1797
    %2086 = vst [vmem:[%s1854] ss:$9 sm:$0xff] %v1798
    %2087 = vst [vmem:[%s1856] ss:$9 sm:$0xff] %v1799
    %2088 = vst [vmem:[%s1858] ss:$9 sm:$0xff] %v1800
    %2089 = vst [vmem:[%s1860] ss:$9 sm:$0xff] %v1801
    %2090 = vst [vmem:[%s1862] ss:$9 sm:$0xff] %v1802
    %2091 = vst [vmem:[%s1864] ss:$9 sm:$0xff] %v1803
    %2092 = vst [vmem:[%s1866] ss:$9 sm:$0xff] %v1804
    %v2093 = vld [vmem:[#allocation1] sm:$0xff]
    %2094 = vst [vmem:[#allocation1] ss:$9 sm:$0xff] %v1805
    %2095 = vst [vmem:[%s1854] ss:$9 sm:$0xff] %v1806
    %2096 = vst [vmem:[%s1856] ss:$9 sm:$0xff] %v1807
    %2097 = vst [vmem:[%s1858] ss:$9 sm:$0xff] %v1808
    %2098 = vst [vmem:[%s1860] ss:$9 sm:$0xff] %v1809
    %2099 = vst [vmem:[%s1862] ss:$9 sm:$0xff] %v1810
    %2100 = vst [vmem:[%s1864] ss:$9 sm:$0xff] %v1811
    %2101 = vst [vmem:[%s1866] ss:$9 sm:$0xff] %v1812
    %v2102 = vld [vmem:[#allocation1] sm:$0xff]
    %2103 = vst [vmem:[#allocation1] ss:$9 sm:$0xff] %v1813
    %2104 = vst [vmem:[%s1854] ss:$9 sm:$0xff] %v1814
    %2105 = vst [vmem:[%s1856] ss:$9 sm:$0xff] %v1815
    %2106 = vst [vmem:[%s1858] ss:$9 sm:$0xff] %v1816
    %2107 = vst [vmem:[%s1860] ss:$9 sm:$0xff] %v1817
    %2108 = vst [vmem:[%s1862] ss:$9 sm:$0xff] %v1818
    %2109 = vst [vmem:[%s1864] ss:$9 sm:$0xff] %v1819
    %2110 = vst [vmem:[%s1866] ss:$9 sm:$0xff] %v1820
    %v2111 = vld [vmem:[#allocation1] sm:$0xff]
    %2112 = vst [vmem:[#allocation1] ss:$9 sm:$0xff] %v1821
    %2113 = vst [vmem:[%s1854] ss:$9 sm:$0xff] %v1822
    %2114 = vst [vmem:[%s1856] ss:$9 sm:$0xff] %v1823
    %2115 = vst [vmem:[%s1858] ss:$9 sm:$0xff] %v1824
    %2116 = vst [vmem:[%s1860] ss:$9 sm:$0xff] %v1825
    %2117 = vst [vmem:[%s1862] ss:$9 sm:$0xff] %v1826
    %2118 = vst [vmem:[%s1864] ss:$9 sm:$0xff] %v1827
    %2119 = vst [vmem:[%s1866] ss:$9 sm:$0xff] %v1828
    %v2120 = vld [vmem:[#allocation1] sm:$0xff]
    %2121 = vst [vmem:[#allocation1] ss:$9 sm:$0xff] %v1829
    %2122 = vst [vmem:[%s1854] ss:$9 sm:$0xff] %v1830
    %2123 = vst [vmem:[%s1856] ss:$9 sm:$0xff] %v1831
    %2124 = vst [vmem:[%s1858] ss:$9 sm:$0xff] %v1832
    %2125 = vst [vmem:[%s1860] ss:$9 sm:$0xff] %v1833
    %2126 = vst [vmem:[%s1862] ss:$9 sm:$0xff] %v1834
    %2127 = vst [vmem:[%s1864] ss:$9 sm:$0xff] %v1835
    %2128 = vst [vmem:[%s1866] ss:$9 sm:$0xff] %v1836
    %v2129 = vld [vmem:[#allocation1] sm:$0xff]
    %2130 = vst [vmem:[#allocation1] ss:$9 sm:$0xff] %v1837
    %2131 = vst [vmem:[%s1854] ss:$9 sm:$0xff] %v1838
    %2132 = vst [vmem:[%s1856] ss:$9 sm:$0xff] %v1839
    %2133 = vst [vmem:[%s1858] ss:$9 sm:$0xff] %v1840
    %2134 = vst [vmem:[%s1860] ss:$9 sm:$0xff] %v1841
    %2135 = vst [vmem:[%s1862] ss:$9 sm:$0xff] %v1842
    %2136 = vst [vmem:[%s1864] ss:$9 sm:$0xff] %v1843
    %2137 = vst [vmem:[%s1866] ss:$9 sm:$0xff] %v1844
    %v2138 = vld [vmem:[#allocation1] sm:$0xff]
    %2139 = vst [vmem:[#allocation1] ss:$9 sm:$0xff] %v1845
    %2140 = vst [vmem:[%s1854] ss:$9 sm:$0xff] %v1846
    %2141 = vst [vmem:[%s1856] ss:$9 sm:$0xff] %v1847
    %2142 = vst [vmem:[%s1858] ss:$9 sm:$0xff] %v1848
    %2143 = vst [vmem:[%s1860] ss:$9 sm:$0xff] %v1849
    %2144 = vst [vmem:[%s1862] ss:$9 sm:$0xff] %v1850
    %2145 = vst [vmem:[%s1864] ss:$9 sm:$0xff] %v1851
    %2146 = vst [vmem:[%s1866] ss:$9 sm:$0xff] %v1852
    %v2147 = vld [vmem:[#allocation1] sm:$0xff]
    %2148 = vset.pattern.permute.xlu0 0
    %2149 = vperm.xlu0 %2148, %v1868
    %v2150 = vpop.permute.xlu0 %2149
    %2151 = vset.pattern.permute.xlu0 0
    %2152 = vperm.xlu0 %2151, %v1877
    %v2153 = vpop.permute.xlu0 %2152
    %2154 = vset.pattern.permute.xlu0 0
    %2155 = vperm.xlu0 %2154, %v1886
    %v2156 = vpop.permute.xlu0 %2155
    %2157 = vset.pattern.permute.xlu0 0
    %2158 = vperm.xlu0 %2157, %v1895
    %v2159 = vpop.permute.xlu0 %2158
    %2160 = vset.pattern.permute.xlu0 0
    %2161 = vperm.xlu0 %2160, %v1904
    %v2162 = vpop.permute.xlu0 %2161
    %2163 = vset.pattern.permute.xlu0 0
    %2164 = vperm.xlu0 %2163, %v1913
    %v2165 = vpop.permute.xlu0 %2164
    %2166 = vset.pattern.permute.xlu0 0
    %2167 = vperm.xlu0 %2166, %v1922
    %v2168 = vpop.permute.xlu0 %2167
    %2169 = vset.pattern.permute.xlu0 0
    %2170 = vperm.xlu0 %2169, %v1931
    %v2171 = vpop.permute.xlu0 %2170
    %2172 = vset.pattern.permute.xlu0 0
    %2173 = vperm.xlu0 %2172, %v1940
    %v2174 = vpop.permute.xlu0 %2173
    %2175 = vset.pattern.permute.xlu0 0
    %2176 = vperm.xlu0 %2175, %v1949
    %v2177 = vpop.permute.xlu0 %2176
    %2178 = vset.pattern.permute.xlu0 0
    %2179 = vperm.xlu0 %2178, %v1958
    %v2180 = vpop.permute.xlu0 %2179
    %2181 = vset.pattern.permute.xlu0 0
    %2182 = vperm.xlu0 %2181, %v1967
    %v2183 = vpop.permute.xlu0 %2182
    %2184 = vset.pattern.permute.xlu0 0
    %2185 = vperm.xlu0 %2184, %v1976
    %v2186 = vpop.permute.xlu0 %2185
    %2187 = vset.pattern.permute.xlu0 0
    %2188 = vperm.xlu0 %2187, %v1985
    %v2189 = vpop.permute.xlu0 %2188
    %2190 = vset.pattern.permute.xlu0 0
    %2191 = vperm.xlu0 %2190, %v1994
    %v2192 = vpop.permute.xlu0 %2191
    %2193 = vset.pattern.permute.xlu0 0
    %2194 = vperm.xlu0 %2193, %v2003
    %v2195 = vpop.permute.xlu0 %2194
    %2196 = vset.pattern.permute.xlu0 0
    %2197 = vperm.xlu0 %2196, %v2012
    %v2198 = vpop.permute.xlu0 %2197
    %2199 = vset.pattern.permute.xlu0 0
    %2200 = vperm.xlu0 %2199, %v2021
    %v2201 = vpop.permute.xlu0 %2200
    %2202 = vset.pattern.permute.xlu0 0
    %2203 = vperm.xlu0 %2202, %v2030
    %v2204 = vpop.permute.xlu0 %2203
    %2205 = vset.pattern.permute.xlu0 0
    %2206 = vperm.xlu0 %2205, %v2039
    %v2207 = vpop.permute.xlu0 %2206
    %2208 = vset.pattern.permute.xlu0 0
    %2209 = vperm.xlu0 %2208, %v2048
    %v2210 = vpop.permute.xlu0 %2209
    %2211 = vset.pattern.permute.xlu0 0
    %2212 = vperm.xlu0 %2211, %v2057
    %v2213 = vpop.permute.xlu0 %2212
    %2214 = vset.pattern.permute.xlu0 0
    %2215 = vperm.xlu0 %2214, %v2066
    %v2216 = vpop.permute.xlu0 %2215
    %2217 = vset.pattern.permute.xlu0 0
    %2218 = vperm.xlu0 %2217, %v2075
    %v2219 = vpop.permute.xlu0 %2218
    %2220 = vset.pattern.permute.xlu0 0
    %2221 = vperm.xlu0 %2220, %v2084
    %v2222 = vpop.permute.xlu0 %2221
    %2223 = vset.pattern.permute.xlu0 0
    %2224 = vperm.xlu0 %2223, %v2093
    %v2225 = vpop.permute.xlu0 %2224
    %2226 = vset.pattern.permute.xlu0 0
    %2227 = vperm.xlu0 %2226, %v2102
    %v2228 = vpop.permute.xlu0 %2227
    %2229 = vset.pattern.permute.xlu0 0
    %2230 = vperm.xlu0 %2229, %v2111
    %v2231 = vpop.permute.xlu0 %2230
    %2232 = vset.pattern.permute.xlu0 0
    %2233 = vperm.xlu0 %2232, %v2120
    %v2234 = vpop.permute.xlu0 %2233
    %2235 = vset.pattern.permute.xlu0 0
    %2236 = vperm.xlu0 %2235, %v2129
    %v2237 = vpop.permute.xlu0 %2236
    %2238 = vset.pattern.permute.xlu0 0
    %2239 = vperm.xlu0 %2238, %v2138
    %v2240 = vpop.permute.xlu0 %2239
    %2241 = vset.pattern.permute.xlu0 0
    %2242 = vperm.xlu0 %2241, %v2147
    %v2243 = vpop.permute.xlu0 %2242
    %v2244 = vlaneseq
    %v2245 = vand.u32 %v2244, 127
    %v2246 = vperm.slane %v2150, %v2245
    %v2247 = vadd.s32 %v2245, 4294967288
    %v2248 = vperm.slane %v2153, %v2247
    %vm2249 = vcmask 130112
    %v2250 = vsel %vm2249, %v2248, %v2246
    %v2251 = vadd.s32 %v2245, 4294967280
    %v2252 = vperm.slane %v2156, %v2251
    %vm2253 = vcmask 195712
    %v2254 = vsel %vm2253, %v2252, %v2250
    %v2255 = vadd.s32 %v2245, 4294967272
    %v2256 = vperm.slane %v2159, %v2255
    %vm2257 = vcmask 261312
    %v2258 = vsel %vm2257, %v2256, %v2254
    %v2259 = vadd.s32 %v2245, 4294967264
    %v2260 = vperm.slane %v2162, %v2259
    %vm2261 = vcmask 326912
    %v2262 = vsel %vm2261, %v2260, %v2258
    %v2263 = vadd.s32 %v2245, 4294967256
    %v2264 = vperm.slane %v2165, %v2263
    %vm2265 = vcmask 392512
    %v2266 = vsel %vm2265, %v2264, %v2262
    %v2267 = vadd.s32 %v2245, 4294967248
    %v2268 = vperm.slane %v2168, %v2267
    %vm2269 = vcmask 458112
    %v2270 = vsel %vm2269, %v2268, %v2266
    %v2271 = vadd.s32 %v2245, 4294967240
    %v2272 = vperm.slane %v2171, %v2271
    %vm2273 = vcmask 523712
    %v2274 = vsel %vm2273, %v2272, %v2270
    %v2275 = vadd.s32 %v2245, 4294967232
    %v2276 = vperm.slane %v2174, %v2275
    %vm2277 = vcmask 589312
    %v2278 = vsel %vm2277, %v2276, %v2274
    %v2279 = vadd.s32 %v2245, 4294967224
    %v2280 = vperm.slane %v2177, %v2279
    %vm2281 = vcmask 654912
    %v2282 = vsel %vm2281, %v2280, %v2278
    %v2283 = vadd.s32 %v2245, 4294967216
    %v2284 = vperm.slane %v2180, %v2283
    %vm2285 = vcmask 720512
    %v2286 = vsel %vm2285, %v2284, %v2282
    %v2287 = vadd.s32 %v2245, 4294967208
    %v2288 = vperm.slane %v2183, %v2287
    %vm2289 = vcmask 786112
    %v2290 = vsel %vm2289, %v2288, %v2286
    %v2291 = vadd.s32 %v2245, 4294967200
    %v2292 = vperm.slane %v2186, %v2291
    %vm2293 = vcmask 851712
    %v2294 = vsel %vm2293, %v2292, %v2290
    %v2295 = vadd.s32 %v2245, 4294967192
    %v2296 = vperm.slane %v2189, %v2295
    %vm2297 = vcmask 917312
    %v2298 = vsel %vm2297, %v2296, %v2294
    %v2299 = vadd.s32 %v2245, 4294967184
    %v2300 = vperm.slane %v2192, %v2299
    %vm2301 = vcmask 982912
    %v2302 = vsel %vm2301, %v2300, %v2298
    %v2303 = vadd.s32 %v2245, 4294967176
    %v2304 = vperm.slane %v2195, %v2303
    %vm2305 = vcmask 1048512
    %v2306 = vsel %vm2305, %v2304, %v2302
    %v2307 = vperm.slane %v2198, %v2245
    %v2308 = vperm.slane %v2201, %v2247
    %v2309 = vsel %vm2249, %v2308, %v2307
    %v2310 = vperm.slane %v2204, %v2251
    %v2311 = vsel %vm2253, %v2310, %v2309
    %v2312 = vperm.slane %v2207, %v2255
    %v2313 = vsel %vm2257, %v2312, %v2311
    %v2314 = vperm.slane %v2210, %v2259
    %v2315 = vsel %vm2261, %v2314, %v2313
    %v2316 = vperm.slane %v2213, %v2263
    %v2317 = vsel %vm2265, %v2316, %v2315
    %v2318 = vperm.slane %v2216, %v2267
    %v2319 = vsel %vm2269, %v2318, %v2317
    %v2320 = vperm.slane %v2219, %v2271
    %v2321 = vsel %vm2273, %v2320, %v2319
    %v2322 = vperm.slane %v2222, %v2275
    %v2323 = vsel %vm2277, %v2322, %v2321
    %v2324 = vperm.slane %v2225, %v2279
    %v2325 = vsel %vm2281, %v2324, %v2323
    %v2326 = vperm.slane %v2228, %v2283
    %v2327 = vsel %vm2285, %v2326, %v2325
    %v2328 = vperm.slane %v2231, %v2287
    %v2329 = vsel %vm2289, %v2328, %v2327
    %v2330 = vperm.slane %v2234, %v2291
    %v2331 = vsel %vm2293, %v2330, %v2329
    %v2332 = vperm.slane %v2237, %v2295
    %v2333 = vsel %vm2297, %v2332, %v2331
    %v2334 = vperm.slane %v2240, %v2299
    %v2335 = vsel %vm2301, %v2334, %v2333
    %v2336 = vperm.slane %v2243, %v2303
    %v2337 = vsel %vm2305, %v2336, %v2335
    %v2338 = vrot.slane %v2337, 7
    %vm2339 = vcmask 1040384
    %v2340 = vsel %vm2339, %v2306, %v2338
    %v2342 = vlaneseq
    %vm2343 = vcmp.ge.s32.totalorder %v2342, 0
    %vm2344 = vcmp.lt.s32.totalorder %v2342, 256
    %vm2345 = vmand %vm2343, %vm2344
    %2346 = vst.msk [vmem:[#allocation9] sm:$0x3] %vm2345, %v2340
    %v2444 = vunpack.c.l.s4 839922192
    %v2445 = vunpack.c.0.s8 %v2444
    %v2446 = vperm.slane %v1469, %v2445
    %v2448 = vunpack.c.l.s4 1985246804
    %v2449 = vunpack.c.0.s8 %v2448
    %v2450 = vperm.slane %v1469, %v2449
    %v2452 = vunpack.c.l.s4 839922192
    %v2453 = vunpack.c.0.s8 %v2452
    %v2454 = vperm.slane %v1470, %v2453
    %v2456 = vunpack.c.l.s4 1985246804
    %v2457 = vunpack.c.0.s8 %v2456
    %v2458 = vperm.slane %v1470, %v2457
    %v2460 = vunpack.c.l.s4 839922192
    %v2461 = vunpack.c.0.s8 %v2460
    %v2462 = vperm.slane %v1471, %v2461
    %v2464 = vunpack.c.l.s4 1985246804
    %v2465 = vunpack.c.0.s8 %v2464
    %v2466 = vperm.slane %v1471, %v2465
    %v2468 = vunpack.c.l.s4 839922192
    %v2469 = vunpack.c.0.s8 %v2468
    %v2470 = vperm.slane %v1472, %v2469
    %v2472 = vunpack.c.l.s4 1985246804
    %v2473 = vunpack.c.0.s8 %v2472
    %v2474 = vperm.slane %v1472, %v2473
    %v2476 = vunpack.c.l.s4 839922192
    %v2477 = vunpack.c.0.s8 %v2476
    %v2478 = vperm.slane %v1473, %v2477
    %v2480 = vunpack.c.l.s4 1985246804
    %v2481 = vunpack.c.0.s8 %v2480
    %v2482 = vperm.slane %v1473, %v2481
    %v2484 = vunpack.c.l.s4 839922192
    %v2485 = vunpack.c.0.s8 %v2484
    %v2486 = vperm.slane %v1474, %v2485
    %v2488 = vunpack.c.l.s4 1985246804
    %v2489 = vunpack.c.0.s8 %v2488
    %v2490 = vperm.slane %v1474, %v2489
    %v2492 = vunpack.c.l.s4 839922192
    %v2493 = vunpack.c.0.s8 %v2492
    %v2494 = vperm.slane %v1475, %v2493
    %v2496 = vunpack.c.l.s4 1985246804
    %v2497 = vunpack.c.0.s8 %v2496
    %v2498 = vperm.slane %v1475, %v2497
    %v2500 = vunpack.c.l.s4 839922192
    %v2501 = vunpack.c.0.s8 %v2500
    %v2502 = vperm.slane %v1476, %v2501
    %v2504 = vunpack.c.l.s4 1985246804
    %v2505 = vunpack.c.0.s8 %v2504
    %v2506 = vperm.slane %v1476, %v2505
    %v2508 = vunpack.c.l.s4 839922192
    %v2509 = vunpack.c.0.s8 %v2508
    %v2510 = vperm.slane %v1477, %v2509
    %v2512 = vunpack.c.l.s4 1985246804
    %v2513 = vunpack.c.0.s8 %v2512
    %v2514 = vperm.slane %v1477, %v2513
    %v2516 = vunpack.c.l.s4 839922192
    %v2517 = vunpack.c.0.s8 %v2516
    %v2518 = vperm.slane %v1478, %v2517
    %v2520 = vunpack.c.l.s4 1985246804
    %v2521 = vunpack.c.0.s8 %v2520
    %v2522 = vperm.slane %v1478, %v2521
    %v2524 = vunpack.c.l.s4 839922192
    %v2525 = vunpack.c.0.s8 %v2524
    %v2526 = vperm.slane %v1479, %v2525
    %v2528 = vunpack.c.l.s4 1985246804
    %v2529 = vunpack.c.0.s8 %v2528
    %v2530 = vperm.slane %v1479, %v2529
    %v2532 = vunpack.c.l.s4 839922192
    %v2533 = vunpack.c.0.s8 %v2532
    %v2534 = vperm.slane %v1480, %v2533
    %v2536 = vunpack.c.l.s4 1985246804
    %v2537 = vunpack.c.0.s8 %v2536
    %v2538 = vperm.slane %v1480, %v2537
    %v2540 = vunpack.c.l.s4 839922192
    %v2541 = vunpack.c.0.s8 %v2540
    %v2542 = vperm.slane %v1481, %v2541
    %v2544 = vunpack.c.l.s4 1985246804
    %v2545 = vunpack.c.0.s8 %v2544
    %v2546 = vperm.slane %v1481, %v2545
    %v2548 = vunpack.c.l.s4 839922192
    %v2549 = vunpack.c.0.s8 %v2548
    %v2550 = vperm.slane %v1482, %v2549
    %v2552 = vunpack.c.l.s4 1985246804
    %v2553 = vunpack.c.0.s8 %v2552
    %v2554 = vperm.slane %v1482, %v2553
    %v2556 = vunpack.c.l.s4 839922192
    %v2557 = vunpack.c.0.s8 %v2556
    %v2558 = vperm.slane %v1483, %v2557
    %v2560 = vunpack.c.l.s4 1985246804
    %v2561 = vunpack.c.0.s8 %v2560
    %v2562 = vperm.slane %v1483, %v2561
    %v2564 = vunpack.c.l.s4 839922192
    %v2565 = vunpack.c.0.s8 %v2564
    %v2566 = vperm.slane %v1484, %v2565
    %v2568 = vunpack.c.l.s4 1985246804
    %v2569 = vunpack.c.0.s8 %v2568
    %v2570 = vperm.slane %v1484, %v2569
    %v2572 = vunpack.c.l.s4 839922192
    %v2573 = vunpack.c.0.s8 %v2572
    %v2574 = vperm.slane %v1485, %v2573
    %v2576 = vunpack.c.l.s4 1985246804
    %v2577 = vunpack.c.0.s8 %v2576
    %v2578 = vperm.slane %v1485, %v2577
    %v2580 = vunpack.c.l.s4 839922192
    %v2581 = vunpack.c.0.s8 %v2580
    %v2582 = vperm.slane %v1486, %v2581
    %v2584 = vunpack.c.l.s4 1985246804
    %v2585 = vunpack.c.0.s8 %v2584
    %v2586 = vperm.slane %v1486, %v2585
    %v2588 = vunpack.c.l.s4 839922192
    %v2589 = vunpack.c.0.s8 %v2588
    %v2590 = vperm.slane %v1487, %v2589
    %v2592 = vunpack.c.l.s4 1985246804
    %v2593 = vunpack.c.0.s8 %v2592
    %v2594 = vperm.slane %v1487, %v2593
    %v2596 = vunpack.c.l.s4 839922192
    %v2597 = vunpack.c.0.s8 %v2596
    %v2598 = vperm.slane %v1488, %v2597
    %v2600 = vunpack.c.l.s4 1985246804
    %v2601 = vunpack.c.0.s8 %v2600
    %v2602 = vperm.slane %v1488, %v2601
    %v2604 = vunpack.c.l.s4 839922192
    %v2605 = vunpack.c.0.s8 %v2604
    %v2606 = vperm.slane %v1489, %v2605
    %v2608 = vunpack.c.l.s4 1985246804
    %v2609 = vunpack.c.0.s8 %v2608
    %v2610 = vperm.slane %v1489, %v2609
    %v2612 = vunpack.c.l.s4 839922192
    %v2613 = vunpack.c.0.s8 %v2612
    %v2614 = vperm.slane %v1490, %v2613
    %v2616 = vunpack.c.l.s4 1985246804
    %v2617 = vunpack.c.0.s8 %v2616
    %v2618 = vperm.slane %v1490, %v2617
    %v2620 = vunpack.c.l.s4 839922192
    %v2621 = vunpack.c.0.s8 %v2620
    %v2622 = vperm.slane %v1491, %v2621
    %v2624 = vunpack.c.l.s4 1985246804
    %v2625 = vunpack.c.0.s8 %v2624
    %v2626 = vperm.slane %v1491, %v2625
    %v2628 = vunpack.c.l.s4 839922192
    %v2629 = vunpack.c.0.s8 %v2628
    %v2630 = vperm.slane %v1492, %v2629
    %v2632 = vunpack.c.l.s4 1985246804
    %v2633 = vunpack.c.0.s8 %v2632
    %v2634 = vperm.slane %v1492, %v2633
    %v2636 = vunpack.c.l.s4 839922192
    %v2637 = vunpack.c.0.s8 %v2636
    %v2638 = vperm.slane %v1493, %v2637
    %v2640 = vunpack.c.l.s4 1985246804
    %v2641 = vunpack.c.0.s8 %v2640
    %v2642 = vperm.slane %v1493, %v2641
    %v2644 = vunpack.c.l.s4 839922192
    %v2645 = vunpack.c.0.s8 %v2644
    %v2646 = vperm.slane %v1494, %v2645
    %v2648 = vunpack.c.l.s4 1985246804
    %v2649 = vunpack.c.0.s8 %v2648
    %v2650 = vperm.slane %v1494, %v2649
    %v2652 = vunpack.c.l.s4 839922192
    %v2653 = vunpack.c.0.s8 %v2652
    %v2654 = vperm.slane %v1495, %v2653
    %v2656 = vunpack.c.l.s4 1985246804
    %v2657 = vunpack.c.0.s8 %v2656
    %v2658 = vperm.slane %v1495, %v2657
    %v2660 = vunpack.c.l.s4 839922192
    %v2661 = vunpack.c.0.s8 %v2660
    %v2662 = vperm.slane %v1496, %v2661
    %v2664 = vunpack.c.l.s4 1985246804
    %v2665 = vunpack.c.0.s8 %v2664
    %v2666 = vperm.slane %v1496, %v2665
    %v2668 = vunpack.c.l.s4 839922192
    %v2669 = vunpack.c.0.s8 %v2668
    %v2670 = vperm.slane %v1497, %v2669
    %v2672 = vunpack.c.l.s4 1985246804
    %v2673 = vunpack.c.0.s8 %v2672
    %v2674 = vperm.slane %v1497, %v2673
    %v2676 = vunpack.c.l.s4 839922192
    %v2677 = vunpack.c.0.s8 %v2676
    %v2678 = vperm.slane %v1498, %v2677
    %v2680 = vunpack.c.l.s4 1985246804
    %v2681 = vunpack.c.0.s8 %v2680
    %v2682 = vperm.slane %v1498, %v2681
    %v2684 = vunpack.c.l.s4 839922192
    %v2685 = vunpack.c.0.s8 %v2684
    %v2686 = vperm.slane %v1499, %v2685
    %v2688 = vunpack.c.l.s4 1985246804
    %v2689 = vunpack.c.0.s8 %v2688
    %v2690 = vperm.slane %v1499, %v2689
    %v2692 = vunpack.c.l.s4 839922192
    %v2693 = vunpack.c.0.s8 %v2692
    %v2694 = vperm.slane %v1500, %v2693
    %v2696 = vunpack.c.l.s4 1985246804
    %v2697 = vunpack.c.0.s8 %v2696
    %v2698 = vperm.slane %v1500, %v2697
    %v2700 = vunpack.c.l.s4 839922192
    %v2701 = vunpack.c.0.s8 %v2700
    %v2702 = vperm.slane %v1501, %v2701
    %v2704 = vunpack.c.l.s4 1985246804
    %v2705 = vunpack.c.0.s8 %v2704
    %v2706 = vperm.slane %v1501, %v2705
    %v2708 = vunpack.c.l.s4 839922192
    %v2709 = vunpack.c.0.s8 %v2708
    %v2710 = vperm.slane %v1502, %v2709
    %v2712 = vunpack.c.l.s4 1985246804
    %v2713 = vunpack.c.0.s8 %v2712
    %v2714 = vperm.slane %v1502, %v2713
    %v2716 = vunpack.c.l.s4 839922192
    %v2717 = vunpack.c.0.s8 %v2716
    %v2718 = vperm.slane %v1503, %v2717
    %v2720 = vunpack.c.l.s4 1985246804
    %v2721 = vunpack.c.0.s8 %v2720
    %v2722 = vperm.slane %v1503, %v2721
    %v2724 = vunpack.c.l.s4 839922192
    %v2725 = vunpack.c.0.s8 %v2724
    %v2726 = vperm.slane %v1504, %v2725
    %v2728 = vunpack.c.l.s4 1985246804
    %v2729 = vunpack.c.0.s8 %v2728
    %v2730 = vperm.slane %v1504, %v2729
    %v2732 = vunpack.c.l.s4 839922192
    %v2733 = vunpack.c.0.s8 %v2732
    %v2734 = vperm.slane %v1505, %v2733
    %v2736 = vunpack.c.l.s4 1985246804
    %v2737 = vunpack.c.0.s8 %v2736
    %v2738 = vperm.slane %v1505, %v2737
    %v2740 = vunpack.c.l.s4 839922192
    %v2741 = vunpack.c.0.s8 %v2740
    %v2742 = vperm.slane %v1506, %v2741
    %v2744 = vunpack.c.l.s4 1985246804
    %v2745 = vunpack.c.0.s8 %v2744
    %v2746 = vperm.slane %v1506, %v2745
    %v2748 = vunpack.c.l.s4 839922192
    %v2749 = vunpack.c.0.s8 %v2748
    %v2750 = vperm.slane %v1507, %v2749
    %v2752 = vunpack.c.l.s4 1985246804
    %v2753 = vunpack.c.0.s8 %v2752
    %v2754 = vperm.slane %v1507, %v2753
    %v2756 = vunpack.c.l.s4 839922192
    %v2757 = vunpack.c.0.s8 %v2756
    %v2758 = vperm.slane %v1508, %v2757
    %v2760 = vunpack.c.l.s4 1985246804
    %v2761 = vunpack.c.0.s8 %v2760
    %v2762 = vperm.slane %v1508, %v2761
    %v2764 = vunpack.c.l.s4 839922192
    %v2765 = vunpack.c.0.s8 %v2764
    %v2766 = vperm.slane %v1509, %v2765
    %v2768 = vunpack.c.l.s4 1985246804
    %v2769 = vunpack.c.0.s8 %v2768
    %v2770 = vperm.slane %v1509, %v2769
    %v2772 = vunpack.c.l.s4 839922192
    %v2773 = vunpack.c.0.s8 %v2772
    %v2774 = vperm.slane %v1510, %v2773
    %v2776 = vunpack.c.l.s4 1985246804
    %v2777 = vunpack.c.0.s8 %v2776
    %v2778 = vperm.slane %v1510, %v2777
    %v2780 = vunpack.c.l.s4 839922192
    %v2781 = vunpack.c.0.s8 %v2780
    %v2782 = vperm.slane %v1511, %v2781
    %v2784 = vunpack.c.l.s4 1985246804
    %v2785 = vunpack.c.0.s8 %v2784
    %v2786 = vperm.slane %v1511, %v2785
    %v2788 = vunpack.c.l.s4 839922192
    %v2789 = vunpack.c.0.s8 %v2788
    %v2790 = vperm.slane %v1512, %v2789
    %v2792 = vunpack.c.l.s4 1985246804
    %v2793 = vunpack.c.0.s8 %v2792
    %v2794 = vperm.slane %v1512, %v2793
    %v2796 = vunpack.c.l.s4 839922192
    %v2797 = vunpack.c.0.s8 %v2796
    %v2798 = vperm.slane %v1513, %v2797
    %v2800 = vunpack.c.l.s4 1985246804
    %v2801 = vunpack.c.0.s8 %v2800
    %v2802 = vperm.slane %v1513, %v2801
    %v2804 = vunpack.c.l.s4 839922192
    %v2805 = vunpack.c.0.s8 %v2804
    %v2806 = vperm.slane %v1514, %v2805
    %v2808 = vunpack.c.l.s4 1985246804
    %v2809 = vunpack.c.0.s8 %v2808
    %v2810 = vperm.slane %v1514, %v2809
    %v2812 = vunpack.c.l.s4 839922192
    %v2813 = vunpack.c.0.s8 %v2812
    %v2814 = vperm.slane %v1515, %v2813
    %v2816 = vunpack.c.l.s4 1985246804
    %v2817 = vunpack.c.0.s8 %v2816
    %v2818 = vperm.slane %v1515, %v2817
    %v2820 = vunpack.c.l.s4 839922192
    %v2821 = vunpack.c.0.s8 %v2820
    %v2822 = vperm.slane %v1516, %v2821
    %v2824 = vunpack.c.l.s4 1985246804
    %v2825 = vunpack.c.0.s8 %v2824
    %v2826 = vperm.slane %v1516, %v2825
    %v2828 = vunpack.c.l.s4 839922192
    %v2829 = vunpack.c.0.s8 %v2828
    %v2830 = vperm.slane %v1517, %v2829
    %v2832 = vunpack.c.l.s4 1985246804
    %v2833 = vunpack.c.0.s8 %v2832
    %v2834 = vperm.slane %v1517, %v2833
    %v2836 = vunpack.c.l.s4 839922192
    %v2837 = vunpack.c.0.s8 %v2836
    %v2838 = vperm.slane %v1518, %v2837
    %v2840 = vunpack.c.l.s4 1985246804
    %v2841 = vunpack.c.0.s8 %v2840
    %v2842 = vperm.slane %v1518, %v2841
    %v2844 = vunpack.c.l.s4 839922192
    %v2845 = vunpack.c.0.s8 %v2844
    %v2846 = vperm.slane %v1519, %v2845
    %v2848 = vunpack.c.l.s4 1985246804
    %v2849 = vunpack.c.0.s8 %v2848
    %v2850 = vperm.slane %v1519, %v2849
    %v2852 = vunpack.c.l.s4 839922192
    %v2853 = vunpack.c.0.s8 %v2852
    %v2854 = vperm.slane %v1520, %v2853
    %v2856 = vunpack.c.l.s4 1985246804
    %v2857 = vunpack.c.0.s8 %v2856
    %v2858 = vperm.slane %v1520, %v2857
    %v2860 = vunpack.c.l.s4 839922192
    %v2861 = vunpack.c.0.s8 %v2860
    %v2862 = vperm.slane %v1521, %v2861
    %v2864 = vunpack.c.l.s4 1985246804
    %v2865 = vunpack.c.0.s8 %v2864
    %v2866 = vperm.slane %v1521, %v2865
    %v2868 = vunpack.c.l.s4 839922192
    %v2869 = vunpack.c.0.s8 %v2868
    %v2870 = vperm.slane %v1522, %v2869
    %v2872 = vunpack.c.l.s4 1985246804
    %v2873 = vunpack.c.0.s8 %v2872
    %v2874 = vperm.slane %v1522, %v2873
    %v2876 = vunpack.c.l.s4 839922192
    %v2877 = vunpack.c.0.s8 %v2876
    %v2878 = vperm.slane %v1523, %v2877
    %v2880 = vunpack.c.l.s4 1985246804
    %v2881 = vunpack.c.0.s8 %v2880
    %v2882 = vperm.slane %v1523, %v2881
    %v2884 = vunpack.c.l.s4 839922192
    %v2885 = vunpack.c.0.s8 %v2884
    %v2886 = vperm.slane %v1524, %v2885
    %v2888 = vunpack.c.l.s4 1985246804
    %v2889 = vunpack.c.0.s8 %v2888
    %v2890 = vperm.slane %v1524, %v2889
    %v2892 = vunpack.c.l.s4 839922192
    %v2893 = vunpack.c.0.s8 %v2892
    %v2894 = vperm.slane %v1525, %v2893
    %v2896 = vunpack.c.l.s4 1985246804
    %v2897 = vunpack.c.0.s8 %v2896
    %v2898 = vperm.slane %v1525, %v2897
    %v2900 = vunpack.c.l.s4 839922192
    %v2901 = vunpack.c.0.s8 %v2900
    %v2902 = vperm.slane %v1526, %v2901
    %v2904 = vunpack.c.l.s4 1985246804
    %v2905 = vunpack.c.0.s8 %v2904
    %v2906 = vperm.slane %v1526, %v2905
    %v2908 = vunpack.c.l.s4 839922192
    %v2909 = vunpack.c.0.s8 %v2908
    %v2910 = vperm.slane %v1527, %v2909
    %v2912 = vunpack.c.l.s4 1985246804
    %v2913 = vunpack.c.0.s8 %v2912
    %v2914 = vperm.slane %v1527, %v2913
    %v2916 = vunpack.c.l.s4 839922192
    %v2917 = vunpack.c.0.s8 %v2916
    %v2918 = vperm.slane %v1528, %v2917
    %v2920 = vunpack.c.l.s4 1985246804
    %v2921 = vunpack.c.0.s8 %v2920
    %v2922 = vperm.slane %v1528, %v2921
    %v2924 = vunpack.c.l.s4 839922192
    %v2925 = vunpack.c.0.s8 %v2924
    %v2926 = vperm.slane %v1529, %v2925
    %v2928 = vunpack.c.l.s4 1985246804
    %v2929 = vunpack.c.0.s8 %v2928
    %v2930 = vperm.slane %v1529, %v2929
    %v2932 = vunpack.c.l.s4 839922192
    %v2933 = vunpack.c.0.s8 %v2932
    %v2934 = vperm.slane %v1530, %v2933
    %v2936 = vunpack.c.l.s4 1985246804
    %v2937 = vunpack.c.0.s8 %v2936
    %v2938 = vperm.slane %v1530, %v2937
    %v2940 = vunpack.c.l.s4 839922192
    %v2941 = vunpack.c.0.s8 %v2940
    %v2942 = vperm.slane %v1531, %v2941
    %v2944 = vunpack.c.l.s4 1985246804
    %v2945 = vunpack.c.0.s8 %v2944
    %v2946 = vperm.slane %v1531, %v2945
    %v2948 = vunpack.c.l.s4 839922192
    %v2949 = vunpack.c.0.s8 %v2948
    %v2950 = vperm.slane %v1532, %v2949
    %v2952 = vunpack.c.l.s4 1985246804
    %v2953 = vunpack.c.0.s8 %v2952
    %v2954 = vperm.slane %v1532, %v2953
    %v2956 = vunpack.c.l.s4 839922192
    %v2957 = vunpack.c.0.s8 %v2956
    %v2958 = vperm.slane %v1533, %v2957
    %v2960 = vunpack.c.l.s4 1985246804
    %v2961 = vunpack.c.0.s8 %v2960
    %v2962 = vperm.slane %v1533, %v2961
    %v2964 = vunpack.c.l.s4 839922192
    %v2965 = vunpack.c.0.s8 %v2964
    %v2966 = vperm.slane %v1534, %v2965
    %v2968 = vunpack.c.l.s4 1985246804
    %v2969 = vunpack.c.0.s8 %v2968
    %v2970 = vperm.slane %v1534, %v2969
    %v2972 = vunpack.c.l.s4 839922192
    %v2973 = vunpack.c.0.s8 %v2972
    %v2974 = vperm.slane %v1535, %v2973
    %v2976 = vunpack.c.l.s4 1985246804
    %v2977 = vunpack.c.0.s8 %v2976
    %v2978 = vperm.slane %v1535, %v2977
    %v2980 = vunpack.c.l.s4 839922192
    %v2981 = vunpack.c.0.s8 %v2980
    %v2982 = vperm.slane %v1536, %v2981
    %v2984 = vunpack.c.l.s4 1985246804
    %v2985 = vunpack.c.0.s8 %v2984
    %v2986 = vperm.slane %v1536, %v2985
    %v2988 = vunpack.c.l.s4 839922192
    %v2989 = vunpack.c.0.s8 %v2988
    %v2990 = vperm.slane %v1537, %v2989
    %v2992 = vunpack.c.l.s4 1985246804
    %v2993 = vunpack.c.0.s8 %v2992
    %v2994 = vperm.slane %v1537, %v2993
    %v2996 = vunpack.c.l.s4 839922192
    %v2997 = vunpack.c.0.s8 %v2996
    %v2998 = vperm.slane %v1538, %v2997
    %v3000 = vunpack.c.l.s4 1985246804
    %v3001 = vunpack.c.0.s8 %v3000
    %v3002 = vperm.slane %v1538, %v3001
    %v3004 = vunpack.c.l.s4 839922192
    %v3005 = vunpack.c.0.s8 %v3004
    %v3006 = vperm.slane %v1539, %v3005
    %v3008 = vunpack.c.l.s4 1985246804
    %v3009 = vunpack.c.0.s8 %v3008
    %v3010 = vperm.slane %v1539, %v3009
    %v3012 = vunpack.c.l.s4 839922192
    %v3013 = vunpack.c.0.s8 %v3012
    %v3014 = vperm.slane %v1540, %v3013
    %v3016 = vunpack.c.l.s4 1985246804
    %v3017 = vunpack.c.0.s8 %v3016
    %v3018 = vperm.slane %v1540, %v3017
    %v3020 = vunpack.c.l.s4 839922192
    %v3021 = vunpack.c.0.s8 %v3020
    %v3022 = vperm.slane %v1541, %v3021
    %v3024 = vunpack.c.l.s4 1985246804
    %v3025 = vunpack.c.0.s8 %v3024
    %v3026 = vperm.slane %v1541, %v3025
    %v3028 = vunpack.c.l.s4 839922192
    %v3029 = vunpack.c.0.s8 %v3028
    %v3030 = vperm.slane %v1542, %v3029
    %v3032 = vunpack.c.l.s4 1985246804
    %v3033 = vunpack.c.0.s8 %v3032
    %v3034 = vperm.slane %v1542, %v3033
    %v3036 = vunpack.c.l.s4 839922192
    %v3037 = vunpack.c.0.s8 %v3036
    %v3038 = vperm.slane %v1543, %v3037
    %v3040 = vunpack.c.l.s4 1985246804
    %v3041 = vunpack.c.0.s8 %v3040
    %v3042 = vperm.slane %v1543, %v3041
    %v3044 = vunpack.c.l.s4 839922192
    %v3045 = vunpack.c.0.s8 %v3044
    %v3046 = vperm.slane %v1544, %v3045
    %v3048 = vunpack.c.l.s4 1985246804
    %v3049 = vunpack.c.0.s8 %v3048
    %v3050 = vperm.slane %v1544, %v3049
    %v3052 = vunpack.c.l.s4 839922192
    %v3053 = vunpack.c.0.s8 %v3052
    %v3054 = vperm.slane %v1545, %v3053
    %v3056 = vunpack.c.l.s4 1985246804
    %v3057 = vunpack.c.0.s8 %v3056
    %v3058 = vperm.slane %v1545, %v3057
    %v3060 = vunpack.c.l.s4 839922192
    %v3061 = vunpack.c.0.s8 %v3060
    %v3062 = vperm.slane %v1546, %v3061
    %v3064 = vunpack.c.l.s4 1985246804
    %v3065 = vunpack.c.0.s8 %v3064
    %v3066 = vperm.slane %v1546, %v3065
    %v3068 = vunpack.c.l.s4 839922192
    %v3069 = vunpack.c.0.s8 %v3068
    %v3070 = vperm.slane %v1547, %v3069
    %v3072 = vunpack.c.l.s4 1985246804
    %v3073 = vunpack.c.0.s8 %v3072
    %v3074 = vperm.slane %v1547, %v3073
    %v3076 = vunpack.c.l.s4 839922192
    %v3077 = vunpack.c.0.s8 %v3076
    %v3078 = vperm.slane %v1548, %v3077
    %v3080 = vunpack.c.l.s4 1985246804
    %v3081 = vunpack.c.0.s8 %v3080
    %v3082 = vperm.slane %v1548, %v3081
    %v3084 = vunpack.c.l.s4 839922192
    %v3085 = vunpack.c.0.s8 %v3084
    %v3086 = vperm.slane %v1549, %v3085
    %v3088 = vunpack.c.l.s4 1985246804
    %v3089 = vunpack.c.0.s8 %v3088
    %v3090 = vperm.slane %v1549, %v3089
    %v3092 = vunpack.c.l.s4 839922192
    %v3093 = vunpack.c.0.s8 %v3092
    %v3094 = vperm.slane %v1550, %v3093
    %v3096 = vunpack.c.l.s4 1985246804
    %v3097 = vunpack.c.0.s8 %v3096
    %v3098 = vperm.slane %v1550, %v3097
    %v3100 = vunpack.c.l.s4 839922192
    %v3101 = vunpack.c.0.s8 %v3100
    %v3102 = vperm.slane %v1551, %v3101
    %v3104 = vunpack.c.l.s4 1985246804
    %v3105 = vunpack.c.0.s8 %v3104
    %v3106 = vperm.slane %v1551, %v3105
    %v3108 = vunpack.c.l.s4 839922192
    %v3109 = vunpack.c.0.s8 %v3108
    %v3110 = vperm.slane %v1552, %v3109
    %v3112 = vunpack.c.l.s4 1985246804
    %v3113 = vunpack.c.0.s8 %v3112
    %v3114 = vperm.slane %v1552, %v3113
    %v3116 = vunpack.c.l.s4 839922192
    %v3117 = vunpack.c.0.s8 %v3116
    %v3118 = vperm.slane %v1553, %v3117
    %v3120 = vunpack.c.l.s4 1985246804
    %v3121 = vunpack.c.0.s8 %v3120
    %v3122 = vperm.slane %v1553, %v3121
    %v3124 = vunpack.c.l.s4 839922192
    %v3125 = vunpack.c.0.s8 %v3124
    %v3126 = vperm.slane %v1554, %v3125
    %v3128 = vunpack.c.l.s4 1985246804
    %v3129 = vunpack.c.0.s8 %v3128
    %v3130 = vperm.slane %v1554, %v3129
    %v3132 = vunpack.c.l.s4 839922192
    %v3133 = vunpack.c.0.s8 %v3132
    %v3134 = vperm.slane %v1555, %v3133
    %v3136 = vunpack.c.l.s4 1985246804
    %v3137 = vunpack.c.0.s8 %v3136
    %v3138 = vperm.slane %v1555, %v3137
    %v3140 = vunpack.c.l.s4 839922192
    %v3141 = vunpack.c.0.s8 %v3140
    %v3142 = vperm.slane %v1556, %v3141
    %v3144 = vunpack.c.l.s4 1985246804
    %v3145 = vunpack.c.0.s8 %v3144
    %v3146 = vperm.slane %v1556, %v3145
    %v3148 = vunpack.c.l.s4 839922192
    %v3149 = vunpack.c.0.s8 %v3148
    %v3150 = vperm.slane %v1557, %v3149
    %v3152 = vunpack.c.l.s4 1985246804
    %v3153 = vunpack.c.0.s8 %v3152
    %v3154 = vperm.slane %v1557, %v3153
    %v3156 = vunpack.c.l.s4 839922192
    %v3157 = vunpack.c.0.s8 %v3156
    %v3158 = vperm.slane %v1558, %v3157
    %v3160 = vunpack.c.l.s4 1985246804
    %v3161 = vunpack.c.0.s8 %v3160
    %v3162 = vperm.slane %v1558, %v3161
    %v3164 = vunpack.c.l.s4 839922192
    %v3165 = vunpack.c.0.s8 %v3164
    %v3166 = vperm.slane %v1559, %v3165
    %v3168 = vunpack.c.l.s4 1985246804
    %v3169 = vunpack.c.0.s8 %v3168
    %v3170 = vperm.slane %v1559, %v3169
    %v3172 = vunpack.c.l.s4 839922192
    %v3173 = vunpack.c.0.s8 %v3172
    %v3174 = vperm.slane %v1560, %v3173
    %v3176 = vunpack.c.l.s4 1985246804
    %v3177 = vunpack.c.0.s8 %v3176
    %v3178 = vperm.slane %v1560, %v3177
    %v3180 = vunpack.c.l.s4 839922192
    %v3181 = vunpack.c.0.s8 %v3180
    %v3182 = vperm.slane %v1561, %v3181
    %v3184 = vunpack.c.l.s4 1985246804
    %v3185 = vunpack.c.0.s8 %v3184
    %v3186 = vperm.slane %v1561, %v3185
    %v3188 = vunpack.c.l.s4 839922192
    %v3189 = vunpack.c.0.s8 %v3188
    %v3190 = vperm.slane %v1562, %v3189
    %v3192 = vunpack.c.l.s4 1985246804
    %v3193 = vunpack.c.0.s8 %v3192
    %v3194 = vperm.slane %v1562, %v3193
    %v3196 = vunpack.c.l.s4 839922192
    %v3197 = vunpack.c.0.s8 %v3196
    %v3198 = vperm.slane %v1563, %v3197
    %v3200 = vunpack.c.l.s4 1985246804
    %v3201 = vunpack.c.0.s8 %v3200
    %v3202 = vperm.slane %v1563, %v3201
    %v3204 = vunpack.c.l.s4 839922192
    %v3205 = vunpack.c.0.s8 %v3204
    %v3206 = vperm.slane %v1564, %v3205
    %v3208 = vunpack.c.l.s4 1985246804
    %v3209 = vunpack.c.0.s8 %v3208
    %v3210 = vperm.slane %v1564, %v3209
    %3211 = vst [vmem:[#allocation1] ss:$2 sm:$0xff] %v2446
    %s3212 = scalar_lea.vmem [#allocation1], 1
    %3213 = vst [vmem:[%s3212] ss:$2 sm:$0xff] %v2450
    %s3214 = scalar_lea.vmem [#allocation1], 16
    %3215 = vst [vmem:[%s3214] ss:$2 sm:$0xff] %v2454
    %s3216 = scalar_lea.vmem [#allocation1], 17
    %3217 = vst [vmem:[%s3216] ss:$2 sm:$0xff] %v2458
    %s3218 = scalar_lea.vmem [#allocation1], 32
    %3219 = vst [vmem:[%s3218] ss:$2 sm:$0xff] %v2462
    %s3220 = scalar_lea.vmem [#allocation1], 33
    %3221 = vst [vmem:[%s3220] ss:$2 sm:$0xff] %v2466
    %s3222 = scalar_lea.vmem [#allocation1], 48
    %3223 = vst [vmem:[%s3222] ss:$2 sm:$0xff] %v2470
    %s3224 = scalar_lea.vmem [#allocation1], 49
    %3225 = vst [vmem:[%s3224] ss:$2 sm:$0xff] %v2474
    %v3226 = vld.sshfl [vmem:[#allocation1] sm:$0xff pattern:$0x75316420]
    %v3227 = vld.sshfl [vmem:[#allocation1 + $0x10] sm:$0xff pattern:$0x75316420]
    %v3228 = vld.sshfl [vmem:[#allocation1 + $0x20] sm:$0xff pattern:$0x75316420]
    %v3229 = vld.sshfl [vmem:[#allocation1 + $0x30] sm:$0xff pattern:$0x75316420]
    %3230 = vst [vmem:[#allocation1] ss:$2 sm:$0xff] %v2478
    %3231 = vst [vmem:[%s3212] ss:$2 sm:$0xff] %v2482
    %3232 = vst [vmem:[%s3214] ss:$2 sm:$0xff] %v2486
    %3233 = vst [vmem:[%s3216] ss:$2 sm:$0xff] %v2490
    %3234 = vst [vmem:[%s3218] ss:$2 sm:$0xff] %v2494
    %3235 = vst [vmem:[%s3220] ss:$2 sm:$0xff] %v2498
    %3236 = vst [vmem:[%s3222] ss:$2 sm:$0xff] %v2502
    %3237 = vst [vmem:[%s3224] ss:$2 sm:$0xff] %v2506
    %v3238 = vld.sshfl [vmem:[#allocation1] sm:$0xff pattern:$0x75316420]
    %v3239 = vld.sshfl [vmem:[#allocation1 + $0x10] sm:$0xff pattern:$0x75316420]
    %v3240 = vld.sshfl [vmem:[#allocation1 + $0x20] sm:$0xff pattern:$0x75316420]
    %v3241 = vld.sshfl [vmem:[#allocation1 + $0x30] sm:$0xff pattern:$0x75316420]
    %3242 = vst [vmem:[#allocation1] ss:$2 sm:$0xff] %v2510
    %3243 = vst [vmem:[%s3212] ss:$2 sm:$0xff] %v2514
    %3244 = vst [vmem:[%s3214] ss:$2 sm:$0xff] %v2518
    %3245 = vst [vmem:[%s3216] ss:$2 sm:$0xff] %v2522
    %3246 = vst [vmem:[%s3218] ss:$2 sm:$0xff] %v2526
    %3247 = vst [vmem:[%s3220] ss:$2 sm:$0xff] %v2530
    %3248 = vst [vmem:[%s3222] ss:$2 sm:$0xff] %v2534
    %3249 = vst [vmem:[%s3224] ss:$2 sm:$0xff] %v2538
    %v3250 = vld.sshfl [vmem:[#allocation1] sm:$0xff pattern:$0x75316420]
    %v3251 = vld.sshfl [vmem:[#allocation1 + $0x10] sm:$0xff pattern:$0x75316420]
    %v3252 = vld.sshfl [vmem:[#allocation1 + $0x20] sm:$0xff pattern:$0x75316420]
    %v3253 = vld.sshfl [vmem:[#allocation1 + $0x30] sm:$0xff pattern:$0x75316420]
    %3254 = vst [vmem:[#allocation1] ss:$2 sm:$0xff] %v2542
    %3255 = vst [vmem:[%s3212] ss:$2 sm:$0xff] %v2546
    %3256 = vst [vmem:[%s3214] ss:$2 sm:$0xff] %v2550
    %3257 = vst [vmem:[%s3216] ss:$2 sm:$0xff] %v2554
    %3258 = vst [vmem:[%s3218] ss:$2 sm:$0xff] %v2558
    %3259 = vst [vmem:[%s3220] ss:$2 sm:$0xff] %v2562
    %3260 = vst [vmem:[%s3222] ss:$2 sm:$0xff] %v2566
    %3261 = vst [vmem:[%s3224] ss:$2 sm:$0xff] %v2570
    %v3262 = vld.sshfl [vmem:[#allocation1] sm:$0xff pattern:$0x75316420]
    %v3263 = vld.sshfl [vmem:[#allocation1 + $0x10] sm:$0xff pattern:$0x75316420]
    %v3264 = vld.sshfl [vmem:[#allocation1 + $0x20] sm:$0xff pattern:$0x75316420]
    %v3265 = vld.sshfl [vmem:[#allocation1 + $0x30] sm:$0xff pattern:$0x75316420]
    %3266 = vst [vmem:[#allocation1] ss:$2 sm:$0xff] %v2574
    %3267 = vst [vmem:[%s3212] ss:$2 sm:$0xff] %v2578
    %3268 = vst [vmem:[%s3214] ss:$2 sm:$0xff] %v2582
    %3269 = vst [vmem:[%s3216] ss:$2 sm:$0xff] %v2586
    %3270 = vst [vmem:[%s3218] ss:$2 sm:$0xff] %v2590
    %3271 = vst [vmem:[%s3220] ss:$2 sm:$0xff] %v2594
    %3272 = vst [vmem:[%s3222] ss:$2 sm:$0xff] %v2598
    %3273 = vst [vmem:[%s3224] ss:$2 sm:$0xff] %v2602
    %v3274 = vld.sshfl [vmem:[#allocation1] sm:$0xff pattern:$0x75316420]
    %v3275 = vld.sshfl [vmem:[#allocation1 + $0x10] sm:$0xff pattern:$0x75316420]
    %v3276 = vld.sshfl [vmem:[#allocation1 + $0x20] sm:$0xff pattern:$0x75316420]
    %v3277 = vld.sshfl [vmem:[#allocation1 + $0x30] sm:$0xff pattern:$0x75316420]
    %3278 = vst [vmem:[#allocation1] ss:$2 sm:$0xff] %v2606
    %3279 = vst [vmem:[%s3212] ss:$2 sm:$0xff] %v2610
    %3280 = vst [vmem:[%s3214] ss:$2 sm:$0xff] %v2614
    %3281 = vst [vmem:[%s3216] ss:$2 sm:$0xff] %v2618
    %3282 = vst [vmem:[%s3218] ss:$2 sm:$0xff] %v2622
    %3283 = vst [vmem:[%s3220] ss:$2 sm:$0xff] %v2626
    %3284 = vst [vmem:[%s3222] ss:$2 sm:$0xff] %v2630
    %3285 = vst [vmem:[%s3224] ss:$2 sm:$0xff] %v2634
    %v3286 = vld.sshfl [vmem:[#allocation1] sm:$0xff pattern:$0x75316420]
    %v3287 = vld.sshfl [vmem:[#allocation1 + $0x10] sm:$0xff pattern:$0x75316420]
    %v3288 = vld.sshfl [vmem:[#allocation1 + $0x20] sm:$0xff pattern:$0x75316420]
    %v3289 = vld.sshfl [vmem:[#allocation1 + $0x30] sm:$0xff pattern:$0x75316420]
    %3290 = vst [vmem:[#allocation1] ss:$2 sm:$0xff] %v2638
    %3291 = vst [vmem:[%s3212] ss:$2 sm:$0xff] %v2642
    %3292 = vst [vmem:[%s3214] ss:$2 sm:$0xff] %v2646
    %3293 = vst [vmem:[%s3216] ss:$2 sm:$0xff] %v2650
    %3294 = vst [vmem:[%s3218] ss:$2 sm:$0xff] %v2654
    %3295 = vst [vmem:[%s3220] ss:$2 sm:$0xff] %v2658
    %3296 = vst [vmem:[%s3222] ss:$2 sm:$0xff] %v2662
    %3297 = vst [vmem:[%s3224] ss:$2 sm:$0xff] %v2666
    %v3298 = vld.sshfl [vmem:[#allocation1] sm:$0xff pattern:$0x75316420]
    %v3299 = vld.sshfl [vmem:[#allocation1 + $0x10] sm:$0xff pattern:$0x75316420]
    %v3300 = vld.sshfl [vmem:[#allocation1 + $0x20] sm:$0xff pattern:$0x75316420]
    %v3301 = vld.sshfl [vmem:[#allocation1 + $0x30] sm:$0xff pattern:$0x75316420]
    %3302 = vst [vmem:[#allocation1] ss:$2 sm:$0xff] %v2670
    %3303 = vst [vmem:[%s3212] ss:$2 sm:$0xff] %v2674
    %3304 = vst [vmem:[%s3214] ss:$2 sm:$0xff] %v2678
    %3305 = vst [vmem:[%s3216] ss:$2 sm:$0xff] %v2682
    %3306 = vst [vmem:[%s3218] ss:$2 sm:$0xff] %v2686
    %3307 = vst [vmem:[%s3220] ss:$2 sm:$0xff] %v2690
    %3308 = vst [vmem:[%s3222] ss:$2 sm:$0xff] %v2694
    %3309 = vst [vmem:[%s3224] ss:$2 sm:$0xff] %v2698
    %v3310 = vld.sshfl [vmem:[#allocation1] sm:$0xff pattern:$0x75316420]
    %v3311 = vld.sshfl [vmem:[#allocation1 + $0x10] sm:$0xff pattern:$0x75316420]
    %v3312 = vld.sshfl [vmem:[#allocation1 + $0x20] sm:$0xff pattern:$0x75316420]
    %v3313 = vld.sshfl [vmem:[#allocation1 + $0x30] sm:$0xff pattern:$0x75316420]
    %3314 = vst [vmem:[#allocation1] ss:$2 sm:$0xff] %v2702
    %3315 = vst [vmem:[%s3212] ss:$2 sm:$0xff] %v2706
    %3316 = vst [vmem:[%s3214] ss:$2 sm:$0xff] %v2710
    %3317 = vst [vmem:[%s3216] ss:$2 sm:$0xff] %v2714
    %3318 = vst [vmem:[%s3218] ss:$2 sm:$0xff] %v2718
    %3319 = vst [vmem:[%s3220] ss:$2 sm:$0xff] %v2722
    %3320 = vst [vmem:[%s3222] ss:$2 sm:$0xff] %v2726
    %3321 = vst [vmem:[%s3224] ss:$2 sm:$0xff] %v2730
    %v3322 = vld.sshfl [vmem:[#allocation1] sm:$0xff pattern:$0x75316420]
    %v3323 = vld.sshfl [vmem:[#allocation1 + $0x10] sm:$0xff pattern:$0x75316420]
    %v3324 = vld.sshfl [vmem:[#allocation1 + $0x20] sm:$0xff pattern:$0x75316420]
    %v3325 = vld.sshfl [vmem:[#allocation1 + $0x30] sm:$0xff pattern:$0x75316420]
    %3326 = vst [vmem:[#allocation1] ss:$2 sm:$0xff] %v2734
    %3327 = vst [vmem:[%s3212] ss:$2 sm:$0xff] %v2738
    %3328 = vst [vmem:[%s3214] ss:$2 sm:$0xff] %v2742
    %3329 = vst [vmem:[%s3216] ss:$2 sm:$0xff] %v2746
    %3330 = vst [vmem:[%s3218] ss:$2 sm:$0xff] %v2750
    %3331 = vst [vmem:[%s3220] ss:$2 sm:$0xff] %v2754
    %3332 = vst [vmem:[%s3222] ss:$2 sm:$0xff] %v2758
    %3333 = vst [vmem:[%s3224] ss:$2 sm:$0xff] %v2762
    %v3334 = vld.sshfl [vmem:[#allocation1] sm:$0xff pattern:$0x75316420]
    %v3335 = vld.sshfl [vmem:[#allocation1 + $0x10] sm:$0xff pattern:$0x75316420]
    %v3336 = vld.sshfl [vmem:[#allocation1 + $0x20] sm:$0xff pattern:$0x75316420]
    %v3337 = vld.sshfl [vmem:[#allocation1 + $0x30] sm:$0xff pattern:$0x75316420]
    %3338 = vst [vmem:[#allocation1] ss:$2 sm:$0xff] %v2766
    %3339 = vst [vmem:[%s3212] ss:$2 sm:$0xff] %v2770
    %3340 = vst [vmem:[%s3214] ss:$2 sm:$0xff] %v2774
    %3341 = vst [vmem:[%s3216] ss:$2 sm:$0xff] %v2778
    %3342 = vst [vmem:[%s3218] ss:$2 sm:$0xff] %v2782
    %3343 = vst [vmem:[%s3220] ss:$2 sm:$0xff] %v2786
    %3344 = vst [vmem:[%s3222] ss:$2 sm:$0xff] %v2790
    %3345 = vst [vmem:[%s3224] ss:$2 sm:$0xff] %v2794
    %v3346 = vld.sshfl [vmem:[#allocation1] sm:$0xff pattern:$0x75316420]
    %v3347 = vld.sshfl [vmem:[#allocation1 + $0x10] sm:$0xff pattern:$0x75316420]
    %v3348 = vld.sshfl [vmem:[#allocation1 + $0x20] sm:$0xff pattern:$0x75316420]
    %v3349 = vld.sshfl [vmem:[#allocation1 + $0x30] sm:$0xff pattern:$0x75316420]
    %3350 = vst [vmem:[#allocation1] ss:$2 sm:$0xff] %v2798
    %3351 = vst [vmem:[%s3212] ss:$2 sm:$0xff] %v2802
    %3352 = vst [vmem:[%s3214] ss:$2 sm:$0xff] %v2806
    %3353 = vst [vmem:[%s3216] ss:$2 sm:$0xff] %v2810
    %3354 = vst [vmem:[%s3218] ss:$2 sm:$0xff] %v2814
    %3355 = vst [vmem:[%s3220] ss:$2 sm:$0xff] %v2818
    %3356 = vst [vmem:[%s3222] ss:$2 sm:$0xff] %v2822
    %3357 = vst [vmem:[%s3224] ss:$2 sm:$0xff] %v2826
    %v3358 = vld.sshfl [vmem:[#allocation1] sm:$0xff pattern:$0x75316420]
    %v3359 = vld.sshfl [vmem:[#allocation1 + $0x10] sm:$0xff pattern:$0x75316420]
    %v3360 = vld.sshfl [vmem:[#allocation1 + $0x20] sm:$0xff pattern:$0x75316420]
    %v3361 = vld.sshfl [vmem:[#allocation1 + $0x30] sm:$0xff pattern:$0x75316420]
    %3362 = vst [vmem:[#allocation1] ss:$2 sm:$0xff] %v2830
    %3363 = vst [vmem:[%s3212] ss:$2 sm:$0xff] %v2834
    %3364 = vst [vmem:[%s3214] ss:$2 sm:$0xff] %v2838
    %3365 = vst [vmem:[%s3216] ss:$2 sm:$0xff] %v2842
    %3366 = vst [vmem:[%s3218] ss:$2 sm:$0xff] %v2846
    %3367 = vst [vmem:[%s3220] ss:$2 sm:$0xff] %v2850
    %3368 = vst [vmem:[%s3222] ss:$2 sm:$0xff] %v2854
    %3369 = vst [vmem:[%s3224] ss:$2 sm:$0xff] %v2858
    %v3370 = vld.sshfl [vmem:[#allocation1] sm:$0xff pattern:$0x75316420]
    %v3371 = vld.sshfl [vmem:[#allocation1 + $0x10] sm:$0xff pattern:$0x75316420]
    %v3372 = vld.sshfl [vmem:[#allocation1 + $0x20] sm:$0xff pattern:$0x75316420]
    %v3373 = vld.sshfl [vmem:[#allocation1 + $0x30] sm:$0xff pattern:$0x75316420]
    %3374 = vst [vmem:[#allocation1] ss:$2 sm:$0xff] %v2862
    %3375 = vst [vmem:[%s3212] ss:$2 sm:$0xff] %v2866
    %3376 = vst [vmem:[%s3214] ss:$2 sm:$0xff] %v2870
    %3377 = vst [vmem:[%s3216] ss:$2 sm:$0xff] %v2874
    %3378 = vst [vmem:[%s3218] ss:$2 sm:$0xff] %v2878
    %3379 = vst [vmem:[%s3220] ss:$2 sm:$0xff] %v2882
    %3380 = vst [vmem:[%s3222] ss:$2 sm:$0xff] %v2886
    %3381 = vst [vmem:[%s3224] ss:$2 sm:$0xff] %v2890
    %v3382 = vld.sshfl [vmem:[#allocation1] sm:$0xff pattern:$0x75316420]
    %v3383 = vld.sshfl [vmem:[#allocation1 + $0x10] sm:$0xff pattern:$0x75316420]
    %v3384 = vld.sshfl [vmem:[#allocation1 + $0x20] sm:$0xff pattern:$0x75316420]
    %v3385 = vld.sshfl [vmem:[#allocation1 + $0x30] sm:$0xff pattern:$0x75316420]
    %3386 = vst [vmem:[#allocation1] ss:$2 sm:$0xff] %v2894
    %3387 = vst [vmem:[%s3212] ss:$2 sm:$0xff] %v2898
    %3388 = vst [vmem:[%s3214] ss:$2 sm:$0xff] %v2902
    %3389 = vst [vmem:[%s3216] ss:$2 sm:$0xff] %v2906
    %3390 = vst [vmem:[%s3218] ss:$2 sm:$0xff] %v2910
    %3391 = vst [vmem:[%s3220] ss:$2 sm:$0xff] %v2914
    %3392 = vst [vmem:[%s3222] ss:$2 sm:$0xff] %v2918
    %3393 = vst [vmem:[%s3224] ss:$2 sm:$0xff] %v2922
    %v3394 = vld.sshfl [vmem:[#allocation1] sm:$0xff pattern:$0x75316420]
    %v3395 = vld.sshfl [vmem:[#allocation1 + $0x10] sm:$0xff pattern:$0x75316420]
    %v3396 = vld.sshfl [vmem:[#allocation1 + $0x20] sm:$0xff pattern:$0x75316420]
    %v3397 = vld.sshfl [vmem:[#allocation1 + $0x30] sm:$0xff pattern:$0x75316420]
    %3398 = vst [vmem:[#allocation1] ss:$2 sm:$0xff] %v2926
    %3399 = vst [vmem:[%s3212] ss:$2 sm:$0xff] %v2930
    %3400 = vst [vmem:[%s3214] ss:$2 sm:$0xff] %v2934
    %3401 = vst [vmem:[%s3216] ss:$2 sm:$0xff] %v2938
    %3402 = vst [vmem:[%s3218] ss:$2 sm:$0xff] %v2942
    %3403 = vst [vmem:[%s3220] ss:$2 sm:$0xff] %v2946
    %3404 = vst [vmem:[%s3222] ss:$2 sm:$0xff] %v2950
    %3405 = vst [vmem:[%s3224] ss:$2 sm:$0xff] %v2954
    %v3406 = vld.sshfl [vmem:[#allocation1] sm:$0xff pattern:$0x75316420]
    %v3407 = vld.sshfl [vmem:[#allocation1 + $0x10] sm:$0xff pattern:$0x75316420]
    %v3408 = vld.sshfl [vmem:[#allocation1 + $0x20] sm:$0xff pattern:$0x75316420]
    %v3409 = vld.sshfl [vmem:[#allocation1 + $0x30] sm:$0xff pattern:$0x75316420]
    %3410 = vst [vmem:[#allocation1] ss:$2 sm:$0xff] %v2958
    %3411 = vst [vmem:[%s3212] ss:$2 sm:$0xff] %v2962
    %3412 = vst [vmem:[%s3214] ss:$2 sm:$0xff] %v2966
    %3413 = vst [vmem:[%s3216] ss:$2 sm:$0xff] %v2970
    %3414 = vst [vmem:[%s3218] ss:$2 sm:$0xff] %v2974
    %3415 = vst [vmem:[%s3220] ss:$2 sm:$0xff] %v2978
    %3416 = vst [vmem:[%s3222] ss:$2 sm:$0xff] %v2982
    %3417 = vst [vmem:[%s3224] ss:$2 sm:$0xff] %v2986
    %v3418 = vld.sshfl [vmem:[#allocation1] sm:$0xff pattern:$0x75316420]
    %v3419 = vld.sshfl [vmem:[#allocation1 + $0x10] sm:$0xff pattern:$0x75316420]
    %v3420 = vld.sshfl [vmem:[#allocation1 + $0x20] sm:$0xff pattern:$0x75316420]
    %v3421 = vld.sshfl [vmem:[#allocation1 + $0x30] sm:$0xff pattern:$0x75316420]
    %3422 = vst [vmem:[#allocation1] ss:$2 sm:$0xff] %v2990
    %3423 = vst [vmem:[%s3212] ss:$2 sm:$0xff] %v2994
    %3424 = vst [vmem:[%s3214] ss:$2 sm:$0xff] %v2998
    %3425 = vst [vmem:[%s3216] ss:$2 sm:$0xff] %v3002
    %3426 = vst [vmem:[%s3218] ss:$2 sm:$0xff] %v3006
    %3427 = vst [vmem:[%s3220] ss:$2 sm:$0xff] %v3010
    %3428 = vst [vmem:[%s3222] ss:$2 sm:$0xff] %v3014
    %3429 = vst [vmem:[%s3224] ss:$2 sm:$0xff] %v3018
    %v3430 = vld.sshfl [vmem:[#allocation1] sm:$0xff pattern:$0x75316420]
    %v3431 = vld.sshfl [vmem:[#allocation1 + $0x10] sm:$0xff pattern:$0x75316420]
    %v3432 = vld.sshfl [vmem:[#allocation1 + $0x20] sm:$0xff pattern:$0x75316420]
    %v3433 = vld.sshfl [vmem:[#allocation1 + $0x30] sm:$0xff pattern:$0x75316420]
    %3434 = vst [vmem:[#allocation1] ss:$2 sm:$0xff] %v3022
    %3435 = vst [vmem:[%s3212] ss:$2 sm:$0xff] %v3026
    %3436 = vst [vmem:[%s3214] ss:$2 sm:$0xff] %v3030
    %3437 = vst [vmem:[%s3216] ss:$2 sm:$0xff] %v3034
    %3438 = vst [vmem:[%s3218] ss:$2 sm:$0xff] %v3038
    %3439 = vst [vmem:[%s3220] ss:$2 sm:$0xff] %v3042
    %3440 = vst [vmem:[%s3222] ss:$2 sm:$0xff] %v3046
    %3441 = vst [vmem:[%s3224] ss:$2 sm:$0xff] %v3050
    %v3442 = vld.sshfl [vmem:[#allocation1] sm:$0xff pattern:$0x75316420]
    %v3443 = vld.sshfl [vmem:[#allocation1 + $0x10] sm:$0xff pattern:$0x75316420]
    %v3444 = vld.sshfl [vmem:[#allocation1 + $0x20] sm:$0xff pattern:$0x75316420]
    %v3445 = vld.sshfl [vmem:[#allocation1 + $0x30] sm:$0xff pattern:$0x75316420]
    %3446 = vst [vmem:[#allocation1] ss:$2 sm:$0xff] %v3054
    %3447 = vst [vmem:[%s3212] ss:$2 sm:$0xff] %v3058
    %3448 = vst [vmem:[%s3214] ss:$2 sm:$0xff] %v3062
    %3449 = vst [vmem:[%s3216] ss:$2 sm:$0xff] %v3066
    %3450 = vst [vmem:[%s3218] ss:$2 sm:$0xff] %v3070
    %3451 = vst [vmem:[%s3220] ss:$2 sm:$0xff] %v3074
    %3452 = vst [vmem:[%s3222] ss:$2 sm:$0xff] %v3078
    %3453 = vst [vmem:[%s3224] ss:$2 sm:$0xff] %v3082
    %v3454 = vld.sshfl [vmem:[#allocation1] sm:$0xff pattern:$0x75316420]
    %v3455 = vld.sshfl [vmem:[#allocation1 + $0x10] sm:$0xff pattern:$0x75316420]
    %v3456 = vld.sshfl [vmem:[#allocation1 + $0x20] sm:$0xff pattern:$0x75316420]
    %v3457 = vld.sshfl [vmem:[#allocation1 + $0x30] sm:$0xff pattern:$0x75316420]
    %3458 = vst [vmem:[#allocation1] ss:$2 sm:$0xff] %v3086
    %3459 = vst [vmem:[%s3212] ss:$2 sm:$0xff] %v3090
    %3460 = vst [vmem:[%s3214] ss:$2 sm:$0xff] %v3094
    %3461 = vst [vmem:[%s3216] ss:$2 sm:$0xff] %v3098
    %3462 = vst [vmem:[%s3218] ss:$2 sm:$0xff] %v3102
    %3463 = vst [vmem:[%s3220] ss:$2 sm:$0xff] %v3106
    %3464 = vst [vmem:[%s3222] ss:$2 sm:$0xff] %v3110
    %3465 = vst [vmem:[%s3224] ss:$2 sm:$0xff] %v3114
    %v3466 = vld.sshfl [vmem:[#allocation1] sm:$0xff pattern:$0x75316420]
    %v3467 = vld.sshfl [vmem:[#allocation1 + $0x10] sm:$0xff pattern:$0x75316420]
    %v3468 = vld.sshfl [vmem:[#allocation1 + $0x20] sm:$0xff pattern:$0x75316420]
    %v3469 = vld.sshfl [vmem:[#allocation1 + $0x30] sm:$0xff pattern:$0x75316420]
    %3470 = vst [vmem:[#allocation1] ss:$2 sm:$0xff] %v3118
    %3471 = vst [vmem:[%s3212] ss:$2 sm:$0xff] %v3122
    %3472 = vst [vmem:[%s3214] ss:$2 sm:$0xff] %v3126
    %3473 = vst [vmem:[%s3216] ss:$2 sm:$0xff] %v3130
    %3474 = vst [vmem:[%s3218] ss:$2 sm:$0xff] %v3134
    %3475 = vst [vmem:[%s3220] ss:$2 sm:$0xff] %v3138
    %3476 = vst [vmem:[%s3222] ss:$2 sm:$0xff] %v3142
    %3477 = vst [vmem:[%s3224] ss:$2 sm:$0xff] %v3146
    %v3478 = vld.sshfl [vmem:[#allocation1] sm:$0xff pattern:$0x75316420]
    %v3479 = vld.sshfl [vmem:[#allocation1 + $0x10] sm:$0xff pattern:$0x75316420]
    %v3480 = vld.sshfl [vmem:[#allocation1 + $0x20] sm:$0xff pattern:$0x75316420]
    %v3481 = vld.sshfl [vmem:[#allocation1 + $0x30] sm:$0xff pattern:$0x75316420]
    %3482 = vst [vmem:[#allocation1] ss:$2 sm:$0xff] %v3150
    %3483 = vst [vmem:[%s3212] ss:$2 sm:$0xff] %v3154
    %3484 = vst [vmem:[%s3214] ss:$2 sm:$0xff] %v3158
    %3485 = vst [vmem:[%s3216] ss:$2 sm:$0xff] %v3162
    %3486 = vst [vmem:[%s3218] ss:$2 sm:$0xff] %v3166
    %3487 = vst [vmem:[%s3220] ss:$2 sm:$0xff] %v3170
    %3488 = vst [vmem:[%s3222] ss:$2 sm:$0xff] %v3174
    %3489 = vst [vmem:[%s3224] ss:$2 sm:$0xff] %v3178
    %v3490 = vld.sshfl [vmem:[#allocation1] sm:$0xff pattern:$0x75316420]
    %v3491 = vld.sshfl [vmem:[#allocation1 + $0x10] sm:$0xff pattern:$0x75316420]
    %v3492 = vld.sshfl [vmem:[#allocation1 + $0x20] sm:$0xff pattern:$0x75316420]
    %v3493 = vld.sshfl [vmem:[#allocation1 + $0x30] sm:$0xff pattern:$0x75316420]
    %3494 = vst [vmem:[#allocation1] ss:$2 sm:$0xff] %v3182
    %3495 = vst [vmem:[%s3212] ss:$2 sm:$0xff] %v3186
    %3496 = vst [vmem:[%s3214] ss:$2 sm:$0xff] %v3190
    %3497 = vst [vmem:[%s3216] ss:$2 sm:$0xff] %v3194
    %3498 = vst [vmem:[%s3218] ss:$2 sm:$0xff] %v3198
    %3499 = vst [vmem:[%s3220] ss:$2 sm:$0xff] %v3202
    %3500 = vst [vmem:[%s3222] ss:$2 sm:$0xff] %v3206
    %3501 = vst [vmem:[%s3224] ss:$2 sm:$0xff] %v3210
    %v3502 = vld.sshfl [vmem:[#allocation1] sm:$0xff pattern:$0x75316420]
    %v3503 = vld.sshfl [vmem:[#allocation1 + $0x10] sm:$0xff pattern:$0x75316420]
    %v3504 = vld.sshfl [vmem:[#allocation1 + $0x20] sm:$0xff pattern:$0x75316420]
    %v3505 = vld.sshfl [vmem:[#allocation1 + $0x30] sm:$0xff pattern:$0x75316420]
    %3506 = vset.pattern.permute.xlu0 0
    %3507 = vperm.xlu0 %3506, %v3226
    %v3508 = vpop.permute.xlu0 %3507
    %3509 = vset.pattern.permute.xlu0 0
    %3510 = vperm.xlu0 %3509, %v3227
    %v3511 = vpop.permute.xlu0 %3510
    %3512 = vset.pattern.permute.xlu0 0
    %3513 = vperm.xlu0 %3512, %v3228
    %v3514 = vpop.permute.xlu0 %3513
    %3515 = vset.pattern.permute.xlu0 0
    %3516 = vperm.xlu0 %3515, %v3229
    %v3517 = vpop.permute.xlu0 %3516
    %3518 = vset.pattern.permute.xlu0 0
    %3519 = vperm.xlu0 %3518, %v3238
    %v3520 = vpop.permute.xlu0 %3519
    %3521 = vset.pattern.permute.xlu0 0
    %3522 = vperm.xlu0 %3521, %v3239
    %v3523 = vpop.permute.xlu0 %3522
    %3524 = vset.pattern.permute.xlu0 0
    %3525 = vperm.xlu0 %3524, %v3240
    %v3526 = vpop.permute.xlu0 %3525
    %3527 = vset.pattern.permute.xlu0 0
    %3528 = vperm.xlu0 %3527, %v3241
    %v3529 = vpop.permute.xlu0 %3528
    %3530 = vset.pattern.permute.xlu0 0
    %3531 = vperm.xlu0 %3530, %v3250
    %v3532 = vpop.permute.xlu0 %3531
    %3533 = vset.pattern.permute.xlu0 0
    %3534 = vperm.xlu0 %3533, %v3251
    %v3535 = vpop.permute.xlu0 %3534
    %3536 = vset.pattern.permute.xlu0 0
    %3537 = vperm.xlu0 %3536, %v3252
    %v3538 = vpop.permute.xlu0 %3537
    %3539 = vset.pattern.permute.xlu0 0
    %3540 = vperm.xlu0 %3539, %v3253
    %v3541 = vpop.permute.xlu0 %3540
    %3542 = vset.pattern.permute.xlu0 0
    %3543 = vperm.xlu0 %3542, %v3262
    %v3544 = vpop.permute.xlu0 %3543
    %3545 = vset.pattern.permute.xlu0 0
    %3546 = vperm.xlu0 %3545, %v3263
    %v3547 = vpop.permute.xlu0 %3546
    %3548 = vset.pattern.permute.xlu0 0
    %3549 = vperm.xlu0 %3548, %v3264
    %v3550 = vpop.permute.xlu0 %3549
    %3551 = vset.pattern.permute.xlu0 0
    %3552 = vperm.xlu0 %3551, %v3265
    %v3553 = vpop.permute.xlu0 %3552
    %3554 = vset.pattern.permute.xlu0 0
    %3555 = vperm.xlu0 %3554, %v3274
    %v3556 = vpop.permute.xlu0 %3555
    %3557 = vset.pattern.permute.xlu0 0
    %3558 = vperm.xlu0 %3557, %v3275
    %v3559 = vpop.permute.xlu0 %3558
    %3560 = vset.pattern.permute.xlu0 0
    %3561 = vperm.xlu0 %3560, %v3276
    %v3562 = vpop.permute.xlu0 %3561
    %3563 = vset.pattern.permute.xlu0 0
    %3564 = vperm.xlu0 %3563, %v3277
    %v3565 = vpop.permute.xlu0 %3564
    %3566 = vset.pattern.permute.xlu0 0
    %3567 = vperm.xlu0 %3566, %v3286
    %v3568 = vpop.permute.xlu0 %3567
    %3569 = vset.pattern.permute.xlu0 0
    %3570 = vperm.xlu0 %3569, %v3287
    %v3571 = vpop.permute.xlu0 %3570
    %3572 = vset.pattern.permute.xlu0 0
    %3573 = vperm.xlu0 %3572, %v3288
    %v3574 = vpop.permute.xlu0 %3573
    %3575 = vset.pattern.permute.xlu0 0
    %3576 = vperm.xlu0 %3575, %v3289
    %v3577 = vpop.permute.xlu0 %3576
    %3578 = vset.pattern.permute.xlu0 0
    %3579 = vperm.xlu0 %3578, %v3298
    %v3580 = vpop.permute.xlu0 %3579
    %3581 = vset.pattern.permute.xlu0 0
    %3582 = vperm.xlu0 %3581, %v3299
    %v3583 = vpop.permute.xlu0 %3582
    %3584 = vset.pattern.permute.xlu0 0
    %3585 = vperm.xlu0 %3584, %v3300
    %v3586 = vpop.permute.xlu0 %3585
    %3587 = vset.pattern.permute.xlu0 0
    %3588 = vperm.xlu0 %3587, %v3301
    %v3589 = vpop.permute.xlu0 %3588
    %3590 = vset.pattern.permute.xlu0 0
    %3591 = vperm.xlu0 %3590, %v3310
    %v3592 = vpop.permute.xlu0 %3591
    %3593 = vset.pattern.permute.xlu0 0
    %3594 = vperm.xlu0 %3593, %v3311
    %v3595 = vpop.permute.xlu0 %3594
    %3596 = vset.pattern.permute.xlu0 0
    %3597 = vperm.xlu0 %3596, %v3312
    %v3598 = vpop.permute.xlu0 %3597
    %3599 = vset.pattern.permute.xlu0 0
    %3600 = vperm.xlu0 %3599, %v3313
    %v3601 = vpop.permute.xlu0 %3600
    %3602 = vset.pattern.permute.xlu0 0
    %3603 = vperm.xlu0 %3602, %v3322
    %v3604 = vpop.permute.xlu0 %3603
    %3605 = vset.pattern.permute.xlu0 0
    %3606 = vperm.xlu0 %3605, %v3323
    %v3607 = vpop.permute.xlu0 %3606
    %3608 = vset.pattern.permute.xlu0 0
    %3609 = vperm.xlu0 %3608, %v3324
    %v3610 = vpop.permute.xlu0 %3609
    %3611 = vset.pattern.permute.xlu0 0
    %3612 = vperm.xlu0 %3611, %v3325
    %v3613 = vpop.permute.xlu0 %3612
    %3614 = vset.pattern.permute.xlu0 0
    %3615 = vperm.xlu0 %3614, %v3334
    %v3616 = vpop.permute.xlu0 %3615
    %3617 = vset.pattern.permute.xlu0 0
    %3618 = vperm.xlu0 %3617, %v3335
    %v3619 = vpop.permute.xlu0 %3618
    %3620 = vset.pattern.permute.xlu0 0
    %3621 = vperm.xlu0 %3620, %v3336
    %v3622 = vpop.permute.xlu0 %3621
    %3623 = vset.pattern.permute.xlu0 0
    %3624 = vperm.xlu0 %3623, %v3337
    %v3625 = vpop.permute.xlu0 %3624
    %3626 = vset.pattern.permute.xlu0 0
    %3627 = vperm.xlu0 %3626, %v3346
    %v3628 = vpop.permute.xlu0 %3627
    %3629 = vset.pattern.permute.xlu0 0
    %3630 = vperm.xlu0 %3629, %v3347
    %v3631 = vpop.permute.xlu0 %3630
    %3632 = vset.pattern.permute.xlu0 0
    %3633 = vperm.xlu0 %3632, %v3348
    %v3634 = vpop.permute.xlu0 %3633
    %3635 = vset.pattern.permute.xlu0 0
    %3636 = vperm.xlu0 %3635, %v3349
    %v3637 = vpop.permute.xlu0 %3636
    %3638 = vset.pattern.permute.xlu0 0
    %3639 = vperm.xlu0 %3638, %v3358
    %v3640 = vpop.permute.xlu0 %3639
    %3641 = vset.pattern.permute.xlu0 0
    %3642 = vperm.xlu0 %3641, %v3359
    %v3643 = vpop.permute.xlu0 %3642
    %3644 = vset.pattern.permute.xlu0 0
    %3645 = vperm.xlu0 %3644, %v3360
    %v3646 = vpop.permute.xlu0 %3645
    %3647 = vset.pattern.permute.xlu0 0
    %3648 = vperm.xlu0 %3647, %v3361
    %v3649 = vpop.permute.xlu0 %3648
    %3650 = vset.pattern.permute.xlu0 0
    %3651 = vperm.xlu0 %3650, %v3370
    %v3652 = vpop.permute.xlu0 %3651
    %3653 = vset.pattern.permute.xlu0 0
    %3654 = vperm.xlu0 %3653, %v3371
    %v3655 = vpop.permute.xlu0 %3654
    %3656 = vset.pattern.permute.xlu0 0
    %3657 = vperm.xlu0 %3656, %v3372
    %v3658 = vpop.permute.xlu0 %3657
    %3659 = vset.pattern.permute.xlu0 0
    %3660 = vperm.xlu0 %3659, %v3373
    %v3661 = vpop.permute.xlu0 %3660
    %3662 = vset.pattern.permute.xlu0 0
    %3663 = vperm.xlu0 %3662, %v3382
    %v3664 = vpop.permute.xlu0 %3663
    %3665 = vset.pattern.permute.xlu0 0
    %3666 = vperm.xlu0 %3665, %v3383
    %v3667 = vpop.permute.xlu0 %3666
    %3668 = vset.pattern.permute.xlu0 0
    %3669 = vperm.xlu0 %3668, %v3384
    %v3670 = vpop.permute.xlu0 %3669
    %3671 = vset.pattern.permute.xlu0 0
    %3672 = vperm.xlu0 %3671, %v3385
    %v3673 = vpop.permute.xlu0 %3672
    %3674 = vset.pattern.permute.xlu0 0
    %3675 = vperm.xlu0 %3674, %v3394
    %v3676 = vpop.permute.xlu0 %3675
    %3677 = vset.pattern.permute.xlu0 0
    %3678 = vperm.xlu0 %3677, %v3395
    %v3679 = vpop.permute.xlu0 %3678
    %3680 = vset.pattern.permute.xlu0 0
    %3681 = vperm.xlu0 %3680, %v3396
    %v3682 = vpop.permute.xlu0 %3681
    %3683 = vset.pattern.permute.xlu0 0
    %3684 = vperm.xlu0 %3683, %v3397
    %v3685 = vpop.permute.xlu0 %3684
    %3686 = vset.pattern.permute.xlu0 0
    %3687 = vperm.xlu0 %3686, %v3406
    %v3688 = vpop.permute.xlu0 %3687
    %3689 = vset.pattern.permute.xlu0 0
    %3690 = vperm.xlu0 %3689, %v3407
    %v3691 = vpop.permute.xlu0 %3690
    %3692 = vset.pattern.permute.xlu0 0
    %3693 = vperm.xlu0 %3692, %v3408
    %v3694 = vpop.permute.xlu0 %3693
    %3695 = vset.pattern.permute.xlu0 0
    %3696 = vperm.xlu0 %3695, %v3409
    %v3697 = vpop.permute.xlu0 %3696
    %3698 = vset.pattern.permute.xlu0 0
    %3699 = vperm.xlu0 %3698, %v3418
    %v3700 = vpop.permute.xlu0 %3699
    %3701 = vset.pattern.permute.xlu0 0
    %3702 = vperm.xlu0 %3701, %v3419
    %v3703 = vpop.permute.xlu0 %3702
    %3704 = vset.pattern.permute.xlu0 0
    %3705 = vperm.xlu0 %3704, %v3420
    %v3706 = vpop.permute.xlu0 %3705
    %3707 = vset.pattern.permute.xlu0 0
    %3708 = vperm.xlu0 %3707, %v3421
    %v3709 = vpop.permute.xlu0 %3708
    %3710 = vset.pattern.permute.xlu0 0
    %3711 = vperm.xlu0 %3710, %v3430
    %v3712 = vpop.permute.xlu0 %3711
    %3713 = vset.pattern.permute.xlu0 0
    %3714 = vperm.xlu0 %3713, %v3431
    %v3715 = vpop.permute.xlu0 %3714
    %3716 = vset.pattern.permute.xlu0 0
    %3717 = vperm.xlu0 %3716, %v3432
    %v3718 = vpop.permute.xlu0 %3717
    %3719 = vset.pattern.permute.xlu0 0
    %3720 = vperm.xlu0 %3719, %v3433
    %v3721 = vpop.permute.xlu0 %3720
    %3722 = vset.pattern.permute.xlu0 0
    %3723 = vperm.xlu0 %3722, %v3442
    %v3724 = vpop.permute.xlu0 %3723
    %3725 = vset.pattern.permute.xlu0 0
    %3726 = vperm.xlu0 %3725, %v3443
    %v3727 = vpop.permute.xlu0 %3726
    %3728 = vset.pattern.permute.xlu0 0
    %3729 = vperm.xlu0 %3728, %v3444
    %v3730 = vpop.permute.xlu0 %3729
    %3731 = vset.pattern.permute.xlu0 0
    %3732 = vperm.xlu0 %3731, %v3445
    %v3733 = vpop.permute.xlu0 %3732
    %3734 = vset.pattern.permute.xlu0 0
    %3735 = vperm.xlu0 %3734, %v3454
    %v3736 = vpop.permute.xlu0 %3735
    %3737 = vset.pattern.permute.xlu0 0
    %3738 = vperm.xlu0 %3737, %v3455
    %v3739 = vpop.permute.xlu0 %3738
    %3740 = vset.pattern.permute.xlu0 0
    %3741 = vperm.xlu0 %3740, %v3456
    %v3742 = vpop.permute.xlu0 %3741
    %3743 = vset.pattern.permute.xlu0 0
    %3744 = vperm.xlu0 %3743, %v3457
    %v3745 = vpop.permute.xlu0 %3744
    %3746 = vset.pattern.permute.xlu0 0
    %3747 = vperm.xlu0 %3746, %v3466
    %v3748 = vpop.permute.xlu0 %3747
    %3749 = vset.pattern.permute.xlu0 0
    %3750 = vperm.xlu0 %3749, %v3467
    %v3751 = vpop.permute.xlu0 %3750
    %3752 = vset.pattern.permute.xlu0 0
    %3753 = vperm.xlu0 %3752, %v3468
    %v3754 = vpop.permute.xlu0 %3753
    %3755 = vset.pattern.permute.xlu0 0
    %3756 = vperm.xlu0 %3755, %v3469
    %v3757 = vpop.permute.xlu0 %3756
    %3758 = vset.pattern.permute.xlu0 0
    %3759 = vperm.xlu0 %3758, %v3478
    %v3760 = vpop.permute.xlu0 %3759
    %3761 = vset.pattern.permute.xlu0 0
    %3762 = vperm.xlu0 %3761, %v3479
    %v3763 = vpop.permute.xlu0 %3762
    %3764 = vset.pattern.permute.xlu0 0
    %3765 = vperm.xlu0 %3764, %v3480
    %v3766 = vpop.permute.xlu0 %3765
    %3767 = vset.pattern.permute.xlu0 0
    %3768 = vperm.xlu0 %3767, %v3481
    %v3769 = vpop.permute.xlu0 %3768
    %3770 = vset.pattern.permute.xlu0 0
    %3771 = vperm.xlu0 %3770, %v3490
    %v3772 = vpop.permute.xlu0 %3771
    %3773 = vset.pattern.permute.xlu0 0
    %3774 = vperm.xlu0 %3773, %v3491
    %v3775 = vpop.permute.xlu0 %3774
    %3776 = vset.pattern.permute.xlu0 0
    %3777 = vperm.xlu0 %3776, %v3492
    %v3778 = vpop.permute.xlu0 %3777
    %3779 = vset.pattern.permute.xlu0 0
    %3780 = vperm.xlu0 %3779, %v3493
    %v3781 = vpop.permute.xlu0 %3780
    %3782 = vset.pattern.permute.xlu0 0
    %3783 = vperm.xlu0 %3782, %v3502
    %v3784 = vpop.permute.xlu0 %3783
    %3785 = vset.pattern.permute.xlu0 0
    %3786 = vperm.xlu0 %3785, %v3503
    %v3787 = vpop.permute.xlu0 %3786
    %3788 = vset.pattern.permute.xlu0 0
    %3789 = vperm.xlu0 %3788, %v3504
    %v3790 = vpop.permute.xlu0 %3789
    %3791 = vset.pattern.permute.xlu0 0
    %3792 = vperm.xlu0 %3791, %v3505
    %v3793 = vpop.permute.xlu0 %3792
    %v3794 = vperm.slane %v3508, %v2245
    %v3795 = vperm.slane %v3511, %v2247
    %v3796 = vsel %vm2249, %v3795, %v3794
    %v3797 = vperm.slane %v3514, %v2251
    %v3798 = vsel %vm2253, %v3797, %v3796
    %v3799 = vperm.slane %v3517, %v2255
    %v3800 = vsel %vm2257, %v3799, %v3798
    %v3801 = vperm.slane %v3520, %v2259
    %v3802 = vsel %vm2261, %v3801, %v3800
    %v3803 = vperm.slane %v3523, %v2263
    %v3804 = vsel %vm2265, %v3803, %v3802
    %v3805 = vperm.slane %v3526, %v2267
    %v3806 = vsel %vm2269, %v3805, %v3804
    %v3807 = vperm.slane %v3529, %v2271
    %v3808 = vsel %vm2273, %v3807, %v3806
    %v3809 = vperm.slane %v3532, %v2275
    %v3810 = vsel %vm2277, %v3809, %v3808
    %v3811 = vperm.slane %v3535, %v2279
    %v3812 = vsel %vm2281, %v3811, %v3810
    %v3813 = vperm.slane %v3538, %v2283
    %v3814 = vsel %vm2285, %v3813, %v3812
    %v3815 = vperm.slane %v3541, %v2287
    %v3816 = vsel %vm2289, %v3815, %v3814
    %v3817 = vperm.slane %v3544, %v2291
    %v3818 = vsel %vm2293, %v3817, %v3816
    %v3819 = vperm.slane %v3547, %v2295
    %v3820 = vsel %vm2297, %v3819, %v3818
    %v3821 = vperm.slane %v3550, %v2299
    %v3822 = vsel %vm2301, %v3821, %v3820
    %v3823 = vperm.slane %v3553, %v2303
    %v3824 = vsel %vm2305, %v3823, %v3822
    %v3825 = vperm.slane %v3556, %v2245
    %v3826 = vperm.slane %v3559, %v2247
    %v3827 = vsel %vm2249, %v3826, %v3825
    %v3828 = vperm.slane %v3562, %v2251
    %v3829 = vsel %vm2253, %v3828, %v3827
    %v3830 = vperm.slane %v3565, %v2255
    %v3831 = vsel %vm2257, %v3830, %v3829
    %v3832 = vperm.slane %v3568, %v2259
    %v3833 = vsel %vm2261, %v3832, %v3831
    %v3834 = vperm.slane %v3571, %v2263
    %v3835 = vsel %vm2265, %v3834, %v3833
    %v3836 = vperm.slane %v3574, %v2267
    %v3837 = vsel %vm2269, %v3836, %v3835
    %v3838 = vperm.slane %v3577, %v2271
    %v3839 = vsel %vm2273, %v3838, %v3837
    %v3840 = vperm.slane %v3580, %v2275
    %v3841 = vsel %vm2277, %v3840, %v3839
    %v3842 = vperm.slane %v3583, %v2279
    %v3843 = vsel %vm2281, %v3842, %v3841
    %v3844 = vperm.slane %v3586, %v2283
    %v3845 = vsel %vm2285, %v3844, %v3843
    %v3846 = vperm.slane %v3589, %v2287
    %v3847 = vsel %vm2289, %v3846, %v3845
    %v3848 = vperm.slane %v3592, %v2291
    %v3849 = vsel %vm2293, %v3848, %v3847
    %v3850 = vperm.slane %v3595, %v2295
    %v3851 = vsel %vm2297, %v3850, %v3849
    %v3852 = vperm.slane %v3598, %v2299
    %v3853 = vsel %vm2301, %v3852, %v3851
    %v3854 = vperm.slane %v3601, %v2303
    %v3855 = vsel %vm2305, %v3854, %v3853
    %v3856 = vperm.slane %v3604, %v2245
    %v3857 = vperm.slane %v3607, %v2247
    %v3858 = vsel %vm2249, %v3857, %v3856
    %v3859 = vperm.slane %v3610, %v2251
    %v3860 = vsel %vm2253, %v3859, %v3858
    %v3861 = vperm.slane %v3613, %v2255
    %v3862 = vsel %vm2257, %v3861, %v3860
    %v3863 = vperm.slane %v3616, %v2259
    %v3864 = vsel %vm2261, %v3863, %v3862
    %v3865 = vperm.slane %v3619, %v2263
    %v3866 = vsel %vm2265, %v3865, %v3864
    %v3867 = vperm.slane %v3622, %v2267
    %v3868 = vsel %vm2269, %v3867, %v3866
    %v3869 = vperm.slane %v3625, %v2271
    %v3870 = vsel %vm2273, %v3869, %v3868
    %v3871 = vperm.slane %v3628, %v2275
    %v3872 = vsel %vm2277, %v3871, %v3870
    %v3873 = vperm.slane %v3631, %v2279
    %v3874 = vsel %vm2281, %v3873, %v3872
    %v3875 = vperm.slane %v3634, %v2283
    %v3876 = vsel %vm2285, %v3875, %v3874
    %v3877 = vperm.slane %v3637, %v2287
    %v3878 = vsel %vm2289, %v3877, %v3876
    %v3879 = vperm.slane %v3640, %v2291
    %v3880 = vsel %vm2293, %v3879, %v3878
    %v3881 = vperm.slane %v3643, %v2295
    %v3882 = vsel %vm2297, %v3881, %v3880
    %v3883 = vperm.slane %v3646, %v2299
    %v3884 = vsel %vm2301, %v3883, %v3882
    %v3885 = vperm.slane %v3649, %v2303
    %v3886 = vsel %vm2305, %v3885, %v3884
    %v3887 = vperm.slane %v3652, %v2245
    %v3888 = vperm.slane %v3655, %v2247
    %v3889 = vsel %vm2249, %v3888, %v3887
    %v3890 = vperm.slane %v3658, %v2251
    %v3891 = vsel %vm2253, %v3890, %v3889
    %v3892 = vperm.slane %v3661, %v2255
    %v3893 = vsel %vm2257, %v3892, %v3891
    %v3894 = vperm.slane %v3664, %v2259
    %v3895 = vsel %vm2261, %v3894, %v3893
    %v3896 = vperm.slane %v3667, %v2263
    %v3897 = vsel %vm2265, %v3896, %v3895
    %v3898 = vperm.slane %v3670, %v2267
    %v3899 = vsel %vm2269, %v3898, %v3897
    %v3900 = vperm.slane %v3673, %v2271
    %v3901 = vsel %vm2273, %v3900, %v3899
    %v3902 = vperm.slane %v3676, %v2275
    %v3903 = vsel %vm2277, %v3902, %v3901
    %v3904 = vperm.slane %v3679, %v2279
    %v3905 = vsel %vm2281, %v3904, %v3903
    %v3906 = vperm.slane %v3682, %v2283
    %v3907 = vsel %vm2285, %v3906, %v3905
    %v3908 = vperm.slane %v3685, %v2287
    %v3909 = vsel %vm2289, %v3908, %v3907
    %v3910 = vperm.slane %v3688, %v2291
    %v3911 = vsel %vm2293, %v3910, %v3909
    %v3912 = vperm.slane %v3691, %v2295
    %v3913 = vsel %vm2297, %v3912, %v3911
    %v3914 = vperm.slane %v3694, %v2299
    %v3915 = vsel %vm2301, %v3914, %v3913
    %v3916 = vperm.slane %v3697, %v2303
    %v3917 = vsel %vm2305, %v3916, %v3915
    %v3918 = vperm.slane %v3700, %v2245
    %v3919 = vperm.slane %v3703, %v2247
    %v3920 = vsel %vm2249, %v3919, %v3918
    %v3921 = vperm.slane %v3706, %v2251
    %v3922 = vsel %vm2253, %v3921, %v3920
    %v3923 = vperm.slane %v3709, %v2255
    %v3924 = vsel %vm2257, %v3923, %v3922
    %v3925 = vperm.slane %v3712, %v2259
    %v3926 = vsel %vm2261, %v3925, %v3924
    %v3927 = vperm.slane %v3715, %v2263
    %v3928 = vsel %vm2265, %v3927, %v3926
    %v3929 = vperm.slane %v3718, %v2267
    %v3930 = vsel %vm2269, %v3929, %v3928
    %v3931 = vperm.slane %v3721, %v2271
    %v3932 = vsel %vm2273, %v3931, %v3930
    %v3933 = vperm.slane %v3724, %v2275
    %v3934 = vsel %vm2277, %v3933, %v3932
    %v3935 = vperm.slane %v3727, %v2279
    %v3936 = vsel %vm2281, %v3935, %v3934
    %v3937 = vperm.slane %v3730, %v2283
    %v3938 = vsel %vm2285, %v3937, %v3936
    %v3939 = vperm.slane %v3733, %v2287
    %v3940 = vsel %vm2289, %v3939, %v3938
    %v3941 = vperm.slane %v3736, %v2291
    %v3942 = vsel %vm2293, %v3941, %v3940
    %v3943 = vperm.slane %v3739, %v2295
    %v3944 = vsel %vm2297, %v3943, %v3942
    %v3945 = vperm.slane %v3742, %v2299
    %v3946 = vsel %vm2301, %v3945, %v3944
    %v3947 = vperm.slane %v3745, %v2303
    %v3948 = vsel %vm2305, %v3947, %v3946
    %v3949 = vperm.slane %v3748, %v2245
    %v3950 = vperm.slane %v3751, %v2247
    %v3951 = vsel %vm2249, %v3950, %v3949
    %v3952 = vperm.slane %v3754, %v2251
    %v3953 = vsel %vm2253, %v3952, %v3951
    %v3954 = vperm.slane %v3757, %v2255
    %v3955 = vsel %vm2257, %v3954, %v3953
    %v3956 = vperm.slane %v3760, %v2259
    %v3957 = vsel %vm2261, %v3956, %v3955
    %v3958 = vperm.slane %v3763, %v2263
    %v3959 = vsel %vm2265, %v3958, %v3957
    %v3960 = vperm.slane %v3766, %v2267
    %v3961 = vsel %vm2269, %v3960, %v3959
    %v3962 = vperm.slane %v3769, %v2271
    %v3963 = vsel %vm2273, %v3962, %v3961
    %v3964 = vperm.slane %v3772, %v2275
    %v3965 = vsel %vm2277, %v3964, %v3963
    %v3966 = vperm.slane %v3775, %v2279
    %v3967 = vsel %vm2281, %v3966, %v3965
    %v3968 = vperm.slane %v3778, %v2283
    %v3969 = vsel %vm2285, %v3968, %v3967
    %v3970 = vperm.slane %v3781, %v2287
    %v3971 = vsel %vm2289, %v3970, %v3969
    %v3972 = vperm.slane %v3784, %v2291
    %v3973 = vsel %vm2293, %v3972, %v3971
    %v3974 = vperm.slane %v3787, %v2295
    %v3975 = vsel %vm2297, %v3974, %v3973
    %v3976 = vperm.slane %v3790, %v2299
    %v3977 = vsel %vm2301, %v3976, %v3975
    %v3978 = vperm.slane %v3793, %v2303
    %v3979 = vsel %vm2305, %v3978, %v3977
    %vm3980 = vcmask 1041409
    %v3981 = vsel %vm3980, %v3886, %v3824
    %vm3982 = vcmask 1042434
    %v3983 = vsel %vm3982, %v3948, %v3981
    %v3984 = vsel %vm3980, %v3917, %v3855
    %v3985 = vsel %vm3982, %v3979, %v3984
    %v3986 = vrot.slane %v3985, 4
    %vm3987 = vcmask 1043456
    %v3988 = vsel %vm3987, %v3983, %v3986
    %3990 = vst [vmem:[#allocation10] sm:$0x77] %v3988
    // Predicated region
    $region38: #{tpu_custom_call.1} parent=1 // pred_check
      _
    $region39: #{tpu_custom_call.1} parent=1 // pred_check_branch
      %3992 = sbr.rel (0) target = $region41
    $region40: #{tpu_custom_call.1} parent=1 // pred_region
      %3994 = vsyncadd [#allocation5], 0
      %s3996 = sshll.u32 [#allocation9], 4
      %s3997 = int_to_ptr.vmem [resolvable:$true] %s3996
      %s3998 = sshll.u32 %s6, 4
      %s3999 = int_to_ptr.hbm [resolvable:$true] %s3998
      %4001 = dma.vmem_to_hbm [thread:$0]  %s3997, 32, %s3999, [#allocation5]
    $region41: #{tpu_custom_call.1} parent=1 // pred_fallthru
      _
    // Predicated region
    $region42: #{tpu_custom_call.1} parent=1 // pred_check
      _
    $region43: #{tpu_custom_call.1} parent=1 // pred_check_branch
      %4003 = sbr.rel (0) target = $region45
    $region44: #{tpu_custom_call.1} parent=1 // pred_region
      %4005 = vsyncadd [#allocation11], 0
      %s4007 = sshll.u32 [#allocation10], 4
      %s4008 = int_to_ptr.vmem [resolvable:$true] %s4007
      %s4009 = sshll.u32 %s7, 4
      %s4010 = int_to_ptr.hbm [resolvable:$true] %s4009
      %4012 = dma.vmem_to_hbm [thread:$0]  %s4008, 128, %s4010, [#allocation11]
    $region45: #{tpu_custom_call.1} parent=1 // pred_fallthru
      _
    // Predicated region
    $region46: #{tpu_custom_call.1} parent=1 // pred_check
      _
    $region47: #{tpu_custom_call.1} parent=1 // pred_check_branch
      %4014 = sbr.rel (0) target = $region49
    $region48: #{tpu_custom_call.1} parent=1 // pred_region
      %4016 = dma.done [#allocation5], 32
    $region49: #{tpu_custom_call.1} parent=1 // pred_fallthru
      _
    // Predicated region
    $region50: #{tpu_custom_call.1} parent=1 // pred_check
      _
    $region51: #{tpu_custom_call.1} parent=1 // pred_check_branch
      %4018 = sbr.rel (0) target = $region53
    $region52: #{tpu_custom_call.1} parent=1 // pred_region
      %4020 = dma.done [#allocation11], 128
    $region53: #{tpu_custom_call.1} parent=1 // pred_fallthru
      _
    %4021 = vsyncpa [#allocation4], 1
    %4022 = vsyncpa [#allocation7], 1
    %4023 = vsyncpa [#allocation5], 1
    %4024 = vsyncpa [#allocation11], 1

</llo_original>
